<compile_context>
chip_gen: v5e
topology: v5e:2x2
jax: 0.10.0
libtpu: 0.0.40
codegen_flags: <defaults>
</compile_context>

<pallas_src>
import jax
import jax.numpy as jnp
from jax.experimental import pallas as pl
from jax.experimental.pallas import tpu as pltpu


# ---------------------------------------------------------------------------
# Kernel 1: fused adapt branch
#   1x1 conv (BN folded) + ReLU  -> VMEM scratch ->  dw 3x3 (BN folded) + ReLU
# ---------------------------------------------------------------------------
def _branch_kernel(x_ref, pw_w_ref, pw_b_ref, dw_w_ref, dw_b_ref, o_ref, h_ref):
    # x_ref: (1,H,W,Cin)  pw_w:(Cin,C)  pw_b:(1,C)  dw_w:(3,3,C)  dw_b:(1,C)
    # o_ref: (1,Ho,Wo,C)  h_ref: VMEM scratch (H,W,C)
    _, H, W, _ = x_ref.shape
    _, Ho, Wo, C = o_ref.shape

    x = x_ref[0]                        # (H, W, Cin)
    pw_w = pw_w_ref[...]                # BN scale already folded into weights
    pw_b = pw_b_ref[...]                # (1, C)

    # 1x1 conv + bias + ReLU, row by row into the VMEM scratch (keeps the
    # intermediate on-chip and avoids any in-kernel vector reshape).
    for i in range(H):
        h_ref[i] = jnp.maximum(
            jnp.dot(x[i], pw_w, preferred_element_type=jnp.float32) + pw_b, 0.0)

    h = h_ref[...]                      # (H, W, C)
    dw_w = dw_w_ref[...]                # (3, 3, C), BN scale folded

    # Depthwise 3x3 "valid" conv: hoist the W-direction shifts (3 sublane
    # relayouts), iterate the H shift over the cheap major axis.
    cols = [h[:, v:v + Wo, :] for v in range(3)]
    acc = jnp.zeros((Ho, Wo, C), jnp.float32)
    for u in range(3):
        for v in range(3):
            acc = acc + cols[v][u:u + Ho] * dw_w[u, v][None, None, :]

    y = acc + dw_b_ref[0][None, None, :]
    o_ref[0] = jnp.maximum(y, 0.0).astype(o_ref.dtype)


def adapt_branch(x_nhwc, p):
    """Fused (1x1 conv + BN + ReLU) -> (dw3x3 + BN + ReLU).  x: (N,H,W,Cin)."""
    N, H, W, Cin = x_nhwc.shape
    C = p["pw_w"].shape[1]
    Ho, Wo = H - 2, W - 2
    return pl.pallas_call(
        _branch_kernel,
        out_shape=jax.ShapeDtypeStruct((N, Ho, Wo, C), jnp.float32),
        grid=(N,),
        in_specs=[
            pl.BlockSpec((1, H, W, Cin), lambda b: (b, 0, 0, 0)),
            pl.BlockSpec((Cin, C), lambda b: (0, 0)),
            pl.BlockSpec((1, C), lambda b: (0, 0)),
            pl.BlockSpec((3, 3, C), lambda b: (0, 0, 0)),
            pl.BlockSpec((1, C), lambda b: (0, 0)),
        ],
        out_specs=pl.BlockSpec((1, Ho, Wo, C), lambda b: (b, 0, 0, 0)),
        scratch_shapes=[pltpu.VMEM((H, W, C), jnp.float32)],
        compiler_params=pltpu.CompilerParams(dimension_semantics=("parallel",)),
    )(x_nhwc, p["pw_w"], p["pw_b"], p["dw_w"], p["dw_b"])


# ---------------------------------------------------------------------------
# Kernel 2: fused depthwise cross-correlation + head (1x1 conv + BN + ReLU,
#           then 1x1 conv + bias), feature kept in a VMEM scratch.
# ---------------------------------------------------------------------------
def _xcorr_head_kernel(s_ref, k_ref, w1_ref, b1_ref, w2_ref, b2_ref,
                       o_ref, feat_ref):
    # s_ref: (1,Hs,Ws,C)  k_ref: (1,Hk,Wk,C)
    # w1:(C,C) BN-folded  b1:(1,C)  w2:(C,Cout)  b2:(1,Cout)
    # o_ref: (1, Ho*Wo, Cout)   feat_ref: VMEM scratch (Ho*Wo, C)
    _, Hs, Ws, C = s_ref.shape
    _, Hk, Wk, _ = k_ref.shape
    Ho = Hs - Hk + 1
    Wo = Ws - Wk + 1

    s = s_ref[0]                        # (Hs, Ws, C)
    k = k_ref[0]                        # (Hk, Wk, C)

    # Depthwise cross-correlation: hoist the W-direction shifts (Wk relayouts
    # instead of Hk*Wk); the H shift is a cheap major-axis slice.
    cols = [s[:, v:v + Wo, :] for v in range(Wk)]
    acc = jnp.zeros((Ho, Wo, C), jnp.float32)
    for u in range(Hk):
        for v in range(Wk):
            acc = acc + cols[v][u:u + Ho] * k[u, v][None, None, :]

    # Flatten (Ho,Wo,C) -> (Ho*Wo,C) through the VMEM scratch via per-row
    # stores (avoids an in-kernel vector reshape).
    for i in range(Ho):
        feat_ref[i * Wo:(i + 1) * Wo, :] = acc[i]
    feat = feat_ref[...]                # (Ho*Wo, C)

    # Head: 1x1 conv (BN folded) + ReLU, then 1x1 conv + bias -- both on the
    # MXU over the flattened spatial positions, no HBM round-trip in between.
    h = jnp.maximum(
        jnp.dot(feat, w1_ref[...], preferred_element_type=jnp.float32)
        + b1_ref[...], 0.0)             # (Ho*Wo, C)
    out = jnp.dot(h, w2_ref[...], preferred_element_type=jnp.float32) + b2_ref[...]
    o_ref[0] = out.astype(o_ref.dtype)  # (Ho*Wo, Cout)


def xcorr_head(search_nhwc, kernel_nhwc, hp):
    N, Hs, Ws, C = search_nhwc.shape
    _, Hk, Wk, _ = kernel_nhwc.shape
    Ho, Wo = Hs - Hk + 1, Ws - Wk + 1
    Cout = hp["w2"].shape[1]
    return pl.pallas_call(
        _xcorr_head_kernel,
        out_shape=jax.ShapeDtypeStruct((N, Ho * Wo, Cout), jnp.float32),
        grid=(N,),
        in_specs=[
            pl.BlockSpec((1, Hs, Ws, C), lambda b: (b, 0, 0, 0)),
            pl.BlockSpec((1, Hk, Wk, C), lambda b: (b, 0, 0, 0)),
            pl.BlockSpec((C, C), lambda b: (0, 0)),
            pl.BlockSpec((1, C), lambda b: (0, 0)),
            pl.BlockSpec((C, Cout), lambda b: (0, 0)),
            pl.BlockSpec((1, Cout), lambda b: (0, 0)),
        ],
        out_specs=pl.BlockSpec((1, Ho * Wo, Cout), lambda b: (b, 0, 0)),
        scratch_shapes=[pltpu.VMEM((Ho * Wo, C), jnp.float32)],
        compiler_params=pltpu.CompilerParams(dimension_semantics=("parallel",)),
    )(search_nhwc, kernel_nhwc, hp["w1"], hp["b1"], hp["w2"], hp["b2"])


# ---------------------------------------------------------------------------
# Parameter construction (deterministic, synthetic); BN folded into weights.
# ---------------------------------------------------------------------------
def _fold_bn(gamma, beta, mean, var, eps=1e-5):
    scale = gamma / jnp.sqrt(var + eps)
    bias = beta - mean * scale
    return scale, bias


def make_bn_params(key, c):
    k1, k2, k3, k4 = jax.random.split(key, 4)
    gamma = 1.0 + 0.1 * jax.random.normal(k1, (c,), jnp.float32)
    beta = 0.1 * jax.random.normal(k2, (c,), jnp.float32)
    mean = 0.1 * jax.random.normal(k3, (c,), jnp.float32)
    var = 1.0 + 0.1 * jnp.abs(jax.random.normal(k4, (c,), jnp.float32))
    return _fold_bn(gamma, beta, mean, var)


def make_adapt_params(key, in_channels, hidden):
    k1, k2, k3, k4 = jax.random.split(key, 4)
    pw_w = 0.1 * jax.random.normal(k1, (in_channels, hidden), jnp.float32)
    pw_scale, pw_bias = make_bn_params(k2, hidden)
    dw_w = 0.1 * jax.random.normal(k3, (3, 3, hidden), jnp.float32)
    dw_scale, dw_bias = make_bn_params(k4, hidden)
    # Fold the BN scale into the conv weights (exact for inference-mode BN).
    return dict(
        pw_w=pw_w * pw_scale[None, :],
        pw_b=pw_bias.reshape(1, hidden),
        dw_w=dw_w * dw_scale[None, None, :],
        dw_b=dw_bias.reshape(1, hidden),
    )


def make_head_params(key, hidden, out_channels):
    k1, k2, k3, k4 = jax.random.split(key, 4)
    w1 = 0.1 * jax.random.normal(k1, (hidden, hidden), jnp.float32)
    s1, b1 = make_bn_params(k2, hidden)
    w2 = 0.1 * jax.random.normal(k3, (hidden, out_channels), jnp.float32)
    b2 = 0.1 * jax.random.normal(k4, (out_channels,), jnp.float32)
    return dict(
        w1=w1 * s1[None, :],            # BN scale folded
        b1=b1.reshape(1, hidden),
        w2=w2,
        b2=b2.reshape(1, out_channels),
    )


# ---------------------------------------------------------------------------
# Module forward (layout plumbing in XLA, all hot work in 3 Pallas kernels)
# ---------------------------------------------------------------------------
def depthwise_xcorr_forward(kernel_nchw, search_nchw, params):
    # NCHW -> NHWC
    kernel = jnp.transpose(kernel_nchw, (0, 2, 3, 1))
    search = jnp.transpose(search_nchw, (0, 2, 3, 1))

    # Center crop (size 7) applied to the *input* of the kernel branch; exact
    # since the 1x1 conv + BN + ReLU are pointwise.  Matches PyTorch which
    # derives the bounds from W and assumes square spatial dims.
    ccs = 7
    l = (kernel.shape[2] - ccs) // 2
    kernel = kernel[:, l:l + ccs, l:l + ccs, :]

    kfeat = adapt_branch(kernel, params["conv_kernel"])   # (N, 5, 5, hidden)
    sfeat = adapt_branch(search, params["conv_search"])   # (N, 15, 15, hidden)

    out_flat = xcorr_head(sfeat, kfeat, params["head"])   # (N, Ho*Wo, Cout)

    N = out_flat.shape[0]
    Cout = out_flat.shape[2]
    Ho = sfeat.shape[1] - kfeat.shape[1] + 1
    Wo = sfeat.shape[2] - kfeat.shape[2] + 1
    # Tiny (~4KB) permute to the PyTorch NCHW convention; stays fused in jit.
    out = jnp.transpose(out_flat, (0, 2, 1)).reshape(N, Cout, Ho, Wo)
    return out


# ---------------------------------------------------------------------------
# Pure-JAX reference (follows the PyTorch op order exactly) for a sanity check
# ---------------------------------------------------------------------------
def _ref_forward(kernel_nchw, search_nchw, params):
    hi = jax.lax.Precision.HIGHEST

    def branch(x_nchw, p, crop):
        x = jnp.transpose(x_nchw, (0, 2, 3, 1))
        h = jnp.einsum("nhwi,ic->nhwc", x, p["pw_w"], precision=hi) + p["pw_b"][0]
        h = jnp.maximum(h, 0.0)
        if crop:
            l = (h.shape[2] - crop) // 2
            h = h[:, l:l + crop, l:l + crop, :]
        N, H, W, C = h.shape
        acc = jnp.zeros((N, H - 2, W - 2, C), jnp.float32)
        for u in range(3):
            for v in range(3):
                acc = acc + h[:, u:u + H - 2, v:v + W - 2, :] * p["dw_w"][u, v]
        return jnp.maximum(acc + p["dw_b"][0], 0.0)

    kf = branch(kernel_nchw, params["conv_kernel"], 7)
    sf = branch(search_nchw, params["conv_search"], 0)
    N, Hs, Ws, C = sf.shape
    _, Hk, Wk, _ = kf.shape
    Ho, Wo = Hs - Hk + 1, Ws - Wk + 1
    acc = jnp.zeros((N, Ho, Wo, C), jnp.float32)
    for u in range(Hk):
        for v in range(Wk):
            acc = acc + sf[:, u:u + Ho, v:v + Wo, :] * kf[:, u, v, :][:, None, None, :]
    hp = params["head"]
    h = jnp.maximum(
        jnp.einsum("nhwc,cd->nhwd", acc, hp["w1"], precision=hi) + hp["b1"][0], 0.0)
    out = jnp.einsum("nhwd,do->nohw", h, hp["w2"], precision=hi)
    return out + hp["b2"][0][None, :, None, None]


# ---------------------------------------------------------------------------
if __name__ == "__main__":
    key = jax.random.PRNGKey(0)
    k_in, k_sr, k_pk, k_ps, k_ph = jax.random.split(key, 5)

    batch = 2
    in_channels = 8
    hidden = 16
    out_channels = 4

    # PyTorch-style NCHW inputs.
    kernel_x = jax.random.normal(k_in, (batch, in_channels, 9, 9), jnp.float32)
    search_x = jax.random.normal(k_sr, (batch, in_channels, 17, 17), jnp.float32)

    params = dict(
        conv_kernel=make_adapt_params(k_pk, in_channels, hidden),
        conv_search=make_adapt_params(k_ps, in_channels, hidden),
        head=make_head_params(k_ph, hidden, out_channels),
    )

    fwd = jax.jit(depthwise_xcorr_forward)
    out = jax.block_until_ready(fwd(kernel_x, search_x, params))

    # kernel branch: 9x9 -> crop 7x7 -> dw3x3 -> 5x5
    # search branch: 17x17 -> dw3x3 -> 15x15 ; xcorr -> 11x11
    assert out.shape == (batch, out_channels, 11, 11), out.shape
    assert bool(jnp.isfinite(out).all())

    ref = _ref_forward(kernel_x, search_x, params)
    assert jnp.allclose(out, ref, rtol=2e-2, atol=2e-2), float(
        jnp.max(jnp.abs(out - ref)))

    print("KERNEL_OK")
</pallas_src>

<mosaic_0001>
module attributes {stable_mosaic.version = 11 : i64} {
  func.func @_branch_kernel(%arg0: i32, %arg1: memref<1x17x17x8xf32, #tpu.memory_space<vmem>>, %arg2: memref<8x16xf32, #tpu.memory_space<vmem>>, %arg3: memref<1x16xf32, #tpu.memory_space<vmem>>, %arg4: memref<3x3x16xf32, #tpu.memory_space<vmem>>, %arg5: memref<1x16xf32, #tpu.memory_space<vmem>>, %arg6: memref<1x15x15x16xf32, #tpu.memory_space<vmem>>, %arg7: memref<17x17x16xf32, #tpu.memory_space<vmem>>) attributes {dimension_semantics = [#tpu.dimension_semantics<parallel>], iteration_bounds = array<i64: 2>, scalar_prefetch = 0 : i64, scratch_operands = 1 : i64, tpu.core_type = #tpu.core_type<tc>, window_params = [{transform_indices = @transform_0, window_bounds = array<i64: 1, 17, 17, 8>}, {pipeline_mode = #tpu.pipeline_mode<synchronous>, transform_indices = @transform_1, window_bounds = array<i64: 8, 16>}, {pipeline_mode = #tpu.pipeline_mode<synchronous>, transform_indices = @transform_2, window_bounds = array<i64: 1, 16>}, {pipeline_mode = #tpu.pipeline_mode<synchronous>, transform_indices = @transform_3, window_bounds = array<i64: 3, 3, 16>}, {pipeline_mode = #tpu.pipeline_mode<synchronous>, transform_indices = @transform_4, window_bounds = array<i64: 1, 16>}, {transform_indices = @transform_5, window_bounds = array<i64: 1, 15, 15, 16>}]} {
    %c0 = arith.constant 0 : index
    %c0_0 = arith.constant 0 : index
    %c0_1 = arith.constant 0 : index
    %c0_2 = arith.constant 0 : index
    %0 = vector.load %arg1[%c0, %c0_0, %c0_1, %c0_2] : memref<1x17x17x8xf32, #tpu.memory_space<vmem>>, vector<1x17x17x8xf32>
    %1 = vector.shape_cast %0 : vector<1x17x17x8xf32> to vector<17x17x8xf32>
    %c0_3 = arith.constant 0 : index
    %c0_4 = arith.constant 0 : index
    %2 = vector.load %arg2[%c0_3, %c0_4] : memref<8x16xf32, #tpu.memory_space<vmem>>, vector<8x16xf32>
    %c0_5 = arith.constant 0 : index
    %c0_6 = arith.constant 0 : index
    %3 = vector.load %arg3[%c0_5, %c0_6] : memref<1x16xf32, #tpu.memory_space<vmem>>, vector<1x16xf32>
    %4 = vector.extract_strided_slice %1 {offsets = [0, 0, 0], sizes = [1, 17, 8], strides = [1, 1, 1]} : vector<17x17x8xf32> to vector<1x17x8xf32>
    %5 = vector.shape_cast %4 : vector<1x17x8xf32> to vector<17x8xf32>
    %cst = arith.constant dense<0.000000e+00> : vector<17x16xf32>
    %6 = tpu.matmul %5, %2, %cst {dimension_numbers = #tpu.dot_dimension_numbers<[1], [0], [0], [1], [0, 0, 1, 1], [], []>} : vector<17x8xf32>, vector<8x16xf32>, vector<17x16xf32> -> vector<17x16xf32>
    %7 = vector.broadcast %3 : vector<1x16xf32> to vector<17x16xf32>
    %8 = arith.addf %6, %7 : vector<17x16xf32>
    %cst_7 = arith.constant 0.000000e+00 : f32
    %9 = vector.broadcast %cst_7 : f32 to vector<17x16xf32>
    %10 = arith.maximumf %8, %9 : vector<17x16xf32>
    %c0_8 = arith.constant 0 : index
    %c0_9 = arith.constant 0 : index
    %c0_10 = arith.constant 0 : index
    %11 = vector.load %arg7[%c0_8, %c0_9, %c0_10] : memref<17x17x16xf32, #tpu.memory_space<vmem>>, vector<1x17x16xf32>
    %12 = vector.shape_cast %11 : vector<1x17x16xf32> to vector<17x16xf32>
    %13 = vector.shape_cast %10 : vector<17x16xf32> to vector<1x17x16xf32>
    tpu.vector_store %arg7[%c0_8, %c0_9, %c0_10], %13 {strides = array<i32>} : memref<17x17x16xf32, #tpu.memory_space<vmem>>, vector<1x17x16xf32>,
    %14 = vector.extract_strided_slice %1 {offsets = [1, 0, 0], sizes = [1, 17, 8], strides = [1, 1, 1]} : vector<17x17x8xf32> to vector<1x17x8xf32>
    %15 = vector.shape_cast %14 : vector<1x17x8xf32> to vector<17x8xf32>
    %cst_11 = arith.constant dense<0.000000e+00> : vector<17x16xf32>
    %16 = tpu.matmul %15, %2, %cst_11 {dimension_numbers = #tpu.dot_dimension_numbers<[1], [0], [0], [1], [0, 0, 1, 1], [], []>} : vector<17x8xf32>, vector<8x16xf32>, vector<17x16xf32> -> vector<17x16xf32>
    %17 = vector.broadcast %3 : vector<1x16xf32> to vector<17x16xf32>
    %18 = arith.addf %16, %17 : vector<17x16xf32>
    %cst_12 = arith.constant 0.000000e+00 : f32
    %19 = vector.broadcast %cst_12 : f32 to vector<17x16xf32>
    %20 = arith.maximumf %18, %19 : vector<17x16xf32>
    %c1 = arith.constant 1 : index
    %c0_13 = arith.constant 0 : index
    %c0_14 = arith.constant 0 : index
    %21 = vector.load %arg7[%c1, %c0_13, %c0_14] : memref<17x17x16xf32, #tpu.memory_space<vmem>>, vector<1x17x16xf32>
    %22 = vector.shape_cast %21 : vector<1x17x16xf32> to vector<17x16xf32>
    %23 = vector.shape_cast %20 : vector<17x16xf32> to vector<1x17x16xf32>
    tpu.vector_store %arg7[%c1, %c0_13, %c0_14], %23 {strides = array<i32>} : memref<17x17x16xf32, #tpu.memory_space<vmem>>, vector<1x17x16xf32>,
    %24 = vector.extract_strided_slice %1 {offsets = [2, 0, 0], sizes = [1, 17, 8], strides = [1, 1, 1]} : vector<17x17x8xf32> to vector<1x17x8xf32>
    %25 = vector.shape_cast %24 : vector<1x17x8xf32> to vector<17x8xf32>
    %cst_15 = arith.constant dense<0.000000e+00> : vector<17x16xf32>
    %26 = tpu.matmul %25, %2, %cst_15 {dimension_numbers = #tpu.dot_dimension_numbers<[1], [0], [0], [1], [0, 0, 1, 1], [], []>} : vector<17x8xf32>, vector<8x16xf32>, vector<17x16xf32> -> vector<17x16xf32>
    %27 = vector.broadcast %3 : vector<1x16xf32> to vector<17x16xf32>
    %28 = arith.addf %26, %27 : vector<17x16xf32>
    %cst_16 = arith.constant 0.000000e+00 : f32
    %29 = vector.broadcast %cst_16 : f32 to vector<17x16xf32>
    %30 = arith.maximumf %28, %29 : vector<17x16xf32>
    %c2 = arith.constant 2 : index
    %c0_17 = arith.constant 0 : index
    %c0_18 = arith.constant 0 : index
    %31 = vector.load %arg7[%c2, %c0_17, %c0_18] : memref<17x17x16xf32, #tpu.memory_space<vmem>>, vector<1x17x16xf32>
    %32 = vector.shape_cast %31 : vector<1x17x16xf32> to vector<17x16xf32>
    %33 = vector.shape_cast %30 : vector<17x16xf32> to vector<1x17x16xf32>
    tpu.vector_store %arg7[%c2, %c0_17, %c0_18], %33 {strides = array<i32>} : memref<17x17x16xf32, #tpu.memory_space<vmem>>, vector<1x17x16xf32>,
    %34 = vector.extract_strided_slice %1 {offsets = [3, 0, 0], sizes = [1, 17, 8], strides = [1, 1, 1]} : vector<17x17x8xf32> to vector<1x17x8xf32>
    %35 = vector.shape_cast %34 : vector<1x17x8xf32> to vector<17x8xf32>
    %cst_19 = arith.constant dense<0.000000e+00> : vector<17x16xf32>
    %36 = tpu.matmul %35, %2, %cst_19 {dimension_numbers = #tpu.dot_dimension_numbers<[1], [0], [0], [1], [0, 0, 1, 1], [], []>} : vector<17x8xf32>, vector<8x16xf32>, vector<17x16xf32> -> vector<17x16xf32>
    %37 = vector.broadcast %3 : vector<1x16xf32> to vector<17x16xf32>
    %38 = arith.addf %36, %37 : vector<17x16xf32>
    %cst_20 = arith.constant 0.000000e+00 : f32
    %39 = vector.broadcast %cst_20 : f32 to vector<17x16xf32>
    %40 = arith.maximumf %38, %39 : vector<17x16xf32>
    %c3 = arith.constant 3 : index
    %c0_21 = arith.constant 0 : index
    %c0_22 = arith.constant 0 : index
    %41 = vector.load %arg7[%c3, %c0_21, %c0_22] : memref<17x17x16xf32, #tpu.memory_space<vmem>>, vector<1x17x16xf32>
    %42 = vector.shape_cast %41 : vector<1x17x16xf32> to vector<17x16xf32>
    %43 = vector.shape_cast %40 : vector<17x16xf32> to vector<1x17x16xf32>
    tpu.vector_store %arg7[%c3, %c0_21, %c0_22], %43 {strides = array<i32>} : memref<17x17x16xf32, #tpu.memory_space<vmem>>, vector<1x17x16xf32>,
    %44 = vector.extract_strided_slice %1 {offsets = [4, 0, 0], sizes = [1, 17, 8], strides = [1, 1, 1]} : vector<17x17x8xf32> to vector<1x17x8xf32>
    %45 = vector.shape_cast %44 : vector<1x17x8xf32> to vector<17x8xf32>
    %cst_23 = arith.constant dense<0.000000e+00> : vector<17x16xf32>
    %46 = tpu.matmul %45, %2, %cst_23 {dimension_numbers = #tpu.dot_dimension_numbers<[1], [0], [0], [1], [0, 0, 1, 1], [], []>} : vector<17x8xf32>, vector<8x16xf32>, vector<17x16xf32> -> vector<17x16xf32>
    %47 = vector.broadcast %3 : vector<1x16xf32> to vector<17x16xf32>
    %48 = arith.addf %46, %47 : vector<17x16xf32>
    %cst_24 = arith.constant 0.000000e+00 : f32
    %49 = vector.broadcast %cst_24 : f32 to vector<17x16xf32>
    %50 = arith.maximumf %48, %49 : vector<17x16xf32>
    %c4 = arith.constant 4 : index
    %c0_25 = arith.constant 0 : index
    %c0_26 = arith.constant 0 : index
    %51 = vector.load %arg7[%c4, %c0_25, %c0_26] : memref<17x17x16xf32, #tpu.memory_space<vmem>>, vector<1x17x16xf32>
    %52 = vector.shape_cast %51 : vector<1x17x16xf32> to vector<17x16xf32>
    %53 = vector.shape_cast %50 : vector<17x16xf32> to vector<1x17x16xf32>
    tpu.vector_store %arg7[%c4, %c0_25, %c0_26], %53 {strides = array<i32>} : memref<17x17x16xf32, #tpu.memory_space<vmem>>, vector<1x17x16xf32>,
    %54 = vector.extract_strided_slice %1 {offsets = [5, 0, 0], sizes = [1, 17, 8], strides = [1, 1, 1]} : vector<17x17x8xf32> to vector<1x17x8xf32>
    %55 = vector.shape_cast %54 : vector<1x17x8xf32> to vector<17x8xf32>
    %cst_27 = arith.constant dense<0.000000e+00> : vector<17x16xf32>
    %56 = tpu.matmul %55, %2, %cst_27 {dimension_numbers = #tpu.dot_dimension_numbers<[1], [0], [0], [1], [0, 0, 1, 1], [], []>} : vector<17x8xf32>, vector<8x16xf32>, vector<17x16xf32> -> vector<17x16xf32>
    %57 = vector.broadcast %3 : vector<1x16xf32> to vector<17x16xf32>
    %58 = arith.addf %56, %57 : vector<17x16xf32>
    %cst_28 = arith.constant 0.000000e+00 : f32
    %59 = vector.broadcast %cst_28 : f32 to vector<17x16xf32>
    %60 = arith.maximumf %58, %59 : vector<17x16xf32>
    %c5 = arith.constant 5 : index
    %c0_29 = arith.constant 0 : index
    %c0_30 = arith.constant 0 : index
    %61 = vector.load %arg7[%c5, %c0_29, %c0_30] : memref<17x17x16xf32, #tpu.memory_space<vmem>>, vector<1x17x16xf32>
    %62 = vector.shape_cast %61 : vector<1x17x16xf32> to vector<17x16xf32>
    %63 = vector.shape_cast %60 : vector<17x16xf32> to vector<1x17x16xf32>
    tpu.vector_store %arg7[%c5, %c0_29, %c0_30], %63 {strides = array<i32>} : memref<17x17x16xf32, #tpu.memory_space<vmem>>, vector<1x17x16xf32>,
    %64 = vector.extract_strided_slice %1 {offsets = [6, 0, 0], sizes = [1, 17, 8], strides = [1, 1, 1]} : vector<17x17x8xf32> to vector<1x17x8xf32>
    %65 = vector.shape_cast %64 : vector<1x17x8xf32> to vector<17x8xf32>
    %cst_31 = arith.constant dense<0.000000e+00> : vector<17x16xf32>
    %66 = tpu.matmul %65, %2, %cst_31 {dimension_numbers = #tpu.dot_dimension_numbers<[1], [0], [0], [1], [0, 0, 1, 1], [], []>} : vector<17x8xf32>, vector<8x16xf32>, vector<17x16xf32> -> vector<17x16xf32>
    %67 = vector.broadcast %3 : vector<1x16xf32> to vector<17x16xf32>
    %68 = arith.addf %66, %67 : vector<17x16xf32>
    %cst_32 = arith.constant 0.000000e+00 : f32
    %69 = vector.broadcast %cst_32 : f32 to vector<17x16xf32>
    %70 = arith.maximumf %68, %69 : vector<17x16xf32>
    %c6 = arith.constant 6 : index
    %c0_33 = arith.constant 0 : index
    %c0_34 = arith.constant 0 : index
    %71 = vector.load %arg7[%c6, %c0_33, %c0_34] : memref<17x17x16xf32, #tpu.memory_space<vmem>>, vector<1x17x16xf32>
    %72 = vector.shape_cast %71 : vector<1x17x16xf32> to vector<17x16xf32>
    %73 = vector.shape_cast %70 : vector<17x16xf32> to vector<1x17x16xf32>
    tpu.vector_store %arg7[%c6, %c0_33, %c0_34], %73 {strides = array<i32>} : memref<17x17x16xf32, #tpu.memory_space<vmem>>, vector<1x17x16xf32>,
    %74 = vector.extract_strided_slice %1 {offsets = [7, 0, 0], sizes = [1, 17, 8], strides = [1, 1, 1]} : vector<17x17x8xf32> to vector<1x17x8xf32>
    %75 = vector.shape_cast %74 : vector<1x17x8xf32> to vector<17x8xf32>
    %cst_35 = arith.constant dense<0.000000e+00> : vector<17x16xf32>
    %76 = tpu.matmul %75, %2, %cst_35 {dimension_numbers = #tpu.dot_dimension_numbers<[1], [0], [0], [1], [0, 0, 1, 1], [], []>} : vector<17x8xf32>, vector<8x16xf32>, vector<17x16xf32> -> vector<17x16xf32>
    %77 = vector.broadcast %3 : vector<1x16xf32> to vector<17x16xf32>
    %78 = arith.addf %76, %77 : vector<17x16xf32>
    %cst_36 = arith.constant 0.000000e+00 : f32
    %79 = vector.broadcast %cst_36 : f32 to vector<17x16xf32>
    %80 = arith.maximumf %78, %79 : vector<17x16xf32>
    %c7 = arith.constant 7 : index
    %c0_37 = arith.constant 0 : index
    %c0_38 = arith.constant 0 : index
    %81 = vector.load %arg7[%c7, %c0_37, %c0_38] : memref<17x17x16xf32, #tpu.memory_space<vmem>>, vector<1x17x16xf32>
    %82 = vector.shape_cast %81 : vector<1x17x16xf32> to vector<17x16xf32>
    %83 = vector.shape_cast %80 : vector<17x16xf32> to vector<1x17x16xf32>
    tpu.vector_store %arg7[%c7, %c0_37, %c0_38], %83 {strides = array<i32>} : memref<17x17x16xf32, #tpu.memory_space<vmem>>, vector<1x17x16xf32>,
    %84 = vector.extract_strided_slice %1 {offsets = [8, 0, 0], sizes = [1, 17, 8], strides = [1, 1, 1]} : vector<17x17x8xf32> to vector<1x17x8xf32>
    %85 = vector.shape_cast %84 : vector<1x17x8xf32> to vector<17x8xf32>
    %cst_39 = arith.constant dense<0.000000e+00> : vector<17x16xf32>
    %86 = tpu.matmul %85, %2, %cst_39 {dimension_numbers = #tpu.dot_dimension_numbers<[1], [0], [0], [1], [0, 0, 1, 1], [], []>} : vector<17x8xf32>, vector<8x16xf32>, vector<17x16xf32> -> vector<17x16xf32>
    %87 = vector.broadcast %3 : vector<1x16xf32> to vector<17x16xf32>
    %88 = arith.addf %86, %87 : vector<17x16xf32>
    %cst_40 = arith.constant 0.000000e+00 : f32
    %89 = vector.broadcast %cst_40 : f32 to vector<17x16xf32>
    %90 = arith.maximumf %88, %89 : vector<17x16xf32>
    %c8 = arith.constant 8 : index
    %c0_41 = arith.constant 0 : index
    %c0_42 = arith.constant 0 : index
    %91 = vector.load %arg7[%c8, %c0_41, %c0_42] : memref<17x17x16xf32, #tpu.memory_space<vmem>>, vector<1x17x16xf32>
    %92 = vector.shape_cast %91 : vector<1x17x16xf32> to vector<17x16xf32>
    %93 = vector.shape_cast %90 : vector<17x16xf32> to vector<1x17x16xf32>
    tpu.vector_store %arg7[%c8, %c0_41, %c0_42], %93 {strides = array<i32>} : memref<17x17x16xf32, #tpu.memory_space<vmem>>, vector<1x17x16xf32>,
    %94 = vector.extract_strided_slice %1 {offsets = [9, 0, 0], sizes = [1, 17, 8], strides = [1, 1, 1]} : vector<17x17x8xf32> to vector<1x17x8xf32>
    %95 = vector.shape_cast %94 : vector<1x17x8xf32> to vector<17x8xf32>
    %cst_43 = arith.constant dense<0.000000e+00> : vector<17x16xf32>
    %96 = tpu.matmul %95, %2, %cst_43 {dimension_numbers = #tpu.dot_dimension_numbers<[1], [0], [0], [1], [0, 0, 1, 1], [], []>} : vector<17x8xf32>, vector<8x16xf32>, vector<17x16xf32> -> vector<17x16xf32>
    %97 = vector.broadcast %3 : vector<1x16xf32> to vector<17x16xf32>
    %98 = arith.addf %96, %97 : vector<17x16xf32>
    %cst_44 = arith.constant 0.000000e+00 : f32
    %99 = vector.broadcast %cst_44 : f32 to vector<17x16xf32>
    %100 = arith.maximumf %98, %99 : vector<17x16xf32>
    %c9 = arith.constant 9 : index
    %c0_45 = arith.constant 0 : index
    %c0_46 = arith.constant 0 : index
    %101 = vector.load %arg7[%c9, %c0_45, %c0_46] : memref<17x17x16xf32, #tpu.memory_space<vmem>>, vector<1x17x16xf32>
    %102 = vector.shape_cast %101 : vector<1x17x16xf32> to vector<17x16xf32>
    %103 = vector.shape_cast %100 : vector<17x16xf32> to vector<1x17x16xf32>
    tpu.vector_store %arg7[%c9, %c0_45, %c0_46], %103 {strides = array<i32>} : memref<17x17x16xf32, #tpu.memory_space<vmem>>, vector<1x17x16xf32>,
    %104 = vector.extract_strided_slice %1 {offsets = [10, 0, 0], sizes = [1, 17, 8], strides = [1, 1, 1]} : vector<17x17x8xf32> to vector<1x17x8xf32>
    %105 = vector.shape_cast %104 : vector<1x17x8xf32> to vector<17x8xf32>
    %cst_47 = arith.constant dense<0.000000e+00> : vector<17x16xf32>
    %106 = tpu.matmul %105, %2, %cst_47 {dimension_numbers = #tpu.dot_dimension_numbers<[1], [0], [0], [1], [0, 0, 1, 1], [], []>} : vector<17x8xf32>, vector<8x16xf32>, vector<17x16xf32> -> vector<17x16xf32>
    %107 = vector.broadcast %3 : vector<1x16xf32> to vector<17x16xf32>
    %108 = arith.addf %106, %107 : vector<17x16xf32>
    %cst_48 = arith.constant 0.000000e+00 : f32
    %109 = vector.broadcast %cst_48 : f32 to vector<17x16xf32>
    %110 = arith.maximumf %108, %109 : vector<17x16xf32>
    %c10 = arith.constant 10 : index
    %c0_49 = arith.constant 0 : index
    %c0_50 = arith.constant 0 : index
    %111 = vector.load %arg7[%c10, %c0_49, %c0_50] : memref<17x17x16xf32, #tpu.memory_space<vmem>>, vector<1x17x16xf32>
    %112 = vector.shape_cast %111 : vector<1x17x16xf32> to vector<17x16xf32>
    %113 = vector.shape_cast %110 : vector<17x16xf32> to vector<1x17x16xf32>
    tpu.vector_store %arg7[%c10, %c0_49, %c0_50], %113 {strides = array<i32>} : memref<17x17x16xf32, #tpu.memory_space<vmem>>, vector<1x17x16xf32>,
    %114 = vector.extract_strided_slice %1 {offsets = [11, 0, 0], sizes = [1, 17, 8], strides = [1, 1, 1]} : vector<17x17x8xf32> to vector<1x17x8xf32>
    %115 = vector.shape_cast %114 : vector<1x17x8xf32> to vector<17x8xf32>
    %cst_51 = arith.constant dense<0.000000e+00> : vector<17x16xf32>
    %116 = tpu.matmul %115, %2, %cst_51 {dimension_numbers = #tpu.dot_dimension_numbers<[1], [0], [0], [1], [0, 0, 1, 1], [], []>} : vector<17x8xf32>, vector<8x16xf32>, vector<17x16xf32> -> vector<17x16xf32>
    %117 = vector.broadcast %3 : vector<1x16xf32> to vector<17x16xf32>
    %118 = arith.addf %116, %117 : vector<17x16xf32>
    %cst_52 = arith.constant 0.000000e+00 : f32
    %119 = vector.broadcast %cst_52 : f32 to vector<17x16xf32>
    %120 = arith.maximumf %118, %119 : vector<17x16xf32>
    %c11 = arith.constant 11 : index
    %c0_53 = arith.constant 0 : index
    %c0_54 = arith.constant 0 : index
    %121 = vector.load %arg7[%c11, %c0_53, %c0_54] : memref<17x17x16xf32, #tpu.memory_space<vmem>>, vector<1x17x16xf32>
    %122 = vector.shape_cast %121 : vector<1x17x16xf32> to vector<17x16xf32>
    %123 = vector.shape_cast %120 : vector<17x16xf32> to vector<1x17x16xf32>
    tpu.vector_store %arg7[%c11, %c0_53, %c0_54], %123 {strides = array<i32>} : memref<17x17x16xf32, #tpu.memory_space<vmem>>, vector<1x17x16xf32>,
    %124 = vector.extract_strided_slice %1 {offsets = [12, 0, 0], sizes = [1, 17, 8], strides = [1, 1, 1]} : vector<17x17x8xf32> to vector<1x17x8xf32>
    %125 = vector.shape_cast %124 : vector<1x17x8xf32> to vector<17x8xf32>
    %cst_55 = arith.constant dense<0.000000e+00> : vector<17x16xf32>
    %126 = tpu.matmul %125, %2, %cst_55 {dimension_numbers = #tpu.dot_dimension_numbers<[1], [0], [0], [1], [0, 0, 1, 1], [], []>} : vector<17x8xf32>, vector<8x16xf32>, vector<17x16xf32> -> vector<17x16xf32>
    %127 = vector.broadcast %3 : vector<1x16xf32> to vector<17x16xf32>
    %128 = arith.addf %126, %127 : vector<17x16xf32>
    %cst_56 = arith.constant 0.000000e+00 : f32
    %129 = vector.broadcast %cst_56 : f32 to vector<17x16xf32>
    %130 = arith.maximumf %128, %129 : vector<17x16xf32>
    %c12 = arith.constant 12 : index
    %c0_57 = arith.constant 0 : index
    %c0_58 = arith.constant 0 : index
    %131 = vector.load %arg7[%c12, %c0_57, %c0_58] : memref<17x17x16xf32, #tpu.memory_space<vmem>>, vector<1x17x16xf32>
    %132 = vector.shape_cast %131 : vector<1x17x16xf32> to vector<17x16xf32>
    %133 = vector.shape_cast %130 : vector<17x16xf32> to vector<1x17x16xf32>
    tpu.vector_store %arg7[%c12, %c0_57, %c0_58], %133 {strides = array<i32>} : memref<17x17x16xf32, #tpu.memory_space<vmem>>, vector<1x17x16xf32>,
    %134 = vector.extract_strided_slice %1 {offsets = [13, 0, 0], sizes = [1, 17, 8], strides = [1, 1, 1]} : vector<17x17x8xf32> to vector<1x17x8xf32>
    %135 = vector.shape_cast %134 : vector<1x17x8xf32> to vector<17x8xf32>
    %cst_59 = arith.constant dense<0.000000e+00> : vector<17x16xf32>
    %136 = tpu.matmul %135, %2, %cst_59 {dimension_numbers = #tpu.dot_dimension_numbers<[1], [0], [0], [1], [0, 0, 1, 1], [], []>} : vector<17x8xf32>, vector<8x16xf32>, vector<17x16xf32> -> vector<17x16xf32>
    %137 = vector.broadcast %3 : vector<1x16xf32> to vector<17x16xf32>
    %138 = arith.addf %136, %137 : vector<17x16xf32>
    %cst_60 = arith.constant 0.000000e+00 : f32
    %139 = vector.broadcast %cst_60 : f32 to vector<17x16xf32>
    %140 = arith.maximumf %138, %139 : vector<17x16xf32>
    %c13 = arith.constant 13 : index
    %c0_61 = arith.constant 0 : index
    %c0_62 = arith.constant 0 : index
    %141 = vector.load %arg7[%c13, %c0_61, %c0_62] : memref<17x17x16xf32, #tpu.memory_space<vmem>>, vector<1x17x16xf32>
    %142 = vector.shape_cast %141 : vector<1x17x16xf32> to vector<17x16xf32>
    %143 = vector.shape_cast %140 : vector<17x16xf32> to vector<1x17x16xf32>
    tpu.vector_store %arg7[%c13, %c0_61, %c0_62], %143 {strides = array<i32>} : memref<17x17x16xf32, #tpu.memory_space<vmem>>, vector<1x17x16xf32>,
    %144 = vector.extract_strided_slice %1 {offsets = [14, 0, 0], sizes = [1, 17, 8], strides = [1, 1, 1]} : vector<17x17x8xf32> to vector<1x17x8xf32>
    %145 = vector.shape_cast %144 : vector<1x17x8xf32> to vector<17x8xf32>
    %cst_63 = arith.constant dense<0.000000e+00> : vector<17x16xf32>
    %146 = tpu.matmul %145, %2, %cst_63 {dimension_numbers = #tpu.dot_dimension_numbers<[1], [0], [0], [1], [0, 0, 1, 1], [], []>} : vector<17x8xf32>, vector<8x16xf32>, vector<17x16xf32> -> vector<17x16xf32>
    %147 = vector.broadcast %3 : vector<1x16xf32> to vector<17x16xf32>
    %148 = arith.addf %146, %147 : vector<17x16xf32>
    %cst_64 = arith.constant 0.000000e+00 : f32
    %149 = vector.broadcast %cst_64 : f32 to vector<17x16xf32>
    %150 = arith.maximumf %148, %149 : vector<17x16xf32>
    %c14 = arith.constant 14 : index
    %c0_65 = arith.constant 0 : index
    %c0_66 = arith.constant 0 : index
    %151 = vector.load %arg7[%c14, %c0_65, %c0_66] : memref<17x17x16xf32, #tpu.memory_space<vmem>>, vector<1x17x16xf32>
    %152 = vector.shape_cast %151 : vector<1x17x16xf32> to vector<17x16xf32>
    %153 = vector.shape_cast %150 : vector<17x16xf32> to vector<1x17x16xf32>
    tpu.vector_store %arg7[%c14, %c0_65, %c0_66], %153 {strides = array<i32>} : memref<17x17x16xf32, #tpu.memory_space<vmem>>, vector<1x17x16xf32>,
    %154 = vector.extract_strided_slice %1 {offsets = [15, 0, 0], sizes = [1, 17, 8], strides = [1, 1, 1]} : vector<17x17x8xf32> to vector<1x17x8xf32>
    %155 = vector.shape_cast %154 : vector<1x17x8xf32> to vector<17x8xf32>
    %cst_67 = arith.constant dense<0.000000e+00> : vector<17x16xf32>
    %156 = tpu.matmul %155, %2, %cst_67 {dimension_numbers = #tpu.dot_dimension_numbers<[1], [0], [0], [1], [0, 0, 1, 1], [], []>} : vector<17x8xf32>, vector<8x16xf32>, vector<17x16xf32> -> vector<17x16xf32>
    %157 = vector.broadcast %3 : vector<1x16xf32> to vector<17x16xf32>
    %158 = arith.addf %156, %157 : vector<17x16xf32>
    %cst_68 = arith.constant 0.000000e+00 : f32
    %159 = vector.broadcast %cst_68 : f32 to vector<17x16xf32>
    %160 = arith.maximumf %158, %159 : vector<17x16xf32>
    %c15 = arith.constant 15 : index
    %c0_69 = arith.constant 0 : index
    %c0_70 = arith.constant 0 : index
    %161 = vector.load %arg7[%c15, %c0_69, %c0_70] : memref<17x17x16xf32, #tpu.memory_space<vmem>>, vector<1x17x16xf32>
    %162 = vector.shape_cast %161 : vector<1x17x16xf32> to vector<17x16xf32>
    %163 = vector.shape_cast %160 : vector<17x16xf32> to vector<1x17x16xf32>
    tpu.vector_store %arg7[%c15, %c0_69, %c0_70], %163 {strides = array<i32>} : memref<17x17x16xf32, #tpu.memory_space<vmem>>, vector<1x17x16xf32>,
    %164 = vector.extract_strided_slice %1 {offsets = [16, 0, 0], sizes = [1, 17, 8], strides = [1, 1, 1]} : vector<17x17x8xf32> to vector<1x17x8xf32>
    %165 = vector.shape_cast %164 : vector<1x17x8xf32> to vector<17x8xf32>
    %cst_71 = arith.constant dense<0.000000e+00> : vector<17x16xf32>
    %166 = tpu.matmul %165, %2, %cst_71 {dimension_numbers = #tpu.dot_dimension_numbers<[1], [0], [0], [1], [0, 0, 1, 1], [], []>} : vector<17x8xf32>, vector<8x16xf32>, vector<17x16xf32> -> vector<17x16xf32>
    %167 = vector.broadcast %3 : vector<1x16xf32> to vector<17x16xf32>
    %168 = arith.addf %166, %167 : vector<17x16xf32>
    %cst_72 = arith.constant 0.000000e+00 : f32
    %169 = vector.broadcast %cst_72 : f32 to vector<17x16xf32>
    %170 = arith.maximumf %168, %169 : vector<17x16xf32>
    %c16 = arith.constant 16 : index
    %c0_73 = arith.constant 0 : index
    %c0_74 = arith.constant 0 : index
    %171 = vector.load %arg7[%c16, %c0_73, %c0_74] : memref<17x17x16xf32, #tpu.memory_space<vmem>>, vector<1x17x16xf32>
    %172 = vector.shape_cast %171 : vector<1x17x16xf32> to vector<17x16xf32>
    %173 = vector.shape_cast %170 : vector<17x16xf32> to vector<1x17x16xf32>
    tpu.vector_store %arg7[%c16, %c0_73, %c0_74], %173 {strides = array<i32>} : memref<17x17x16xf32, #tpu.memory_space<vmem>>, vector<1x17x16xf32>,
    %c0_75 = arith.constant 0 : index
    %c0_76 = arith.constant 0 : index
    %c0_77 = arith.constant 0 : index
    %174 = vector.load %arg7[%c0_75, %c0_76, %c0_77] : memref<17x17x16xf32, #tpu.memory_space<vmem>>, vector<17x17x16xf32>
    %c0_78 = arith.constant 0 : index
    %c0_79 = arith.constant 0 : index
    %c0_80 = arith.constant 0 : index
    %175 = vector.load %arg4[%c0_78, %c0_79, %c0_80] : memref<3x3x16xf32, #tpu.memory_space<vmem>>, vector<3x3x16xf32>
    %176 = vector.extract_strided_slice %174 {offsets = [0, 0, 0], sizes = [17, 15, 16], strides = [1, 1, 1]} : vector<17x17x16xf32> to vector<17x15x16xf32>
    %177 = vector.extract_strided_slice %174 {offsets = [0, 1, 0], sizes = [17, 15, 16], strides = [1, 1, 1]} : vector<17x17x16xf32> to vector<17x15x16xf32>
    %178 = vector.extract_strided_slice %174 {offsets = [0, 2, 0], sizes = [17, 15, 16], strides = [1, 1, 1]} : vector<17x17x16xf32> to vector<17x15x16xf32>
    %cst_81 = arith.constant 0.000000e+00 : f32
    %179 = vector.broadcast %cst_81 : f32 to vector<15x15x16xf32>
    %180 = vector.extract_strided_slice %176 {offsets = [0, 0, 0], sizes = [15, 15, 16], strides = [1, 1, 1]} : vector<17x15x16xf32> to vector<15x15x16xf32>
    %181 = vector.extract_strided_slice %175 {offsets = [0, 0, 0], sizes = [1, 1, 16], strides = [1, 1, 1]} : vector<3x3x16xf32> to vector<1x1x16xf32>
    %182 = vector.shape_cast %181 : vector<1x1x16xf32> to vector<16xf32>
    %183 = vector.shape_cast %182 : vector<16xf32> to vector<1x1x16xf32>
    %184 = vector.broadcast %183 : vector<1x1x16xf32> to vector<15x15x16xf32>
    %185 = arith.mulf %180, %184 : vector<15x15x16xf32>
    %186 = arith.addf %179, %185 : vector<15x15x16xf32>
    %187 = vector.extract_strided_slice %177 {offsets = [0, 0, 0], sizes = [15, 15, 16], strides = [1, 1, 1]} : vector<17x15x16xf32> to vector<15x15x16xf32>
    %188 = vector.extract_strided_slice %175 {offsets = [0, 1, 0], sizes = [1, 1, 16], strides = [1, 1, 1]} : vector<3x3x16xf32> to vector<1x1x16xf32>
    %189 = vector.shape_cast %188 : vector<1x1x16xf32> to vector<16xf32>
    %190 = vector.shape_cast %189 : vector<16xf32> to vector<1x1x16xf32>
    %191 = vector.broadcast %190 : vector<1x1x16xf32> to vector<15x15x16xf32>
    %192 = arith.mulf %187, %191 : vector<15x15x16xf32>
    %193 = arith.addf %186, %192 : vector<15x15x16xf32>
    %194 = vector.extract_strided_slice %178 {offsets = [0, 0, 0], sizes = [15, 15, 16], strides = [1, 1, 1]} : vector<17x15x16xf32> to vector<15x15x16xf32>
    %195 = vector.extract_strided_slice %175 {offsets = [0, 2, 0], sizes = [1, 1, 16], strides = [1, 1, 1]} : vector<3x3x16xf32> to vector<1x1x16xf32>
    %196 = vector.shape_cast %195 : vector<1x1x16xf32> to vector<16xf32>
    %197 = vector.shape_cast %196 : vector<16xf32> to vector<1x1x16xf32>
    %198 = vector.broadcast %197 : vector<1x1x16xf32> to vector<15x15x16xf32>
    %199 = arith.mulf %194, %198 : vector<15x15x16xf32>
    %200 = arith.addf %193, %199 : vector<15x15x16xf32>
    %201 = vector.extract_strided_slice %176 {offsets = [1, 0, 0], sizes = [15, 15, 16], strides = [1, 1, 1]} : vector<17x15x16xf32> to vector<15x15x16xf32>
    %202 = vector.extract_strided_slice %175 {offsets = [1, 0, 0], sizes = [1, 1, 16], strides = [1, 1, 1]} : vector<3x3x16xf32> to vector<1x1x16xf32>
    %203 = vector.shape_cast %202 : vector<1x1x16xf32> to vector<16xf32>
    %204 = vector.shape_cast %203 : vector<16xf32> to vector<1x1x16xf32>
    %205 = vector.broadcast %204 : vector<1x1x16xf32> to vector<15x15x16xf32>
    %206 = arith.mulf %201, %205 : vector<15x15x16xf32>
    %207 = arith.addf %200, %206 : vector<15x15x16xf32>
    %208 = vector.extract_strided_slice %177 {offsets = [1, 0, 0], sizes = [15, 15, 16], strides = [1, 1, 1]} : vector<17x15x16xf32> to vector<15x15x16xf32>
    %209 = vector.extract_strided_slice %175 {offsets = [1, 1, 0], sizes = [1, 1, 16], strides = [1, 1, 1]} : vector<3x3x16xf32> to vector<1x1x16xf32>
    %210 = vector.shape_cast %209 : vector<1x1x16xf32> to vector<16xf32>
    %211 = vector.shape_cast %210 : vector<16xf32> to vector<1x1x16xf32>
    %212 = vector.broadcast %211 : vector<1x1x16xf32> to vector<15x15x16xf32>
    %213 = arith.mulf %208, %212 : vector<15x15x16xf32>
    %214 = arith.addf %207, %213 : vector<15x15x16xf32>
    %215 = vector.extract_strided_slice %178 {offsets = [1, 0, 0], sizes = [15, 15, 16], strides = [1, 1, 1]} : vector<17x15x16xf32> to vector<15x15x16xf32>
    %216 = vector.extract_strided_slice %175 {offsets = [1, 2, 0], sizes = [1, 1, 16], strides = [1, 1, 1]} : vector<3x3x16xf32> to vector<1x1x16xf32>
    %217 = vector.shape_cast %216 : vector<1x1x16xf32> to vector<16xf32>
    %218 = vector.shape_cast %217 : vector<16xf32> to vector<1x1x16xf32>
    %219 = vector.broadcast %218 : vector<1x1x16xf32> to vector<15x15x16xf32>
    %220 = arith.mulf %215, %219 : vector<15x15x16xf32>
    %221 = arith.addf %214, %220 : vector<15x15x16xf32>
    %222 = vector.extract_strided_slice %176 {offsets = [2, 0, 0], sizes = [15, 15, 16], strides = [1, 1, 1]} : vector<17x15x16xf32> to vector<15x15x16xf32>
    %223 = vector.extract_strided_slice %175 {offsets = [2, 0, 0], sizes = [1, 1, 16], strides = [1, 1, 1]} : vector<3x3x16xf32> to vector<1x1x16xf32>
    %224 = vector.shape_cast %223 : vector<1x1x16xf32> to vector<16xf32>
    %225 = vector.shape_cast %224 : vector<16xf32> to vector<1x1x16xf32>
    %226 = vector.broadcast %225 : vector<1x1x16xf32> to vector<15x15x16xf32>
    %227 = arith.mulf %222, %226 : vector<15x15x16xf32>
    %228 = arith.addf %221, %227 : vector<15x15x16xf32>
    %229 = vector.extract_strided_slice %177 {offsets = [2, 0, 0], sizes = [15, 15, 16], strides = [1, 1, 1]} : vector<17x15x16xf32> to vector<15x15x16xf32>
    %230 = vector.extract_strided_slice %175 {offsets = [2, 1, 0], sizes = [1, 1, 16], strides = [1, 1, 1]} : vector<3x3x16xf32> to vector<1x1x16xf32>
    %231 = vector.shape_cast %230 : vector<1x1x16xf32> to vector<16xf32>
    %232 = vector.shape_cast %231 : vector<16xf32> to vector<1x1x16xf32>
    %233 = vector.broadcast %232 : vector<1x1x16xf32> to vector<15x15x16xf32>
    %234 = arith.mulf %229, %233 : vector<15x15x16xf32>
    %235 = arith.addf %228, %234 : vector<15x15x16xf32>
    %236 = vector.extract_strided_slice %178 {offsets = [2, 0, 0], sizes = [15, 15, 16], strides = [1, 1, 1]} : vector<17x15x16xf32> to vector<15x15x16xf32>
    %237 = vector.extract_strided_slice %175 {offsets = [2, 2, 0], sizes = [1, 1, 16], strides = [1, 1, 1]} : vector<3x3x16xf32> to vector<1x1x16xf32>
    %238 = vector.shape_cast %237 : vector<1x1x16xf32> to vector<16xf32>
    %239 = vector.shape_cast %238 : vector<16xf32> to vector<1x1x16xf32>
    %240 = vector.broadcast %239 : vector<1x1x16xf32> to vector<15x15x16xf32>
    %241 = arith.mulf %236, %240 : vector<15x15x16xf32>
    %242 = arith.addf %235, %241 : vector<15x15x16xf32>
    %c0_82 = arith.constant 0 : index
    %c0_83 = arith.constant 0 : index
    %243 = vector.load %arg5[%c0_82, %c0_83] : memref<1x16xf32, #tpu.memory_space<vmem>>, vector<1x16xf32>
    %244 = vector.shape_cast %243 : vector<1x16xf32> to vector<16xf32>
    %245 = vector.shape_cast %244 : vector<16xf32> to vector<1x1x16xf32>
    %246 = vector.broadcast %245 : vector<1x1x16xf32> to vector<15x15x16xf32>
    %247 = arith.addf %242, %246 : vector<15x15x16xf32>
    %cst_84 = arith.constant 0.000000e+00 : f32
    %248 = vector.broadcast %cst_84 : f32 to vector<15x15x16xf32>
    %249 = arith.maximumf %247, %248 : vector<15x15x16xf32>
    %c0_85 = arith.constant 0 : index
    %c0_86 = arith.constant 0 : index
    %c0_87 = arith.constant 0 : index
    %c0_88 = arith.constant 0 : index
    %250 = vector.load %arg6[%c0_85, %c0_86, %c0_87, %c0_88] : memref<1x15x15x16xf32, #tpu.memory_space<vmem>>, vector<1x15x15x16xf32>
    %251 = vector.shape_cast %250 : vector<1x15x15x16xf32> to vector<15x15x16xf32>
    %252 = vector.shape_cast %249 : vector<15x15x16xf32> to vector<1x15x15x16xf32>
    tpu.vector_store %arg6[%c0_85, %c0_86, %c0_87, %c0_88], %252 {strides = array<i32>} : memref<1x15x15x16xf32, #tpu.memory_space<vmem>>, vector<1x15x15x16xf32>,
    return
  }
  func.func @transform_0(%arg0: i32) -> (i32, i32, i32, i32) {
    %c0_i32 = arith.constant 0 : i32
    %c0_i32_0 = arith.constant 0 : i32
    %c0_i32_1 = arith.constant 0 : i32
    %c0_i32_2 = arith.constant 0 : i32
    return %arg0, %c0_i32, %c0_i32_0, %c0_i32_1 : i32, i32, i32, i32
  }
  func.func @transform_1(%arg0: i32) -> (i32, i32) {
    %c0_i32 = arith.constant 0 : i32
    %c0_i32_0 = arith.constant 0 : i32
    %c0_i32_1 = arith.constant 0 : i32
    return %c0_i32, %c0_i32_0 : i32, i32
  }
  func.func @transform_2(%arg0: i32) -> (i32, i32) {
    %c0_i32 = arith.constant 0 : i32
    %c0_i32_0 = arith.constant 0 : i32
    %c0_i32_1 = arith.constant 0 : i32
    return %c0_i32, %c0_i32_0 : i32, i32
  }
  func.func @transform_3(%arg0: i32) -> (i32, i32, i32) {
    %c0_i32 = arith.constant 0 : i32
    %c0_i32_0 = arith.constant 0 : i32
    %c0_i32_1 = arith.constant 0 : i32
    %c0_i32_2 = arith.constant 0 : i32
    return %c0_i32, %c0_i32_0, %c0_i32_1 : i32, i32, i32
  }
  func.func @transform_4(%arg0: i32) -> (i32, i32) {
    %c0_i32 = arith.constant 0 : i32
    %c0_i32_0 = arith.constant 0 : i32
    %c0_i32_1 = arith.constant 0 : i32
    return %c0_i32, %c0_i32_0 : i32, i32
  }
  func.func @transform_5(%arg0: i32) -> (i32, i32, i32, i32) {
    %c0_i32 = arith.constant 0 : i32
    %c0_i32_0 = arith.constant 0 : i32
    %c0_i32_1 = arith.constant 0 : i32
    %c0_i32_2 = arith.constant 0 : i32
    return %arg0, %c0_i32, %c0_i32_0, %c0_i32_1 : i32, i32, i32, i32
  }
}

module attributes {stable_mosaic.version = 11 : i64} {
  func.func @_branch_kernel(%arg0: i32, %arg1: memref<1x7x7x8xf32, #tpu.memory_space<vmem>>, %arg2: memref<8x16xf32, #tpu.memory_space<vmem>>, %arg3: memref<1x16xf32, #tpu.memory_space<vmem>>, %arg4: memref<3x3x16xf32, #tpu.memory_space<vmem>>, %arg5: memref<1x16xf32, #tpu.memory_space<vmem>>, %arg6: memref<1x5x5x16xf32, #tpu.memory_space<vmem>>, %arg7: memref<7x7x16xf32, #tpu.memory_space<vmem>>) attributes {dimension_semantics = [#tpu.dimension_semantics<parallel>], iteration_bounds = array<i64: 2>, scalar_prefetch = 0 : i64, scratch_operands = 1 : i64, tpu.core_type = #tpu.core_type<tc>, window_params = [{transform_indices = @transform_0, window_bounds = array<i64: 1, 7, 7, 8>}, {pipeline_mode = #tpu.pipeline_mode<synchronous>, transform_indices = @transform_1, window_bounds = array<i64: 8, 16>}, {pipeline_mode = #tpu.pipeline_mode<synchronous>, transform_indices = @transform_2, window_bounds = array<i64: 1, 16>}, {pipeline_mode = #tpu.pipeline_mode<synchronous>, transform_indices = @transform_3, window_bounds = array<i64: 3, 3, 16>}, {pipeline_mode = #tpu.pipeline_mode<synchronous>, transform_indices = @transform_4, window_bounds = array<i64: 1, 16>}, {transform_indices = @transform_5, window_bounds = array<i64: 1, 5, 5, 16>}]} {
    %c0 = arith.constant 0 : index
    %c0_0 = arith.constant 0 : index
    %c0_1 = arith.constant 0 : index
    %c0_2 = arith.constant 0 : index
    %0 = vector.load %arg1[%c0, %c0_0, %c0_1, %c0_2] : memref<1x7x7x8xf32, #tpu.memory_space<vmem>>, vector<1x7x7x8xf32>
    %1 = vector.shape_cast %0 : vector<1x7x7x8xf32> to vector<7x7x8xf32>
    %c0_3 = arith.constant 0 : index
    %c0_4 = arith.constant 0 : index
    %2 = vector.load %arg2[%c0_3, %c0_4] : memref<8x16xf32, #tpu.memory_space<vmem>>, vector<8x16xf32>
    %c0_5 = arith.constant 0 : index
    %c0_6 = arith.constant 0 : index
    %3 = vector.load %arg3[%c0_5, %c0_6] : memref<1x16xf32, #tpu.memory_space<vmem>>, vector<1x16xf32>
    %4 = vector.extract_strided_slice %1 {offsets = [0, 0, 0], sizes = [1, 7, 8], strides = [1, 1, 1]} : vector<7x7x8xf32> to vector<1x7x8xf32>
    %5 = vector.shape_cast %4 : vector<1x7x8xf32> to vector<7x8xf32>
    %cst = arith.constant dense<0.000000e+00> : vector<7x16xf32>
    %6 = tpu.matmul %5, %2, %cst {dimension_numbers = #tpu.dot_dimension_numbers<[1], [0], [0], [1], [0, 0, 1, 1], [], []>} : vector<7x8xf32>, vector<8x16xf32>, vector<7x16xf32> -> vector<7x16xf32>
    %7 = vector.broadcast %3 : vector<1x16xf32> to vector<7x16xf32>
    %8 = arith.addf %6, %7 : vector<7x16xf32>
    %cst_7 = arith.constant 0.000000e+00 : f32
    %9 = vector.broadcast %cst_7 : f32 to vector<7x16xf32>
    %10 = arith.maximumf %8, %9 : vector<7x16xf32>
    %c0_8 = arith.constant 0 : index
    %c0_9 = arith.constant 0 : index
    %c0_10 = arith.constant 0 : index
    %11 = vector.load %arg7[%c0_8, %c0_9, %c0_10] : memref<7x7x16xf32, #tpu.memory_space<vmem>>, vector<1x7x16xf32>
    %12 = vector.shape_cast %11 : vector<1x7x16xf32> to vector<7x16xf32>
    %13 = vector.shape_cast %10 : vector<7x16xf32> to vector<1x7x16xf32>
    tpu.vector_store %arg7[%c0_8, %c0_9, %c0_10], %13 {strides = array<i32>} : memref<7x7x16xf32, #tpu.memory_space<vmem>>, vector<1x7x16xf32>,
    %14 = vector.extract_strided_slice %1 {offsets = [1, 0, 0], sizes = [1, 7, 8], strides = [1, 1, 1]} : vector<7x7x8xf32> to vector<1x7x8xf32>
    %15 = vector.shape_cast %14 : vector<1x7x8xf32> to vector<7x8xf32>
    %cst_11 = arith.constant dense<0.000000e+00> : vector<7x16xf32>
    %16 = tpu.matmul %15, %2, %cst_11 {dimension_numbers = #tpu.dot_dimension_numbers<[1], [0], [0], [1], [0, 0, 1, 1], [], []>} : vector<7x8xf32>, vector<8x16xf32>, vector<7x16xf32> -> vector<7x16xf32>
    %17 = vector.broadcast %3 : vector<1x16xf32> to vector<7x16xf32>
    %18 = arith.addf %16, %17 : vector<7x16xf32>
    %cst_12 = arith.constant 0.000000e+00 : f32
    %19 = vector.broadcast %cst_12 : f32 to vector<7x16xf32>
    %20 = arith.maximumf %18, %19 : vector<7x16xf32>
    %c1 = arith.constant 1 : index
    %c0_13 = arith.constant 0 : index
    %c0_14 = arith.constant 0 : index
    %21 = vector.load %arg7[%c1, %c0_13, %c0_14] : memref<7x7x16xf32, #tpu.memory_space<vmem>>, vector<1x7x16xf32>
    %22 = vector.shape_cast %21 : vector<1x7x16xf32> to vector<7x16xf32>
    %23 = vector.shape_cast %20 : vector<7x16xf32> to vector<1x7x16xf32>
    tpu.vector_store %arg7[%c1, %c0_13, %c0_14], %23 {strides = array<i32>} : memref<7x7x16xf32, #tpu.memory_space<vmem>>, vector<1x7x16xf32>,
    %24 = vector.extract_strided_slice %1 {offsets = [2, 0, 0], sizes = [1, 7, 8], strides = [1, 1, 1]} : vector<7x7x8xf32> to vector<1x7x8xf32>
    %25 = vector.shape_cast %24 : vector<1x7x8xf32> to vector<7x8xf32>
    %cst_15 = arith.constant dense<0.000000e+00> : vector<7x16xf32>
    %26 = tpu.matmul %25, %2, %cst_15 {dimension_numbers = #tpu.dot_dimension_numbers<[1], [0], [0], [1], [0, 0, 1, 1], [], []>} : vector<7x8xf32>, vector<8x16xf32>, vector<7x16xf32> -> vector<7x16xf32>
    %27 = vector.broadcast %3 : vector<1x16xf32> to vector<7x16xf32>
    %28 = arith.addf %26, %27 : vector<7x16xf32>
    %cst_16 = arith.constant 0.000000e+00 : f32
    %29 = vector.broadcast %cst_16 : f32 to vector<7x16xf32>
    %30 = arith.maximumf %28, %29 : vector<7x16xf32>
    %c2 = arith.constant 2 : index
    %c0_17 = arith.constant 0 : index
    %c0_18 = arith.constant 0 : index
    %31 = vector.load %arg7[%c2, %c0_17, %c0_18] : memref<7x7x16xf32, #tpu.memory_space<vmem>>, vector<1x7x16xf32>
    %32 = vector.shape_cast %31 : vector<1x7x16xf32> to vector<7x16xf32>
    %33 = vector.shape_cast %30 : vector<7x16xf32> to vector<1x7x16xf32>
    tpu.vector_store %arg7[%c2, %c0_17, %c0_18], %33 {strides = array<i32>} : memref<7x7x16xf32, #tpu.memory_space<vmem>>, vector<1x7x16xf32>,
    %34 = vector.extract_strided_slice %1 {offsets = [3, 0, 0], sizes = [1, 7, 8], strides = [1, 1, 1]} : vector<7x7x8xf32> to vector<1x7x8xf32>
    %35 = vector.shape_cast %34 : vector<1x7x8xf32> to vector<7x8xf32>
    %cst_19 = arith.constant dense<0.000000e+00> : vector<7x16xf32>
    %36 = tpu.matmul %35, %2, %cst_19 {dimension_numbers = #tpu.dot_dimension_numbers<[1], [0], [0], [1], [0, 0, 1, 1], [], []>} : vector<7x8xf32>, vector<8x16xf32>, vector<7x16xf32> -> vector<7x16xf32>
    %37 = vector.broadcast %3 : vector<1x16xf32> to vector<7x16xf32>
    %38 = arith.addf %36, %37 : vector<7x16xf32>
    %cst_20 = arith.constant 0.000000e+00 : f32
    %39 = vector.broadcast %cst_20 : f32 to vector<7x16xf32>
    %40 = arith.maximumf %38, %39 : vector<7x16xf32>
    %c3 = arith.constant 3 : index
    %c0_21 = arith.constant 0 : index
    %c0_22 = arith.constant 0 : index
    %41 = vector.load %arg7[%c3, %c0_21, %c0_22] : memref<7x7x16xf32, #tpu.memory_space<vmem>>, vector<1x7x16xf32>
    %42 = vector.shape_cast %41 : vector<1x7x16xf32> to vector<7x16xf32>
    %43 = vector.shape_cast %40 : vector<7x16xf32> to vector<1x7x16xf32>
    tpu.vector_store %arg7[%c3, %c0_21, %c0_22], %43 {strides = array<i32>} : memref<7x7x16xf32, #tpu.memory_space<vmem>>, vector<1x7x16xf32>,
    %44 = vector.extract_strided_slice %1 {offsets = [4, 0, 0], sizes = [1, 7, 8], strides = [1, 1, 1]} : vector<7x7x8xf32> to vector<1x7x8xf32>
    %45 = vector.shape_cast %44 : vector<1x7x8xf32> to vector<7x8xf32>
    %cst_23 = arith.constant dense<0.000000e+00> : vector<7x16xf32>
    %46 = tpu.matmul %45, %2, %cst_23 {dimension_numbers = #tpu.dot_dimension_numbers<[1], [0], [0], [1], [0, 0, 1, 1], [], []>} : vector<7x8xf32>, vector<8x16xf32>, vector<7x16xf32> -> vector<7x16xf32>
    %47 = vector.broadcast %3 : vector<1x16xf32> to vector<7x16xf32>
    %48 = arith.addf %46, %47 : vector<7x16xf32>
    %cst_24 = arith.constant 0.000000e+00 : f32
    %49 = vector.broadcast %cst_24 : f32 to vector<7x16xf32>
    %50 = arith.maximumf %48, %49 : vector<7x16xf32>
    %c4 = arith.constant 4 : index
    %c0_25 = arith.constant 0 : index
    %c0_26 = arith.constant 0 : index
    %51 = vector.load %arg7[%c4, %c0_25, %c0_26] : memref<7x7x16xf32, #tpu.memory_space<vmem>>, vector<1x7x16xf32>
    %52 = vector.shape_cast %51 : vector<1x7x16xf32> to vector<7x16xf32>
    %53 = vector.shape_cast %50 : vector<7x16xf32> to vector<1x7x16xf32>
    tpu.vector_store %arg7[%c4, %c0_25, %c0_26], %53 {strides = array<i32>} : memref<7x7x16xf32, #tpu.memory_space<vmem>>, vector<1x7x16xf32>,
    %54 = vector.extract_strided_slice %1 {offsets = [5, 0, 0], sizes = [1, 7, 8], strides = [1, 1, 1]} : vector<7x7x8xf32> to vector<1x7x8xf32>
    %55 = vector.shape_cast %54 : vector<1x7x8xf32> to vector<7x8xf32>
    %cst_27 = arith.constant dense<0.000000e+00> : vector<7x16xf32>
    %56 = tpu.matmul %55, %2, %cst_27 {dimension_numbers = #tpu.dot_dimension_numbers<[1], [0], [0], [1], [0, 0, 1, 1], [], []>} : vector<7x8xf32>, vector<8x16xf32>, vector<7x16xf32> -> vector<7x16xf32>
    %57 = vector.broadcast %3 : vector<1x16xf32> to vector<7x16xf32>
    %58 = arith.addf %56, %57 : vector<7x16xf32>
    %cst_28 = arith.constant 0.000000e+00 : f32
    %59 = vector.broadcast %cst_28 : f32 to vector<7x16xf32>
    %60 = arith.maximumf %58, %59 : vector<7x16xf32>
    %c5 = arith.constant 5 : index
    %c0_29 = arith.constant 0 : index
    %c0_30 = arith.constant 0 : index
    %61 = vector.load %arg7[%c5, %c0_29, %c0_30] : memref<7x7x16xf32, #tpu.memory_space<vmem>>, vector<1x7x16xf32>
    %62 = vector.shape_cast %61 : vector<1x7x16xf32> to vector<7x16xf32>
    %63 = vector.shape_cast %60 : vector<7x16xf32> to vector<1x7x16xf32>
    tpu.vector_store %arg7[%c5, %c0_29, %c0_30], %63 {strides = array<i32>} : memref<7x7x16xf32, #tpu.memory_space<vmem>>, vector<1x7x16xf32>,
    %64 = vector.extract_strided_slice %1 {offsets = [6, 0, 0], sizes = [1, 7, 8], strides = [1, 1, 1]} : vector<7x7x8xf32> to vector<1x7x8xf32>
    %65 = vector.shape_cast %64 : vector<1x7x8xf32> to vector<7x8xf32>
    %cst_31 = arith.constant dense<0.000000e+00> : vector<7x16xf32>
    %66 = tpu.matmul %65, %2, %cst_31 {dimension_numbers = #tpu.dot_dimension_numbers<[1], [0], [0], [1], [0, 0, 1, 1], [], []>} : vector<7x8xf32>, vector<8x16xf32>, vector<7x16xf32> -> vector<7x16xf32>
    %67 = vector.broadcast %3 : vector<1x16xf32> to vector<7x16xf32>
    %68 = arith.addf %66, %67 : vector<7x16xf32>
    %cst_32 = arith.constant 0.000000e+00 : f32
    %69 = vector.broadcast %cst_32 : f32 to vector<7x16xf32>
    %70 = arith.maximumf %68, %69 : vector<7x16xf32>
    %c6 = arith.constant 6 : index
    %c0_33 = arith.constant 0 : index
    %c0_34 = arith.constant 0 : index
    %71 = vector.load %arg7[%c6, %c0_33, %c0_34] : memref<7x7x16xf32, #tpu.memory_space<vmem>>, vector<1x7x16xf32>
    %72 = vector.shape_cast %71 : vector<1x7x16xf32> to vector<7x16xf32>
    %73 = vector.shape_cast %70 : vector<7x16xf32> to vector<1x7x16xf32>
    tpu.vector_store %arg7[%c6, %c0_33, %c0_34], %73 {strides = array<i32>} : memref<7x7x16xf32, #tpu.memory_space<vmem>>, vector<1x7x16xf32>,
    %c0_35 = arith.constant 0 : index
    %c0_36 = arith.constant 0 : index
    %c0_37 = arith.constant 0 : index
    %74 = vector.load %arg7[%c0_35, %c0_36, %c0_37] : memref<7x7x16xf32, #tpu.memory_space<vmem>>, vector<7x7x16xf32>
    %c0_38 = arith.constant 0 : index
    %c0_39 = arith.constant 0 : index
    %c0_40 = arith.constant 0 : index
    %75 = vector.load %arg4[%c0_38, %c0_39, %c0_40] : memref<3x3x16xf32, #tpu.memory_space<vmem>>, vector<3x3x16xf32>
    %76 = vector.extract_strided_slice %74 {offsets = [0, 0, 0], sizes = [7, 5, 16], strides = [1, 1, 1]} : vector<7x7x16xf32> to vector<7x5x16xf32>
    %77 = vector.extract_strided_slice %74 {offsets = [0, 1, 0], sizes = [7, 5, 16], strides = [1, 1, 1]} : vector<7x7x16xf32> to vector<7x5x16xf32>
    %78 = vector.extract_strided_slice %74 {offsets = [0, 2, 0], sizes = [7, 5, 16], strides = [1, 1, 1]} : vector<7x7x16xf32> to vector<7x5x16xf32>
    %cst_41 = arith.constant 0.000000e+00 : f32
    %79 = vector.broadcast %cst_41 : f32 to vector<5x5x16xf32>
    %80 = vector.extract_strided_slice %76 {offsets = [0, 0, 0], sizes = [5, 5, 16], strides = [1, 1, 1]} : vector<7x5x16xf32> to vector<5x5x16xf32>
    %81 = vector.extract_strided_slice %75 {offsets = [0, 0, 0], sizes = [1, 1, 16], strides = [1, 1, 1]} : vector<3x3x16xf32> to vector<1x1x16xf32>
    %82 = vector.shape_cast %81 : vector<1x1x16xf32> to vector<16xf32>
    %83 = vector.shape_cast %82 : vector<16xf32> to vector<1x1x16xf32>
    %84 = vector.broadcast %83 : vector<1x1x16xf32> to vector<5x5x16xf32>
    %85 = arith.mulf %80, %84 : vector<5x5x16xf32>
    %86 = arith.addf %79, %85 : vector<5x5x16xf32>
    %87 = vector.extract_strided_slice %77 {offsets = [0, 0, 0], sizes = [5, 5, 16], strides = [1, 1, 1]} : vector<7x5x16xf32> to vector<5x5x16xf32>
    %88 = vector.extract_strided_slice %75 {offsets = [0, 1, 0], sizes = [1, 1, 16], strides = [1, 1, 1]} : vector<3x3x16xf32> to vector<1x1x16xf32>
    %89 = vector.shape_cast %88 : vector<1x1x16xf32> to vector<16xf32>
    %90 = vector.shape_cast %89 : vector<16xf32> to vector<1x1x16xf32>
    %91 = vector.broadcast %90 : vector<1x1x16xf32> to vector<5x5x16xf32>
    %92 = arith.mulf %87, %91 : vector<5x5x16xf32>
    %93 = arith.addf %86, %92 : vector<5x5x16xf32>
    %94 = vector.extract_strided_slice %78 {offsets = [0, 0, 0], sizes = [5, 5, 16], strides = [1, 1, 1]} : vector<7x5x16xf32> to vector<5x5x16xf32>
    %95 = vector.extract_strided_slice %75 {offsets = [0, 2, 0], sizes = [1, 1, 16], strides = [1, 1, 1]} : vector<3x3x16xf32> to vector<1x1x16xf32>
    %96 = vector.shape_cast %95 : vector<1x1x16xf32> to vector<16xf32>
    %97 = vector.shape_cast %96 : vector<16xf32> to vector<1x1x16xf32>
    %98 = vector.broadcast %97 : vector<1x1x16xf32> to vector<5x5x16xf32>
    %99 = arith.mulf %94, %98 : vector<5x5x16xf32>
    %100 = arith.addf %93, %99 : vector<5x5x16xf32>
    %101 = vector.extract_strided_slice %76 {offsets = [1, 0, 0], sizes = [5, 5, 16], strides = [1, 1, 1]} : vector<7x5x16xf32> to vector<5x5x16xf32>
    %102 = vector.extract_strided_slice %75 {offsets = [1, 0, 0], sizes = [1, 1, 16], strides = [1, 1, 1]} : vector<3x3x16xf32> to vector<1x1x16xf32>
    %103 = vector.shape_cast %102 : vector<1x1x16xf32> to vector<16xf32>
    %104 = vector.shape_cast %103 : vector<16xf32> to vector<1x1x16xf32>
    %105 = vector.broadcast %104 : vector<1x1x16xf32> to vector<5x5x16xf32>
    %106 = arith.mulf %101, %105 : vector<5x5x16xf32>
    %107 = arith.addf %100, %106 : vector<5x5x16xf32>
    %108 = vector.extract_strided_slice %77 {offsets = [1, 0, 0], sizes = [5, 5, 16], strides = [1, 1, 1]} : vector<7x5x16xf32> to vector<5x5x16xf32>
    %109 = vector.extract_strided_slice %75 {offsets = [1, 1, 0], sizes = [1, 1, 16], strides = [1, 1, 1]} : vector<3x3x16xf32> to vector<1x1x16xf32>
    %110 = vector.shape_cast %109 : vector<1x1x16xf32> to vector<16xf32>
    %111 = vector.shape_cast %110 : vector<16xf32> to vector<1x1x16xf32>
    %112 = vector.broadcast %111 : vector<1x1x16xf32> to vector<5x5x16xf32>
    %113 = arith.mulf %108, %112 : vector<5x5x16xf32>
    %114 = arith.addf %107, %113 : vector<5x5x16xf32>
    %115 = vector.extract_strided_slice %78 {offsets = [1, 0, 0], sizes = [5, 5, 16], strides = [1, 1, 1]} : vector<7x5x16xf32> to vector<5x5x16xf32>
    %116 = vector.extract_strided_slice %75 {offsets = [1, 2, 0], sizes = [1, 1, 16], strides = [1, 1, 1]} : vector<3x3x16xf32> to vector<1x1x16xf32>
    %117 = vector.shape_cast %116 : vector<1x1x16xf32> to vector<16xf32>
    %118 = vector.shape_cast %117 : vector<16xf32> to vector<1x1x16xf32>
    %119 = vector.broadcast %118 : vector<1x1x16xf32> to vector<5x5x16xf32>
    %120 = arith.mulf %115, %119 : vector<5x5x16xf32>
    %121 = arith.addf %114, %120 : vector<5x5x16xf32>
    %122 = vector.extract_strided_slice %76 {offsets = [2, 0, 0], sizes = [5, 5, 16], strides = [1, 1, 1]} : vector<7x5x16xf32> to vector<5x5x16xf32>
    %123 = vector.extract_strided_slice %75 {offsets = [2, 0, 0], sizes = [1, 1, 16], strides = [1, 1, 1]} : vector<3x3x16xf32> to vector<1x1x16xf32>
    %124 = vector.shape_cast %123 : vector<1x1x16xf32> to vector<16xf32>
    %125 = vector.shape_cast %124 : vector<16xf32> to vector<1x1x16xf32>
    %126 = vector.broadcast %125 : vector<1x1x16xf32> to vector<5x5x16xf32>
    %127 = arith.mulf %122, %126 : vector<5x5x16xf32>
    %128 = arith.addf %121, %127 : vector<5x5x16xf32>
    %129 = vector.extract_strided_slice %77 {offsets = [2, 0, 0], sizes = [5, 5, 16], strides = [1, 1, 1]} : vector<7x5x16xf32> to vector<5x5x16xf32>
    %130 = vector.extract_strided_slice %75 {offsets = [2, 1, 0], sizes = [1, 1, 16], strides = [1, 1, 1]} : vector<3x3x16xf32> to vector<1x1x16xf32>
    %131 = vector.shape_cast %130 : vector<1x1x16xf32> to vector<16xf32>
    %132 = vector.shape_cast %131 : vector<16xf32> to vector<1x1x16xf32>
    %133 = vector.broadcast %132 : vector<1x1x16xf32> to vector<5x5x16xf32>
    %134 = arith.mulf %129, %133 : vector<5x5x16xf32>
    %135 = arith.addf %128, %134 : vector<5x5x16xf32>
    %136 = vector.extract_strided_slice %78 {offsets = [2, 0, 0], sizes = [5, 5, 16], strides = [1, 1, 1]} : vector<7x5x16xf32> to vector<5x5x16xf32>
    %137 = vector.extract_strided_slice %75 {offsets = [2, 2, 0], sizes = [1, 1, 16], strides = [1, 1, 1]} : vector<3x3x16xf32> to vector<1x1x16xf32>
    %138 = vector.shape_cast %137 : vector<1x1x16xf32> to vector<16xf32>
    %139 = vector.shape_cast %138 : vector<16xf32> to vector<1x1x16xf32>
    %140 = vector.broadcast %139 : vector<1x1x16xf32> to vector<5x5x16xf32>
    %141 = arith.mulf %136, %140 : vector<5x5x16xf32>
    %142 = arith.addf %135, %141 : vector<5x5x16xf32>
    %c0_42 = arith.constant 0 : index
    %c0_43 = arith.constant 0 : index
    %143 = vector.load %arg5[%c0_42, %c0_43] : memref<1x16xf32, #tpu.memory_space<vmem>>, vector<1x16xf32>
    %144 = vector.shape_cast %143 : vector<1x16xf32> to vector<16xf32>
    %145 = vector.shape_cast %144 : vector<16xf32> to vector<1x1x16xf32>
    %146 = vector.broadcast %145 : vector<1x1x16xf32> to vector<5x5x16xf32>
    %147 = arith.addf %142, %146 : vector<5x5x16xf32>
    %cst_44 = arith.constant 0.000000e+00 : f32
    %148 = vector.broadcast %cst_44 : f32 to vector<5x5x16xf32>
    %149 = arith.maximumf %147, %148 : vector<5x5x16xf32>
    %c0_45 = arith.constant 0 : index
    %c0_46 = arith.constant 0 : index
    %c0_47 = arith.constant 0 : index
    %c0_48 = arith.constant 0 : index
    %150 = vector.load %arg6[%c0_45, %c0_46, %c0_47, %c0_48] : memref<1x5x5x16xf32, #tpu.memory_space<vmem>>, vector<1x5x5x16xf32>
    %151 = vector.shape_cast %150 : vector<1x5x5x16xf32> to vector<5x5x16xf32>
    %152 = vector.shape_cast %149 : vector<5x5x16xf32> to vector<1x5x5x16xf32>
    tpu.vector_store %arg6[%c0_45, %c0_46, %c0_47, %c0_48], %152 {strides = array<i32>} : memref<1x5x5x16xf32, #tpu.memory_space<vmem>>, vector<1x5x5x16xf32>,
    return
  }
  func.func @transform_0(%arg0: i32) -> (i32, i32, i32, i32) {
    %c0_i32 = arith.constant 0 : i32
    %c0_i32_0 = arith.constant 0 : i32
    %c0_i32_1 = arith.constant 0 : i32
    %c0_i32_2 = arith.constant 0 : i32
    return %arg0, %c0_i32, %c0_i32_0, %c0_i32_1 : i32, i32, i32, i32
  }
  func.func @transform_1(%arg0: i32) -> (i32, i32) {
    %c0_i32 = arith.constant 0 : i32
    %c0_i32_0 = arith.constant 0 : i32
    %c0_i32_1 = arith.constant 0 : i32
    return %c0_i32, %c0_i32_0 : i32, i32
  }
  func.func @transform_2(%arg0: i32) -> (i32, i32) {
    %c0_i32 = arith.constant 0 : i32
    %c0_i32_0 = arith.constant 0 : i32
    %c0_i32_1 = arith.constant 0 : i32
    return %c0_i32, %c0_i32_0 : i32, i32
  }
  func.func @transform_3(%arg0: i32) -> (i32, i32, i32) {
    %c0_i32 = arith.constant 0 : i32
    %c0_i32_0 = arith.constant 0 : i32
    %c0_i32_1 = arith.constant 0 : i32
    %c0_i32_2 = arith.constant 0 : i32
    return %c0_i32, %c0_i32_0, %c0_i32_1 : i32, i32, i32
  }
  func.func @transform_4(%arg0: i32) -> (i32, i32) {
    %c0_i32 = arith.constant 0 : i32
    %c0_i32_0 = arith.constant 0 : i32
    %c0_i32_1 = arith.constant 0 : i32
    return %c0_i32, %c0_i32_0 : i32, i32
  }
  func.func @transform_5(%arg0: i32) -> (i32, i32, i32, i32) {
    %c0_i32 = arith.constant 0 : i32
    %c0_i32_0 = arith.constant 0 : i32
    %c0_i32_1 = arith.constant 0 : i32
    %c0_i32_2 = arith.constant 0 : i32
    return %arg0, %c0_i32, %c0_i32_0, %c0_i32_1 : i32, i32, i32, i32
  }
}

module attributes {stable_mosaic.version = 11 : i64} {
  func.func @_xcorr_head_kernel(%arg0: i32, %arg1: memref<1x15x15x16xf32, #tpu.memory_space<vmem>>, %arg2: memref<1x5x5x16xf32, #tpu.memory_space<vmem>>, %arg3: memref<16x16xf32, #tpu.memory_space<vmem>>, %arg4: memref<1x16xf32, #tpu.memory_space<vmem>>, %arg5: memref<16x4xf32, #tpu.memory_space<vmem>>, %arg6: memref<1x4xf32, #tpu.memory_space<vmem>>, %arg7: memref<1x121x4xf32, #tpu.memory_space<vmem>>, %arg8: memref<121x16xf32, #tpu.memory_space<vmem>>) attributes {dimension_semantics = [#tpu.dimension_semantics<parallel>], iteration_bounds = array<i64: 2>, scalar_prefetch = 0 : i64, scratch_operands = 1 : i64, tpu.core_type = #tpu.core_type<tc>, window_params = [{transform_indices = @transform_0, window_bounds = array<i64: 1, 15, 15, 16>}, {transform_indices = @transform_1, window_bounds = array<i64: 1, 5, 5, 16>}, {pipeline_mode = #tpu.pipeline_mode<synchronous>, transform_indices = @transform_2, window_bounds = array<i64: 16, 16>}, {pipeline_mode = #tpu.pipeline_mode<synchronous>, transform_indices = @transform_3, window_bounds = array<i64: 1, 16>}, {pipeline_mode = #tpu.pipeline_mode<synchronous>, transform_indices = @transform_4, window_bounds = array<i64: 16, 4>}, {pipeline_mode = #tpu.pipeline_mode<synchronous>, transform_indices = @transform_5, window_bounds = array<i64: 1, 4>}, {transform_indices = @transform_6, window_bounds = array<i64: 1, 121, 4>}]} {
    %c0 = arith.constant 0 : index
    %c0_0 = arith.constant 0 : index
    %c0_1 = arith.constant 0 : index
    %c0_2 = arith.constant 0 : index
    %0 = vector.load %arg1[%c0, %c0_0, %c0_1, %c0_2] : memref<1x15x15x16xf32, #tpu.memory_space<vmem>>, vector<1x15x15x16xf32>
    %1 = vector.shape_cast %0 : vector<1x15x15x16xf32> to vector<15x15x16xf32>
    %c0_3 = arith.constant 0 : index
    %c0_4 = arith.constant 0 : index
    %c0_5 = arith.constant 0 : index
    %c0_6 = arith.constant 0 : index
    %2 = vector.load %arg2[%c0_3, %c0_4, %c0_5, %c0_6] : memref<1x5x5x16xf32, #tpu.memory_space<vmem>>, vector<1x5x5x16xf32>
    %3 = vector.shape_cast %2 : vector<1x5x5x16xf32> to vector<5x5x16xf32>
    %4 = vector.extract_strided_slice %1 {offsets = [0, 0, 0], sizes = [15, 11, 16], strides = [1, 1, 1]} : vector<15x15x16xf32> to vector<15x11x16xf32>
    %5 = vector.extract_strided_slice %1 {offsets = [0, 1, 0], sizes = [15, 11, 16], strides = [1, 1, 1]} : vector<15x15x16xf32> to vector<15x11x16xf32>
    %6 = vector.extract_strided_slice %1 {offsets = [0, 2, 0], sizes = [15, 11, 16], strides = [1, 1, 1]} : vector<15x15x16xf32> to vector<15x11x16xf32>
    %7 = vector.extract_strided_slice %1 {offsets = [0, 3, 0], sizes = [15, 11, 16], strides = [1, 1, 1]} : vector<15x15x16xf32> to vector<15x11x16xf32>
    %8 = vector.extract_strided_slice %1 {offsets = [0, 4, 0], sizes = [15, 11, 16], strides = [1, 1, 1]} : vector<15x15x16xf32> to vector<15x11x16xf32>
    %cst = arith.constant 0.000000e+00 : f32
    %9 = vector.broadcast %cst : f32 to vector<11x11x16xf32>
    %10 = vector.extract_strided_slice %4 {offsets = [0, 0, 0], sizes = [11, 11, 16], strides = [1, 1, 1]} : vector<15x11x16xf32> to vector<11x11x16xf32>
    %11 = vector.extract_strided_slice %3 {offsets = [0, 0, 0], sizes = [1, 1, 16], strides = [1, 1, 1]} : vector<5x5x16xf32> to vector<1x1x16xf32>
    %12 = vector.shape_cast %11 : vector<1x1x16xf32> to vector<16xf32>
    %13 = vector.shape_cast %12 : vector<16xf32> to vector<1x1x16xf32>
    %14 = vector.broadcast %13 : vector<1x1x16xf32> to vector<11x11x16xf32>
    %15 = arith.mulf %10, %14 : vector<11x11x16xf32>
    %16 = arith.addf %9, %15 : vector<11x11x16xf32>
    %17 = vector.extract_strided_slice %5 {offsets = [0, 0, 0], sizes = [11, 11, 16], strides = [1, 1, 1]} : vector<15x11x16xf32> to vector<11x11x16xf32>
    %18 = vector.extract_strided_slice %3 {offsets = [0, 1, 0], sizes = [1, 1, 16], strides = [1, 1, 1]} : vector<5x5x16xf32> to vector<1x1x16xf32>
    %19 = vector.shape_cast %18 : vector<1x1x16xf32> to vector<16xf32>
    %20 = vector.shape_cast %19 : vector<16xf32> to vector<1x1x16xf32>
    %21 = vector.broadcast %20 : vector<1x1x16xf32> to vector<11x11x16xf32>
    %22 = arith.mulf %17, %21 : vector<11x11x16xf32>
    %23 = arith.addf %16, %22 : vector<11x11x16xf32>
    %24 = vector.extract_strided_slice %6 {offsets = [0, 0, 0], sizes = [11, 11, 16], strides = [1, 1, 1]} : vector<15x11x16xf32> to vector<11x11x16xf32>
    %25 = vector.extract_strided_slice %3 {offsets = [0, 2, 0], sizes = [1, 1, 16], strides = [1, 1, 1]} : vector<5x5x16xf32> to vector<1x1x16xf32>
    %26 = vector.shape_cast %25 : vector<1x1x16xf32> to vector<16xf32>
    %27 = vector.shape_cast %26 : vector<16xf32> to vector<1x1x16xf32>
    %28 = vector.broadcast %27 : vector<1x1x16xf32> to vector<11x11x16xf32>
    %29 = arith.mulf %24, %28 : vector<11x11x16xf32>
    %30 = arith.addf %23, %29 : vector<11x11x16xf32>
    %31 = vector.extract_strided_slice %7 {offsets = [0, 0, 0], sizes = [11, 11, 16], strides = [1, 1, 1]} : vector<15x11x16xf32> to vector<11x11x16xf32>
    %32 = vector.extract_strided_slice %3 {offsets = [0, 3, 0], sizes = [1, 1, 16], strides = [1, 1, 1]} : vector<5x5x16xf32> to vector<1x1x16xf32>
    %33 = vector.shape_cast %32 : vector<1x1x16xf32> to vector<16xf32>
    %34 = vector.shape_cast %33 : vector<16xf32> to vector<1x1x16xf32>
    %35 = vector.broadcast %34 : vector<1x1x16xf32> to vector<11x11x16xf32>
    %36 = arith.mulf %31, %35 : vector<11x11x16xf32>
    %37 = arith.addf %30, %36 : vector<11x11x16xf32>
    %38 = vector.extract_strided_slice %8 {offsets = [0, 0, 0], sizes = [11, 11, 16], strides = [1, 1, 1]} : vector<15x11x16xf32> to vector<11x11x16xf32>
    %39 = vector.extract_strided_slice %3 {offsets = [0, 4, 0], sizes = [1, 1, 16], strides = [1, 1, 1]} : vector<5x5x16xf32> to vector<1x1x16xf32>
    %40 = vector.shape_cast %39 : vector<1x1x16xf32> to vector<16xf32>
    %41 = vector.shape_cast %40 : vector<16xf32> to vector<1x1x16xf32>
    %42 = vector.broadcast %41 : vector<1x1x16xf32> to vector<11x11x16xf32>
    %43 = arith.mulf %38, %42 : vector<11x11x16xf32>
    %44 = arith.addf %37, %43 : vector<11x11x16xf32>
    %45 = vector.extract_strided_slice %4 {offsets = [1, 0, 0], sizes = [11, 11, 16], strides = [1, 1, 1]} : vector<15x11x16xf32> to vector<11x11x16xf32>
    %46 = vector.extract_strided_slice %3 {offsets = [1, 0, 0], sizes = [1, 1, 16], strides = [1, 1, 1]} : vector<5x5x16xf32> to vector<1x1x16xf32>
    %47 = vector.shape_cast %46 : vector<1x1x16xf32> to vector<16xf32>
    %48 = vector.shape_cast %47 : vector<16xf32> to vector<1x1x16xf32>
    %49 = vector.broadcast %48 : vector<1x1x16xf32> to vector<11x11x16xf32>
    %50 = arith.mulf %45, %49 : vector<11x11x16xf32>
    %51 = arith.addf %44, %50 : vector<11x11x16xf32>
    %52 = vector.extract_strided_slice %5 {offsets = [1, 0, 0], sizes = [11, 11, 16], strides = [1, 1, 1]} : vector<15x11x16xf32> to vector<11x11x16xf32>
    %53 = vector.extract_strided_slice %3 {offsets = [1, 1, 0], sizes = [1, 1, 16], strides = [1, 1, 1]} : vector<5x5x16xf32> to vector<1x1x16xf32>
    %54 = vector.shape_cast %53 : vector<1x1x16xf32> to vector<16xf32>
    %55 = vector.shape_cast %54 : vector<16xf32> to vector<1x1x16xf32>
    %56 = vector.broadcast %55 : vector<1x1x16xf32> to vector<11x11x16xf32>
    %57 = arith.mulf %52, %56 : vector<11x11x16xf32>
    %58 = arith.addf %51, %57 : vector<11x11x16xf32>
    %59 = vector.extract_strided_slice %6 {offsets = [1, 0, 0], sizes = [11, 11, 16], strides = [1, 1, 1]} : vector<15x11x16xf32> to vector<11x11x16xf32>
    %60 = vector.extract_strided_slice %3 {offsets = [1, 2, 0], sizes = [1, 1, 16], strides = [1, 1, 1]} : vector<5x5x16xf32> to vector<1x1x16xf32>
    %61 = vector.shape_cast %60 : vector<1x1x16xf32> to vector<16xf32>
    %62 = vector.shape_cast %61 : vector<16xf32> to vector<1x1x16xf32>
    %63 = vector.broadcast %62 : vector<1x1x16xf32> to vector<11x11x16xf32>
    %64 = arith.mulf %59, %63 : vector<11x11x16xf32>
    %65 = arith.addf %58, %64 : vector<11x11x16xf32>
    %66 = vector.extract_strided_slice %7 {offsets = [1, 0, 0], sizes = [11, 11, 16], strides = [1, 1, 1]} : vector<15x11x16xf32> to vector<11x11x16xf32>
    %67 = vector.extract_strided_slice %3 {offsets = [1, 3, 0], sizes = [1, 1, 16], strides = [1, 1, 1]} : vector<5x5x16xf32> to vector<1x1x16xf32>
    %68 = vector.shape_cast %67 : vector<1x1x16xf32> to vector<16xf32>
    %69 = vector.shape_cast %68 : vector<16xf32> to vector<1x1x16xf32>
    %70 = vector.broadcast %69 : vector<1x1x16xf32> to vector<11x11x16xf32>
    %71 = arith.mulf %66, %70 : vector<11x11x16xf32>
    %72 = arith.addf %65, %71 : vector<11x11x16xf32>
    %73 = vector.extract_strided_slice %8 {offsets = [1, 0, 0], sizes = [11, 11, 16], strides = [1, 1, 1]} : vector<15x11x16xf32> to vector<11x11x16xf32>
    %74 = vector.extract_strided_slice %3 {offsets = [1, 4, 0], sizes = [1, 1, 16], strides = [1, 1, 1]} : vector<5x5x16xf32> to vector<1x1x16xf32>
    %75 = vector.shape_cast %74 : vector<1x1x16xf32> to vector<16xf32>
    %76 = vector.shape_cast %75 : vector<16xf32> to vector<1x1x16xf32>
    %77 = vector.broadcast %76 : vector<1x1x16xf32> to vector<11x11x16xf32>
    %78 = arith.mulf %73, %77 : vector<11x11x16xf32>
    %79 = arith.addf %72, %78 : vector<11x11x16xf32>
    %80 = vector.extract_strided_slice %4 {offsets = [2, 0, 0], sizes = [11, 11, 16], strides = [1, 1, 1]} : vector<15x11x16xf32> to vector<11x11x16xf32>
    %81 = vector.extract_strided_slice %3 {offsets = [2, 0, 0], sizes = [1, 1, 16], strides = [1, 1, 1]} : vector<5x5x16xf32> to vector<1x1x16xf32>
    %82 = vector.shape_cast %81 : vector<1x1x16xf32> to vector<16xf32>
    %83 = vector.shape_cast %82 : vector<16xf32> to vector<1x1x16xf32>
    %84 = vector.broadcast %83 : vector<1x1x16xf32> to vector<11x11x16xf32>
    %85 = arith.mulf %80, %84 : vector<11x11x16xf32>
    %86 = arith.addf %79, %85 : vector<11x11x16xf32>
    %87 = vector.extract_strided_slice %5 {offsets = [2, 0, 0], sizes = [11, 11, 16], strides = [1, 1, 1]} : vector<15x11x16xf32> to vector<11x11x16xf32>
    %88 = vector.extract_strided_slice %3 {offsets = [2, 1, 0], sizes = [1, 1, 16], strides = [1, 1, 1]} : vector<5x5x16xf32> to vector<1x1x16xf32>
    %89 = vector.shape_cast %88 : vector<1x1x16xf32> to vector<16xf32>
    %90 = vector.shape_cast %89 : vector<16xf32> to vector<1x1x16xf32>
    %91 = vector.broadcast %90 : vector<1x1x16xf32> to vector<11x11x16xf32>
    %92 = arith.mulf %87, %91 : vector<11x11x16xf32>
    %93 = arith.addf %86, %92 : vector<11x11x16xf32>
    %94 = vector.extract_strided_slice %6 {offsets = [2, 0, 0], sizes = [11, 11, 16], strides = [1, 1, 1]} : vector<15x11x16xf32> to vector<11x11x16xf32>
    %95 = vector.extract_strided_slice %3 {offsets = [2, 2, 0], sizes = [1, 1, 16], strides = [1, 1, 1]} : vector<5x5x16xf32> to vector<1x1x16xf32>
    %96 = vector.shape_cast %95 : vector<1x1x16xf32> to vector<16xf32>
    %97 = vector.shape_cast %96 : vector<16xf32> to vector<1x1x16xf32>
    %98 = vector.broadcast %97 : vector<1x1x16xf32> to vector<11x11x16xf32>
    %99 = arith.mulf %94, %98 : vector<11x11x16xf32>
    %100 = arith.addf %93, %99 : vector<11x11x16xf32>
    %101 = vector.extract_strided_slice %7 {offsets = [2, 0, 0], sizes = [11, 11, 16], strides = [1, 1, 1]} : vector<15x11x16xf32> to vector<11x11x16xf32>
    %102 = vector.extract_strided_slice %3 {offsets = [2, 3, 0], sizes = [1, 1, 16], strides = [1, 1, 1]} : vector<5x5x16xf32> to vector<1x1x16xf32>
    %103 = vector.shape_cast %102 : vector<1x1x16xf32> to vector<16xf32>
    %104 = vector.shape_cast %103 : vector<16xf32> to vector<1x1x16xf32>
    %105 = vector.broadcast %104 : vector<1x1x16xf32> to vector<11x11x16xf32>
    %106 = arith.mulf %101, %105 : vector<11x11x16xf32>
    %107 = arith.addf %100, %106 : vector<11x11x16xf32>
    %108 = vector.extract_strided_slice %8 {offsets = [2, 0, 0], sizes = [11, 11, 16], strides = [1, 1, 1]} : vector<15x11x16xf32> to vector<11x11x16xf32>
    %109 = vector.extract_strided_slice %3 {offsets = [2, 4, 0], sizes = [1, 1, 16], strides = [1, 1, 1]} : vector<5x5x16xf32> to vector<1x1x16xf32>
    %110 = vector.shape_cast %109 : vector<1x1x16xf32> to vector<16xf32>
    %111 = vector.shape_cast %110 : vector<16xf32> to vector<1x1x16xf32>
    %112 = vector.broadcast %111 : vector<1x1x16xf32> to vector<11x11x16xf32>
    %113 = arith.mulf %108, %112 : vector<11x11x16xf32>
    %114 = arith.addf %107, %113 : vector<11x11x16xf32>
    %115 = vector.extract_strided_slice %4 {offsets = [3, 0, 0], sizes = [11, 11, 16], strides = [1, 1, 1]} : vector<15x11x16xf32> to vector<11x11x16xf32>
    %116 = vector.extract_strided_slice %3 {offsets = [3, 0, 0], sizes = [1, 1, 16], strides = [1, 1, 1]} : vector<5x5x16xf32> to vector<1x1x16xf32>
    %117 = vector.shape_cast %116 : vector<1x1x16xf32> to vector<16xf32>
    %118 = vector.shape_cast %117 : vector<16xf32> to vector<1x1x16xf32>
    %119 = vector.broadcast %118 : vector<1x1x16xf32> to vector<11x11x16xf32>
    %120 = arith.mulf %115, %119 : vector<11x11x16xf32>
    %121 = arith.addf %114, %120 : vector<11x11x16xf32>
    %122 = vector.extract_strided_slice %5 {offsets = [3, 0, 0], sizes = [11, 11, 16], strides = [1, 1, 1]} : vector<15x11x16xf32> to vector<11x11x16xf32>
    %123 = vector.extract_strided_slice %3 {offsets = [3, 1, 0], sizes = [1, 1, 16], strides = [1, 1, 1]} : vector<5x5x16xf32> to vector<1x1x16xf32>
    %124 = vector.shape_cast %123 : vector<1x1x16xf32> to vector<16xf32>
    %125 = vector.shape_cast %124 : vector<16xf32> to vector<1x1x16xf32>
    %126 = vector.broadcast %125 : vector<1x1x16xf32> to vector<11x11x16xf32>
    %127 = arith.mulf %122, %126 : vector<11x11x16xf32>
    %128 = arith.addf %121, %127 : vector<11x11x16xf32>
    %129 = vector.extract_strided_slice %6 {offsets = [3, 0, 0], sizes = [11, 11, 16], strides = [1, 1, 1]} : vector<15x11x16xf32> to vector<11x11x16xf32>
    %130 = vector.extract_strided_slice %3 {offsets = [3, 2, 0], sizes = [1, 1, 16], strides = [1, 1, 1]} : vector<5x5x16xf32> to vector<1x1x16xf32>
    %131 = vector.shape_cast %130 : vector<1x1x16xf32> to vector<16xf32>
    %132 = vector.shape_cast %131 : vector<16xf32> to vector<1x1x16xf32>
    %133 = vector.broadcast %132 : vector<1x1x16xf32> to vector<11x11x16xf32>
    %134 = arith.mulf %129, %133 : vector<11x11x16xf32>
    %135 = arith.addf %128, %134 : vector<11x11x16xf32>
    %136 = vector.extract_strided_slice %7 {offsets = [3, 0, 0], sizes = [11, 11, 16], strides = [1, 1, 1]} : vector<15x11x16xf32> to vector<11x11x16xf32>
    %137 = vector.extract_strided_slice %3 {offsets = [3, 3, 0], sizes = [1, 1, 16], strides = [1, 1, 1]} : vector<5x5x16xf32> to vector<1x1x16xf32>
    %138 = vector.shape_cast %137 : vector<1x1x16xf32> to vector<16xf32>
    %139 = vector.shape_cast %138 : vector<16xf32> to vector<1x1x16xf32>
    %140 = vector.broadcast %139 : vector<1x1x16xf32> to vector<11x11x16xf32>
    %141 = arith.mulf %136, %140 : vector<11x11x16xf32>
    %142 = arith.addf %135, %141 : vector<11x11x16xf32>
    %143 = vector.extract_strided_slice %8 {offsets = [3, 0, 0], sizes = [11, 11, 16], strides = [1, 1, 1]} : vector<15x11x16xf32> to vector<11x11x16xf32>
    %144 = vector.extract_strided_slice %3 {offsets = [3, 4, 0], sizes = [1, 1, 16], strides = [1, 1, 1]} : vector<5x5x16xf32> to vector<1x1x16xf32>
    %145 = vector.shape_cast %144 : vector<1x1x16xf32> to vector<16xf32>
    %146 = vector.shape_cast %145 : vector<16xf32> to vector<1x1x16xf32>
    %147 = vector.broadcast %146 : vector<1x1x16xf32> to vector<11x11x16xf32>
    %148 = arith.mulf %143, %147 : vector<11x11x16xf32>
    %149 = arith.addf %142, %148 : vector<11x11x16xf32>
    %150 = vector.extract_strided_slice %4 {offsets = [4, 0, 0], sizes = [11, 11, 16], strides = [1, 1, 1]} : vector<15x11x16xf32> to vector<11x11x16xf32>
    %151 = vector.extract_strided_slice %3 {offsets = [4, 0, 0], sizes = [1, 1, 16], strides = [1, 1, 1]} : vector<5x5x16xf32> to vector<1x1x16xf32>
    %152 = vector.shape_cast %151 : vector<1x1x16xf32> to vector<16xf32>
    %153 = vector.shape_cast %152 : vector<16xf32> to vector<1x1x16xf32>
    %154 = vector.broadcast %153 : vector<1x1x16xf32> to vector<11x11x16xf32>
    %155 = arith.mulf %150, %154 : vector<11x11x16xf32>
    %156 = arith.addf %149, %155 : vector<11x11x16xf32>
    %157 = vector.extract_strided_slice %5 {offsets = [4, 0, 0], sizes = [11, 11, 16], strides = [1, 1, 1]} : vector<15x11x16xf32> to vector<11x11x16xf32>
    %158 = vector.extract_strided_slice %3 {offsets = [4, 1, 0], sizes = [1, 1, 16], strides = [1, 1, 1]} : vector<5x5x16xf32> to vector<1x1x16xf32>
    %159 = vector.shape_cast %158 : vector<1x1x16xf32> to vector<16xf32>
    %160 = vector.shape_cast %159 : vector<16xf32> to vector<1x1x16xf32>
    %161 = vector.broadcast %160 : vector<1x1x16xf32> to vector<11x11x16xf32>
    %162 = arith.mulf %157, %161 : vector<11x11x16xf32>
    %163 = arith.addf %156, %162 : vector<11x11x16xf32>
    %164 = vector.extract_strided_slice %6 {offsets = [4, 0, 0], sizes = [11, 11, 16], strides = [1, 1, 1]} : vector<15x11x16xf32> to vector<11x11x16xf32>
    %165 = vector.extract_strided_slice %3 {offsets = [4, 2, 0], sizes = [1, 1, 16], strides = [1, 1, 1]} : vector<5x5x16xf32> to vector<1x1x16xf32>
    %166 = vector.shape_cast %165 : vector<1x1x16xf32> to vector<16xf32>
    %167 = vector.shape_cast %166 : vector<16xf32> to vector<1x1x16xf32>
    %168 = vector.broadcast %167 : vector<1x1x16xf32> to vector<11x11x16xf32>
    %169 = arith.mulf %164, %168 : vector<11x11x16xf32>
    %170 = arith.addf %163, %169 : vector<11x11x16xf32>
    %171 = vector.extract_strided_slice %7 {offsets = [4, 0, 0], sizes = [11, 11, 16], strides = [1, 1, 1]} : vector<15x11x16xf32> to vector<11x11x16xf32>
    %172 = vector.extract_strided_slice %3 {offsets = [4, 3, 0], sizes = [1, 1, 16], strides = [1, 1, 1]} : vector<5x5x16xf32> to vector<1x1x16xf32>
    %173 = vector.shape_cast %172 : vector<1x1x16xf32> to vector<16xf32>
    %174 = vector.shape_cast %173 : vector<16xf32> to vector<1x1x16xf32>
    %175 = vector.broadcast %174 : vector<1x1x16xf32> to vector<11x11x16xf32>
    %176 = arith.mulf %171, %175 : vector<11x11x16xf32>
    %177 = arith.addf %170, %176 : vector<11x11x16xf32>
    %178 = vector.extract_strided_slice %8 {offsets = [4, 0, 0], sizes = [11, 11, 16], strides = [1, 1, 1]} : vector<15x11x16xf32> to vector<11x11x16xf32>
    %179 = vector.extract_strided_slice %3 {offsets = [4, 4, 0], sizes = [1, 1, 16], strides = [1, 1, 1]} : vector<5x5x16xf32> to vector<1x1x16xf32>
    %180 = vector.shape_cast %179 : vector<1x1x16xf32> to vector<16xf32>
    %181 = vector.shape_cast %180 : vector<16xf32> to vector<1x1x16xf32>
    %182 = vector.broadcast %181 : vector<1x1x16xf32> to vector<11x11x16xf32>
    %183 = arith.mulf %178, %182 : vector<11x11x16xf32>
    %184 = arith.addf %177, %183 : vector<11x11x16xf32>
    %185 = vector.extract_strided_slice %184 {offsets = [0, 0, 0], sizes = [1, 11, 16], strides = [1, 1, 1]} : vector<11x11x16xf32> to vector<1x11x16xf32>
    %186 = vector.shape_cast %185 : vector<1x11x16xf32> to vector<11x16xf32>
    %c0_7 = arith.constant 0 : index
    %c0_8 = arith.constant 0 : index
    %187 = vector.load %arg8[%c0_7, %c0_8] : memref<121x16xf32, #tpu.memory_space<vmem>>, vector<11x16xf32>
    tpu.vector_store %arg8[%c0_7, %c0_8], %186 {strides = array<i32>} : memref<121x16xf32, #tpu.memory_space<vmem>>, vector<11x16xf32>,
    %188 = vector.extract_strided_slice %184 {offsets = [1, 0, 0], sizes = [1, 11, 16], strides = [1, 1, 1]} : vector<11x11x16xf32> to vector<1x11x16xf32>
    %189 = vector.shape_cast %188 : vector<1x11x16xf32> to vector<11x16xf32>
    %c11 = arith.constant 11 : index
    %c0_9 = arith.constant 0 : index
    %190 = vector.load %arg8[%c11, %c0_9] : memref<121x16xf32, #tpu.memory_space<vmem>>, vector<11x16xf32>
    tpu.vector_store %arg8[%c11, %c0_9], %189 {strides = array<i32>} : memref<121x16xf32, #tpu.memory_space<vmem>>, vector<11x16xf32>,
    %191 = vector.extract_strided_slice %184 {offsets = [2, 0, 0], sizes = [1, 11, 16], strides = [1, 1, 1]} : vector<11x11x16xf32> to vector<1x11x16xf32>
    %192 = vector.shape_cast %191 : vector<1x11x16xf32> to vector<11x16xf32>
    %c22 = arith.constant 22 : index
    %c0_10 = arith.constant 0 : index
    %193 = vector.load %arg8[%c22, %c0_10] : memref<121x16xf32, #tpu.memory_space<vmem>>, vector<11x16xf32>
    tpu.vector_store %arg8[%c22, %c0_10], %192 {strides = array<i32>} : memref<121x16xf32, #tpu.memory_space<vmem>>, vector<11x16xf32>,
    %194 = vector.extract_strided_slice %184 {offsets = [3, 0, 0], sizes = [1, 11, 16], strides = [1, 1, 1]} : vector<11x11x16xf32> to vector<1x11x16xf32>
    %195 = vector.shape_cast %194 : vector<1x11x16xf32> to vector<11x16xf32>
    %c33 = arith.constant 33 : index
    %c0_11 = arith.constant 0 : index
    %196 = vector.load %arg8[%c33, %c0_11] : memref<121x16xf32, #tpu.memory_space<vmem>>, vector<11x16xf32>
    tpu.vector_store %arg8[%c33, %c0_11], %195 {strides = array<i32>} : memref<121x16xf32, #tpu.memory_space<vmem>>, vector<11x16xf32>,
    %197 = vector.extract_strided_slice %184 {offsets = [4, 0, 0], sizes = [1, 11, 16], strides = [1, 1, 1]} : vector<11x11x16xf32> to vector<1x11x16xf32>
    %198 = vector.shape_cast %197 : vector<1x11x16xf32> to vector<11x16xf32>
    %c44 = arith.constant 44 : index
    %c0_12 = arith.constant 0 : index
    %199 = vector.load %arg8[%c44, %c0_12] : memref<121x16xf32, #tpu.memory_space<vmem>>, vector<11x16xf32>
    tpu.vector_store %arg8[%c44, %c0_12], %198 {strides = array<i32>} : memref<121x16xf32, #tpu.memory_space<vmem>>, vector<11x16xf32>,
    %200 = vector.extract_strided_slice %184 {offsets = [5, 0, 0], sizes = [1, 11, 16], strides = [1, 1, 1]} : vector<11x11x16xf32> to vector<1x11x16xf32>
    %201 = vector.shape_cast %200 : vector<1x11x16xf32> to vector<11x16xf32>
    %c55 = arith.constant 55 : index
    %c0_13 = arith.constant 0 : index
    %202 = vector.load %arg8[%c55, %c0_13] : memref<121x16xf32, #tpu.memory_space<vmem>>, vector<11x16xf32>
    tpu.vector_store %arg8[%c55, %c0_13], %201 {strides = array<i32>} : memref<121x16xf32, #tpu.memory_space<vmem>>, vector<11x16xf32>,
    %203 = vector.extract_strided_slice %184 {offsets = [6, 0, 0], sizes = [1, 11, 16], strides = [1, 1, 1]} : vector<11x11x16xf32> to vector<1x11x16xf32>
    %204 = vector.shape_cast %203 : vector<1x11x16xf32> to vector<11x16xf32>
    %c66 = arith.constant 66 : index
    %c0_14 = arith.constant 0 : index
    %205 = vector.load %arg8[%c66, %c0_14] : memref<121x16xf32, #tpu.memory_space<vmem>>, vector<11x16xf32>
    tpu.vector_store %arg8[%c66, %c0_14], %204 {strides = array<i32>} : memref<121x16xf32, #tpu.memory_space<vmem>>, vector<11x16xf32>,
    %206 = vector.extract_strided_slice %184 {offsets = [7, 0, 0], sizes = [1, 11, 16], strides = [1, 1, 1]} : vector<11x11x16xf32> to vector<1x11x16xf32>
    %207 = vector.shape_cast %206 : vector<1x11x16xf32> to vector<11x16xf32>
    %c77 = arith.constant 77 : index
    %c0_15 = arith.constant 0 : index
    %208 = vector.load %arg8[%c77, %c0_15] : memref<121x16xf32, #tpu.memory_space<vmem>>, vector<11x16xf32>
    tpu.vector_store %arg8[%c77, %c0_15], %207 {strides = array<i32>} : memref<121x16xf32, #tpu.memory_space<vmem>>, vector<11x16xf32>,
    %209 = vector.extract_strided_slice %184 {offsets = [8, 0, 0], sizes = [1, 11, 16], strides = [1, 1, 1]} : vector<11x11x16xf32> to vector<1x11x16xf32>
    %210 = vector.shape_cast %209 : vector<1x11x16xf32> to vector<11x16xf32>
    %c88 = arith.constant 88 : index
    %c0_16 = arith.constant 0 : index
    %211 = vector.load %arg8[%c88, %c0_16] : memref<121x16xf32, #tpu.memory_space<vmem>>, vector<11x16xf32>
    tpu.vector_store %arg8[%c88, %c0_16], %210 {strides = array<i32>} : memref<121x16xf32, #tpu.memory_space<vmem>>, vector<11x16xf32>,
    %212 = vector.extract_strided_slice %184 {offsets = [9, 0, 0], sizes = [1, 11, 16], strides = [1, 1, 1]} : vector<11x11x16xf32> to vector<1x11x16xf32>
    %213 = vector.shape_cast %212 : vector<1x11x16xf32> to vector<11x16xf32>
    %c99 = arith.constant 99 : index
    %c0_17 = arith.constant 0 : index
    %214 = vector.load %arg8[%c99, %c0_17] : memref<121x16xf32, #tpu.memory_space<vmem>>, vector<11x16xf32>
    tpu.vector_store %arg8[%c99, %c0_17], %213 {strides = array<i32>} : memref<121x16xf32, #tpu.memory_space<vmem>>, vector<11x16xf32>,
    %215 = vector.extract_strided_slice %184 {offsets = [10, 0, 0], sizes = [1, 11, 16], strides = [1, 1, 1]} : vector<11x11x16xf32> to vector<1x11x16xf32>
    %216 = vector.shape_cast %215 : vector<1x11x16xf32> to vector<11x16xf32>
    %c110 = arith.constant 110 : index
    %c0_18 = arith.constant 0 : index
    %217 = vector.load %arg8[%c110, %c0_18] : memref<121x16xf32, #tpu.memory_space<vmem>>, vector<11x16xf32>
    tpu.vector_store %arg8[%c110, %c0_18], %216 {strides = array<i32>} : memref<121x16xf32, #tpu.memory_space<vmem>>, vector<11x16xf32>,
    %c0_19 = arith.constant 0 : index
    %c0_20 = arith.constant 0 : index
    %218 = vector.load %arg8[%c0_19, %c0_20] : memref<121x16xf32, #tpu.memory_space<vmem>>, vector<121x16xf32>
    %c0_21 = arith.constant 0 : index
    %c0_22 = arith.constant 0 : index
    %219 = vector.load %arg3[%c0_21, %c0_22] : memref<16x16xf32, #tpu.memory_space<vmem>>, vector<16x16xf32>
    %cst_23 = arith.constant dense<0.000000e+00> : vector<121x16xf32>
    %220 = tpu.matmul %218, %219, %cst_23 {dimension_numbers = #tpu.dot_dimension_numbers<[1], [0], [0], [1], [0, 0, 1, 1], [], []>} : vector<121x16xf32>, vector<16x16xf32>, vector<121x16xf32> -> vector<121x16xf32>
    %c0_24 = arith.constant 0 : index
    %c0_25 = arith.constant 0 : index
    %221 = vector.load %arg4[%c0_24, %c0_25] : memref<1x16xf32, #tpu.memory_space<vmem>>, vector<1x16xf32>
    %222 = vector.broadcast %221 : vector<1x16xf32> to vector<121x16xf32>
    %223 = arith.addf %220, %222 : vector<121x16xf32>
    %cst_26 = arith.constant 0.000000e+00 : f32
    %224 = vector.broadcast %cst_26 : f32 to vector<121x16xf32>
    %225 = arith.maximumf %223, %224 : vector<121x16xf32>
    %c0_27 = arith.constant 0 : index
    %c0_28 = arith.constant 0 : index
    %226 = vector.load %arg5[%c0_27, %c0_28] : memref<16x4xf32, #tpu.memory_space<vmem>>, vector<16x4xf32>
    %cst_29 = arith.constant dense<0.000000e+00> : vector<121x4xf32>
    %227 = tpu.matmul %225, %226, %cst_29 {dimension_numbers = #tpu.dot_dimension_numbers<[1], [0], [0], [1], [0, 0, 1, 1], [], []>} : vector<121x16xf32>, vector<16x4xf32>, vector<121x4xf32> -> vector<121x4xf32>
    %c0_30 = arith.constant 0 : index
    %c0_31 = arith.constant 0 : index
    %228 = vector.load %arg6[%c0_30, %c0_31] : memref<1x4xf32, #tpu.memory_space<vmem>>, vector<1x4xf32>
    %229 = vector.broadcast %228 : vector<1x4xf32> to vector<121x4xf32>
    %230 = arith.addf %227, %229 : vector<121x4xf32>
    %c0_32 = arith.constant 0 : index
    %c0_33 = arith.constant 0 : index
    %c0_34 = arith.constant 0 : index
    %231 = vector.load %arg7[%c0_32, %c0_33, %c0_34] : memref<1x121x4xf32, #tpu.memory_space<vmem>>, vector<1x121x4xf32>
    %232 = vector.shape_cast %231 : vector<1x121x4xf32> to vector<121x4xf32>
    %233 = vector.shape_cast %230 : vector<121x4xf32> to vector<1x121x4xf32>
    tpu.vector_store %arg7[%c0_32, %c0_33, %c0_34], %233 {strides = array<i32>} : memref<1x121x4xf32, #tpu.memory_space<vmem>>, vector<1x121x4xf32>,
    return
  }
  func.func @transform_0(%arg0: i32) -> (i32, i32, i32, i32) {
    %c0_i32 = arith.constant 0 : i32
    %c0_i32_0 = arith.constant 0 : i32
    %c0_i32_1 = arith.constant 0 : i32
    %c0_i32_2 = arith.constant 0 : i32
    return %arg0, %c0_i32, %c0_i32_0, %c0_i32_1 : i32, i32, i32, i32
  }
  func.func @transform_1(%arg0: i32) -> (i32, i32, i32, i32) {
    %c0_i32 = arith.constant 0 : i32
    %c0_i32_0 = arith.constant 0 : i32
    %c0_i32_1 = arith.constant 0 : i32
    %c0_i32_2 = arith.constant 0 : i32
    return %arg0, %c0_i32, %c0_i32_0, %c0_i32_1 : i32, i32, i32, i32
  }
  func.func @transform_2(%arg0: i32) -> (i32, i32) {
    %c0_i32 = arith.constant 0 : i32
    %c0_i32_0 = arith.constant 0 : i32
    %c0_i32_1 = arith.constant 0 : i32
    return %c0_i32, %c0_i32_0 : i32, i32
  }
  func.func @transform_3(%arg0: i32) -> (i32, i32) {
    %c0_i32 = arith.constant 0 : i32
    %c0_i32_0 = arith.constant 0 : i32
    %c0_i32_1 = arith.constant 0 : i32
    return %c0_i32, %c0_i32_0 : i32, i32
  }
  func.func @transform_4(%arg0: i32) -> (i32, i32) {
    %c0_i32 = arith.constant 0 : i32
    %c0_i32_0 = arith.constant 0 : i32
    %c0_i32_1 = arith.constant 0 : i32
    return %c0_i32, %c0_i32_0 : i32, i32
  }
  func.func @transform_5(%arg0: i32) -> (i32, i32) {
    %c0_i32 = arith.constant 0 : i32
    %c0_i32_0 = arith.constant 0 : i32
    %c0_i32_1 = arith.constant 0 : i32
    return %c0_i32, %c0_i32_0 : i32, i32
  }
  func.func @transform_6(%arg0: i32) -> (i32, i32, i32) {
    %c0_i32 = arith.constant 0 : i32
    %c0_i32_0 = arith.constant 0 : i32
    %c0_i32_1 = arith.constant 0 : i32
    return %arg0, %c0_i32, %c0_i32_0 : i32, i32, i32
  }
}

</mosaic_0001>

<llo_original>
// kernel: depthwise_xcorr_forward.3
$region0: #{depthwise_xcorr_forward.3}
  #allocation0 [shape = 'u32[]', space=smem, size = 0x4, offset = 0x4, fixed_abs, tag = 'smem constant byte address 0x4 - core index']
  #allocation1 [shape = 'u32[72,128]{1,0:T(1,128)}', space=vmem, size = 0x9000, scoped, tag = 'internal scratch']
  #allocation2 [shape = 'f32[7,7,16]{2,1,0:T(8,128)}', space=vmem, size = 0x7000, scoped, tag = 'scratch operand']
  %s0 = inlined_call_operand.vmem [shape: f32[2,7,7,8], index: 0, kind: input, shape index: {}]
  %s1 = inlined_call_operand.vmem [shape: f32[8,16], index: 1, kind: input, shape index: {}]
  %s2 = inlined_call_operand.vmem [shape: f32[1,16], index: 2, kind: input, shape index: {}]
  %s3 = inlined_call_operand.vmem [shape: f32[3,3,16], index: 3, kind: input, shape index: {}]
  %s4 = inlined_call_operand.vmem [shape: f32[1,16], index: 4, kind: input, shape index: {}]
  %s5 = inlined_call_operand.vmem [shape: f32[2,5,5,16], index: 5, kind: output, shape index: {}]
  %s6 = sld [smem:[#allocation0]]
  $region53: #{depthwise_xcorr_forward.3} parent=0
    _
  %s8 = ssub.s32 1, %s6
  %s9 = scalar_select 0, %s8, %s6
  loop: start=0, step=1, limit=4
  $region2: #{depthwise_xcorr_forward.3} parent=0 // loop_pre_header
    _
  $region3: #{depthwise_xcorr_forward.3} parent=0 // loop_header
    %s11 = sphi 0, %s15
    %p12 = scmp.ge.s32.totalorder %s11, 4
    %s21 = sphi 0, %s23
    %s24 = sphi 0, %s21
    %s25 = sphi 0, %s24
    %s41 = sphi 0, %s25
    %s45 = sphi 0, %s45
    %s47 = sphi 0, %s45
    %s48 = sphi 0, %s47
    %s62 = sphi 0, %s48
    %s66 = sphi 0, %s66
    %s68 = sphi 0, %s66
    %s69 = sphi 0, %s68
    %s83 = sphi 0, %s69
    %s87 = sphi 0, %s87
    %s89 = sphi 0, %s87
    %s90 = sphi 0, %s89
    %s104 = sphi 0, %s90
    %s108 = sphi 0, %s108
    %s110 = sphi 0, %s108
    %s111 = sphi 0, %s110
    %s125 = sphi 0, %s111
    %s131 = sphi 0, %s133
    %s134 = sphi 0, %s131
    %s135 = sphi 0, %s134
    %s151 = sphi 0, %s135
  $region4: #{depthwise_xcorr_forward.3} parent=0 // loop_header_branch
    %14 = sbr.rel (%p12) target = $region8
  $region5: #{depthwise_xcorr_forward.3} parent=0 // loop_body
    %s16 = ssub.s32 %s11, 1
    %s17 = ssub.s32 %s11, 2
    %s18 = sadd.s32 %s11, 1
    %s19 = ssub.s32 %s11, %s18
    %p20 = scmp.eq.s32.totalorder %s19, 0
    %s22 = sadd.s32 %s21, 1
    %s23 = scalar_select %p20, %s21, %s22
    %p26 = pneg %p20
    %p27 = scmp.eq.s32.totalorder %s11, 1
    %p28 = por %p26, %p27
    %p29 = scmp.ne.s32.totalorder %s21, %s24
    %p30 = scmp.eq.s32.totalorder %s11, 0
    %p31 = por %p29, %p30
    %p32 = scmp.ne.s32.totalorder %s21, %s24
    %p33 = scmp.eq.s32.totalorder %s16, 1
    %p34 = por %p32, %p33
    %p35 = scmp.ne.s32.totalorder %s24, %s25
    %p36 = scmp.eq.s32.totalorder %s16, 0
    %p37 = por %p35, %p36
    %p38 = scmp.ne.s32.totalorder %s24, %s25
    %p39 = scmp.eq.s32.totalorder %s17, 1
    %p40 = por %p38, %p39
    %p42 = scmp.ne.s32.totalorder %s25, %s41
    %p43 = scmp.eq.s32.totalorder %s17, 0
    %p44 = por %p42, %p43
    %s46 = sadd.s32 %s45, 1
    %p49 = scmp.eq.s32.totalorder %s11, 1
    %p50 = scmp.ne.s32.totalorder %s45, %s47
    %p51 = scmp.eq.s32.totalorder %s11, 0
    %p52 = por %p50, %p51
    %p53 = scmp.ne.s32.totalorder %s45, %s47
    %p54 = scmp.eq.s32.totalorder %s16, 1
    %p55 = por %p53, %p54
    %p56 = scmp.ne.s32.totalorder %s47, %s48
    %p57 = scmp.eq.s32.totalorder %s16, 0
    %p58 = por %p56, %p57
    %p59 = scmp.ne.s32.totalorder %s47, %s48
    %p60 = scmp.eq.s32.totalorder %s17, 1
    %p61 = por %p59, %p60
    %p63 = scmp.ne.s32.totalorder %s48, %s62
    %p64 = scmp.eq.s32.totalorder %s17, 0
    %p65 = por %p63, %p64
    %s67 = sadd.s32 %s66, 1
    %p70 = scmp.eq.s32.totalorder %s11, 1
    %p71 = scmp.ne.s32.totalorder %s66, %s68
    %p72 = scmp.eq.s32.totalorder %s11, 0
    %p73 = por %p71, %p72
    %p74 = scmp.ne.s32.totalorder %s66, %s68
    %p75 = scmp.eq.s32.totalorder %s16, 1
    %p76 = por %p74, %p75
    %p77 = scmp.ne.s32.totalorder %s68, %s69
    %p78 = scmp.eq.s32.totalorder %s16, 0
    %p79 = por %p77, %p78
    %p80 = scmp.ne.s32.totalorder %s68, %s69
    %p81 = scmp.eq.s32.totalorder %s17, 1
    %p82 = por %p80, %p81
    %p84 = scmp.ne.s32.totalorder %s69, %s83
    %p85 = scmp.eq.s32.totalorder %s17, 0
    %p86 = por %p84, %p85
    %s88 = sadd.s32 %s87, 1
    %p91 = scmp.eq.s32.totalorder %s11, 1
    %p92 = scmp.ne.s32.totalorder %s87, %s89
    %p93 = scmp.eq.s32.totalorder %s11, 0
    %p94 = por %p92, %p93
    %p95 = scmp.ne.s32.totalorder %s87, %s89
    %p96 = scmp.eq.s32.totalorder %s16, 1
    %p97 = por %p95, %p96
    %p98 = scmp.ne.s32.totalorder %s89, %s90
    %p99 = scmp.eq.s32.totalorder %s16, 0
    %p100 = por %p98, %p99
    %p101 = scmp.ne.s32.totalorder %s89, %s90
    %p102 = scmp.eq.s32.totalorder %s17, 1
    %p103 = por %p101, %p102
    %p105 = scmp.ne.s32.totalorder %s90, %s104
    %p106 = scmp.eq.s32.totalorder %s17, 0
    %p107 = por %p105, %p106
    %s109 = sadd.s32 %s108, 1
    %p112 = scmp.eq.s32.totalorder %s11, 1
    %p113 = scmp.ne.s32.totalorder %s108, %s110
    %p114 = scmp.eq.s32.totalorder %s11, 0
    %p115 = por %p113, %p114
    %p116 = scmp.ne.s32.totalorder %s108, %s110
    %p117 = scmp.eq.s32.totalorder %s16, 1
    %p118 = por %p116, %p117
    %p119 = scmp.ne.s32.totalorder %s110, %s111
    %p120 = scmp.eq.s32.totalorder %s16, 0
    %p121 = por %p119, %p120
    %p122 = scmp.ne.s32.totalorder %s110, %s111
    %p123 = scmp.eq.s32.totalorder %s17, 1
    %p124 = por %p122, %p123
    %p126 = scmp.ne.s32.totalorder %s111, %s125
    %p127 = scmp.eq.s32.totalorder %s17, 0
    %p128 = por %p126, %p127
    %s129 = ssub.s32 %s11, %s18
    %p130 = scmp.eq.s32.totalorder %s129, 0
    %s132 = sadd.s32 %s131, 1
    %s133 = scalar_select %p130, %s131, %s132
    %p136 = pneg %p130
    %p137 = scmp.eq.s32.totalorder %s11, 1
    %p138 = por %p136, %p137
    %p139 = scmp.ne.s32.totalorder %s131, %s134
    %p140 = scmp.eq.s32.totalorder %s11, 0
    %p141 = por %p139, %p140
    %p142 = scmp.ne.s32.totalorder %s131, %s134
    %p143 = scmp.eq.s32.totalorder %s16, 1
    %p144 = por %p142, %p143
    %p145 = scmp.ne.s32.totalorder %s134, %s135
    %p146 = scmp.eq.s32.totalorder %s16, 0
    %p147 = por %p145, %p146
    %p148 = scmp.ne.s32.totalorder %s134, %s135
    %p149 = scmp.eq.s32.totalorder %s17, 1
    %p150 = por %p148, %p149
    %p152 = scmp.ne.s32.totalorder %s135, %s151
    %p153 = scmp.eq.s32.totalorder %s17, 0
    %p154 = por %p152, %p153
    %p155 = scmp.le.s32.totalorder 1, %s11
    %p156 = scmp.lt.s32.totalorder %s11, 3
    %p157 = pnand %p155, %p156
    %p158 = pneg %p157
    // Predicated region
    $region9: #{depthwise_xcorr_forward.3} parent=5 // pred_check
      _
    $region10: #{depthwise_xcorr_forward.3} parent=5 // pred_check_branch
      %160 = sbr.rel (%p157) target = $region12
    $region11: #{depthwise_xcorr_forward.3} parent=5 // pred_region
      %s161 = ssub.s32 %s11, 1
      // Predicated region
      $region13: #{depthwise_xcorr_forward.3} parent=11 // pred_check
        %p162 = pneg %p58
      $region14: #{depthwise_xcorr_forward.3} parent=11 // pred_check_branch
        %164 = sbr.rel (%p162) target = $region16
      $region15: #{depthwise_xcorr_forward.3} parent=11 // pred_region
        _
      $region16: #{depthwise_xcorr_forward.3} parent=11 // pred_fallthru
        _
      // Predicated region
      $region17: #{depthwise_xcorr_forward.3} parent=11 // pred_check
        %p165 = pneg %p79
      $region18: #{depthwise_xcorr_forward.3} parent=11 // pred_check_branch
        %167 = sbr.rel (%p165) target = $region20
      $region19: #{depthwise_xcorr_forward.3} parent=11 // pred_region
        _
      $region20: #{depthwise_xcorr_forward.3} parent=11 // pred_fallthru
        _
      // Predicated region
      $region21: #{depthwise_xcorr_forward.3} parent=11 // pred_check
        %p168 = pneg %p100
      $region22: #{depthwise_xcorr_forward.3} parent=11 // pred_check_branch
        %170 = sbr.rel (%p168) target = $region24
      $region23: #{depthwise_xcorr_forward.3} parent=11 // pred_region
        _
      $region24: #{depthwise_xcorr_forward.3} parent=11 // pred_fallthru
        _
      // Predicated region
      $region25: #{depthwise_xcorr_forward.3} parent=11 // pred_check
        %p171 = pneg %p121
      $region26: #{depthwise_xcorr_forward.3} parent=11 // pred_check_branch
        %173 = sbr.rel (%p171) target = $region28
      $region27: #{depthwise_xcorr_forward.3} parent=11 // pred_region
        _
      $region28: #{depthwise_xcorr_forward.3} parent=11 // pred_fallthru
        _
    $region12: #{depthwise_xcorr_forward.3} parent=5 // pred_fallthru
      _
    %p174 = scmp.lt.s32.totalorder %s11, 2
    // Predicated region
    $region29: #{depthwise_xcorr_forward.3} parent=5 // pred_check
      %p175 = pneg %p174
    $region30: #{depthwise_xcorr_forward.3} parent=5 // pred_check_branch
      %177 = sbr.rel (%p175) target = $region32
    $region31: #{depthwise_xcorr_forward.3} parent=5 // pred_region
      // Predicated region
      $region33: #{depthwise_xcorr_forward.3} parent=31 // pred_check
        %p178 = pneg %p31
      $region34: #{depthwise_xcorr_forward.3} parent=31 // pred_check_branch
        %180 = sbr.rel (%p178) target = $region36
      $region35: #{depthwise_xcorr_forward.3} parent=31 // pred_region
        %p181 = scmp.lt.s32.totalorder %s11, 1
        %s182 = scalar_select %p181, %s11, 1
        %s183 = smul.addr %s182, 7
        %s184 = smul.addr %s183, 8
        %s185 = scalar_lea.vmem %s0, %s184
      $region36: #{depthwise_xcorr_forward.3} parent=31 // pred_fallthru
        _
    $region32: #{depthwise_xcorr_forward.3} parent=5 // pred_fallthru
      _
    %p186 = scmp.le.s32.totalorder 1, %s11
    %p187 = scmp.lt.s32.totalorder %s11, 3
    %p188 = pnand %p186, %p187
    %p189 = pneg %p188
    // Predicated region
    $region37: #{depthwise_xcorr_forward.3} parent=5 // pred_check
      _
    $region38: #{depthwise_xcorr_forward.3} parent=5 // pred_check_branch
      %191 = sbr.rel (%p188) target = $region40
    $region39: #{depthwise_xcorr_forward.3} parent=5 // pred_region
      %s192 = ssub.s32 %s11, 1
      %p193 = scmp.lt.s32.totalorder %s16, 1
      %s194 = scalar_select %p193, %s16, 1
      %s195 = smul.addr %s194, 7
      %s196 = smul.addr %s195, 8
      %s197 = scalar_lea.vmem %s0, %s196
      %p198 = pneg %p37
      %p199 = pneg %p34
      %p200 = pneg %p58
      %p201 = pneg %p55
      %p202 = pneg %p79
      %p203 = pneg %p76
      %p204 = pneg %p100
      %p205 = pneg %p97
      %p206 = pneg %p121
      %p207 = pneg %p118
      %p208 = pneg %p147
      %p209 = pneg %p144
      %p210 = scmp.lt.s32.totalorder %s16, 1
      %s211 = scalar_select %p210, %s16, 1
      %s212 = smul.addr %s211, 5
      %s213 = smul.addr %s212, 8
      %s214 = scalar_lea.vmem %s5, %s213
      %p215 = scmp.lt.s32.totalorder %s16, 1
      %s216 = scalar_select %p215, %s16, 1
      %s217 = smul.addr %s216, 7
      %s218 = smul.addr %s217, 8
      %s219 = scalar_lea.vmem %s0, %s218
      %p220 = scmp.lt.s32.totalorder %s16, 1
      %s221 = scalar_select %p220, %s16, 1
      %s222 = smul.addr %s221, 5
      %s223 = smul.addr %s222, 8
      %s224 = scalar_lea.vmem %s5, %s223
      %v225 = vld [vmem:[%s219] sm:$0x7f]
      %v226 = vld [vmem:[%s219 + $0x8] sm:$0x7f]
      %v227 = vld [vmem:[%s219 + $0x10] sm:$0x7f]
      %v228 = vld [vmem:[%s219 + $0x18] sm:$0x7f]
      %v229 = vld [vmem:[%s219 + $0x20] sm:$0x7f]
      %v230 = vld [vmem:[%s219 + $0x28] sm:$0x7f]
      %v231 = vld [vmem:[%s219 + $0x30] sm:$0x7f]
      %v232 = vld [vmem:[%s1] sm:$0xff]
      %v233 = vld [vmem:[%s2] sm:$0x1]
      %v235 = vperm.slane %v233, 0
      %vm237 = vcmask 64512
      %v239 = vsel %vm237, %v225, 0
      %241 = vmatpush.msra.mxu0 0.0
      %242 = vmatpush.msra.mxu0 0.0
      %243 = vmatpush.msra.mxu0 0.0
      %244 = vmatpush.msra.mxu0 0.0
      %245 = vmatpush.msra.mxu0 0.0
      %246 = vmatpush.msra.mxu0 0.0
      %247 = vmatpush.msra.mxu0 0.0
      %248 = vmatpush.msra.mxu0 0.0
      %249 = vmatpush.msra.mxu0 0.0
      %250 = vmatpush.msra.mxu0 0.0
      %251 = vmatpush.msra.mxu0 0.0
      %252 = vmatpush.msra.mxu0 0.0
      %253 = vmatpush.msra.mxu0 0.0
      %254 = vmatpush.msra.mxu0 0.0
      %255 = vmatpush.msra.mxu0 0.0
      %256 = vmatpush.msra.mxu0 %v232
      %257 = vmatmul.f32.gmra.mxu0 %v239
      %v258 = vpop.f32.mrf.mxu0
      %v259 = vadd.f32 %v235, %v258
      %260 = vdwg.mxu0
      %v261 = vmax.f32 %v259, 0.0
      %vm262 = vcmask 129024
      %263 = vst.msk [vmem:[#allocation2] sm:$0x7f] %vm262, %v261
      %v265 = vsel %vm237, %v226, 0
      %267 = vmatpush.msra.mxu0 0.0
      %268 = vmatpush.msra.mxu0 0.0
      %269 = vmatpush.msra.mxu0 0.0
      %270 = vmatpush.msra.mxu0 0.0
      %271 = vmatpush.msra.mxu0 0.0
      %272 = vmatpush.msra.mxu0 0.0
      %273 = vmatpush.msra.mxu0 0.0
      %274 = vmatpush.msra.mxu0 0.0
      %275 = vmatpush.msra.mxu0 0.0
      %276 = vmatpush.msra.mxu0 0.0
      %277 = vmatpush.msra.mxu0 0.0
      %278 = vmatpush.msra.mxu0 0.0
      %279 = vmatpush.msra.mxu0 0.0
      %280 = vmatpush.msra.mxu0 0.0
      %281 = vmatpush.msra.mxu0 0.0
      %282 = vmatpush.msra.mxu0 %v232
      %283 = vmatmul.f32.gmra.mxu0 %v265
      %v284 = vpop.f32.mrf.mxu0
      %v285 = vadd.f32 %v235, %v284
      %286 = vdwg.mxu0
      %v287 = vmax.f32 %v285, 0.0
      %s288 = scalar_lea.vmem [#allocation2], 8
      %289 = vst.msk [vmem:[%s288] sm:$0x7f] %vm262, %v287
      %v291 = vsel %vm237, %v227, 0
      %293 = vmatpush.msra.mxu0 0.0
      %294 = vmatpush.msra.mxu0 0.0
      %295 = vmatpush.msra.mxu0 0.0
      %296 = vmatpush.msra.mxu0 0.0
      %297 = vmatpush.msra.mxu0 0.0
      %298 = vmatpush.msra.mxu0 0.0
      %299 = vmatpush.msra.mxu0 0.0
      %300 = vmatpush.msra.mxu0 0.0
      %301 = vmatpush.msra.mxu0 0.0
      %302 = vmatpush.msra.mxu0 0.0
      %303 = vmatpush.msra.mxu0 0.0
      %304 = vmatpush.msra.mxu0 0.0
      %305 = vmatpush.msra.mxu0 0.0
      %306 = vmatpush.msra.mxu0 0.0
      %307 = vmatpush.msra.mxu0 0.0
      %308 = vmatpush.msra.mxu0 %v232
      %309 = vmatmul.f32.gmra.mxu0 %v291
      %v310 = vpop.f32.mrf.mxu0
      %v311 = vadd.f32 %v235, %v310
      %312 = vdwg.mxu0
      %v313 = vmax.f32 %v311, 0.0
      %s314 = scalar_lea.vmem [#allocation2], 16
      %315 = vst.msk [vmem:[%s314] sm:$0x7f] %vm262, %v313
      %v317 = vsel %vm237, %v228, 0
      %319 = vmatpush.msra.mxu0 0.0
      %320 = vmatpush.msra.mxu0 0.0
      %321 = vmatpush.msra.mxu0 0.0
      %322 = vmatpush.msra.mxu0 0.0
      %323 = vmatpush.msra.mxu0 0.0
      %324 = vmatpush.msra.mxu0 0.0
      %325 = vmatpush.msra.mxu0 0.0
      %326 = vmatpush.msra.mxu0 0.0
      %327 = vmatpush.msra.mxu0 0.0
      %328 = vmatpush.msra.mxu0 0.0
      %329 = vmatpush.msra.mxu0 0.0
      %330 = vmatpush.msra.mxu0 0.0
      %331 = vmatpush.msra.mxu0 0.0
      %332 = vmatpush.msra.mxu0 0.0
      %333 = vmatpush.msra.mxu0 0.0
      %334 = vmatpush.msra.mxu0 %v232
      %335 = vmatmul.f32.gmra.mxu0 %v317
      %v336 = vpop.f32.mrf.mxu0
      %v337 = vadd.f32 %v235, %v336
      %338 = vdwg.mxu0
      %v339 = vmax.f32 %v337, 0.0
      %s340 = scalar_lea.vmem [#allocation2], 24
      %341 = vst.msk [vmem:[%s340] sm:$0x7f] %vm262, %v339
      %v343 = vsel %vm237, %v229, 0
      %345 = vmatpush.msra.mxu0 0.0
      %346 = vmatpush.msra.mxu0 0.0
      %347 = vmatpush.msra.mxu0 0.0
      %348 = vmatpush.msra.mxu0 0.0
      %349 = vmatpush.msra.mxu0 0.0
      %350 = vmatpush.msra.mxu0 0.0
      %351 = vmatpush.msra.mxu0 0.0
      %352 = vmatpush.msra.mxu0 0.0
      %353 = vmatpush.msra.mxu0 0.0
      %354 = vmatpush.msra.mxu0 0.0
      %355 = vmatpush.msra.mxu0 0.0
      %356 = vmatpush.msra.mxu0 0.0
      %357 = vmatpush.msra.mxu0 0.0
      %358 = vmatpush.msra.mxu0 0.0
      %359 = vmatpush.msra.mxu0 0.0
      %360 = vmatpush.msra.mxu0 %v232
      %361 = vmatmul.f32.gmra.mxu0 %v343
      %v362 = vpop.f32.mrf.mxu0
      %v363 = vadd.f32 %v235, %v362
      %364 = vdwg.mxu0
      %v365 = vmax.f32 %v363, 0.0
      %s366 = scalar_lea.vmem [#allocation2], 32
      %367 = vst.msk [vmem:[%s366] sm:$0x7f] %vm262, %v365
      %v369 = vsel %vm237, %v230, 0
      %371 = vmatpush.msra.mxu0 0.0
      %372 = vmatpush.msra.mxu0 0.0
      %373 = vmatpush.msra.mxu0 0.0
      %374 = vmatpush.msra.mxu0 0.0
      %375 = vmatpush.msra.mxu0 0.0
      %376 = vmatpush.msra.mxu0 0.0
      %377 = vmatpush.msra.mxu0 0.0
      %378 = vmatpush.msra.mxu0 0.0
      %379 = vmatpush.msra.mxu0 0.0
      %380 = vmatpush.msra.mxu0 0.0
      %381 = vmatpush.msra.mxu0 0.0
      %382 = vmatpush.msra.mxu0 0.0
      %383 = vmatpush.msra.mxu0 0.0
      %384 = vmatpush.msra.mxu0 0.0
      %385 = vmatpush.msra.mxu0 0.0
      %386 = vmatpush.msra.mxu0 %v232
      %387 = vmatmul.f32.gmra.mxu0 %v369
      %v388 = vpop.f32.mrf.mxu0
      %v389 = vadd.f32 %v235, %v388
      %390 = vdwg.mxu0
      %v391 = vmax.f32 %v389, 0.0
      %s392 = scalar_lea.vmem [#allocation2], 40
      %393 = vst.msk [vmem:[%s392] sm:$0x7f] %vm262, %v391
      %v395 = vsel %vm237, %v231, 0
      %397 = vmatpush.msra.mxu0 0.0
      %398 = vmatpush.msra.mxu0 0.0
      %399 = vmatpush.msra.mxu0 0.0
      %400 = vmatpush.msra.mxu0 0.0
      %401 = vmatpush.msra.mxu0 0.0
      %402 = vmatpush.msra.mxu0 0.0
      %403 = vmatpush.msra.mxu0 0.0
      %404 = vmatpush.msra.mxu0 0.0
      %405 = vmatpush.msra.mxu0 0.0
      %406 = vmatpush.msra.mxu0 0.0
      %407 = vmatpush.msra.mxu0 0.0
      %408 = vmatpush.msra.mxu0 0.0
      %409 = vmatpush.msra.mxu0 0.0
      %410 = vmatpush.msra.mxu0 0.0
      %411 = vmatpush.msra.mxu0 0.0
      %412 = vmatpush.msra.mxu0 %v232
      %413 = vmatmul.f32.gmra.mxu0 %v395
      %v414 = vpop.f32.mrf.mxu0
      %v415 = vadd.f32 %v235, %v414
      %416 = vdwg.mxu0
      %v417 = vmax.f32 %v415, 0.0
      %s418 = scalar_lea.vmem [#allocation2], 48
      %419 = vst.msk [vmem:[%s418] sm:$0x7f] %vm262, %v417
      %v420 = vld [vmem:[#allocation2] sm:$0x7f]
      %v421 = vld [vmem:[#allocation2 + $0x8] sm:$0x7f]
      %v422 = vld [vmem:[#allocation2 + $0x10] sm:$0x7f]
      %v423 = vld [vmem:[#allocation2 + $0x18] sm:$0x7f]
      %v424 = vld [vmem:[#allocation2 + $0x20] sm:$0x7f]
      %v425 = vld [vmem:[#allocation2 + $0x28] sm:$0x7f]
      %v426 = vld [vmem:[#allocation2 + $0x30] sm:$0x7f]
      %v427 = vld [vmem:[%s3] sm:$0x7]
      %v428 = vld [vmem:[%s3 + $0x4] sm:$0x7]
      %v429 = vld [vmem:[%s3 + $0x8] sm:$0x7]
      %v430 = vperm.slane %v427, 0
      %v431 = vmul.f32 %v420, %v430
      %v432 = vmul.f32 %v421, %v430
      %v433 = vmul.f32 %v422, %v430
      %v434 = vmul.f32 %v423, %v430
      %v435 = vmul.f32 %v424, %v430
      %v436 = vadd.f32 %v431, 0.0
      %v437 = vadd.f32 %v432, 0.0
      %v438 = vadd.f32 %v433, 0.0
      %v439 = vadd.f32 %v434, 0.0
      %v440 = vadd.f32 %v435, 0.0
      %v441 = vperm.slane %v427, 1
      %v442 = vmul.f32 %v420, %v441
      %v443 = vmul.f32 %v421, %v441
      %v444 = vmul.f32 %v422, %v441
      %v445 = vmul.f32 %v423, %v441
      %v446 = vmul.f32 %v424, %v441
      %v452 = vrot.slane %v442, 1
      %v453 = vrot.slane %v443, 1
      %v454 = vrot.slane %v444, 1
      %v455 = vrot.slane %v445, 1
      %v456 = vrot.slane %v446, 1
      %v462 = vadd.f32 %v436, %v452
      %v463 = vadd.f32 %v437, %v453
      %v464 = vadd.f32 %v438, %v454
      %v465 = vadd.f32 %v439, %v455
      %v466 = vadd.f32 %v440, %v456
      %v467 = vperm.slane %v427, 2
      %v468 = vmul.f32 %v420, %v467
      %v469 = vmul.f32 %v421, %v467
      %v470 = vmul.f32 %v422, %v467
      %v471 = vmul.f32 %v423, %v467
      %v472 = vmul.f32 %v424, %v467
      %v478 = vrot.slane %v468, 2
      %v479 = vrot.slane %v469, 2
      %v480 = vrot.slane %v470, 2
      %v481 = vrot.slane %v471, 2
      %v482 = vrot.slane %v472, 2
      %v488 = vadd.f32 %v462, %v478
      %v489 = vadd.f32 %v463, %v479
      %v490 = vadd.f32 %v464, %v480
      %v491 = vadd.f32 %v465, %v481
      %v492 = vadd.f32 %v466, %v482
      %v493 = vperm.slane %v428, 0
      %v494 = vmul.f32 %v421, %v493
      %v495 = vmul.f32 %v422, %v493
      %v496 = vmul.f32 %v423, %v493
      %v497 = vmul.f32 %v424, %v493
      %v498 = vmul.f32 %v425, %v493
      %v499 = vadd.f32 %v488, %v494
      %v500 = vadd.f32 %v489, %v495
      %v501 = vadd.f32 %v490, %v496
      %v502 = vadd.f32 %v491, %v497
      %v503 = vadd.f32 %v492, %v498
      %v504 = vperm.slane %v428, 1
      %v505 = vmul.f32 %v421, %v504
      %v506 = vmul.f32 %v422, %v504
      %v507 = vmul.f32 %v423, %v504
      %v508 = vmul.f32 %v424, %v504
      %v509 = vmul.f32 %v425, %v504
      %v515 = vrot.slane %v505, 1
      %v516 = vrot.slane %v506, 1
      %v517 = vrot.slane %v507, 1
      %v518 = vrot.slane %v508, 1
      %v519 = vrot.slane %v509, 1
      %v525 = vadd.f32 %v499, %v515
      %v526 = vadd.f32 %v500, %v516
      %v527 = vadd.f32 %v501, %v517
      %v528 = vadd.f32 %v502, %v518
      %v529 = vadd.f32 %v503, %v519
      %v530 = vperm.slane %v428, 2
      %v531 = vmul.f32 %v421, %v530
      %v532 = vmul.f32 %v422, %v530
      %v533 = vmul.f32 %v423, %v530
      %v534 = vmul.f32 %v424, %v530
      %v535 = vmul.f32 %v425, %v530
      %v541 = vrot.slane %v531, 2
      %v542 = vrot.slane %v532, 2
      %v543 = vrot.slane %v533, 2
      %v544 = vrot.slane %v534, 2
      %v545 = vrot.slane %v535, 2
      %v551 = vadd.f32 %v525, %v541
      %v552 = vadd.f32 %v526, %v542
      %v553 = vadd.f32 %v527, %v543
      %v554 = vadd.f32 %v528, %v544
      %v555 = vadd.f32 %v529, %v545
      %v556 = vperm.slane %v429, 0
      %v557 = vmul.f32 %v422, %v556
      %v558 = vmul.f32 %v423, %v556
      %v559 = vmul.f32 %v424, %v556
      %v560 = vmul.f32 %v425, %v556
      %v561 = vmul.f32 %v426, %v556
      %v562 = vadd.f32 %v551, %v557
      %v563 = vadd.f32 %v552, %v558
      %v564 = vadd.f32 %v553, %v559
      %v565 = vadd.f32 %v554, %v560
      %v566 = vadd.f32 %v555, %v561
      %v567 = vperm.slane %v429, 1
      %v568 = vmul.f32 %v422, %v567
      %v569 = vmul.f32 %v423, %v567
      %v570 = vmul.f32 %v424, %v567
      %v571 = vmul.f32 %v425, %v567
      %v572 = vmul.f32 %v426, %v567
      %v578 = vrot.slane %v568, 1
      %v579 = vrot.slane %v569, 1
      %v580 = vrot.slane %v570, 1
      %v581 = vrot.slane %v571, 1
      %v582 = vrot.slane %v572, 1
      %v588 = vadd.f32 %v562, %v578
      %v589 = vadd.f32 %v563, %v579
      %v590 = vadd.f32 %v564, %v580
      %v591 = vadd.f32 %v565, %v581
      %v592 = vadd.f32 %v566, %v582
      %v593 = vperm.slane %v429, 2
      %v594 = vmul.f32 %v422, %v593
      %v595 = vmul.f32 %v423, %v593
      %v596 = vmul.f32 %v424, %v593
      %v597 = vmul.f32 %v425, %v593
      %v598 = vmul.f32 %v426, %v593
      %v604 = vrot.slane %v594, 2
      %v605 = vrot.slane %v595, 2
      %v606 = vrot.slane %v596, 2
      %v607 = vrot.slane %v597, 2
      %v608 = vrot.slane %v598, 2
      %v614 = vadd.f32 %v588, %v604
      %v615 = vadd.f32 %v589, %v605
      %v616 = vadd.f32 %v590, %v606
      %v617 = vadd.f32 %v591, %v607
      %v618 = vadd.f32 %v592, %v608
      %v619 = vld [vmem:[%s4] sm:$0x1]
      %v621 = vperm.slane %v619, 0
      %v623 = vadd.f32 %v614, %v621
      %v624 = vadd.f32 %v615, %v621
      %v625 = vadd.f32 %v616, %v621
      %v626 = vadd.f32 %v617, %v621
      %v627 = vadd.f32 %v618, %v621
      %v628 = vmax.f32 %v623, 0.0
      %v629 = vmax.f32 %v624, 0.0
      %v630 = vmax.f32 %v625, 0.0
      %v631 = vmax.f32 %v626, 0.0
      %v632 = vmax.f32 %v627, 0.0
      %vm633 = vcmask 126976
      %634 = vst.msk [vmem:[%s224] sm:$0x1f] %vm633, %v628
      %635 = vst.msk [vmem:[%s224 + $0x8] sm:$0x1f] %vm633, %v629
      %636 = vst.msk [vmem:[%s224 + $0x10] sm:$0x1f] %vm633, %v630
      %637 = vst.msk [vmem:[%s224 + $0x18] sm:$0x1f] %vm633, %v631
      %638 = vst.msk [vmem:[%s224 + $0x20] sm:$0x1f] %vm633, %v632
      %p639 = scmp.lt.s32.totalorder %s16, 1
      %s640 = scalar_select %p639, %s16, 1
      %s641 = smul.addr %s640, 5
      %s642 = smul.addr %s641, 8
      %s643 = scalar_lea.vmem %s5, %s642
      // Predicated region
      $region41: #{depthwise_xcorr_forward.3} parent=39 // pred_check
        %p644 = pneg %p144
      $region42: #{depthwise_xcorr_forward.3} parent=39 // pred_check_branch
        %646 = sbr.rel (%p644) target = $region44
      $region43: #{depthwise_xcorr_forward.3} parent=39 // pred_region
        _
      $region44: #{depthwise_xcorr_forward.3} parent=39 // pred_fallthru
        _
    $region40: #{depthwise_xcorr_forward.3} parent=5 // pred_fallthru
      _
    %p647 = scmp.le.s32.totalorder 2, %s11
    // Predicated region
    $region45: #{depthwise_xcorr_forward.3} parent=5 // pred_check
      %p648 = pneg %p647
    $region46: #{depthwise_xcorr_forward.3} parent=5 // pred_check_branch
      %650 = sbr.rel (%p648) target = $region48
    $region47: #{depthwise_xcorr_forward.3} parent=5 // pred_region
      %s651 = ssub.s32 %s11, 2
      // Predicated region
      $region49: #{depthwise_xcorr_forward.3} parent=47 // pred_check
        %p652 = pneg %p150
      $region50: #{depthwise_xcorr_forward.3} parent=47 // pred_check_branch
        %654 = sbr.rel (%p652) target = $region52
      $region51: #{depthwise_xcorr_forward.3} parent=47 // pred_region
        %p655 = scmp.lt.s32.totalorder %s17, 1
        %s656 = scalar_select %p655, %s17, 1
        %s657 = smul.addr %s656, 5
        %s658 = smul.addr %s657, 8
        %s659 = scalar_lea.vmem %s5, %s658
      $region52: #{depthwise_xcorr_forward.3} parent=47 // pred_fallthru
        _
    $region48: #{depthwise_xcorr_forward.3} parent=5 // pred_fallthru
      _
  $region6: #{depthwise_xcorr_forward.3} parent=0 // loop_footer
    %s15 = sadd.s32 1, %s11
  $region7: #{depthwise_xcorr_forward.3} parent=0 // loop_footer_branch
    %10 = sbr.rel target = $region3
  $region8: #{depthwise_xcorr_forward.3} parent=0 // loop_exit
    _

// kernel: depthwise_xcorr_forward.4
$region0: #{depthwise_xcorr_forward.4}
  #allocation0 [shape = 'u32[]', space=smem, size = 0x4, offset = 0x4, fixed_abs, tag = 'smem constant byte address 0x4 - core index']
  #allocation1 [shape = 'u32[72,128]{1,0:T(1,128)}', space=vmem, size = 0x9000, scoped, tag = 'internal scratch']
  #allocation2 [shape = 'f32[17,17,16]{2,1,0:T(8,128)}', space=vmem, size = 0x33000, scoped, tag = 'scratch operand']
  %s0 = inlined_call_operand.vmem [shape: f32[2,17,17,8], index: 0, kind: input, shape index: {}]
  %s1 = inlined_call_operand.vmem [shape: f32[8,16], index: 1, kind: input, shape index: {}]
  %s2 = inlined_call_operand.vmem [shape: f32[1,16], index: 2, kind: input, shape index: {}]
  %s3 = inlined_call_operand.vmem [shape: f32[3,3,16], index: 3, kind: input, shape index: {}]
  %s4 = inlined_call_operand.vmem [shape: f32[1,16], index: 4, kind: input, shape index: {}]
  %s5 = inlined_call_operand.vmem [shape: f32[2,15,15,16], index: 5, kind: output, shape index: {}]
  %s6 = sld [smem:[#allocation0]]
  $region53: #{depthwise_xcorr_forward.4} parent=0
    _
  %s8 = ssub.s32 1, %s6
  %s9 = scalar_select 0, %s8, %s6
  loop: start=0, step=1, limit=4
  $region2: #{depthwise_xcorr_forward.4} parent=0 // loop_pre_header
    _
  $region3: #{depthwise_xcorr_forward.4} parent=0 // loop_header
    %s11 = sphi 0, %s15
    %p12 = scmp.ge.s32.totalorder %s11, 4
    %s21 = sphi 0, %s23
    %s24 = sphi 0, %s21
    %s25 = sphi 0, %s24
    %s41 = sphi 0, %s25
    %s45 = sphi 0, %s45
    %s47 = sphi 0, %s45
    %s48 = sphi 0, %s47
    %s62 = sphi 0, %s48
    %s66 = sphi 0, %s66
    %s68 = sphi 0, %s66
    %s69 = sphi 0, %s68
    %s83 = sphi 0, %s69
    %s87 = sphi 0, %s87
    %s89 = sphi 0, %s87
    %s90 = sphi 0, %s89
    %s104 = sphi 0, %s90
    %s108 = sphi 0, %s108
    %s110 = sphi 0, %s108
    %s111 = sphi 0, %s110
    %s125 = sphi 0, %s111
    %s131 = sphi 0, %s133
    %s134 = sphi 0, %s131
    %s135 = sphi 0, %s134
    %s151 = sphi 0, %s135
  $region4: #{depthwise_xcorr_forward.4} parent=0 // loop_header_branch
    %14 = sbr.rel (%p12) target = $region8
  $region5: #{depthwise_xcorr_forward.4} parent=0 // loop_body
    %s16 = ssub.s32 %s11, 1
    %s17 = ssub.s32 %s11, 2
    %s18 = sadd.s32 %s11, 1
    %s19 = ssub.s32 %s11, %s18
    %p20 = scmp.eq.s32.totalorder %s19, 0
    %s22 = sadd.s32 %s21, 1
    %s23 = scalar_select %p20, %s21, %s22
    %p26 = pneg %p20
    %p27 = scmp.eq.s32.totalorder %s11, 1
    %p28 = por %p26, %p27
    %p29 = scmp.ne.s32.totalorder %s21, %s24
    %p30 = scmp.eq.s32.totalorder %s11, 0
    %p31 = por %p29, %p30
    %p32 = scmp.ne.s32.totalorder %s21, %s24
    %p33 = scmp.eq.s32.totalorder %s16, 1
    %p34 = por %p32, %p33
    %p35 = scmp.ne.s32.totalorder %s24, %s25
    %p36 = scmp.eq.s32.totalorder %s16, 0
    %p37 = por %p35, %p36
    %p38 = scmp.ne.s32.totalorder %s24, %s25
    %p39 = scmp.eq.s32.totalorder %s17, 1
    %p40 = por %p38, %p39
    %p42 = scmp.ne.s32.totalorder %s25, %s41
    %p43 = scmp.eq.s32.totalorder %s17, 0
    %p44 = por %p42, %p43
    %s46 = sadd.s32 %s45, 1
    %p49 = scmp.eq.s32.totalorder %s11, 1
    %p50 = scmp.ne.s32.totalorder %s45, %s47
    %p51 = scmp.eq.s32.totalorder %s11, 0
    %p52 = por %p50, %p51
    %p53 = scmp.ne.s32.totalorder %s45, %s47
    %p54 = scmp.eq.s32.totalorder %s16, 1
    %p55 = por %p53, %p54
    %p56 = scmp.ne.s32.totalorder %s47, %s48
    %p57 = scmp.eq.s32.totalorder %s16, 0
    %p58 = por %p56, %p57
    %p59 = scmp.ne.s32.totalorder %s47, %s48
    %p60 = scmp.eq.s32.totalorder %s17, 1
    %p61 = por %p59, %p60
    %p63 = scmp.ne.s32.totalorder %s48, %s62
    %p64 = scmp.eq.s32.totalorder %s17, 0
    %p65 = por %p63, %p64
    %s67 = sadd.s32 %s66, 1
    %p70 = scmp.eq.s32.totalorder %s11, 1
    %p71 = scmp.ne.s32.totalorder %s66, %s68
    %p72 = scmp.eq.s32.totalorder %s11, 0
    %p73 = por %p71, %p72
    %p74 = scmp.ne.s32.totalorder %s66, %s68
    %p75 = scmp.eq.s32.totalorder %s16, 1
    %p76 = por %p74, %p75
    %p77 = scmp.ne.s32.totalorder %s68, %s69
    %p78 = scmp.eq.s32.totalorder %s16, 0
    %p79 = por %p77, %p78
    %p80 = scmp.ne.s32.totalorder %s68, %s69
    %p81 = scmp.eq.s32.totalorder %s17, 1
    %p82 = por %p80, %p81
    %p84 = scmp.ne.s32.totalorder %s69, %s83
    %p85 = scmp.eq.s32.totalorder %s17, 0
    %p86 = por %p84, %p85
    %s88 = sadd.s32 %s87, 1
    %p91 = scmp.eq.s32.totalorder %s11, 1
    %p92 = scmp.ne.s32.totalorder %s87, %s89
    %p93 = scmp.eq.s32.totalorder %s11, 0
    %p94 = por %p92, %p93
    %p95 = scmp.ne.s32.totalorder %s87, %s89
    %p96 = scmp.eq.s32.totalorder %s16, 1
    %p97 = por %p95, %p96
    %p98 = scmp.ne.s32.totalorder %s89, %s90
    %p99 = scmp.eq.s32.totalorder %s16, 0
    %p100 = por %p98, %p99
    %p101 = scmp.ne.s32.totalorder %s89, %s90
    %p102 = scmp.eq.s32.totalorder %s17, 1
    %p103 = por %p101, %p102
    %p105 = scmp.ne.s32.totalorder %s90, %s104
    %p106 = scmp.eq.s32.totalorder %s17, 0
    %p107 = por %p105, %p106
    %s109 = sadd.s32 %s108, 1
    %p112 = scmp.eq.s32.totalorder %s11, 1
    %p113 = scmp.ne.s32.totalorder %s108, %s110
    %p114 = scmp.eq.s32.totalorder %s11, 0
    %p115 = por %p113, %p114
    %p116 = scmp.ne.s32.totalorder %s108, %s110
    %p117 = scmp.eq.s32.totalorder %s16, 1
    %p118 = por %p116, %p117
    %p119 = scmp.ne.s32.totalorder %s110, %s111
    %p120 = scmp.eq.s32.totalorder %s16, 0
    %p121 = por %p119, %p120
    %p122 = scmp.ne.s32.totalorder %s110, %s111
    %p123 = scmp.eq.s32.totalorder %s17, 1
    %p124 = por %p122, %p123
    %p126 = scmp.ne.s32.totalorder %s111, %s125
    %p127 = scmp.eq.s32.totalorder %s17, 0
    %p128 = por %p126, %p127
    %s129 = ssub.s32 %s11, %s18
    %p130 = scmp.eq.s32.totalorder %s129, 0
    %s132 = sadd.s32 %s131, 1
    %s133 = scalar_select %p130, %s131, %s132
    %p136 = pneg %p130
    %p137 = scmp.eq.s32.totalorder %s11, 1
    %p138 = por %p136, %p137
    %p139 = scmp.ne.s32.totalorder %s131, %s134
    %p140 = scmp.eq.s32.totalorder %s11, 0
    %p141 = por %p139, %p140
    %p142 = scmp.ne.s32.totalorder %s131, %s134
    %p143 = scmp.eq.s32.totalorder %s16, 1
    %p144 = por %p142, %p143
    %p145 = scmp.ne.s32.totalorder %s134, %s135
    %p146 = scmp.eq.s32.totalorder %s16, 0
    %p147 = por %p145, %p146
    %p148 = scmp.ne.s32.totalorder %s134, %s135
    %p149 = scmp.eq.s32.totalorder %s17, 1
    %p150 = por %p148, %p149
    %p152 = scmp.ne.s32.totalorder %s135, %s151
    %p153 = scmp.eq.s32.totalorder %s17, 0
    %p154 = por %p152, %p153
    %p155 = scmp.le.s32.totalorder 1, %s11
    %p156 = scmp.lt.s32.totalorder %s11, 3
    %p157 = pnand %p155, %p156
    %p158 = pneg %p157
    // Predicated region
    $region9: #{depthwise_xcorr_forward.4} parent=5 // pred_check
      _
    $region10: #{depthwise_xcorr_forward.4} parent=5 // pred_check_branch
      %160 = sbr.rel (%p157) target = $region12
    $region11: #{depthwise_xcorr_forward.4} parent=5 // pred_region
      %s161 = ssub.s32 %s11, 1
      // Predicated region
      $region13: #{depthwise_xcorr_forward.4} parent=11 // pred_check
        %p162 = pneg %p58
      $region14: #{depthwise_xcorr_forward.4} parent=11 // pred_check_branch
        %164 = sbr.rel (%p162) target = $region16
      $region15: #{depthwise_xcorr_forward.4} parent=11 // pred_region
        _
      $region16: #{depthwise_xcorr_forward.4} parent=11 // pred_fallthru
        _
      // Predicated region
      $region17: #{depthwise_xcorr_forward.4} parent=11 // pred_check
        %p165 = pneg %p79
      $region18: #{depthwise_xcorr_forward.4} parent=11 // pred_check_branch
        %167 = sbr.rel (%p165) target = $region20
      $region19: #{depthwise_xcorr_forward.4} parent=11 // pred_region
        _
      $region20: #{depthwise_xcorr_forward.4} parent=11 // pred_fallthru
        _
      // Predicated region
      $region21: #{depthwise_xcorr_forward.4} parent=11 // pred_check
        %p168 = pneg %p100
      $region22: #{depthwise_xcorr_forward.4} parent=11 // pred_check_branch
        %170 = sbr.rel (%p168) target = $region24
      $region23: #{depthwise_xcorr_forward.4} parent=11 // pred_region
        _
      $region24: #{depthwise_xcorr_forward.4} parent=11 // pred_fallthru
        _
      // Predicated region
      $region25: #{depthwise_xcorr_forward.4} parent=11 // pred_check
        %p171 = pneg %p121
      $region26: #{depthwise_xcorr_forward.4} parent=11 // pred_check_branch
        %173 = sbr.rel (%p171) target = $region28
      $region27: #{depthwise_xcorr_forward.4} parent=11 // pred_region
        _
      $region28: #{depthwise_xcorr_forward.4} parent=11 // pred_fallthru
        _
    $region12: #{depthwise_xcorr_forward.4} parent=5 // pred_fallthru
      _
    %p174 = scmp.lt.s32.totalorder %s11, 2
    // Predicated region
    $region29: #{depthwise_xcorr_forward.4} parent=5 // pred_check
      %p175 = pneg %p174
    $region30: #{depthwise_xcorr_forward.4} parent=5 // pred_check_branch
      %177 = sbr.rel (%p175) target = $region32
    $region31: #{depthwise_xcorr_forward.4} parent=5 // pred_region
      // Predicated region
      $region33: #{depthwise_xcorr_forward.4} parent=31 // pred_check
        %p178 = pneg %p31
      $region34: #{depthwise_xcorr_forward.4} parent=31 // pred_check_branch
        %180 = sbr.rel (%p178) target = $region36
      $region35: #{depthwise_xcorr_forward.4} parent=31 // pred_region
        %p181 = scmp.lt.s32.totalorder %s11, 1
        %s182 = scalar_select %p181, %s11, 1
        %s183 = smul.addr %s182, 51
        %s184 = smul.addr %s183, 8
        %s185 = scalar_lea.vmem %s0, %s184
      $region36: #{depthwise_xcorr_forward.4} parent=31 // pred_fallthru
        _
    $region32: #{depthwise_xcorr_forward.4} parent=5 // pred_fallthru
      _
    %p186 = scmp.le.s32.totalorder 1, %s11
    %p187 = scmp.lt.s32.totalorder %s11, 3
    %p188 = pnand %p186, %p187
    %p189 = pneg %p188
    // Predicated region
    $region37: #{depthwise_xcorr_forward.4} parent=5 // pred_check
      _
    $region38: #{depthwise_xcorr_forward.4} parent=5 // pred_check_branch
      %191 = sbr.rel (%p188) target = $region40
    $region39: #{depthwise_xcorr_forward.4} parent=5 // pred_region
      %s192 = ssub.s32 %s11, 1
      %p193 = scmp.lt.s32.totalorder %s16, 1
      %s194 = scalar_select %p193, %s16, 1
      %s195 = smul.addr %s194, 51
      %s196 = smul.addr %s195, 8
      %s197 = scalar_lea.vmem %s0, %s196
      %p198 = pneg %p37
      %p199 = pneg %p34
      %p200 = pneg %p58
      %p201 = pneg %p55
      %p202 = pneg %p79
      %p203 = pneg %p76
      %p204 = pneg %p100
      %p205 = pneg %p97
      %p206 = pneg %p121
      %p207 = pneg %p118
      %p208 = pneg %p147
      %p209 = pneg %p144
      %p210 = scmp.lt.s32.totalorder %s16, 1
      %s211 = scalar_select %p210, %s16, 1
      %s212 = smul.addr %s211, 30
      %s213 = smul.addr %s212, 8
      %s214 = scalar_lea.vmem %s5, %s213
      %p215 = scmp.lt.s32.totalorder %s16, 1
      %s216 = scalar_select %p215, %s16, 1
      %s217 = smul.addr %s216, 51
      %s218 = smul.addr %s217, 8
      %s219 = scalar_lea.vmem %s0, %s218
      %p220 = scmp.lt.s32.totalorder %s16, 1
      %s221 = scalar_select %p220, %s16, 1
      %s222 = smul.addr %s221, 30
      %s223 = smul.addr %s222, 8
      %s224 = scalar_lea.vmem %s5, %s223
      %v225 = vld [vmem:[%s219] sm:$0xff]
      %v226 = vld [vmem:[%s219 + $0x8] sm:$0xff]
      %v227 = vld [vmem:[%s219 + $0x10] sm:$0x1]
      %v228 = vld [vmem:[%s219 + $0x18] sm:$0xff]
      %v229 = vld [vmem:[%s219 + $0x20] sm:$0xff]
      %v230 = vld [vmem:[%s219 + $0x28] sm:$0x1]
      %v231 = vld [vmem:[%s219 + $0x30] sm:$0xff]
      %v232 = vld [vmem:[%s219 + $0x38] sm:$0xff]
      %v233 = vld [vmem:[%s219 + $0x40] sm:$0x1]
      %v234 = vld [vmem:[%s219 + $0x48] sm:$0xff]
      %v235 = vld [vmem:[%s219 + $0x50] sm:$0xff]
      %v236 = vld [vmem:[%s219 + $0x58] sm:$0x1]
      %v237 = vld [vmem:[%s219 + $0x60] sm:$0xff]
      %v238 = vld [vmem:[%s219 + $0x68] sm:$0xff]
      %v239 = vld [vmem:[%s219 + $0x70] sm:$0x1]
      %v240 = vld [vmem:[%s219 + $0x78] sm:$0xff]
      %v241 = vld [vmem:[%s219 + $0x80] sm:$0xff]
      %v242 = vld [vmem:[%s219 + $0x88] sm:$0x1]
      %v243 = vld [vmem:[%s219 + $0x90] sm:$0xff]
      %v244 = vld [vmem:[%s219 + $0x98] sm:$0xff]
      %v245 = vld [vmem:[%s219 + $0xa0] sm:$0x1]
      %v246 = vld [vmem:[%s219 + $0xa8] sm:$0xff]
      %v247 = vld [vmem:[%s219 + $0xb0] sm:$0xff]
      %v248 = vld [vmem:[%s219 + $0xb8] sm:$0x1]
      %v249 = vld [vmem:[%s219 + $0xc0] sm:$0xff]
      %v250 = vld [vmem:[%s219 + $0xc8] sm:$0xff]
      %v251 = vld [vmem:[%s219 + $0xd0] sm:$0x1]
      %v252 = vld [vmem:[%s219 + $0xd8] sm:$0xff]
      %v253 = vld [vmem:[%s219 + $0xe0] sm:$0xff]
      %v254 = vld [vmem:[%s219 + $0xe8] sm:$0x1]
      %v255 = vld [vmem:[%s219 + $0xf0] sm:$0xff]
      %v256 = vld [vmem:[%s219 + $0xf8] sm:$0xff]
      %v257 = vld [vmem:[%s219 + $0x100] sm:$0x1]
      %v258 = vld [vmem:[%s219 + $0x108] sm:$0xff]
      %v259 = vld [vmem:[%s219 + $0x110] sm:$0xff]
      %v260 = vld [vmem:[%s219 + $0x118] sm:$0x1]
      %v261 = vld [vmem:[%s219 + $0x120] sm:$0xff]
      %v262 = vld [vmem:[%s219 + $0x128] sm:$0xff]
      %v263 = vld [vmem:[%s219 + $0x130] sm:$0x1]
      %v264 = vld [vmem:[%s219 + $0x138] sm:$0xff]
      %v265 = vld [vmem:[%s219 + $0x140] sm:$0xff]
      %v266 = vld [vmem:[%s219 + $0x148] sm:$0x1]
      %v267 = vld [vmem:[%s219 + $0x150] sm:$0xff]
      %v268 = vld [vmem:[%s219 + $0x158] sm:$0xff]
      %v269 = vld [vmem:[%s219 + $0x160] sm:$0x1]
      %v270 = vld [vmem:[%s219 + $0x168] sm:$0xff]
      %v271 = vld [vmem:[%s219 + $0x170] sm:$0xff]
      %v272 = vld [vmem:[%s219 + $0x178] sm:$0x1]
      %v273 = vld [vmem:[%s219 + $0x180] sm:$0xff]
      %v274 = vld [vmem:[%s219 + $0x188] sm:$0xff]
      %v275 = vld [vmem:[%s219 + $0x190] sm:$0x1]
      %v276 = vld [vmem:[%s1] sm:$0xff]
      %v277 = vld [vmem:[%s2] sm:$0x1]
      %v279 = vperm.slane %v277, 0
      %vm281 = vcmask 64512
      %v283 = vsel %vm281, %v225, 0
      %v286 = vsel %vm281, %v226, 0
      %v289 = vsel %vm281, %v227, 0
      %291 = vmatpush.msra.mxu0 0.0
      %292 = vmatpush.msra.mxu0 0.0
      %293 = vmatpush.msra.mxu0 0.0
      %294 = vmatpush.msra.mxu0 0.0
      %295 = vmatpush.msra.mxu0 0.0
      %296 = vmatpush.msra.mxu0 0.0
      %297 = vmatpush.msra.mxu0 0.0
      %298 = vmatpush.msra.mxu0 0.0
      %299 = vmatpush.msra.mxu0 0.0
      %300 = vmatpush.msra.mxu0 0.0
      %301 = vmatpush.msra.mxu0 0.0
      %302 = vmatpush.msra.mxu0 0.0
      %303 = vmatpush.msra.mxu0 0.0
      %304 = vmatpush.msra.mxu0 0.0
      %305 = vmatpush.msra.mxu0 0.0
      %306 = vmatpush.msra.mxu0 %v276
      %307 = vmatmul.f32.gmra.mxu0 %v283
      %v308 = vpop.f32.mrf.mxu0
      %v309 = vadd.f32 %v279, %v308
      %310 = vmatmul.f32.gmra.mxu0 %v286
      %v311 = vpop.f32.mrf.mxu0
      %v312 = vadd.f32 %v279, %v311
      %313 = vmatmul.f32.gmra.mxu0 %v289
      %v314 = vpop.f32.mrf.mxu0
      %v315 = vadd.f32 %v279, %v314
      %316 = vdwg.mxu0
      %v317 = vmax.f32 %v309, 0.0
      %v318 = vmax.f32 %v312, 0.0
      %v319 = vmax.f32 %v315, 0.0
      %vm320 = vcmask 130048
      %321 = vst.msk [vmem:[#allocation2] sm:$0xff] %vm320, %v317
      %322 = vst.msk [vmem:[#allocation2 + $0x8] sm:$0xff] %vm320, %v318
      %vm323 = vcmask 122880
      %324 = vst.msk [vmem:[#allocation2 + $0x10] sm:$0x1] %vm323, %v319
      %v326 = vsel %vm281, %v228, 0
      %v329 = vsel %vm281, %v229, 0
      %v332 = vsel %vm281, %v230, 0
      %334 = vmatpush.msra.mxu0 0.0
      %335 = vmatpush.msra.mxu0 0.0
      %336 = vmatpush.msra.mxu0 0.0
      %337 = vmatpush.msra.mxu0 0.0
      %338 = vmatpush.msra.mxu0 0.0
      %339 = vmatpush.msra.mxu0 0.0
      %340 = vmatpush.msra.mxu0 0.0
      %341 = vmatpush.msra.mxu0 0.0
      %342 = vmatpush.msra.mxu0 0.0
      %343 = vmatpush.msra.mxu0 0.0
      %344 = vmatpush.msra.mxu0 0.0
      %345 = vmatpush.msra.mxu0 0.0
      %346 = vmatpush.msra.mxu0 0.0
      %347 = vmatpush.msra.mxu0 0.0
      %348 = vmatpush.msra.mxu0 0.0
      %349 = vmatpush.msra.mxu0 %v276
      %350 = vmatmul.f32.gmra.mxu0 %v326
      %v351 = vpop.f32.mrf.mxu0
      %v352 = vadd.f32 %v279, %v351
      %353 = vmatmul.f32.gmra.mxu0 %v329
      %v354 = vpop.f32.mrf.mxu0
      %v355 = vadd.f32 %v279, %v354
      %356 = vmatmul.f32.gmra.mxu0 %v332
      %v357 = vpop.f32.mrf.mxu0
      %v358 = vadd.f32 %v279, %v357
      %359 = vdwg.mxu0
      %v360 = vmax.f32 %v352, 0.0
      %v361 = vmax.f32 %v355, 0.0
      %v362 = vmax.f32 %v358, 0.0
      %s363 = scalar_lea.vmem [#allocation2], 24
      %364 = vst.msk [vmem:[%s363] sm:$0xff] %vm320, %v360
      %365 = vst.msk [vmem:[%s363 + $0x8] sm:$0xff] %vm320, %v361
      %366 = vst.msk [vmem:[%s363 + $0x10] sm:$0x1] %vm323, %v362
      %v368 = vsel %vm281, %v231, 0
      %v371 = vsel %vm281, %v232, 0
      %v374 = vsel %vm281, %v233, 0
      %376 = vmatpush.msra.mxu0 0.0
      %377 = vmatpush.msra.mxu0 0.0
      %378 = vmatpush.msra.mxu0 0.0
      %379 = vmatpush.msra.mxu0 0.0
      %380 = vmatpush.msra.mxu0 0.0
      %381 = vmatpush.msra.mxu0 0.0
      %382 = vmatpush.msra.mxu0 0.0
      %383 = vmatpush.msra.mxu0 0.0
      %384 = vmatpush.msra.mxu0 0.0
      %385 = vmatpush.msra.mxu0 0.0
      %386 = vmatpush.msra.mxu0 0.0
      %387 = vmatpush.msra.mxu0 0.0
      %388 = vmatpush.msra.mxu0 0.0
      %389 = vmatpush.msra.mxu0 0.0
      %390 = vmatpush.msra.mxu0 0.0
      %391 = vmatpush.msra.mxu0 %v276
      %392 = vmatmul.f32.gmra.mxu0 %v368
      %v393 = vpop.f32.mrf.mxu0
      %v394 = vadd.f32 %v279, %v393
      %395 = vmatmul.f32.gmra.mxu0 %v371
      %v396 = vpop.f32.mrf.mxu0
      %v397 = vadd.f32 %v279, %v396
      %398 = vmatmul.f32.gmra.mxu0 %v374
      %v399 = vpop.f32.mrf.mxu0
      %v400 = vadd.f32 %v279, %v399
      %401 = vdwg.mxu0
      %v402 = vmax.f32 %v394, 0.0
      %v403 = vmax.f32 %v397, 0.0
      %v404 = vmax.f32 %v400, 0.0
      %s405 = scalar_lea.vmem [#allocation2], 48
      %406 = vst.msk [vmem:[%s405] sm:$0xff] %vm320, %v402
      %407 = vst.msk [vmem:[%s405 + $0x8] sm:$0xff] %vm320, %v403
      %408 = vst.msk [vmem:[%s405 + $0x10] sm:$0x1] %vm323, %v404
      %v410 = vsel %vm281, %v234, 0
      %v413 = vsel %vm281, %v235, 0
      %v416 = vsel %vm281, %v236, 0
      %418 = vmatpush.msra.mxu0 0.0
      %419 = vmatpush.msra.mxu0 0.0
      %420 = vmatpush.msra.mxu0 0.0
      %421 = vmatpush.msra.mxu0 0.0
      %422 = vmatpush.msra.mxu0 0.0
      %423 = vmatpush.msra.mxu0 0.0
      %424 = vmatpush.msra.mxu0 0.0
      %425 = vmatpush.msra.mxu0 0.0
      %426 = vmatpush.msra.mxu0 0.0
      %427 = vmatpush.msra.mxu0 0.0
      %428 = vmatpush.msra.mxu0 0.0
      %429 = vmatpush.msra.mxu0 0.0
      %430 = vmatpush.msra.mxu0 0.0
      %431 = vmatpush.msra.mxu0 0.0
      %432 = vmatpush.msra.mxu0 0.0
      %433 = vmatpush.msra.mxu0 %v276
      %434 = vmatmul.f32.gmra.mxu0 %v410
      %v435 = vpop.f32.mrf.mxu0
      %v436 = vadd.f32 %v279, %v435
      %437 = vmatmul.f32.gmra.mxu0 %v413
      %v438 = vpop.f32.mrf.mxu0
      %v439 = vadd.f32 %v279, %v438
      %440 = vmatmul.f32.gmra.mxu0 %v416
      %v441 = vpop.f32.mrf.mxu0
      %v442 = vadd.f32 %v279, %v441
      %443 = vdwg.mxu0
      %v444 = vmax.f32 %v436, 0.0
      %v445 = vmax.f32 %v439, 0.0
      %v446 = vmax.f32 %v442, 0.0
      %s447 = scalar_lea.vmem [#allocation2], 72
      %448 = vst.msk [vmem:[%s447] sm:$0xff] %vm320, %v444
      %449 = vst.msk [vmem:[%s447 + $0x8] sm:$0xff] %vm320, %v445
      %450 = vst.msk [vmem:[%s447 + $0x10] sm:$0x1] %vm323, %v446
      %v452 = vsel %vm281, %v237, 0
      %v455 = vsel %vm281, %v238, 0
      %v458 = vsel %vm281, %v239, 0
      %460 = vmatpush.msra.mxu0 0.0
      %461 = vmatpush.msra.mxu0 0.0
      %462 = vmatpush.msra.mxu0 0.0
      %463 = vmatpush.msra.mxu0 0.0
      %464 = vmatpush.msra.mxu0 0.0
      %465 = vmatpush.msra.mxu0 0.0
      %466 = vmatpush.msra.mxu0 0.0
      %467 = vmatpush.msra.mxu0 0.0
      %468 = vmatpush.msra.mxu0 0.0
      %469 = vmatpush.msra.mxu0 0.0
      %470 = vmatpush.msra.mxu0 0.0
      %471 = vmatpush.msra.mxu0 0.0
      %472 = vmatpush.msra.mxu0 0.0
      %473 = vmatpush.msra.mxu0 0.0
      %474 = vmatpush.msra.mxu0 0.0
      %475 = vmatpush.msra.mxu0 %v276
      %476 = vmatmul.f32.gmra.mxu0 %v452
      %v477 = vpop.f32.mrf.mxu0
      %v478 = vadd.f32 %v279, %v477
      %479 = vmatmul.f32.gmra.mxu0 %v455
      %v480 = vpop.f32.mrf.mxu0
      %v481 = vadd.f32 %v279, %v480
      %482 = vmatmul.f32.gmra.mxu0 %v458
      %v483 = vpop.f32.mrf.mxu0
      %v484 = vadd.f32 %v279, %v483
      %485 = vdwg.mxu0
      %v486 = vmax.f32 %v478, 0.0
      %v487 = vmax.f32 %v481, 0.0
      %v488 = vmax.f32 %v484, 0.0
      %s489 = scalar_lea.vmem [#allocation2], 96
      %490 = vst.msk [vmem:[%s489] sm:$0xff] %vm320, %v486
      %491 = vst.msk [vmem:[%s489 + $0x8] sm:$0xff] %vm320, %v487
      %492 = vst.msk [vmem:[%s489 + $0x10] sm:$0x1] %vm323, %v488
      %v494 = vsel %vm281, %v240, 0
      %v497 = vsel %vm281, %v241, 0
      %v500 = vsel %vm281, %v242, 0
      %502 = vmatpush.msra.mxu0 0.0
      %503 = vmatpush.msra.mxu0 0.0
      %504 = vmatpush.msra.mxu0 0.0
      %505 = vmatpush.msra.mxu0 0.0
      %506 = vmatpush.msra.mxu0 0.0
      %507 = vmatpush.msra.mxu0 0.0
      %508 = vmatpush.msra.mxu0 0.0
      %509 = vmatpush.msra.mxu0 0.0
      %510 = vmatpush.msra.mxu0 0.0
      %511 = vmatpush.msra.mxu0 0.0
      %512 = vmatpush.msra.mxu0 0.0
      %513 = vmatpush.msra.mxu0 0.0
      %514 = vmatpush.msra.mxu0 0.0
      %515 = vmatpush.msra.mxu0 0.0
      %516 = vmatpush.msra.mxu0 0.0
      %517 = vmatpush.msra.mxu0 %v276
      %518 = vmatmul.f32.gmra.mxu0 %v494
      %v519 = vpop.f32.mrf.mxu0
      %v520 = vadd.f32 %v279, %v519
      %521 = vmatmul.f32.gmra.mxu0 %v497
      %v522 = vpop.f32.mrf.mxu0
      %v523 = vadd.f32 %v279, %v522
      %524 = vmatmul.f32.gmra.mxu0 %v500
      %v525 = vpop.f32.mrf.mxu0
      %v526 = vadd.f32 %v279, %v525
      %527 = vdwg.mxu0
      %v528 = vmax.f32 %v520, 0.0
      %v529 = vmax.f32 %v523, 0.0
      %v530 = vmax.f32 %v526, 0.0
      %s531 = scalar_lea.vmem [#allocation2], 120
      %532 = vst.msk [vmem:[%s531] sm:$0xff] %vm320, %v528
      %533 = vst.msk [vmem:[%s531 + $0x8] sm:$0xff] %vm320, %v529
      %534 = vst.msk [vmem:[%s531 + $0x10] sm:$0x1] %vm323, %v530
      %v536 = vsel %vm281, %v243, 0
      %v539 = vsel %vm281, %v244, 0
      %v542 = vsel %vm281, %v245, 0
      %544 = vmatpush.msra.mxu0 0.0
      %545 = vmatpush.msra.mxu0 0.0
      %546 = vmatpush.msra.mxu0 0.0
      %547 = vmatpush.msra.mxu0 0.0
      %548 = vmatpush.msra.mxu0 0.0
      %549 = vmatpush.msra.mxu0 0.0
      %550 = vmatpush.msra.mxu0 0.0
      %551 = vmatpush.msra.mxu0 0.0
      %552 = vmatpush.msra.mxu0 0.0
      %553 = vmatpush.msra.mxu0 0.0
      %554 = vmatpush.msra.mxu0 0.0
      %555 = vmatpush.msra.mxu0 0.0
      %556 = vmatpush.msra.mxu0 0.0
      %557 = vmatpush.msra.mxu0 0.0
      %558 = vmatpush.msra.mxu0 0.0
      %559 = vmatpush.msra.mxu0 %v276
      %560 = vmatmul.f32.gmra.mxu0 %v536
      %v561 = vpop.f32.mrf.mxu0
      %v562 = vadd.f32 %v279, %v561
      %563 = vmatmul.f32.gmra.mxu0 %v539
      %v564 = vpop.f32.mrf.mxu0
      %v565 = vadd.f32 %v279, %v564
      %566 = vmatmul.f32.gmra.mxu0 %v542
      %v567 = vpop.f32.mrf.mxu0
      %v568 = vadd.f32 %v279, %v567
      %569 = vdwg.mxu0
      %v570 = vmax.f32 %v562, 0.0
      %v571 = vmax.f32 %v565, 0.0
      %v572 = vmax.f32 %v568, 0.0
      %s573 = scalar_lea.vmem [#allocation2], 144
      %574 = vst.msk [vmem:[%s573] sm:$0xff] %vm320, %v570
      %575 = vst.msk [vmem:[%s573 + $0x8] sm:$0xff] %vm320, %v571
      %576 = vst.msk [vmem:[%s573 + $0x10] sm:$0x1] %vm323, %v572
      %v578 = vsel %vm281, %v246, 0
      %v581 = vsel %vm281, %v247, 0
      %v584 = vsel %vm281, %v248, 0
      %586 = vmatpush.msra.mxu0 0.0
      %587 = vmatpush.msra.mxu0 0.0
      %588 = vmatpush.msra.mxu0 0.0
      %589 = vmatpush.msra.mxu0 0.0
      %590 = vmatpush.msra.mxu0 0.0
      %591 = vmatpush.msra.mxu0 0.0
      %592 = vmatpush.msra.mxu0 0.0
      %593 = vmatpush.msra.mxu0 0.0
      %594 = vmatpush.msra.mxu0 0.0
      %595 = vmatpush.msra.mxu0 0.0
      %596 = vmatpush.msra.mxu0 0.0
      %597 = vmatpush.msra.mxu0 0.0
      %598 = vmatpush.msra.mxu0 0.0
      %599 = vmatpush.msra.mxu0 0.0
      %600 = vmatpush.msra.mxu0 0.0
      %601 = vmatpush.msra.mxu0 %v276
      %602 = vmatmul.f32.gmra.mxu0 %v578
      %v603 = vpop.f32.mrf.mxu0
      %v604 = vadd.f32 %v279, %v603
      %605 = vmatmul.f32.gmra.mxu0 %v581
      %v606 = vpop.f32.mrf.mxu0
      %v607 = vadd.f32 %v279, %v606
      %608 = vmatmul.f32.gmra.mxu0 %v584
      %v609 = vpop.f32.mrf.mxu0
      %v610 = vadd.f32 %v279, %v609
      %611 = vdwg.mxu0
      %v612 = vmax.f32 %v604, 0.0
      %v613 = vmax.f32 %v607, 0.0
      %v614 = vmax.f32 %v610, 0.0
      %s615 = scalar_lea.vmem [#allocation2], 168
      %616 = vst.msk [vmem:[%s615] sm:$0xff] %vm320, %v612
      %617 = vst.msk [vmem:[%s615 + $0x8] sm:$0xff] %vm320, %v613
      %618 = vst.msk [vmem:[%s615 + $0x10] sm:$0x1] %vm323, %v614
      %v620 = vsel %vm281, %v249, 0
      %v623 = vsel %vm281, %v250, 0
      %v626 = vsel %vm281, %v251, 0
      %628 = vmatpush.msra.mxu0 0.0
      %629 = vmatpush.msra.mxu0 0.0
      %630 = vmatpush.msra.mxu0 0.0
      %631 = vmatpush.msra.mxu0 0.0
      %632 = vmatpush.msra.mxu0 0.0
      %633 = vmatpush.msra.mxu0 0.0
      %634 = vmatpush.msra.mxu0 0.0
      %635 = vmatpush.msra.mxu0 0.0
      %636 = vmatpush.msra.mxu0 0.0
      %637 = vmatpush.msra.mxu0 0.0
      %638 = vmatpush.msra.mxu0 0.0
      %639 = vmatpush.msra.mxu0 0.0
      %640 = vmatpush.msra.mxu0 0.0
      %641 = vmatpush.msra.mxu0 0.0
      %642 = vmatpush.msra.mxu0 0.0
      %643 = vmatpush.msra.mxu0 %v276
      %644 = vmatmul.f32.gmra.mxu0 %v620
      %v645 = vpop.f32.mrf.mxu0
      %v646 = vadd.f32 %v279, %v645
      %647 = vmatmul.f32.gmra.mxu0 %v623
      %v648 = vpop.f32.mrf.mxu0
      %v649 = vadd.f32 %v279, %v648
      %650 = vmatmul.f32.gmra.mxu0 %v626
      %v651 = vpop.f32.mrf.mxu0
      %v652 = vadd.f32 %v279, %v651
      %653 = vdwg.mxu0
      %v654 = vmax.f32 %v646, 0.0
      %v655 = vmax.f32 %v649, 0.0
      %v656 = vmax.f32 %v652, 0.0
      %s657 = scalar_lea.vmem [#allocation2], 192
      %658 = vst.msk [vmem:[%s657] sm:$0xff] %vm320, %v654
      %659 = vst.msk [vmem:[%s657 + $0x8] sm:$0xff] %vm320, %v655
      %660 = vst.msk [vmem:[%s657 + $0x10] sm:$0x1] %vm323, %v656
      %v662 = vsel %vm281, %v252, 0
      %v665 = vsel %vm281, %v253, 0
      %v668 = vsel %vm281, %v254, 0
      %670 = vmatpush.msra.mxu0 0.0
      %671 = vmatpush.msra.mxu0 0.0
      %672 = vmatpush.msra.mxu0 0.0
      %673 = vmatpush.msra.mxu0 0.0
      %674 = vmatpush.msra.mxu0 0.0
      %675 = vmatpush.msra.mxu0 0.0
      %676 = vmatpush.msra.mxu0 0.0
      %677 = vmatpush.msra.mxu0 0.0
      %678 = vmatpush.msra.mxu0 0.0
      %679 = vmatpush.msra.mxu0 0.0
      %680 = vmatpush.msra.mxu0 0.0
      %681 = vmatpush.msra.mxu0 0.0
      %682 = vmatpush.msra.mxu0 0.0
      %683 = vmatpush.msra.mxu0 0.0
      %684 = vmatpush.msra.mxu0 0.0
      %685 = vmatpush.msra.mxu0 %v276
      %686 = vmatmul.f32.gmra.mxu0 %v662
      %v687 = vpop.f32.mrf.mxu0
      %v688 = vadd.f32 %v279, %v687
      %689 = vmatmul.f32.gmra.mxu0 %v665
      %v690 = vpop.f32.mrf.mxu0
      %v691 = vadd.f32 %v279, %v690
      %692 = vmatmul.f32.gmra.mxu0 %v668
      %v693 = vpop.f32.mrf.mxu0
      %v694 = vadd.f32 %v279, %v693
      %695 = vdwg.mxu0
      %v696 = vmax.f32 %v688, 0.0
      %v697 = vmax.f32 %v691, 0.0
      %v698 = vmax.f32 %v694, 0.0
      %s699 = scalar_lea.vmem [#allocation2], 216
      %700 = vst.msk [vmem:[%s699] sm:$0xff] %vm320, %v696
      %701 = vst.msk [vmem:[%s699 + $0x8] sm:$0xff] %vm320, %v697
      %702 = vst.msk [vmem:[%s699 + $0x10] sm:$0x1] %vm323, %v698
      %v704 = vsel %vm281, %v255, 0
      %v707 = vsel %vm281, %v256, 0
      %v710 = vsel %vm281, %v257, 0
      %712 = vmatpush.msra.mxu0 0.0
      %713 = vmatpush.msra.mxu0 0.0
      %714 = vmatpush.msra.mxu0 0.0
      %715 = vmatpush.msra.mxu0 0.0
      %716 = vmatpush.msra.mxu0 0.0
      %717 = vmatpush.msra.mxu0 0.0
      %718 = vmatpush.msra.mxu0 0.0
      %719 = vmatpush.msra.mxu0 0.0
      %720 = vmatpush.msra.mxu0 0.0
      %721 = vmatpush.msra.mxu0 0.0
      %722 = vmatpush.msra.mxu0 0.0
      %723 = vmatpush.msra.mxu0 0.0
      %724 = vmatpush.msra.mxu0 0.0
      %725 = vmatpush.msra.mxu0 0.0
      %726 = vmatpush.msra.mxu0 0.0
      %727 = vmatpush.msra.mxu0 %v276
      %728 = vmatmul.f32.gmra.mxu0 %v704
      %v729 = vpop.f32.mrf.mxu0
      %v730 = vadd.f32 %v279, %v729
      %731 = vmatmul.f32.gmra.mxu0 %v707
      %v732 = vpop.f32.mrf.mxu0
      %v733 = vadd.f32 %v279, %v732
      %734 = vmatmul.f32.gmra.mxu0 %v710
      %v735 = vpop.f32.mrf.mxu0
      %v736 = vadd.f32 %v279, %v735
      %737 = vdwg.mxu0
      %v738 = vmax.f32 %v730, 0.0
      %v739 = vmax.f32 %v733, 0.0
      %v740 = vmax.f32 %v736, 0.0
      %s741 = scalar_lea.vmem [#allocation2], 240
      %742 = vst.msk [vmem:[%s741] sm:$0xff] %vm320, %v738
      %743 = vst.msk [vmem:[%s741 + $0x8] sm:$0xff] %vm320, %v739
      %744 = vst.msk [vmem:[%s741 + $0x10] sm:$0x1] %vm323, %v740
      %v746 = vsel %vm281, %v258, 0
      %v749 = vsel %vm281, %v259, 0
      %v752 = vsel %vm281, %v260, 0
      %754 = vmatpush.msra.mxu0 0.0
      %755 = vmatpush.msra.mxu0 0.0
      %756 = vmatpush.msra.mxu0 0.0
      %757 = vmatpush.msra.mxu0 0.0
      %758 = vmatpush.msra.mxu0 0.0
      %759 = vmatpush.msra.mxu0 0.0
      %760 = vmatpush.msra.mxu0 0.0
      %761 = vmatpush.msra.mxu0 0.0
      %762 = vmatpush.msra.mxu0 0.0
      %763 = vmatpush.msra.mxu0 0.0
      %764 = vmatpush.msra.mxu0 0.0
      %765 = vmatpush.msra.mxu0 0.0
      %766 = vmatpush.msra.mxu0 0.0
      %767 = vmatpush.msra.mxu0 0.0
      %768 = vmatpush.msra.mxu0 0.0
      %769 = vmatpush.msra.mxu0 %v276
      %770 = vmatmul.f32.gmra.mxu0 %v746
      %v771 = vpop.f32.mrf.mxu0
      %v772 = vadd.f32 %v279, %v771
      %773 = vmatmul.f32.gmra.mxu0 %v749
      %v774 = vpop.f32.mrf.mxu0
      %v775 = vadd.f32 %v279, %v774
      %776 = vmatmul.f32.gmra.mxu0 %v752
      %v777 = vpop.f32.mrf.mxu0
      %v778 = vadd.f32 %v279, %v777
      %779 = vdwg.mxu0
      %v780 = vmax.f32 %v772, 0.0
      %v781 = vmax.f32 %v775, 0.0
      %v782 = vmax.f32 %v778, 0.0
      %s783 = scalar_lea.vmem [#allocation2], 264
      %784 = vst.msk [vmem:[%s783] sm:$0xff] %vm320, %v780
      %785 = vst.msk [vmem:[%s783 + $0x8] sm:$0xff] %vm320, %v781
      %786 = vst.msk [vmem:[%s783 + $0x10] sm:$0x1] %vm323, %v782
      %v788 = vsel %vm281, %v261, 0
      %v791 = vsel %vm281, %v262, 0
      %v794 = vsel %vm281, %v263, 0
      %796 = vmatpush.msra.mxu0 0.0
      %797 = vmatpush.msra.mxu0 0.0
      %798 = vmatpush.msra.mxu0 0.0
      %799 = vmatpush.msra.mxu0 0.0
      %800 = vmatpush.msra.mxu0 0.0
      %801 = vmatpush.msra.mxu0 0.0
      %802 = vmatpush.msra.mxu0 0.0
      %803 = vmatpush.msra.mxu0 0.0
      %804 = vmatpush.msra.mxu0 0.0
      %805 = vmatpush.msra.mxu0 0.0
      %806 = vmatpush.msra.mxu0 0.0
      %807 = vmatpush.msra.mxu0 0.0
      %808 = vmatpush.msra.mxu0 0.0
      %809 = vmatpush.msra.mxu0 0.0
      %810 = vmatpush.msra.mxu0 0.0
      %811 = vmatpush.msra.mxu0 %v276
      %812 = vmatmul.f32.gmra.mxu0 %v788
      %v813 = vpop.f32.mrf.mxu0
      %v814 = vadd.f32 %v279, %v813
      %815 = vmatmul.f32.gmra.mxu0 %v791
      %v816 = vpop.f32.mrf.mxu0
      %v817 = vadd.f32 %v279, %v816
      %818 = vmatmul.f32.gmra.mxu0 %v794
      %v819 = vpop.f32.mrf.mxu0
      %v820 = vadd.f32 %v279, %v819
      %821 = vdwg.mxu0
      %v822 = vmax.f32 %v814, 0.0
      %v823 = vmax.f32 %v817, 0.0
      %v824 = vmax.f32 %v820, 0.0
      %s825 = scalar_lea.vmem [#allocation2], 288
      %826 = vst.msk [vmem:[%s825] sm:$0xff] %vm320, %v822
      %827 = vst.msk [vmem:[%s825 + $0x8] sm:$0xff] %vm320, %v823
      %828 = vst.msk [vmem:[%s825 + $0x10] sm:$0x1] %vm323, %v824
      %v830 = vsel %vm281, %v264, 0
      %v833 = vsel %vm281, %v265, 0
      %v836 = vsel %vm281, %v266, 0
      %838 = vmatpush.msra.mxu0 0.0
      %839 = vmatpush.msra.mxu0 0.0
      %840 = vmatpush.msra.mxu0 0.0
      %841 = vmatpush.msra.mxu0 0.0
      %842 = vmatpush.msra.mxu0 0.0
      %843 = vmatpush.msra.mxu0 0.0
      %844 = vmatpush.msra.mxu0 0.0
      %845 = vmatpush.msra.mxu0 0.0
      %846 = vmatpush.msra.mxu0 0.0
      %847 = vmatpush.msra.mxu0 0.0
      %848 = vmatpush.msra.mxu0 0.0
      %849 = vmatpush.msra.mxu0 0.0
      %850 = vmatpush.msra.mxu0 0.0
      %851 = vmatpush.msra.mxu0 0.0
      %852 = vmatpush.msra.mxu0 0.0
      %853 = vmatpush.msra.mxu0 %v276
      %854 = vmatmul.f32.gmra.mxu0 %v830
      %v855 = vpop.f32.mrf.mxu0
      %v856 = vadd.f32 %v279, %v855
      %857 = vmatmul.f32.gmra.mxu0 %v833
      %v858 = vpop.f32.mrf.mxu0
      %v859 = vadd.f32 %v279, %v858
      %860 = vmatmul.f32.gmra.mxu0 %v836
      %v861 = vpop.f32.mrf.mxu0
      %v862 = vadd.f32 %v279, %v861
      %863 = vdwg.mxu0
      %v864 = vmax.f32 %v856, 0.0
      %v865 = vmax.f32 %v859, 0.0
      %v866 = vmax.f32 %v862, 0.0
      %s867 = scalar_lea.vmem [#allocation2], 312
      %868 = vst.msk [vmem:[%s867] sm:$0xff] %vm320, %v864
      %869 = vst.msk [vmem:[%s867 + $0x8] sm:$0xff] %vm320, %v865
      %870 = vst.msk [vmem:[%s867 + $0x10] sm:$0x1] %vm323, %v866
      %v872 = vsel %vm281, %v267, 0
      %v875 = vsel %vm281, %v268, 0
      %v878 = vsel %vm281, %v269, 0
      %880 = vmatpush.msra.mxu0 0.0
      %881 = vmatpush.msra.mxu0 0.0
      %882 = vmatpush.msra.mxu0 0.0
      %883 = vmatpush.msra.mxu0 0.0
      %884 = vmatpush.msra.mxu0 0.0
      %885 = vmatpush.msra.mxu0 0.0
      %886 = vmatpush.msra.mxu0 0.0
      %887 = vmatpush.msra.mxu0 0.0
      %888 = vmatpush.msra.mxu0 0.0
      %889 = vmatpush.msra.mxu0 0.0
      %890 = vmatpush.msra.mxu0 0.0
      %891 = vmatpush.msra.mxu0 0.0
      %892 = vmatpush.msra.mxu0 0.0
      %893 = vmatpush.msra.mxu0 0.0
      %894 = vmatpush.msra.mxu0 0.0
      %895 = vmatpush.msra.mxu0 %v276
      %896 = vmatmul.f32.gmra.mxu0 %v872
      %v897 = vpop.f32.mrf.mxu0
      %v898 = vadd.f32 %v279, %v897
      %899 = vmatmul.f32.gmra.mxu0 %v875
      %v900 = vpop.f32.mrf.mxu0
      %v901 = vadd.f32 %v279, %v900
      %902 = vmatmul.f32.gmra.mxu0 %v878
      %v903 = vpop.f32.mrf.mxu0
      %v904 = vadd.f32 %v279, %v903
      %905 = vdwg.mxu0
      %v906 = vmax.f32 %v898, 0.0
      %v907 = vmax.f32 %v901, 0.0
      %v908 = vmax.f32 %v904, 0.0
      %s909 = scalar_lea.vmem [#allocation2], 336
      %910 = vst.msk [vmem:[%s909] sm:$0xff] %vm320, %v906
      %911 = vst.msk [vmem:[%s909 + $0x8] sm:$0xff] %vm320, %v907
      %912 = vst.msk [vmem:[%s909 + $0x10] sm:$0x1] %vm323, %v908
      %v914 = vsel %vm281, %v270, 0
      %v917 = vsel %vm281, %v271, 0
      %v920 = vsel %vm281, %v272, 0
      %922 = vmatpush.msra.mxu0 0.0
      %923 = vmatpush.msra.mxu0 0.0
      %924 = vmatpush.msra.mxu0 0.0
      %925 = vmatpush.msra.mxu0 0.0
      %926 = vmatpush.msra.mxu0 0.0
      %927 = vmatpush.msra.mxu0 0.0
      %928 = vmatpush.msra.mxu0 0.0
      %929 = vmatpush.msra.mxu0 0.0
      %930 = vmatpush.msra.mxu0 0.0
      %931 = vmatpush.msra.mxu0 0.0
      %932 = vmatpush.msra.mxu0 0.0
      %933 = vmatpush.msra.mxu0 0.0
      %934 = vmatpush.msra.mxu0 0.0
      %935 = vmatpush.msra.mxu0 0.0
      %936 = vmatpush.msra.mxu0 0.0
      %937 = vmatpush.msra.mxu0 %v276
      %938 = vmatmul.f32.gmra.mxu0 %v914
      %v939 = vpop.f32.mrf.mxu0
      %v940 = vadd.f32 %v279, %v939
      %941 = vmatmul.f32.gmra.mxu0 %v917
      %v942 = vpop.f32.mrf.mxu0
      %v943 = vadd.f32 %v279, %v942
      %944 = vmatmul.f32.gmra.mxu0 %v920
      %v945 = vpop.f32.mrf.mxu0
      %v946 = vadd.f32 %v279, %v945
      %947 = vdwg.mxu0
      %v948 = vmax.f32 %v940, 0.0
      %v949 = vmax.f32 %v943, 0.0
      %v950 = vmax.f32 %v946, 0.0
      %s951 = scalar_lea.vmem [#allocation2], 360
      %952 = vst.msk [vmem:[%s951] sm:$0xff] %vm320, %v948
      %953 = vst.msk [vmem:[%s951 + $0x8] sm:$0xff] %vm320, %v949
      %954 = vst.msk [vmem:[%s951 + $0x10] sm:$0x1] %vm323, %v950
      %v956 = vsel %vm281, %v273, 0
      %v959 = vsel %vm281, %v274, 0
      %v962 = vsel %vm281, %v275, 0
      %964 = vmatpush.msra.mxu0 0.0
      %965 = vmatpush.msra.mxu0 0.0
      %966 = vmatpush.msra.mxu0 0.0
      %967 = vmatpush.msra.mxu0 0.0
      %968 = vmatpush.msra.mxu0 0.0
      %969 = vmatpush.msra.mxu0 0.0
      %970 = vmatpush.msra.mxu0 0.0
      %971 = vmatpush.msra.mxu0 0.0
      %972 = vmatpush.msra.mxu0 0.0
      %973 = vmatpush.msra.mxu0 0.0
      %974 = vmatpush.msra.mxu0 0.0
      %975 = vmatpush.msra.mxu0 0.0
      %976 = vmatpush.msra.mxu0 0.0
      %977 = vmatpush.msra.mxu0 0.0
      %978 = vmatpush.msra.mxu0 0.0
      %979 = vmatpush.msra.mxu0 %v276
      %980 = vmatmul.f32.gmra.mxu0 %v956
      %v981 = vpop.f32.mrf.mxu0
      %v982 = vadd.f32 %v279, %v981
      %983 = vmatmul.f32.gmra.mxu0 %v959
      %v984 = vpop.f32.mrf.mxu0
      %v985 = vadd.f32 %v279, %v984
      %986 = vmatmul.f32.gmra.mxu0 %v962
      %v987 = vpop.f32.mrf.mxu0
      %v988 = vadd.f32 %v279, %v987
      %989 = vdwg.mxu0
      %v990 = vmax.f32 %v982, 0.0
      %v991 = vmax.f32 %v985, 0.0
      %v992 = vmax.f32 %v988, 0.0
      %s993 = scalar_lea.vmem [#allocation2], 384
      %994 = vst.msk [vmem:[%s993] sm:$0xff] %vm320, %v990
      %995 = vst.msk [vmem:[%s993 + $0x8] sm:$0xff] %vm320, %v991
      %996 = vst.msk [vmem:[%s993 + $0x10] sm:$0x1] %vm323, %v992
      %v997 = vld [vmem:[#allocation2] sm:$0xff]
      %v998 = vld [vmem:[#allocation2 + $0x8] sm:$0xff]
      %v999 = vld [vmem:[#allocation2 + $0x10] sm:$0x1]
      %v1000 = vld [vmem:[#allocation2 + $0x18] sm:$0xff]
      %v1001 = vld [vmem:[#allocation2 + $0x20] sm:$0xff]
      %v1002 = vld [vmem:[#allocation2 + $0x28] sm:$0x1]
      %v1003 = vld [vmem:[#allocation2 + $0x30] sm:$0xff]
      %v1004 = vld [vmem:[#allocation2 + $0x38] sm:$0xff]
      %v1005 = vld [vmem:[#allocation2 + $0x40] sm:$0x1]
      %v1006 = vld [vmem:[#allocation2 + $0x48] sm:$0xff]
      %v1007 = vld [vmem:[#allocation2 + $0x50] sm:$0xff]
      %v1008 = vld [vmem:[#allocation2 + $0x58] sm:$0x1]
      %v1009 = vld [vmem:[#allocation2 + $0x60] sm:$0xff]
      %v1010 = vld [vmem:[#allocation2 + $0x68] sm:$0xff]
      %v1011 = vld [vmem:[#allocation2 + $0x70] sm:$0x1]
      %v1012 = vld [vmem:[#allocation2 + $0x78] sm:$0xff]
      %v1013 = vld [vmem:[#allocation2 + $0x80] sm:$0xff]
      %v1014 = vld [vmem:[#allocation2 + $0x88] sm:$0x1]
      %v1015 = vld [vmem:[#allocation2 + $0x90] sm:$0xff]
      %v1016 = vld [vmem:[#allocation2 + $0x98] sm:$0xff]
      %v1017 = vld [vmem:[#allocation2 + $0xa0] sm:$0x1]
      %v1018 = vld [vmem:[#allocation2 + $0xa8] sm:$0xff]
      %v1019 = vld [vmem:[#allocation2 + $0xb0] sm:$0xff]
      %v1020 = vld [vmem:[#allocation2 + $0xb8] sm:$0x1]
      %v1021 = vld [vmem:[#allocation2 + $0xc0] sm:$0xff]
      %v1022 = vld [vmem:[#allocation2 + $0xc8] sm:$0xff]
      %v1023 = vld [vmem:[#allocation2 + $0xd0] sm:$0x1]
      %v1024 = vld [vmem:[#allocation2 + $0xd8] sm:$0xff]
      %v1025 = vld [vmem:[#allocation2 + $0xe0] sm:$0xff]
      %v1026 = vld [vmem:[#allocation2 + $0xe8] sm:$0x1]
      %v1027 = vld [vmem:[#allocation2 + $0xf0] sm:$0xff]
      %v1028 = vld [vmem:[#allocation2 + $0xf8] sm:$0xff]
      %v1029 = vld [vmem:[#allocation2 + $0x100] sm:$0x1]
      %v1030 = vld [vmem:[#allocation2 + $0x108] sm:$0xff]
      %v1031 = vld [vmem:[#allocation2 + $0x110] sm:$0xff]
      %v1032 = vld [vmem:[#allocation2 + $0x118] sm:$0x1]
      %v1033 = vld [vmem:[#allocation2 + $0x120] sm:$0xff]
      %v1034 = vld [vmem:[#allocation2 + $0x128] sm:$0xff]
      %v1035 = vld [vmem:[#allocation2 + $0x130] sm:$0x1]
      %v1036 = vld [vmem:[#allocation2 + $0x138] sm:$0xff]
      %v1037 = vld [vmem:[#allocation2 + $0x140] sm:$0xff]
      %v1038 = vld [vmem:[#allocation2 + $0x148] sm:$0x1]
      %v1039 = vld [vmem:[#allocation2 + $0x150] sm:$0xff]
      %v1040 = vld [vmem:[#allocation2 + $0x158] sm:$0xff]
      %v1041 = vld [vmem:[#allocation2 + $0x160] sm:$0x1]
      %v1042 = vld [vmem:[#allocation2 + $0x168] sm:$0xff]
      %v1043 = vld [vmem:[#allocation2 + $0x170] sm:$0xff]
      %v1044 = vld [vmem:[#allocation2 + $0x178] sm:$0x1]
      %v1045 = vld [vmem:[#allocation2 + $0x180] sm:$0xff]
      %v1046 = vld [vmem:[#allocation2 + $0x188] sm:$0xff]
      %v1047 = vld [vmem:[#allocation2 + $0x190] sm:$0x1]
      %v1048 = vld [vmem:[%s3] sm:$0x7]
      %v1049 = vld [vmem:[%s3 + $0x4] sm:$0x7]
      %v1050 = vld [vmem:[%s3 + $0x8] sm:$0x7]
      %v1051 = vperm.slane %v1048, 0
      %v1052 = vmul.f32 %v997, %v1051
      %v1053 = vmul.f32 %v998, %v1051
      %v1054 = vmul.f32 %v1000, %v1051
      %v1055 = vmul.f32 %v1001, %v1051
      %v1056 = vmul.f32 %v1003, %v1051
      %v1057 = vmul.f32 %v1004, %v1051
      %v1058 = vmul.f32 %v1006, %v1051
      %v1059 = vmul.f32 %v1007, %v1051
      %v1060 = vmul.f32 %v1009, %v1051
      %v1061 = vmul.f32 %v1010, %v1051
      %v1062 = vmul.f32 %v1012, %v1051
      %v1063 = vmul.f32 %v1013, %v1051
      %v1064 = vmul.f32 %v1015, %v1051
      %v1065 = vmul.f32 %v1016, %v1051
      %v1066 = vmul.f32 %v1018, %v1051
      %v1067 = vmul.f32 %v1019, %v1051
      %v1068 = vmul.f32 %v1021, %v1051
      %v1069 = vmul.f32 %v1022, %v1051
      %v1070 = vmul.f32 %v1024, %v1051
      %v1071 = vmul.f32 %v1025, %v1051
      %v1072 = vmul.f32 %v1027, %v1051
      %v1073 = vmul.f32 %v1028, %v1051
      %v1074 = vmul.f32 %v1030, %v1051
      %v1075 = vmul.f32 %v1031, %v1051
      %v1076 = vmul.f32 %v1033, %v1051
      %v1077 = vmul.f32 %v1034, %v1051
      %v1078 = vmul.f32 %v1036, %v1051
      %v1079 = vmul.f32 %v1037, %v1051
      %v1080 = vmul.f32 %v1039, %v1051
      %v1081 = vmul.f32 %v1040, %v1051
      %v1082 = vadd.f32 %v1052, 0.0
      %v1083 = vadd.f32 %v1053, 0.0
      %v1084 = vadd.f32 %v1054, 0.0
      %v1085 = vadd.f32 %v1055, 0.0
      %v1086 = vadd.f32 %v1056, 0.0
      %v1087 = vadd.f32 %v1057, 0.0
      %v1088 = vadd.f32 %v1058, 0.0
      %v1089 = vadd.f32 %v1059, 0.0
      %v1090 = vadd.f32 %v1060, 0.0
      %v1091 = vadd.f32 %v1061, 0.0
      %v1092 = vadd.f32 %v1062, 0.0
      %v1093 = vadd.f32 %v1063, 0.0
      %v1094 = vadd.f32 %v1064, 0.0
      %v1095 = vadd.f32 %v1065, 0.0
      %v1096 = vadd.f32 %v1066, 0.0
      %v1097 = vadd.f32 %v1067, 0.0
      %v1098 = vadd.f32 %v1068, 0.0
      %v1099 = vadd.f32 %v1069, 0.0
      %v1100 = vadd.f32 %v1070, 0.0
      %v1101 = vadd.f32 %v1071, 0.0
      %v1102 = vadd.f32 %v1072, 0.0
      %v1103 = vadd.f32 %v1073, 0.0
      %v1104 = vadd.f32 %v1074, 0.0
      %v1105 = vadd.f32 %v1075, 0.0
      %v1106 = vadd.f32 %v1076, 0.0
      %v1107 = vadd.f32 %v1077, 0.0
      %v1108 = vadd.f32 %v1078, 0.0
      %v1109 = vadd.f32 %v1079, 0.0
      %v1110 = vadd.f32 %v1080, 0.0
      %v1111 = vadd.f32 %v1081, 0.0
      %v1112 = vperm.slane %v1048, 1
      %v1113 = vmul.f32 %v997, %v1112
      %v1114 = vmul.f32 %v998, %v1112
      %v1115 = vmul.f32 %v1000, %v1112
      %v1116 = vmul.f32 %v1001, %v1112
      %v1117 = vmul.f32 %v1003, %v1112
      %v1118 = vmul.f32 %v1004, %v1112
      %v1119 = vmul.f32 %v1006, %v1112
      %v1120 = vmul.f32 %v1007, %v1112
      %v1121 = vmul.f32 %v1009, %v1112
      %v1122 = vmul.f32 %v1010, %v1112
      %v1123 = vmul.f32 %v1012, %v1112
      %v1124 = vmul.f32 %v1013, %v1112
      %v1125 = vmul.f32 %v1015, %v1112
      %v1126 = vmul.f32 %v1016, %v1112
      %v1127 = vmul.f32 %v1018, %v1112
      %v1128 = vmul.f32 %v1019, %v1112
      %v1129 = vmul.f32 %v1021, %v1112
      %v1130 = vmul.f32 %v1022, %v1112
      %v1131 = vmul.f32 %v1024, %v1112
      %v1132 = vmul.f32 %v1025, %v1112
      %v1133 = vmul.f32 %v1027, %v1112
      %v1134 = vmul.f32 %v1028, %v1112
      %v1135 = vmul.f32 %v1030, %v1112
      %v1136 = vmul.f32 %v1031, %v1112
      %v1137 = vmul.f32 %v1033, %v1112
      %v1138 = vmul.f32 %v1034, %v1112
      %v1139 = vmul.f32 %v1036, %v1112
      %v1140 = vmul.f32 %v1037, %v1112
      %v1141 = vmul.f32 %v1039, %v1112
      %v1142 = vmul.f32 %v1040, %v1112
      %vm1173 = vcmask 1046528
      %v1174 = vrot.slane %v1113, 1
      %v1175 = vrot.slane %v1114, 1
      %v1176 = vsel %vm1173, %v1174, %v1175
      %v1177 = vrot.slane %v1115, 1
      %v1178 = vrot.slane %v1116, 1
      %v1179 = vsel %vm1173, %v1177, %v1178
      %v1180 = vrot.slane %v1117, 1
      %v1181 = vrot.slane %v1118, 1
      %v1182 = vsel %vm1173, %v1180, %v1181
      %v1183 = vrot.slane %v1119, 1
      %v1184 = vrot.slane %v1120, 1
      %v1185 = vsel %vm1173, %v1183, %v1184
      %v1186 = vrot.slane %v1121, 1
      %v1187 = vrot.slane %v1122, 1
      %v1188 = vsel %vm1173, %v1186, %v1187
      %v1189 = vrot.slane %v1123, 1
      %v1190 = vrot.slane %v1124, 1
      %v1191 = vsel %vm1173, %v1189, %v1190
      %v1192 = vrot.slane %v1125, 1
      %v1193 = vrot.slane %v1126, 1
      %v1194 = vsel %vm1173, %v1192, %v1193
      %v1195 = vrot.slane %v1127, 1
      %v1196 = vrot.slane %v1128, 1
      %v1197 = vsel %vm1173, %v1195, %v1196
      %v1198 = vrot.slane %v1129, 1
      %v1199 = vrot.slane %v1130, 1
      %v1200 = vsel %vm1173, %v1198, %v1199
      %v1201 = vrot.slane %v1131, 1
      %v1202 = vrot.slane %v1132, 1
      %v1203 = vsel %vm1173, %v1201, %v1202
      %v1204 = vrot.slane %v1133, 1
      %v1205 = vrot.slane %v1134, 1
      %v1206 = vsel %vm1173, %v1204, %v1205
      %v1207 = vrot.slane %v1135, 1
      %v1208 = vrot.slane %v1136, 1
      %v1209 = vsel %vm1173, %v1207, %v1208
      %v1210 = vrot.slane %v1137, 1
      %v1211 = vrot.slane %v1138, 1
      %v1212 = vsel %vm1173, %v1210, %v1211
      %v1213 = vrot.slane %v1139, 1
      %v1214 = vrot.slane %v1140, 1
      %v1215 = vsel %vm1173, %v1213, %v1214
      %v1216 = vrot.slane %v1141, 1
      %v1217 = vrot.slane %v1142, 1
      %v1218 = vsel %vm1173, %v1216, %v1217
      %v1249 = vadd.f32 %v1082, %v1176
      %v1250 = vadd.f32 %v1083, %v1175
      %v1251 = vadd.f32 %v1084, %v1179
      %v1252 = vadd.f32 %v1085, %v1178
      %v1253 = vadd.f32 %v1086, %v1182
      %v1254 = vadd.f32 %v1087, %v1181
      %v1255 = vadd.f32 %v1088, %v1185
      %v1256 = vadd.f32 %v1089, %v1184
      %v1257 = vadd.f32 %v1090, %v1188
      %v1258 = vadd.f32 %v1091, %v1187
      %v1259 = vadd.f32 %v1092, %v1191
      %v1260 = vadd.f32 %v1093, %v1190
      %v1261 = vadd.f32 %v1094, %v1194
      %v1262 = vadd.f32 %v1095, %v1193
      %v1263 = vadd.f32 %v1096, %v1197
      %v1264 = vadd.f32 %v1097, %v1196
      %v1265 = vadd.f32 %v1098, %v1200
      %v1266 = vadd.f32 %v1099, %v1199
      %v1267 = vadd.f32 %v1100, %v1203
      %v1268 = vadd.f32 %v1101, %v1202
      %v1269 = vadd.f32 %v1102, %v1206
      %v1270 = vadd.f32 %v1103, %v1205
      %v1271 = vadd.f32 %v1104, %v1209
      %v1272 = vadd.f32 %v1105, %v1208
      %v1273 = vadd.f32 %v1106, %v1212
      %v1274 = vadd.f32 %v1107, %v1211
      %v1275 = vadd.f32 %v1108, %v1215
      %v1276 = vadd.f32 %v1109, %v1214
      %v1277 = vadd.f32 %v1110, %v1218
      %v1278 = vadd.f32 %v1111, %v1217
      %v1279 = vperm.slane %v1048, 2
      %v1280 = vmul.f32 %v997, %v1279
      %v1281 = vmul.f32 %v998, %v1279
      %v1282 = vmul.f32 %v999, %v1279
      %v1283 = vmul.f32 %v1000, %v1279
      %v1284 = vmul.f32 %v1001, %v1279
      %v1285 = vmul.f32 %v1002, %v1279
      %v1286 = vmul.f32 %v1003, %v1279
      %v1287 = vmul.f32 %v1004, %v1279
      %v1288 = vmul.f32 %v1005, %v1279
      %v1289 = vmul.f32 %v1006, %v1279
      %v1290 = vmul.f32 %v1007, %v1279
      %v1291 = vmul.f32 %v1008, %v1279
      %v1292 = vmul.f32 %v1009, %v1279
      %v1293 = vmul.f32 %v1010, %v1279
      %v1294 = vmul.f32 %v1011, %v1279
      %v1295 = vmul.f32 %v1012, %v1279
      %v1296 = vmul.f32 %v1013, %v1279
      %v1297 = vmul.f32 %v1014, %v1279
      %v1298 = vmul.f32 %v1015, %v1279
      %v1299 = vmul.f32 %v1016, %v1279
      %v1300 = vmul.f32 %v1017, %v1279
      %v1301 = vmul.f32 %v1018, %v1279
      %v1302 = vmul.f32 %v1019, %v1279
      %v1303 = vmul.f32 %v1020, %v1279
      %v1304 = vmul.f32 %v1021, %v1279
      %v1305 = vmul.f32 %v1022, %v1279
      %v1306 = vmul.f32 %v1023, %v1279
      %v1307 = vmul.f32 %v1024, %v1279
      %v1308 = vmul.f32 %v1025, %v1279
      %v1309 = vmul.f32 %v1026, %v1279
      %v1310 = vmul.f32 %v1027, %v1279
      %v1311 = vmul.f32 %v1028, %v1279
      %v1312 = vmul.f32 %v1029, %v1279
      %v1313 = vmul.f32 %v1030, %v1279
      %v1314 = vmul.f32 %v1031, %v1279
      %v1315 = vmul.f32 %v1032, %v1279
      %v1316 = vmul.f32 %v1033, %v1279
      %v1317 = vmul.f32 %v1034, %v1279
      %v1318 = vmul.f32 %v1035, %v1279
      %v1319 = vmul.f32 %v1036, %v1279
      %v1320 = vmul.f32 %v1037, %v1279
      %v1321 = vmul.f32 %v1038, %v1279
      %v1322 = vmul.f32 %v1039, %v1279
      %v1323 = vmul.f32 %v1040, %v1279
      %v1324 = vmul.f32 %v1041, %v1279
      %vm1370 = vcmask 1045504
      %v1371 = vrot.slane %v1280, 2
      %v1372 = vrot.slane %v1281, 2
      %v1373 = vsel %vm1370, %v1371, %v1372
      %v1374 = vrot.slane %v1282, 2
      %v1375 = vsel %vm1370, %v1372, %v1374
      %v1376 = vrot.slane %v1283, 2
      %v1377 = vrot.slane %v1284, 2
      %v1378 = vsel %vm1370, %v1376, %v1377
      %v1379 = vrot.slane %v1285, 2
      %v1380 = vsel %vm1370, %v1377, %v1379
      %v1381 = vrot.slane %v1286, 2
      %v1382 = vrot.slane %v1287, 2
      %v1383 = vsel %vm1370, %v1381, %v1382
      %v1384 = vrot.slane %v1288, 2
      %v1385 = vsel %vm1370, %v1382, %v1384
      %v1386 = vrot.slane %v1289, 2
      %v1387 = vrot.slane %v1290, 2
      %v1388 = vsel %vm1370, %v1386, %v1387
      %v1389 = vrot.slane %v1291, 2
      %v1390 = vsel %vm1370, %v1387, %v1389
      %v1391 = vrot.slane %v1292, 2
      %v1392 = vrot.slane %v1293, 2
      %v1393 = vsel %vm1370, %v1391, %v1392
      %v1394 = vrot.slane %v1294, 2
      %v1395 = vsel %vm1370, %v1392, %v1394
      %v1396 = vrot.slane %v1295, 2
      %v1397 = vrot.slane %v1296, 2
      %v1398 = vsel %vm1370, %v1396, %v1397
      %v1399 = vrot.slane %v1297, 2
      %v1400 = vsel %vm1370, %v1397, %v1399
      %v1401 = vrot.slane %v1298, 2
      %v1402 = vrot.slane %v1299, 2
      %v1403 = vsel %vm1370, %v1401, %v1402
      %v1404 = vrot.slane %v1300, 2
      %v1405 = vsel %vm1370, %v1402, %v1404
      %v1406 = vrot.slane %v1301, 2
      %v1407 = vrot.slane %v1302, 2
      %v1408 = vsel %vm1370, %v1406, %v1407
      %v1409 = vrot.slane %v1303, 2
      %v1410 = vsel %vm1370, %v1407, %v1409
      %v1411 = vrot.slane %v1304, 2
      %v1412 = vrot.slane %v1305, 2
      %v1413 = vsel %vm1370, %v1411, %v1412
      %v1414 = vrot.slane %v1306, 2
      %v1415 = vsel %vm1370, %v1412, %v1414
      %v1416 = vrot.slane %v1307, 2
      %v1417 = vrot.slane %v1308, 2
      %v1418 = vsel %vm1370, %v1416, %v1417
      %v1419 = vrot.slane %v1309, 2
      %v1420 = vsel %vm1370, %v1417, %v1419
      %v1421 = vrot.slane %v1310, 2
      %v1422 = vrot.slane %v1311, 2
      %v1423 = vsel %vm1370, %v1421, %v1422
      %v1424 = vrot.slane %v1312, 2
      %v1425 = vsel %vm1370, %v1422, %v1424
      %v1426 = vrot.slane %v1313, 2
      %v1427 = vrot.slane %v1314, 2
      %v1428 = vsel %vm1370, %v1426, %v1427
      %v1429 = vrot.slane %v1315, 2
      %v1430 = vsel %vm1370, %v1427, %v1429
      %v1431 = vrot.slane %v1316, 2
      %v1432 = vrot.slane %v1317, 2
      %v1433 = vsel %vm1370, %v1431, %v1432
      %v1434 = vrot.slane %v1318, 2
      %v1435 = vsel %vm1370, %v1432, %v1434
      %v1436 = vrot.slane %v1319, 2
      %v1437 = vrot.slane %v1320, 2
      %v1438 = vsel %vm1370, %v1436, %v1437
      %v1439 = vrot.slane %v1321, 2
      %v1440 = vsel %vm1370, %v1437, %v1439
      %v1441 = vrot.slane %v1322, 2
      %v1442 = vrot.slane %v1323, 2
      %v1443 = vsel %vm1370, %v1441, %v1442
      %v1444 = vrot.slane %v1324, 2
      %v1445 = vsel %vm1370, %v1442, %v1444
      %v1476 = vadd.f32 %v1249, %v1373
      %v1477 = vadd.f32 %v1250, %v1375
      %v1478 = vadd.f32 %v1251, %v1378
      %v1479 = vadd.f32 %v1252, %v1380
      %v1480 = vadd.f32 %v1253, %v1383
      %v1481 = vadd.f32 %v1254, %v1385
      %v1482 = vadd.f32 %v1255, %v1388
      %v1483 = vadd.f32 %v1256, %v1390
      %v1484 = vadd.f32 %v1257, %v1393
      %v1485 = vadd.f32 %v1258, %v1395
      %v1486 = vadd.f32 %v1259, %v1398
      %v1487 = vadd.f32 %v1260, %v1400
      %v1488 = vadd.f32 %v1261, %v1403
      %v1489 = vadd.f32 %v1262, %v1405
      %v1490 = vadd.f32 %v1263, %v1408
      %v1491 = vadd.f32 %v1264, %v1410
      %v1492 = vadd.f32 %v1265, %v1413
      %v1493 = vadd.f32 %v1266, %v1415
      %v1494 = vadd.f32 %v1267, %v1418
      %v1495 = vadd.f32 %v1268, %v1420
      %v1496 = vadd.f32 %v1269, %v1423
      %v1497 = vadd.f32 %v1270, %v1425
      %v1498 = vadd.f32 %v1271, %v1428
      %v1499 = vadd.f32 %v1272, %v1430
      %v1500 = vadd.f32 %v1273, %v1433
      %v1501 = vadd.f32 %v1274, %v1435
      %v1502 = vadd.f32 %v1275, %v1438
      %v1503 = vadd.f32 %v1276, %v1440
      %v1504 = vadd.f32 %v1277, %v1443
      %v1505 = vadd.f32 %v1278, %v1445
      %v1506 = vperm.slane %v1049, 0
      %v1507 = vmul.f32 %v1000, %v1506
      %v1508 = vmul.f32 %v1001, %v1506
      %v1509 = vmul.f32 %v1003, %v1506
      %v1510 = vmul.f32 %v1004, %v1506
      %v1511 = vmul.f32 %v1006, %v1506
      %v1512 = vmul.f32 %v1007, %v1506
      %v1513 = vmul.f32 %v1009, %v1506
      %v1514 = vmul.f32 %v1010, %v1506
      %v1515 = vmul.f32 %v1012, %v1506
      %v1516 = vmul.f32 %v1013, %v1506
      %v1517 = vmul.f32 %v1015, %v1506
      %v1518 = vmul.f32 %v1016, %v1506
      %v1519 = vmul.f32 %v1018, %v1506
      %v1520 = vmul.f32 %v1019, %v1506
      %v1521 = vmul.f32 %v1021, %v1506
      %v1522 = vmul.f32 %v1022, %v1506
      %v1523 = vmul.f32 %v1024, %v1506
      %v1524 = vmul.f32 %v1025, %v1506
      %v1525 = vmul.f32 %v1027, %v1506
      %v1526 = vmul.f32 %v1028, %v1506
      %v1527 = vmul.f32 %v1030, %v1506
      %v1528 = vmul.f32 %v1031, %v1506
      %v1529 = vmul.f32 %v1033, %v1506
      %v1530 = vmul.f32 %v1034, %v1506
      %v1531 = vmul.f32 %v1036, %v1506
      %v1532 = vmul.f32 %v1037, %v1506
      %v1533 = vmul.f32 %v1039, %v1506
      %v1534 = vmul.f32 %v1040, %v1506
      %v1535 = vmul.f32 %v1042, %v1506
      %v1536 = vmul.f32 %v1043, %v1506
      %v1537 = vadd.f32 %v1476, %v1507
      %v1538 = vadd.f32 %v1477, %v1508
      %v1539 = vadd.f32 %v1478, %v1509
      %v1540 = vadd.f32 %v1479, %v1510
      %v1541 = vadd.f32 %v1480, %v1511
      %v1542 = vadd.f32 %v1481, %v1512
      %v1543 = vadd.f32 %v1482, %v1513
      %v1544 = vadd.f32 %v1483, %v1514
      %v1545 = vadd.f32 %v1484, %v1515
      %v1546 = vadd.f32 %v1485, %v1516
      %v1547 = vadd.f32 %v1486, %v1517
      %v1548 = vadd.f32 %v1487, %v1518
      %v1549 = vadd.f32 %v1488, %v1519
      %v1550 = vadd.f32 %v1489, %v1520
      %v1551 = vadd.f32 %v1490, %v1521
      %v1552 = vadd.f32 %v1491, %v1522
      %v1553 = vadd.f32 %v1492, %v1523
      %v1554 = vadd.f32 %v1493, %v1524
      %v1555 = vadd.f32 %v1494, %v1525
      %v1556 = vadd.f32 %v1495, %v1526
      %v1557 = vadd.f32 %v1496, %v1527
      %v1558 = vadd.f32 %v1497, %v1528
      %v1559 = vadd.f32 %v1498, %v1529
      %v1560 = vadd.f32 %v1499, %v1530
      %v1561 = vadd.f32 %v1500, %v1531
      %v1562 = vadd.f32 %v1501, %v1532
      %v1563 = vadd.f32 %v1502, %v1533
      %v1564 = vadd.f32 %v1503, %v1534
      %v1565 = vadd.f32 %v1504, %v1535
      %v1566 = vadd.f32 %v1505, %v1536
      %v1567 = vperm.slane %v1049, 1
      %v1568 = vmul.f32 %v1000, %v1567
      %v1569 = vmul.f32 %v1001, %v1567
      %v1570 = vmul.f32 %v1003, %v1567
      %v1571 = vmul.f32 %v1004, %v1567
      %v1572 = vmul.f32 %v1006, %v1567
      %v1573 = vmul.f32 %v1007, %v1567
      %v1574 = vmul.f32 %v1009, %v1567
      %v1575 = vmul.f32 %v1010, %v1567
      %v1576 = vmul.f32 %v1012, %v1567
      %v1577 = vmul.f32 %v1013, %v1567
      %v1578 = vmul.f32 %v1015, %v1567
      %v1579 = vmul.f32 %v1016, %v1567
      %v1580 = vmul.f32 %v1018, %v1567
      %v1581 = vmul.f32 %v1019, %v1567
      %v1582 = vmul.f32 %v1021, %v1567
      %v1583 = vmul.f32 %v1022, %v1567
      %v1584 = vmul.f32 %v1024, %v1567
      %v1585 = vmul.f32 %v1025, %v1567
      %v1586 = vmul.f32 %v1027, %v1567
      %v1587 = vmul.f32 %v1028, %v1567
      %v1588 = vmul.f32 %v1030, %v1567
      %v1589 = vmul.f32 %v1031, %v1567
      %v1590 = vmul.f32 %v1033, %v1567
      %v1591 = vmul.f32 %v1034, %v1567
      %v1592 = vmul.f32 %v1036, %v1567
      %v1593 = vmul.f32 %v1037, %v1567
      %v1594 = vmul.f32 %v1039, %v1567
      %v1595 = vmul.f32 %v1040, %v1567
      %v1596 = vmul.f32 %v1042, %v1567
      %v1597 = vmul.f32 %v1043, %v1567
      %v1628 = vrot.slane %v1568, 1
      %v1629 = vrot.slane %v1569, 1
      %v1630 = vsel %vm1173, %v1628, %v1629
      %v1631 = vrot.slane %v1570, 1
      %v1632 = vrot.slane %v1571, 1
      %v1633 = vsel %vm1173, %v1631, %v1632
      %v1634 = vrot.slane %v1572, 1
      %v1635 = vrot.slane %v1573, 1
      %v1636 = vsel %vm1173, %v1634, %v1635
      %v1637 = vrot.slane %v1574, 1
      %v1638 = vrot.slane %v1575, 1
      %v1639 = vsel %vm1173, %v1637, %v1638
      %v1640 = vrot.slane %v1576, 1
      %v1641 = vrot.slane %v1577, 1
      %v1642 = vsel %vm1173, %v1640, %v1641
      %v1643 = vrot.slane %v1578, 1
      %v1644 = vrot.slane %v1579, 1
      %v1645 = vsel %vm1173, %v1643, %v1644
      %v1646 = vrot.slane %v1580, 1
      %v1647 = vrot.slane %v1581, 1
      %v1648 = vsel %vm1173, %v1646, %v1647
      %v1649 = vrot.slane %v1582, 1
      %v1650 = vrot.slane %v1583, 1
      %v1651 = vsel %vm1173, %v1649, %v1650
      %v1652 = vrot.slane %v1584, 1
      %v1653 = vrot.slane %v1585, 1
      %v1654 = vsel %vm1173, %v1652, %v1653
      %v1655 = vrot.slane %v1586, 1
      %v1656 = vrot.slane %v1587, 1
      %v1657 = vsel %vm1173, %v1655, %v1656
      %v1658 = vrot.slane %v1588, 1
      %v1659 = vrot.slane %v1589, 1
      %v1660 = vsel %vm1173, %v1658, %v1659
      %v1661 = vrot.slane %v1590, 1
      %v1662 = vrot.slane %v1591, 1
      %v1663 = vsel %vm1173, %v1661, %v1662
      %v1664 = vrot.slane %v1592, 1
      %v1665 = vrot.slane %v1593, 1
      %v1666 = vsel %vm1173, %v1664, %v1665
      %v1667 = vrot.slane %v1594, 1
      %v1668 = vrot.slane %v1595, 1
      %v1669 = vsel %vm1173, %v1667, %v1668
      %v1670 = vrot.slane %v1596, 1
      %v1671 = vrot.slane %v1597, 1
      %v1672 = vsel %vm1173, %v1670, %v1671
      %v1703 = vadd.f32 %v1537, %v1630
      %v1704 = vadd.f32 %v1538, %v1629
      %v1705 = vadd.f32 %v1539, %v1633
      %v1706 = vadd.f32 %v1540, %v1632
      %v1707 = vadd.f32 %v1541, %v1636
      %v1708 = vadd.f32 %v1542, %v1635
      %v1709 = vadd.f32 %v1543, %v1639
      %v1710 = vadd.f32 %v1544, %v1638
      %v1711 = vadd.f32 %v1545, %v1642
      %v1712 = vadd.f32 %v1546, %v1641
      %v1713 = vadd.f32 %v1547, %v1645
      %v1714 = vadd.f32 %v1548, %v1644
      %v1715 = vadd.f32 %v1549, %v1648
      %v1716 = vadd.f32 %v1550, %v1647
      %v1717 = vadd.f32 %v1551, %v1651
      %v1718 = vadd.f32 %v1552, %v1650
      %v1719 = vadd.f32 %v1553, %v1654
      %v1720 = vadd.f32 %v1554, %v1653
      %v1721 = vadd.f32 %v1555, %v1657
      %v1722 = vadd.f32 %v1556, %v1656
      %v1723 = vadd.f32 %v1557, %v1660
      %v1724 = vadd.f32 %v1558, %v1659
      %v1725 = vadd.f32 %v1559, %v1663
      %v1726 = vadd.f32 %v1560, %v1662
      %v1727 = vadd.f32 %v1561, %v1666
      %v1728 = vadd.f32 %v1562, %v1665
      %v1729 = vadd.f32 %v1563, %v1669
      %v1730 = vadd.f32 %v1564, %v1668
      %v1731 = vadd.f32 %v1565, %v1672
      %v1732 = vadd.f32 %v1566, %v1671
      %v1733 = vperm.slane %v1049, 2
      %v1734 = vmul.f32 %v1000, %v1733
      %v1735 = vmul.f32 %v1001, %v1733
      %v1736 = vmul.f32 %v1002, %v1733
      %v1737 = vmul.f32 %v1003, %v1733
      %v1738 = vmul.f32 %v1004, %v1733
      %v1739 = vmul.f32 %v1005, %v1733
      %v1740 = vmul.f32 %v1006, %v1733
      %v1741 = vmul.f32 %v1007, %v1733
      %v1742 = vmul.f32 %v1008, %v1733
      %v1743 = vmul.f32 %v1009, %v1733
      %v1744 = vmul.f32 %v1010, %v1733
      %v1745 = vmul.f32 %v1011, %v1733
      %v1746 = vmul.f32 %v1012, %v1733
      %v1747 = vmul.f32 %v1013, %v1733
      %v1748 = vmul.f32 %v1014, %v1733
      %v1749 = vmul.f32 %v1015, %v1733
      %v1750 = vmul.f32 %v1016, %v1733
      %v1751 = vmul.f32 %v1017, %v1733
      %v1752 = vmul.f32 %v1018, %v1733
      %v1753 = vmul.f32 %v1019, %v1733
      %v1754 = vmul.f32 %v1020, %v1733
      %v1755 = vmul.f32 %v1021, %v1733
      %v1756 = vmul.f32 %v1022, %v1733
      %v1757 = vmul.f32 %v1023, %v1733
      %v1758 = vmul.f32 %v1024, %v1733
      %v1759 = vmul.f32 %v1025, %v1733
      %v1760 = vmul.f32 %v1026, %v1733
      %v1761 = vmul.f32 %v1027, %v1733
      %v1762 = vmul.f32 %v1028, %v1733
      %v1763 = vmul.f32 %v1029, %v1733
      %v1764 = vmul.f32 %v1030, %v1733
      %v1765 = vmul.f32 %v1031, %v1733
      %v1766 = vmul.f32 %v1032, %v1733
      %v1767 = vmul.f32 %v1033, %v1733
      %v1768 = vmul.f32 %v1034, %v1733
      %v1769 = vmul.f32 %v1035, %v1733
      %v1770 = vmul.f32 %v1036, %v1733
      %v1771 = vmul.f32 %v1037, %v1733
      %v1772 = vmul.f32 %v1038, %v1733
      %v1773 = vmul.f32 %v1039, %v1733
      %v1774 = vmul.f32 %v1040, %v1733
      %v1775 = vmul.f32 %v1041, %v1733
      %v1776 = vmul.f32 %v1042, %v1733
      %v1777 = vmul.f32 %v1043, %v1733
      %v1778 = vmul.f32 %v1044, %v1733
      %v1824 = vrot.slane %v1734, 2
      %v1825 = vrot.slane %v1735, 2
      %v1826 = vsel %vm1370, %v1824, %v1825
      %v1827 = vrot.slane %v1736, 2
      %v1828 = vsel %vm1370, %v1825, %v1827
      %v1829 = vrot.slane %v1737, 2
      %v1830 = vrot.slane %v1738, 2
      %v1831 = vsel %vm1370, %v1829, %v1830
      %v1832 = vrot.slane %v1739, 2
      %v1833 = vsel %vm1370, %v1830, %v1832
      %v1834 = vrot.slane %v1740, 2
      %v1835 = vrot.slane %v1741, 2
      %v1836 = vsel %vm1370, %v1834, %v1835
      %v1837 = vrot.slane %v1742, 2
      %v1838 = vsel %vm1370, %v1835, %v1837
      %v1839 = vrot.slane %v1743, 2
      %v1840 = vrot.slane %v1744, 2
      %v1841 = vsel %vm1370, %v1839, %v1840
      %v1842 = vrot.slane %v1745, 2
      %v1843 = vsel %vm1370, %v1840, %v1842
      %v1844 = vrot.slane %v1746, 2
      %v1845 = vrot.slane %v1747, 2
      %v1846 = vsel %vm1370, %v1844, %v1845
      %v1847 = vrot.slane %v1748, 2
      %v1848 = vsel %vm1370, %v1845, %v1847
      %v1849 = vrot.slane %v1749, 2
      %v1850 = vrot.slane %v1750, 2
      %v1851 = vsel %vm1370, %v1849, %v1850
      %v1852 = vrot.slane %v1751, 2
      %v1853 = vsel %vm1370, %v1850, %v1852
      %v1854 = vrot.slane %v1752, 2
      %v1855 = vrot.slane %v1753, 2
      %v1856 = vsel %vm1370, %v1854, %v1855
      %v1857 = vrot.slane %v1754, 2
      %v1858 = vsel %vm1370, %v1855, %v1857
      %v1859 = vrot.slane %v1755, 2
      %v1860 = vrot.slane %v1756, 2
      %v1861 = vsel %vm1370, %v1859, %v1860
      %v1862 = vrot.slane %v1757, 2
      %v1863 = vsel %vm1370, %v1860, %v1862
      %v1864 = vrot.slane %v1758, 2
      %v1865 = vrot.slane %v1759, 2
      %v1866 = vsel %vm1370, %v1864, %v1865
      %v1867 = vrot.slane %v1760, 2
      %v1868 = vsel %vm1370, %v1865, %v1867
      %v1869 = vrot.slane %v1761, 2
      %v1870 = vrot.slane %v1762, 2
      %v1871 = vsel %vm1370, %v1869, %v1870
      %v1872 = vrot.slane %v1763, 2
      %v1873 = vsel %vm1370, %v1870, %v1872
      %v1874 = vrot.slane %v1764, 2
      %v1875 = vrot.slane %v1765, 2
      %v1876 = vsel %vm1370, %v1874, %v1875
      %v1877 = vrot.slane %v1766, 2
      %v1878 = vsel %vm1370, %v1875, %v1877
      %v1879 = vrot.slane %v1767, 2
      %v1880 = vrot.slane %v1768, 2
      %v1881 = vsel %vm1370, %v1879, %v1880
      %v1882 = vrot.slane %v1769, 2
      %v1883 = vsel %vm1370, %v1880, %v1882
      %v1884 = vrot.slane %v1770, 2
      %v1885 = vrot.slane %v1771, 2
      %v1886 = vsel %vm1370, %v1884, %v1885
      %v1887 = vrot.slane %v1772, 2
      %v1888 = vsel %vm1370, %v1885, %v1887
      %v1889 = vrot.slane %v1773, 2
      %v1890 = vrot.slane %v1774, 2
      %v1891 = vsel %vm1370, %v1889, %v1890
      %v1892 = vrot.slane %v1775, 2
      %v1893 = vsel %vm1370, %v1890, %v1892
      %v1894 = vrot.slane %v1776, 2
      %v1895 = vrot.slane %v1777, 2
      %v1896 = vsel %vm1370, %v1894, %v1895
      %v1897 = vrot.slane %v1778, 2
      %v1898 = vsel %vm1370, %v1895, %v1897
      %v1929 = vadd.f32 %v1703, %v1826
      %v1930 = vadd.f32 %v1704, %v1828
      %v1931 = vadd.f32 %v1705, %v1831
      %v1932 = vadd.f32 %v1706, %v1833
      %v1933 = vadd.f32 %v1707, %v1836
      %v1934 = vadd.f32 %v1708, %v1838
      %v1935 = vadd.f32 %v1709, %v1841
      %v1936 = vadd.f32 %v1710, %v1843
      %v1937 = vadd.f32 %v1711, %v1846
      %v1938 = vadd.f32 %v1712, %v1848
      %v1939 = vadd.f32 %v1713, %v1851
      %v1940 = vadd.f32 %v1714, %v1853
      %v1941 = vadd.f32 %v1715, %v1856
      %v1942 = vadd.f32 %v1716, %v1858
      %v1943 = vadd.f32 %v1717, %v1861
      %v1944 = vadd.f32 %v1718, %v1863
      %v1945 = vadd.f32 %v1719, %v1866
      %v1946 = vadd.f32 %v1720, %v1868
      %v1947 = vadd.f32 %v1721, %v1871
      %v1948 = vadd.f32 %v1722, %v1873
      %v1949 = vadd.f32 %v1723, %v1876
      %v1950 = vadd.f32 %v1724, %v1878
      %v1951 = vadd.f32 %v1725, %v1881
      %v1952 = vadd.f32 %v1726, %v1883
      %v1953 = vadd.f32 %v1727, %v1886
      %v1954 = vadd.f32 %v1728, %v1888
      %v1955 = vadd.f32 %v1729, %v1891
      %v1956 = vadd.f32 %v1730, %v1893
      %v1957 = vadd.f32 %v1731, %v1896
      %v1958 = vadd.f32 %v1732, %v1898
      %v1959 = vperm.slane %v1050, 0
      %v1960 = vmul.f32 %v1003, %v1959
      %v1961 = vmul.f32 %v1004, %v1959
      %v1962 = vmul.f32 %v1006, %v1959
      %v1963 = vmul.f32 %v1007, %v1959
      %v1964 = vmul.f32 %v1009, %v1959
      %v1965 = vmul.f32 %v1010, %v1959
      %v1966 = vmul.f32 %v1012, %v1959
      %v1967 = vmul.f32 %v1013, %v1959
      %v1968 = vmul.f32 %v1015, %v1959
      %v1969 = vmul.f32 %v1016, %v1959
      %v1970 = vmul.f32 %v1018, %v1959
      %v1971 = vmul.f32 %v1019, %v1959
      %v1972 = vmul.f32 %v1021, %v1959
      %v1973 = vmul.f32 %v1022, %v1959
      %v1974 = vmul.f32 %v1024, %v1959
      %v1975 = vmul.f32 %v1025, %v1959
      %v1976 = vmul.f32 %v1027, %v1959
      %v1977 = vmul.f32 %v1028, %v1959
      %v1978 = vmul.f32 %v1030, %v1959
      %v1979 = vmul.f32 %v1031, %v1959
      %v1980 = vmul.f32 %v1033, %v1959
      %v1981 = vmul.f32 %v1034, %v1959
      %v1982 = vmul.f32 %v1036, %v1959
      %v1983 = vmul.f32 %v1037, %v1959
      %v1984 = vmul.f32 %v1039, %v1959
      %v1985 = vmul.f32 %v1040, %v1959
      %v1986 = vmul.f32 %v1042, %v1959
      %v1987 = vmul.f32 %v1043, %v1959
      %v1988 = vmul.f32 %v1045, %v1959
      %v1989 = vmul.f32 %v1046, %v1959
      %v1990 = vadd.f32 %v1929, %v1960
      %v1991 = vadd.f32 %v1930, %v1961
      %v1992 = vadd.f32 %v1931, %v1962
      %v1993 = vadd.f32 %v1932, %v1963
      %v1994 = vadd.f32 %v1933, %v1964
      %v1995 = vadd.f32 %v1934, %v1965
      %v1996 = vadd.f32 %v1935, %v1966
      %v1997 = vadd.f32 %v1936, %v1967
      %v1998 = vadd.f32 %v1937, %v1968
      %v1999 = vadd.f32 %v1938, %v1969
      %v2000 = vadd.f32 %v1939, %v1970
      %v2001 = vadd.f32 %v1940, %v1971
      %v2002 = vadd.f32 %v1941, %v1972
      %v2003 = vadd.f32 %v1942, %v1973
      %v2004 = vadd.f32 %v1943, %v1974
      %v2005 = vadd.f32 %v1944, %v1975
      %v2006 = vadd.f32 %v1945, %v1976
      %v2007 = vadd.f32 %v1946, %v1977
      %v2008 = vadd.f32 %v1947, %v1978
      %v2009 = vadd.f32 %v1948, %v1979
      %v2010 = vadd.f32 %v1949, %v1980
      %v2011 = vadd.f32 %v1950, %v1981
      %v2012 = vadd.f32 %v1951, %v1982
      %v2013 = vadd.f32 %v1952, %v1983
      %v2014 = vadd.f32 %v1953, %v1984
      %v2015 = vadd.f32 %v1954, %v1985
      %v2016 = vadd.f32 %v1955, %v1986
      %v2017 = vadd.f32 %v1956, %v1987
      %v2018 = vadd.f32 %v1957, %v1988
      %v2019 = vadd.f32 %v1958, %v1989
      %v2020 = vperm.slane %v1050, 1
      %v2021 = vmul.f32 %v1003, %v2020
      %v2022 = vmul.f32 %v1004, %v2020
      %v2023 = vmul.f32 %v1006, %v2020
      %v2024 = vmul.f32 %v1007, %v2020
      %v2025 = vmul.f32 %v1009, %v2020
      %v2026 = vmul.f32 %v1010, %v2020
      %v2027 = vmul.f32 %v1012, %v2020
      %v2028 = vmul.f32 %v1013, %v2020
      %v2029 = vmul.f32 %v1015, %v2020
      %v2030 = vmul.f32 %v1016, %v2020
      %v2031 = vmul.f32 %v1018, %v2020
      %v2032 = vmul.f32 %v1019, %v2020
      %v2033 = vmul.f32 %v1021, %v2020
      %v2034 = vmul.f32 %v1022, %v2020
      %v2035 = vmul.f32 %v1024, %v2020
      %v2036 = vmul.f32 %v1025, %v2020
      %v2037 = vmul.f32 %v1027, %v2020
      %v2038 = vmul.f32 %v1028, %v2020
      %v2039 = vmul.f32 %v1030, %v2020
      %v2040 = vmul.f32 %v1031, %v2020
      %v2041 = vmul.f32 %v1033, %v2020
      %v2042 = vmul.f32 %v1034, %v2020
      %v2043 = vmul.f32 %v1036, %v2020
      %v2044 = vmul.f32 %v1037, %v2020
      %v2045 = vmul.f32 %v1039, %v2020
      %v2046 = vmul.f32 %v1040, %v2020
      %v2047 = vmul.f32 %v1042, %v2020
      %v2048 = vmul.f32 %v1043, %v2020
      %v2049 = vmul.f32 %v1045, %v2020
      %v2050 = vmul.f32 %v1046, %v2020
      %v2081 = vrot.slane %v2021, 1
      %v2082 = vrot.slane %v2022, 1
      %v2083 = vsel %vm1173, %v2081, %v2082
      %v2084 = vrot.slane %v2023, 1
      %v2085 = vrot.slane %v2024, 1
      %v2086 = vsel %vm1173, %v2084, %v2085
      %v2087 = vrot.slane %v2025, 1
      %v2088 = vrot.slane %v2026, 1
      %v2089 = vsel %vm1173, %v2087, %v2088
      %v2090 = vrot.slane %v2027, 1
      %v2091 = vrot.slane %v2028, 1
      %v2092 = vsel %vm1173, %v2090, %v2091
      %v2093 = vrot.slane %v2029, 1
      %v2094 = vrot.slane %v2030, 1
      %v2095 = vsel %vm1173, %v2093, %v2094
      %v2096 = vrot.slane %v2031, 1
      %v2097 = vrot.slane %v2032, 1
      %v2098 = vsel %vm1173, %v2096, %v2097
      %v2099 = vrot.slane %v2033, 1
      %v2100 = vrot.slane %v2034, 1
      %v2101 = vsel %vm1173, %v2099, %v2100
      %v2102 = vrot.slane %v2035, 1
      %v2103 = vrot.slane %v2036, 1
      %v2104 = vsel %vm1173, %v2102, %v2103
      %v2105 = vrot.slane %v2037, 1
      %v2106 = vrot.slane %v2038, 1
      %v2107 = vsel %vm1173, %v2105, %v2106
      %v2108 = vrot.slane %v2039, 1
      %v2109 = vrot.slane %v2040, 1
      %v2110 = vsel %vm1173, %v2108, %v2109
      %v2111 = vrot.slane %v2041, 1
      %v2112 = vrot.slane %v2042, 1
      %v2113 = vsel %vm1173, %v2111, %v2112
      %v2114 = vrot.slane %v2043, 1
      %v2115 = vrot.slane %v2044, 1
      %v2116 = vsel %vm1173, %v2114, %v2115
      %v2117 = vrot.slane %v2045, 1
      %v2118 = vrot.slane %v2046, 1
      %v2119 = vsel %vm1173, %v2117, %v2118
      %v2120 = vrot.slane %v2047, 1
      %v2121 = vrot.slane %v2048, 1
      %v2122 = vsel %vm1173, %v2120, %v2121
      %v2123 = vrot.slane %v2049, 1
      %v2124 = vrot.slane %v2050, 1
      %v2125 = vsel %vm1173, %v2123, %v2124
      %v2156 = vadd.f32 %v1990, %v2083
      %v2157 = vadd.f32 %v1991, %v2082
      %v2158 = vadd.f32 %v1992, %v2086
      %v2159 = vadd.f32 %v1993, %v2085
      %v2160 = vadd.f32 %v1994, %v2089
      %v2161 = vadd.f32 %v1995, %v2088
      %v2162 = vadd.f32 %v1996, %v2092
      %v2163 = vadd.f32 %v1997, %v2091
      %v2164 = vadd.f32 %v1998, %v2095
      %v2165 = vadd.f32 %v1999, %v2094
      %v2166 = vadd.f32 %v2000, %v2098
      %v2167 = vadd.f32 %v2001, %v2097
      %v2168 = vadd.f32 %v2002, %v2101
      %v2169 = vadd.f32 %v2003, %v2100
      %v2170 = vadd.f32 %v2004, %v2104
      %v2171 = vadd.f32 %v2005, %v2103
      %v2172 = vadd.f32 %v2006, %v2107
      %v2173 = vadd.f32 %v2007, %v2106
      %v2174 = vadd.f32 %v2008, %v2110
      %v2175 = vadd.f32 %v2009, %v2109
      %v2176 = vadd.f32 %v2010, %v2113
      %v2177 = vadd.f32 %v2011, %v2112
      %v2178 = vadd.f32 %v2012, %v2116
      %v2179 = vadd.f32 %v2013, %v2115
      %v2180 = vadd.f32 %v2014, %v2119
      %v2181 = vadd.f32 %v2015, %v2118
      %v2182 = vadd.f32 %v2016, %v2122
      %v2183 = vadd.f32 %v2017, %v2121
      %v2184 = vadd.f32 %v2018, %v2125
      %v2185 = vadd.f32 %v2019, %v2124
      %v2186 = vperm.slane %v1050, 2
      %v2187 = vmul.f32 %v1003, %v2186
      %v2188 = vmul.f32 %v1004, %v2186
      %v2189 = vmul.f32 %v1005, %v2186
      %v2190 = vmul.f32 %v1006, %v2186
      %v2191 = vmul.f32 %v1007, %v2186
      %v2192 = vmul.f32 %v1008, %v2186
      %v2193 = vmul.f32 %v1009, %v2186
      %v2194 = vmul.f32 %v1010, %v2186
      %v2195 = vmul.f32 %v1011, %v2186
      %v2196 = vmul.f32 %v1012, %v2186
      %v2197 = vmul.f32 %v1013, %v2186
      %v2198 = vmul.f32 %v1014, %v2186
      %v2199 = vmul.f32 %v1015, %v2186
      %v2200 = vmul.f32 %v1016, %v2186
      %v2201 = vmul.f32 %v1017, %v2186
      %v2202 = vmul.f32 %v1018, %v2186
      %v2203 = vmul.f32 %v1019, %v2186
      %v2204 = vmul.f32 %v1020, %v2186
      %v2205 = vmul.f32 %v1021, %v2186
      %v2206 = vmul.f32 %v1022, %v2186
      %v2207 = vmul.f32 %v1023, %v2186
      %v2208 = vmul.f32 %v1024, %v2186
      %v2209 = vmul.f32 %v1025, %v2186
      %v2210 = vmul.f32 %v1026, %v2186
      %v2211 = vmul.f32 %v1027, %v2186
      %v2212 = vmul.f32 %v1028, %v2186
      %v2213 = vmul.f32 %v1029, %v2186
      %v2214 = vmul.f32 %v1030, %v2186
      %v2215 = vmul.f32 %v1031, %v2186
      %v2216 = vmul.f32 %v1032, %v2186
      %v2217 = vmul.f32 %v1033, %v2186
      %v2218 = vmul.f32 %v1034, %v2186
      %v2219 = vmul.f32 %v1035, %v2186
      %v2220 = vmul.f32 %v1036, %v2186
      %v2221 = vmul.f32 %v1037, %v2186
      %v2222 = vmul.f32 %v1038, %v2186
      %v2223 = vmul.f32 %v1039, %v2186
      %v2224 = vmul.f32 %v1040, %v2186
      %v2225 = vmul.f32 %v1041, %v2186
      %v2226 = vmul.f32 %v1042, %v2186
      %v2227 = vmul.f32 %v1043, %v2186
      %v2228 = vmul.f32 %v1044, %v2186
      %v2229 = vmul.f32 %v1045, %v2186
      %v2230 = vmul.f32 %v1046, %v2186
      %v2231 = vmul.f32 %v1047, %v2186
      %v2277 = vrot.slane %v2187, 2
      %v2278 = vrot.slane %v2188, 2
      %v2279 = vsel %vm1370, %v2277, %v2278
      %v2280 = vrot.slane %v2189, 2
      %v2281 = vsel %vm1370, %v2278, %v2280
      %v2282 = vrot.slane %v2190, 2
      %v2283 = vrot.slane %v2191, 2
      %v2284 = vsel %vm1370, %v2282, %v2283
      %v2285 = vrot.slane %v2192, 2
      %v2286 = vsel %vm1370, %v2283, %v2285
      %v2287 = vrot.slane %v2193, 2
      %v2288 = vrot.slane %v2194, 2
      %v2289 = vsel %vm1370, %v2287, %v2288
      %v2290 = vrot.slane %v2195, 2
      %v2291 = vsel %vm1370, %v2288, %v2290
      %v2292 = vrot.slane %v2196, 2
      %v2293 = vrot.slane %v2197, 2
      %v2294 = vsel %vm1370, %v2292, %v2293
      %v2295 = vrot.slane %v2198, 2
      %v2296 = vsel %vm1370, %v2293, %v2295
      %v2297 = vrot.slane %v2199, 2
      %v2298 = vrot.slane %v2200, 2
      %v2299 = vsel %vm1370, %v2297, %v2298
      %v2300 = vrot.slane %v2201, 2
      %v2301 = vsel %vm1370, %v2298, %v2300
      %v2302 = vrot.slane %v2202, 2
      %v2303 = vrot.slane %v2203, 2
      %v2304 = vsel %vm1370, %v2302, %v2303
      %v2305 = vrot.slane %v2204, 2
      %v2306 = vsel %vm1370, %v2303, %v2305
      %v2307 = vrot.slane %v2205, 2
      %v2308 = vrot.slane %v2206, 2
      %v2309 = vsel %vm1370, %v2307, %v2308
      %v2310 = vrot.slane %v2207, 2
      %v2311 = vsel %vm1370, %v2308, %v2310
      %v2312 = vrot.slane %v2208, 2
      %v2313 = vrot.slane %v2209, 2
      %v2314 = vsel %vm1370, %v2312, %v2313
      %v2315 = vrot.slane %v2210, 2
      %v2316 = vsel %vm1370, %v2313, %v2315
      %v2317 = vrot.slane %v2211, 2
      %v2318 = vrot.slane %v2212, 2
      %v2319 = vsel %vm1370, %v2317, %v2318
      %v2320 = vrot.slane %v2213, 2
      %v2321 = vsel %vm1370, %v2318, %v2320
      %v2322 = vrot.slane %v2214, 2
      %v2323 = vrot.slane %v2215, 2
      %v2324 = vsel %vm1370, %v2322, %v2323
      %v2325 = vrot.slane %v2216, 2
      %v2326 = vsel %vm1370, %v2323, %v2325
      %v2327 = vrot.slane %v2217, 2
      %v2328 = vrot.slane %v2218, 2
      %v2329 = vsel %vm1370, %v2327, %v2328
      %v2330 = vrot.slane %v2219, 2
      %v2331 = vsel %vm1370, %v2328, %v2330
      %v2332 = vrot.slane %v2220, 2
      %v2333 = vrot.slane %v2221, 2
      %v2334 = vsel %vm1370, %v2332, %v2333
      %v2335 = vrot.slane %v2222, 2
      %v2336 = vsel %vm1370, %v2333, %v2335
      %v2337 = vrot.slane %v2223, 2
      %v2338 = vrot.slane %v2224, 2
      %v2339 = vsel %vm1370, %v2337, %v2338
      %v2340 = vrot.slane %v2225, 2
      %v2341 = vsel %vm1370, %v2338, %v2340
      %v2342 = vrot.slane %v2226, 2
      %v2343 = vrot.slane %v2227, 2
      %v2344 = vsel %vm1370, %v2342, %v2343
      %v2345 = vrot.slane %v2228, 2
      %v2346 = vsel %vm1370, %v2343, %v2345
      %v2347 = vrot.slane %v2229, 2
      %v2348 = vrot.slane %v2230, 2
      %v2349 = vsel %vm1370, %v2347, %v2348
      %v2350 = vrot.slane %v2231, 2
      %v2351 = vsel %vm1370, %v2348, %v2350
      %v2382 = vadd.f32 %v2156, %v2279
      %v2383 = vadd.f32 %v2157, %v2281
      %v2384 = vadd.f32 %v2158, %v2284
      %v2385 = vadd.f32 %v2159, %v2286
      %v2386 = vadd.f32 %v2160, %v2289
      %v2387 = vadd.f32 %v2161, %v2291
      %v2388 = vadd.f32 %v2162, %v2294
      %v2389 = vadd.f32 %v2163, %v2296
      %v2390 = vadd.f32 %v2164, %v2299
      %v2391 = vadd.f32 %v2165, %v2301
      %v2392 = vadd.f32 %v2166, %v2304
      %v2393 = vadd.f32 %v2167, %v2306
      %v2394 = vadd.f32 %v2168, %v2309
      %v2395 = vadd.f32 %v2169, %v2311
      %v2396 = vadd.f32 %v2170, %v2314
      %v2397 = vadd.f32 %v2171, %v2316
      %v2398 = vadd.f32 %v2172, %v2319
      %v2399 = vadd.f32 %v2173, %v2321
      %v2400 = vadd.f32 %v2174, %v2324
      %v2401 = vadd.f32 %v2175, %v2326
      %v2402 = vadd.f32 %v2176, %v2329
      %v2403 = vadd.f32 %v2177, %v2331
      %v2404 = vadd.f32 %v2178, %v2334
      %v2405 = vadd.f32 %v2179, %v2336
      %v2406 = vadd.f32 %v2180, %v2339
      %v2407 = vadd.f32 %v2181, %v2341
      %v2408 = vadd.f32 %v2182, %v2344
      %v2409 = vadd.f32 %v2183, %v2346
      %v2410 = vadd.f32 %v2184, %v2349
      %v2411 = vadd.f32 %v2185, %v2351
      %v2412 = vld [vmem:[%s4] sm:$0x1]
      %v2414 = vperm.slane %v2412, 0
      %v2416 = vadd.f32 %v2382, %v2414
      %v2417 = vadd.f32 %v2383, %v2414
      %v2418 = vadd.f32 %v2384, %v2414
      %v2419 = vadd.f32 %v2385, %v2414
      %v2420 = vadd.f32 %v2386, %v2414
      %v2421 = vadd.f32 %v2387, %v2414
      %v2422 = vadd.f32 %v2388, %v2414
      %v2423 = vadd.f32 %v2389, %v2414
      %v2424 = vadd.f32 %v2390, %v2414
      %v2425 = vadd.f32 %v2391, %v2414
      %v2426 = vadd.f32 %v2392, %v2414
      %v2427 = vadd.f32 %v2393, %v2414
      %v2428 = vadd.f32 %v2394, %v2414
      %v2429 = vadd.f32 %v2395, %v2414
      %v2430 = vadd.f32 %v2396, %v2414
      %v2431 = vadd.f32 %v2397, %v2414
      %v2432 = vadd.f32 %v2398, %v2414
      %v2433 = vadd.f32 %v2399, %v2414
      %v2434 = vadd.f32 %v2400, %v2414
      %v2435 = vadd.f32 %v2401, %v2414
      %v2436 = vadd.f32 %v2402, %v2414
      %v2437 = vadd.f32 %v2403, %v2414
      %v2438 = vadd.f32 %v2404, %v2414
      %v2439 = vadd.f32 %v2405, %v2414
      %v2440 = vadd.f32 %v2406, %v2414
      %v2441 = vadd.f32 %v2407, %v2414
      %v2442 = vadd.f32 %v2408, %v2414
      %v2443 = vadd.f32 %v2409, %v2414
      %v2444 = vadd.f32 %v2410, %v2414
      %v2445 = vadd.f32 %v2411, %v2414
      %v2446 = vmax.f32 %v2416, 0.0
      %v2447 = vmax.f32 %v2417, 0.0
      %v2448 = vmax.f32 %v2418, 0.0
      %v2449 = vmax.f32 %v2419, 0.0
      %v2450 = vmax.f32 %v2420, 0.0
      %v2451 = vmax.f32 %v2421, 0.0
      %v2452 = vmax.f32 %v2422, 0.0
      %v2453 = vmax.f32 %v2423, 0.0
      %v2454 = vmax.f32 %v2424, 0.0
      %v2455 = vmax.f32 %v2425, 0.0
      %v2456 = vmax.f32 %v2426, 0.0
      %v2457 = vmax.f32 %v2427, 0.0
      %v2458 = vmax.f32 %v2428, 0.0
      %v2459 = vmax.f32 %v2429, 0.0
      %v2460 = vmax.f32 %v2430, 0.0
      %v2461 = vmax.f32 %v2431, 0.0
      %v2462 = vmax.f32 %v2432, 0.0
      %v2463 = vmax.f32 %v2433, 0.0
      %v2464 = vmax.f32 %v2434, 0.0
      %v2465 = vmax.f32 %v2435, 0.0
      %v2466 = vmax.f32 %v2436, 0.0
      %v2467 = vmax.f32 %v2437, 0.0
      %v2468 = vmax.f32 %v2438, 0.0
      %v2469 = vmax.f32 %v2439, 0.0
      %v2470 = vmax.f32 %v2440, 0.0
      %v2471 = vmax.f32 %v2441, 0.0
      %v2472 = vmax.f32 %v2442, 0.0
      %v2473 = vmax.f32 %v2443, 0.0
      %v2474 = vmax.f32 %v2444, 0.0
      %v2475 = vmax.f32 %v2445, 0.0
      %2476 = vst.msk [vmem:[%s224] sm:$0xff] %vm320, %v2446
      %vm2477 = vcmask 129024
      %2478 = vst.msk [vmem:[%s224 + $0x8] sm:$0x7f] %vm2477, %v2447
      %2479 = vst.msk [vmem:[%s224 + $0x10] sm:$0xff] %vm320, %v2448
      %2480 = vst.msk [vmem:[%s224 + $0x18] sm:$0x7f] %vm2477, %v2449
      %2481 = vst.msk [vmem:[%s224 + $0x20] sm:$0xff] %vm320, %v2450
      %2482 = vst.msk [vmem:[%s224 + $0x28] sm:$0x7f] %vm2477, %v2451
      %2483 = vst.msk [vmem:[%s224 + $0x30] sm:$0xff] %vm320, %v2452
      %2484 = vst.msk [vmem:[%s224 + $0x38] sm:$0x7f] %vm2477, %v2453
      %2485 = vst.msk [vmem:[%s224 + $0x40] sm:$0xff] %vm320, %v2454
      %2486 = vst.msk [vmem:[%s224 + $0x48] sm:$0x7f] %vm2477, %v2455
      %2487 = vst.msk [vmem:[%s224 + $0x50] sm:$0xff] %vm320, %v2456
      %2488 = vst.msk [vmem:[%s224 + $0x58] sm:$0x7f] %vm2477, %v2457
      %2489 = vst.msk [vmem:[%s224 + $0x60] sm:$0xff] %vm320, %v2458
      %2490 = vst.msk [vmem:[%s224 + $0x68] sm:$0x7f] %vm2477, %v2459
      %2491 = vst.msk [vmem:[%s224 + $0x70] sm:$0xff] %vm320, %v2460
      %2492 = vst.msk [vmem:[%s224 + $0x78] sm:$0x7f] %vm2477, %v2461
      %2493 = vst.msk [vmem:[%s224 + $0x80] sm:$0xff] %vm320, %v2462
      %2494 = vst.msk [vmem:[%s224 + $0x88] sm:$0x7f] %vm2477, %v2463
      %2495 = vst.msk [vmem:[%s224 + $0x90] sm:$0xff] %vm320, %v2464
      %2496 = vst.msk [vmem:[%s224 + $0x98] sm:$0x7f] %vm2477, %v2465
      %2497 = vst.msk [vmem:[%s224 + $0xa0] sm:$0xff] %vm320, %v2466
      %2498 = vst.msk [vmem:[%s224 + $0xa8] sm:$0x7f] %vm2477, %v2467
      %2499 = vst.msk [vmem:[%s224 + $0xb0] sm:$0xff] %vm320, %v2468
      %2500 = vst.msk [vmem:[%s224 + $0xb8] sm:$0x7f] %vm2477, %v2469
      %2501 = vst.msk [vmem:[%s224 + $0xc0] sm:$0xff] %vm320, %v2470
      %2502 = vst.msk [vmem:[%s224 + $0xc8] sm:$0x7f] %vm2477, %v2471
      %2503 = vst.msk [vmem:[%s224 + $0xd0] sm:$0xff] %vm320, %v2472
      %2504 = vst.msk [vmem:[%s224 + $0xd8] sm:$0x7f] %vm2477, %v2473
      %2505 = vst.msk [vmem:[%s224 + $0xe0] sm:$0xff] %vm320, %v2474
      %2506 = vst.msk [vmem:[%s224 + $0xe8] sm:$0x7f] %vm2477, %v2475
      %p2507 = scmp.lt.s32.totalorder %s16, 1
      %s2508 = scalar_select %p2507, %s16, 1
      %s2509 = smul.addr %s2508, 30
      %s2510 = smul.addr %s2509, 8
      %s2511 = scalar_lea.vmem %s5, %s2510
      // Predicated region
      $region41: #{depthwise_xcorr_forward.4} parent=39 // pred_check
        %p2512 = pneg %p144
      $region42: #{depthwise_xcorr_forward.4} parent=39 // pred_check_branch
        %2514 = sbr.rel (%p2512) target = $region44
      $region43: #{depthwise_xcorr_forward.4} parent=39 // pred_region
        _
      $region44: #{depthwise_xcorr_forward.4} parent=39 // pred_fallthru
        _
    $region40: #{depthwise_xcorr_forward.4} parent=5 // pred_fallthru
      _
    %p2515 = scmp.le.s32.totalorder 2, %s11
    // Predicated region
    $region45: #{depthwise_xcorr_forward.4} parent=5 // pred_check
      %p2516 = pneg %p2515
    $region46: #{depthwise_xcorr_forward.4} parent=5 // pred_check_branch
      %2518 = sbr.rel (%p2516) target = $region48
    $region47: #{depthwise_xcorr_forward.4} parent=5 // pred_region
      %s2519 = ssub.s32 %s11, 2
      // Predicated region
      $region49: #{depthwise_xcorr_forward.4} parent=47 // pred_check
        %p2520 = pneg %p150
      $region50: #{depthwise_xcorr_forward.4} parent=47 // pred_check_branch
        %2522 = sbr.rel (%p2520) target = $region52
      $region51: #{depthwise_xcorr_forward.4} parent=47 // pred_region
        %p2523 = scmp.lt.s32.totalorder %s17, 1
        %s2524 = scalar_select %p2523, %s17, 1
        %s2525 = smul.addr %s2524, 30
        %s2526 = smul.addr %s2525, 8
        %s2527 = scalar_lea.vmem %s5, %s2526
      $region52: #{depthwise_xcorr_forward.4} parent=47 // pred_fallthru
        _
    $region48: #{depthwise_xcorr_forward.4} parent=5 // pred_fallthru
      _
  $region6: #{depthwise_xcorr_forward.4} parent=0 // loop_footer
    %s15 = sadd.s32 1, %s11
  $region7: #{depthwise_xcorr_forward.4} parent=0 // loop_footer_branch
    %10 = sbr.rel target = $region3
  $region8: #{depthwise_xcorr_forward.4} parent=0 // loop_exit
    _

// kernel: depthwise_xcorr_forward.5
$region0: #{depthwise_xcorr_forward.5}
  #allocation0 [shape = 'u32[]', space=smem, size = 0x4, offset = 0x4, fixed_abs, tag = 'smem constant byte address 0x4 - core index']
  #allocation1 [shape = 'u32[72,128]{1,0:T(1,128)}', space=vmem, size = 0x9000, scoped, tag = 'internal scratch']
  #allocation2 [shape = 'f32[121,16]{1,0:T(8,128)}', space=vmem, size = 0x10000, scoped, tag = 'scratch operand']
  %s0 = inlined_call_operand.vmem [shape: f32[2,15,15,16], index: 0, kind: input, shape index: {}]
  %s1 = inlined_call_operand.vmem [shape: f32[2,5,5,16], index: 1, kind: input, shape index: {}]
  %s2 = inlined_call_operand.vmem [shape: f32[16,16], index: 2, kind: input, shape index: {}]
  %s3 = inlined_call_operand.vmem [shape: f32[1,16], index: 3, kind: input, shape index: {}]
  %s4 = inlined_call_operand.vmem [shape: f32[16,4], index: 4, kind: input, shape index: {}]
  %s5 = inlined_call_operand.vmem [shape: f32[1,4], index: 5, kind: input, shape index: {}]
  %s6 = inlined_call_operand.vmem [shape: f32[2,121,4], index: 6, kind: output, shape index: {}]
  %s7 = sld [smem:[#allocation0]]
  $region57: #{depthwise_xcorr_forward.5} parent=0
    _
  %s9 = ssub.s32 1, %s7
  %s10 = scalar_select 0, %s9, %s7
  loop: start=0, step=1, limit=4
  $region2: #{depthwise_xcorr_forward.5} parent=0 // loop_pre_header
    _
  $region3: #{depthwise_xcorr_forward.5} parent=0 // loop_header
    %s12 = sphi 0, %s16
    %p13 = scmp.ge.s32.totalorder %s12, 4
    %s22 = sphi 0, %s24
    %s25 = sphi 0, %s22
    %s26 = sphi 0, %s25
    %s42 = sphi 0, %s26
    %s48 = sphi 0, %s50
    %s51 = sphi 0, %s48
    %s52 = sphi 0, %s51
    %s68 = sphi 0, %s52
    %s72 = sphi 0, %s72
    %s74 = sphi 0, %s72
    %s75 = sphi 0, %s74
    %s89 = sphi 0, %s75
    %s93 = sphi 0, %s93
    %s95 = sphi 0, %s93
    %s96 = sphi 0, %s95
    %s110 = sphi 0, %s96
    %s114 = sphi 0, %s114
    %s116 = sphi 0, %s114
    %s117 = sphi 0, %s116
    %s131 = sphi 0, %s117
    %s135 = sphi 0, %s135
    %s137 = sphi 0, %s135
    %s138 = sphi 0, %s137
    %s152 = sphi 0, %s138
    %s158 = sphi 0, %s160
    %s161 = sphi 0, %s158
    %s162 = sphi 0, %s161
    %s178 = sphi 0, %s162
  $region4: #{depthwise_xcorr_forward.5} parent=0 // loop_header_branch
    %15 = sbr.rel (%p13) target = $region8
  $region5: #{depthwise_xcorr_forward.5} parent=0 // loop_body
    %s17 = ssub.s32 %s12, 1
    %s18 = ssub.s32 %s12, 2
    %s19 = sadd.s32 %s12, 1
    %s20 = ssub.s32 %s12, %s19
    %p21 = scmp.eq.s32.totalorder %s20, 0
    %s23 = sadd.s32 %s22, 1
    %s24 = scalar_select %p21, %s22, %s23
    %p27 = pneg %p21
    %p28 = scmp.eq.s32.totalorder %s12, 1
    %p29 = por %p27, %p28
    %p30 = scmp.ne.s32.totalorder %s22, %s25
    %p31 = scmp.eq.s32.totalorder %s12, 0
    %p32 = por %p30, %p31
    %p33 = scmp.ne.s32.totalorder %s22, %s25
    %p34 = scmp.eq.s32.totalorder %s17, 1
    %p35 = por %p33, %p34
    %p36 = scmp.ne.s32.totalorder %s25, %s26
    %p37 = scmp.eq.s32.totalorder %s17, 0
    %p38 = por %p36, %p37
    %p39 = scmp.ne.s32.totalorder %s25, %s26
    %p40 = scmp.eq.s32.totalorder %s18, 1
    %p41 = por %p39, %p40
    %p43 = scmp.ne.s32.totalorder %s26, %s42
    %p44 = scmp.eq.s32.totalorder %s18, 0
    %p45 = por %p43, %p44
    %s46 = ssub.s32 %s12, %s19
    %p47 = scmp.eq.s32.totalorder %s46, 0
    %s49 = sadd.s32 %s48, 1
    %s50 = scalar_select %p47, %s48, %s49
    %p53 = pneg %p47
    %p54 = scmp.eq.s32.totalorder %s12, 1
    %p55 = por %p53, %p54
    %p56 = scmp.ne.s32.totalorder %s48, %s51
    %p57 = scmp.eq.s32.totalorder %s12, 0
    %p58 = por %p56, %p57
    %p59 = scmp.ne.s32.totalorder %s48, %s51
    %p60 = scmp.eq.s32.totalorder %s17, 1
    %p61 = por %p59, %p60
    %p62 = scmp.ne.s32.totalorder %s51, %s52
    %p63 = scmp.eq.s32.totalorder %s17, 0
    %p64 = por %p62, %p63
    %p65 = scmp.ne.s32.totalorder %s51, %s52
    %p66 = scmp.eq.s32.totalorder %s18, 1
    %p67 = por %p65, %p66
    %p69 = scmp.ne.s32.totalorder %s52, %s68
    %p70 = scmp.eq.s32.totalorder %s18, 0
    %p71 = por %p69, %p70
    %s73 = sadd.s32 %s72, 1
    %p76 = scmp.eq.s32.totalorder %s12, 1
    %p77 = scmp.ne.s32.totalorder %s72, %s74
    %p78 = scmp.eq.s32.totalorder %s12, 0
    %p79 = por %p77, %p78
    %p80 = scmp.ne.s32.totalorder %s72, %s74
    %p81 = scmp.eq.s32.totalorder %s17, 1
    %p82 = por %p80, %p81
    %p83 = scmp.ne.s32.totalorder %s74, %s75
    %p84 = scmp.eq.s32.totalorder %s17, 0
    %p85 = por %p83, %p84
    %p86 = scmp.ne.s32.totalorder %s74, %s75
    %p87 = scmp.eq.s32.totalorder %s18, 1
    %p88 = por %p86, %p87
    %p90 = scmp.ne.s32.totalorder %s75, %s89
    %p91 = scmp.eq.s32.totalorder %s18, 0
    %p92 = por %p90, %p91
    %s94 = sadd.s32 %s93, 1
    %p97 = scmp.eq.s32.totalorder %s12, 1
    %p98 = scmp.ne.s32.totalorder %s93, %s95
    %p99 = scmp.eq.s32.totalorder %s12, 0
    %p100 = por %p98, %p99
    %p101 = scmp.ne.s32.totalorder %s93, %s95
    %p102 = scmp.eq.s32.totalorder %s17, 1
    %p103 = por %p101, %p102
    %p104 = scmp.ne.s32.totalorder %s95, %s96
    %p105 = scmp.eq.s32.totalorder %s17, 0
    %p106 = por %p104, %p105
    %p107 = scmp.ne.s32.totalorder %s95, %s96
    %p108 = scmp.eq.s32.totalorder %s18, 1
    %p109 = por %p107, %p108
    %p111 = scmp.ne.s32.totalorder %s96, %s110
    %p112 = scmp.eq.s32.totalorder %s18, 0
    %p113 = por %p111, %p112
    %s115 = sadd.s32 %s114, 1
    %p118 = scmp.eq.s32.totalorder %s12, 1
    %p119 = scmp.ne.s32.totalorder %s114, %s116
    %p120 = scmp.eq.s32.totalorder %s12, 0
    %p121 = por %p119, %p120
    %p122 = scmp.ne.s32.totalorder %s114, %s116
    %p123 = scmp.eq.s32.totalorder %s17, 1
    %p124 = por %p122, %p123
    %p125 = scmp.ne.s32.totalorder %s116, %s117
    %p126 = scmp.eq.s32.totalorder %s17, 0
    %p127 = por %p125, %p126
    %p128 = scmp.ne.s32.totalorder %s116, %s117
    %p129 = scmp.eq.s32.totalorder %s18, 1
    %p130 = por %p128, %p129
    %p132 = scmp.ne.s32.totalorder %s117, %s131
    %p133 = scmp.eq.s32.totalorder %s18, 0
    %p134 = por %p132, %p133
    %s136 = sadd.s32 %s135, 1
    %p139 = scmp.eq.s32.totalorder %s12, 1
    %p140 = scmp.ne.s32.totalorder %s135, %s137
    %p141 = scmp.eq.s32.totalorder %s12, 0
    %p142 = por %p140, %p141
    %p143 = scmp.ne.s32.totalorder %s135, %s137
    %p144 = scmp.eq.s32.totalorder %s17, 1
    %p145 = por %p143, %p144
    %p146 = scmp.ne.s32.totalorder %s137, %s138
    %p147 = scmp.eq.s32.totalorder %s17, 0
    %p148 = por %p146, %p147
    %p149 = scmp.ne.s32.totalorder %s137, %s138
    %p150 = scmp.eq.s32.totalorder %s18, 1
    %p151 = por %p149, %p150
    %p153 = scmp.ne.s32.totalorder %s138, %s152
    %p154 = scmp.eq.s32.totalorder %s18, 0
    %p155 = por %p153, %p154
    %s156 = ssub.s32 %s12, %s19
    %p157 = scmp.eq.s32.totalorder %s156, 0
    %s159 = sadd.s32 %s158, 1
    %s160 = scalar_select %p157, %s158, %s159
    %p163 = pneg %p157
    %p164 = scmp.eq.s32.totalorder %s12, 1
    %p165 = por %p163, %p164
    %p166 = scmp.ne.s32.totalorder %s158, %s161
    %p167 = scmp.eq.s32.totalorder %s12, 0
    %p168 = por %p166, %p167
    %p169 = scmp.ne.s32.totalorder %s158, %s161
    %p170 = scmp.eq.s32.totalorder %s17, 1
    %p171 = por %p169, %p170
    %p172 = scmp.ne.s32.totalorder %s161, %s162
    %p173 = scmp.eq.s32.totalorder %s17, 0
    %p174 = por %p172, %p173
    %p175 = scmp.ne.s32.totalorder %s161, %s162
    %p176 = scmp.eq.s32.totalorder %s18, 1
    %p177 = por %p175, %p176
    %p179 = scmp.ne.s32.totalorder %s162, %s178
    %p180 = scmp.eq.s32.totalorder %s18, 0
    %p181 = por %p179, %p180
    %p182 = scmp.le.s32.totalorder 1, %s12
    %p183 = scmp.lt.s32.totalorder %s12, 3
    %p184 = pnand %p182, %p183
    %p185 = pneg %p184
    // Predicated region
    $region9: #{depthwise_xcorr_forward.5} parent=5 // pred_check
      _
    $region10: #{depthwise_xcorr_forward.5} parent=5 // pred_check_branch
      %187 = sbr.rel (%p184) target = $region12
    $region11: #{depthwise_xcorr_forward.5} parent=5 // pred_region
      %s188 = ssub.s32 %s12, 1
      // Predicated region
      $region13: #{depthwise_xcorr_forward.5} parent=11 // pred_check
        %p189 = pneg %p85
      $region14: #{depthwise_xcorr_forward.5} parent=11 // pred_check_branch
        %191 = sbr.rel (%p189) target = $region16
      $region15: #{depthwise_xcorr_forward.5} parent=11 // pred_region
        _
      $region16: #{depthwise_xcorr_forward.5} parent=11 // pred_fallthru
        _
      // Predicated region
      $region17: #{depthwise_xcorr_forward.5} parent=11 // pred_check
        %p192 = pneg %p106
      $region18: #{depthwise_xcorr_forward.5} parent=11 // pred_check_branch
        %194 = sbr.rel (%p192) target = $region20
      $region19: #{depthwise_xcorr_forward.5} parent=11 // pred_region
        _
      $region20: #{depthwise_xcorr_forward.5} parent=11 // pred_fallthru
        _
      // Predicated region
      $region21: #{depthwise_xcorr_forward.5} parent=11 // pred_check
        %p195 = pneg %p127
      $region22: #{depthwise_xcorr_forward.5} parent=11 // pred_check_branch
        %197 = sbr.rel (%p195) target = $region24
      $region23: #{depthwise_xcorr_forward.5} parent=11 // pred_region
        _
      $region24: #{depthwise_xcorr_forward.5} parent=11 // pred_fallthru
        _
      // Predicated region
      $region25: #{depthwise_xcorr_forward.5} parent=11 // pred_check
        %p198 = pneg %p148
      $region26: #{depthwise_xcorr_forward.5} parent=11 // pred_check_branch
        %200 = sbr.rel (%p198) target = $region28
      $region27: #{depthwise_xcorr_forward.5} parent=11 // pred_region
        _
      $region28: #{depthwise_xcorr_forward.5} parent=11 // pred_fallthru
        _
    $region12: #{depthwise_xcorr_forward.5} parent=5 // pred_fallthru
      _
    %p201 = scmp.lt.s32.totalorder %s12, 2
    // Predicated region
    $region29: #{depthwise_xcorr_forward.5} parent=5 // pred_check
      %p202 = pneg %p201
    $region30: #{depthwise_xcorr_forward.5} parent=5 // pred_check_branch
      %204 = sbr.rel (%p202) target = $region32
    $region31: #{depthwise_xcorr_forward.5} parent=5 // pred_region
      // Predicated region
      $region33: #{depthwise_xcorr_forward.5} parent=31 // pred_check
        %p205 = pneg %p32
      $region34: #{depthwise_xcorr_forward.5} parent=31 // pred_check_branch
        %207 = sbr.rel (%p205) target = $region36
      $region35: #{depthwise_xcorr_forward.5} parent=31 // pred_region
        %p208 = scmp.lt.s32.totalorder %s12, 1
        %s209 = scalar_select %p208, %s12, 1
        %s210 = smul.addr %s209, 30
        %s211 = smul.addr %s210, 8
        %s212 = scalar_lea.vmem %s0, %s211
      $region36: #{depthwise_xcorr_forward.5} parent=31 // pred_fallthru
        _
      // Predicated region
      $region37: #{depthwise_xcorr_forward.5} parent=31 // pred_check
        %p213 = pneg %p58
      $region38: #{depthwise_xcorr_forward.5} parent=31 // pred_check_branch
        %215 = sbr.rel (%p213) target = $region40
      $region39: #{depthwise_xcorr_forward.5} parent=31 // pred_region
        %p216 = scmp.lt.s32.totalorder %s12, 1
        %s217 = scalar_select %p216, %s12, 1
        %s218 = smul.addr %s217, 5
        %s219 = smul.addr %s218, 8
        %s220 = scalar_lea.vmem %s1, %s219
      $region40: #{depthwise_xcorr_forward.5} parent=31 // pred_fallthru
        _
    $region32: #{depthwise_xcorr_forward.5} parent=5 // pred_fallthru
      _
    %p221 = scmp.le.s32.totalorder 1, %s12
    %p222 = scmp.lt.s32.totalorder %s12, 3
    %p223 = pnand %p221, %p222
    %p224 = pneg %p223
    // Predicated region
    $region41: #{depthwise_xcorr_forward.5} parent=5 // pred_check
      _
    $region42: #{depthwise_xcorr_forward.5} parent=5 // pred_check_branch
      %226 = sbr.rel (%p223) target = $region44
    $region43: #{depthwise_xcorr_forward.5} parent=5 // pred_region
      %s227 = ssub.s32 %s12, 1
      %p228 = scmp.lt.s32.totalorder %s17, 1
      %s229 = scalar_select %p228, %s17, 1
      %s230 = smul.addr %s229, 30
      %s231 = smul.addr %s230, 8
      %s232 = scalar_lea.vmem %s0, %s231
      %p233 = pneg %p38
      %p234 = pneg %p35
      %p235 = scmp.lt.s32.totalorder %s17, 1
      %s236 = scalar_select %p235, %s17, 1
      %s237 = smul.addr %s236, 5
      %s238 = smul.addr %s237, 8
      %s239 = scalar_lea.vmem %s1, %s238
      %p240 = pneg %p64
      %p241 = pneg %p61
      %p242 = pneg %p85
      %p243 = pneg %p82
      %p244 = pneg %p106
      %p245 = pneg %p103
      %p246 = pneg %p127
      %p247 = pneg %p124
      %p248 = pneg %p148
      %p249 = pneg %p145
      %p250 = pneg %p174
      %p251 = pneg %p171
      %p252 = scmp.lt.s32.totalorder %s17, 1
      %s253 = scalar_select %p252, %s17, 1
      %s254 = smul.addr %s253, 16
      %s255 = smul.addr %s254, 8
      %s256 = scalar_lea.vmem %s6, %s255
      %p257 = scmp.lt.s32.totalorder %s17, 1
      %s258 = scalar_select %p257, %s17, 1
      %s259 = smul.addr %s258, 30
      %s260 = smul.addr %s259, 8
      %s261 = scalar_lea.vmem %s0, %s260
      %p262 = scmp.lt.s32.totalorder %s17, 1
      %s263 = scalar_select %p262, %s17, 1
      %s264 = smul.addr %s263, 5
      %s265 = smul.addr %s264, 8
      %s266 = scalar_lea.vmem %s1, %s265
      %p267 = scmp.lt.s32.totalorder %s17, 1
      %s268 = scalar_select %p267, %s17, 1
      %s269 = smul.addr %s268, 16
      %s270 = smul.addr %s269, 8
      %s271 = scalar_lea.vmem %s6, %s270
      %v272 = vld [vmem:[%s261] sm:$0xff]
      %v273 = vld [vmem:[%s261 + $0x8] sm:$0x7f]
      %v274 = vld [vmem:[%s261 + $0x10] sm:$0xff]
      %v275 = vld [vmem:[%s261 + $0x18] sm:$0x7f]
      %v276 = vld [vmem:[%s261 + $0x20] sm:$0xff]
      %v277 = vld [vmem:[%s261 + $0x28] sm:$0x7f]
      %v278 = vld [vmem:[%s261 + $0x30] sm:$0xff]
      %v279 = vld [vmem:[%s261 + $0x38] sm:$0x7f]
      %v280 = vld [vmem:[%s261 + $0x40] sm:$0xff]
      %v281 = vld [vmem:[%s261 + $0x48] sm:$0x7f]
      %v282 = vld [vmem:[%s261 + $0x50] sm:$0xff]
      %v283 = vld [vmem:[%s261 + $0x58] sm:$0x7f]
      %v284 = vld [vmem:[%s261 + $0x60] sm:$0xff]
      %v285 = vld [vmem:[%s261 + $0x68] sm:$0x7f]
      %v286 = vld [vmem:[%s261 + $0x70] sm:$0xff]
      %v287 = vld [vmem:[%s261 + $0x78] sm:$0x7f]
      %v288 = vld [vmem:[%s261 + $0x80] sm:$0xff]
      %v289 = vld [vmem:[%s261 + $0x88] sm:$0x7f]
      %v290 = vld [vmem:[%s261 + $0x90] sm:$0xff]
      %v291 = vld [vmem:[%s261 + $0x98] sm:$0x7f]
      %v292 = vld [vmem:[%s261 + $0xa0] sm:$0xff]
      %v293 = vld [vmem:[%s261 + $0xa8] sm:$0x7f]
      %v294 = vld [vmem:[%s261 + $0xb0] sm:$0xff]
      %v295 = vld [vmem:[%s261 + $0xb8] sm:$0x7f]
      %v296 = vld [vmem:[%s261 + $0xc0] sm:$0xff]
      %v297 = vld [vmem:[%s261 + $0xc8] sm:$0x7f]
      %v298 = vld [vmem:[%s261 + $0xd0] sm:$0xff]
      %v299 = vld [vmem:[%s261 + $0xd8] sm:$0x7f]
      %v300 = vld [vmem:[%s261 + $0xe0] sm:$0xff]
      %v301 = vld [vmem:[%s261 + $0xe8] sm:$0x7f]
      %v302 = vld [vmem:[%s266] sm:$0x1f]
      %v303 = vld [vmem:[%s266 + $0x8] sm:$0x1f]
      %v304 = vld [vmem:[%s266 + $0x10] sm:$0x1f]
      %v305 = vld [vmem:[%s266 + $0x18] sm:$0x1f]
      %v306 = vld [vmem:[%s266 + $0x20] sm:$0x1f]
      %v307 = vperm.slane %v302, 0
      %v308 = vmul.f32 %v272, %v307
      %v309 = vmul.f32 %v273, %v307
      %v310 = vmul.f32 %v274, %v307
      %v311 = vmul.f32 %v275, %v307
      %v312 = vmul.f32 %v276, %v307
      %v313 = vmul.f32 %v277, %v307
      %v314 = vmul.f32 %v278, %v307
      %v315 = vmul.f32 %v279, %v307
      %v316 = vmul.f32 %v280, %v307
      %v317 = vmul.f32 %v281, %v307
      %v318 = vmul.f32 %v282, %v307
      %v319 = vmul.f32 %v283, %v307
      %v320 = vmul.f32 %v284, %v307
      %v321 = vmul.f32 %v285, %v307
      %v322 = vmul.f32 %v286, %v307
      %v323 = vmul.f32 %v287, %v307
      %v324 = vmul.f32 %v288, %v307
      %v325 = vmul.f32 %v289, %v307
      %v326 = vmul.f32 %v290, %v307
      %v327 = vmul.f32 %v291, %v307
      %v328 = vmul.f32 %v292, %v307
      %v329 = vmul.f32 %v293, %v307
      %v330 = vadd.f32 %v308, 0.0
      %v331 = vadd.f32 %v309, 0.0
      %v332 = vadd.f32 %v310, 0.0
      %v333 = vadd.f32 %v311, 0.0
      %v334 = vadd.f32 %v312, 0.0
      %v335 = vadd.f32 %v313, 0.0
      %v336 = vadd.f32 %v314, 0.0
      %v337 = vadd.f32 %v315, 0.0
      %v338 = vadd.f32 %v316, 0.0
      %v339 = vadd.f32 %v317, 0.0
      %v340 = vadd.f32 %v318, 0.0
      %v341 = vadd.f32 %v319, 0.0
      %v342 = vadd.f32 %v320, 0.0
      %v343 = vadd.f32 %v321, 0.0
      %v344 = vadd.f32 %v322, 0.0
      %v345 = vadd.f32 %v323, 0.0
      %v346 = vadd.f32 %v324, 0.0
      %v347 = vadd.f32 %v325, 0.0
      %v348 = vadd.f32 %v326, 0.0
      %v349 = vadd.f32 %v327, 0.0
      %v350 = vadd.f32 %v328, 0.0
      %v351 = vadd.f32 %v329, 0.0
      %v352 = vperm.slane %v302, 1
      %v353 = vmul.f32 %v272, %v352
      %v354 = vmul.f32 %v273, %v352
      %v355 = vmul.f32 %v274, %v352
      %v356 = vmul.f32 %v275, %v352
      %v357 = vmul.f32 %v276, %v352
      %v358 = vmul.f32 %v277, %v352
      %v359 = vmul.f32 %v278, %v352
      %v360 = vmul.f32 %v279, %v352
      %v361 = vmul.f32 %v280, %v352
      %v362 = vmul.f32 %v281, %v352
      %v363 = vmul.f32 %v282, %v352
      %v364 = vmul.f32 %v283, %v352
      %v365 = vmul.f32 %v284, %v352
      %v366 = vmul.f32 %v285, %v352
      %v367 = vmul.f32 %v286, %v352
      %v368 = vmul.f32 %v287, %v352
      %v369 = vmul.f32 %v288, %v352
      %v370 = vmul.f32 %v289, %v352
      %v371 = vmul.f32 %v290, %v352
      %v372 = vmul.f32 %v291, %v352
      %v373 = vmul.f32 %v292, %v352
      %v374 = vmul.f32 %v293, %v352
      %vm397 = vcmask 1046528
      %v398 = vrot.slane %v353, 1
      %v399 = vrot.slane %v354, 1
      %v400 = vsel %vm397, %v398, %v399
      %v401 = vrot.slane %v355, 1
      %v402 = vrot.slane %v356, 1
      %v403 = vsel %vm397, %v401, %v402
      %v404 = vrot.slane %v357, 1
      %v405 = vrot.slane %v358, 1
      %v406 = vsel %vm397, %v404, %v405
      %v407 = vrot.slane %v359, 1
      %v408 = vrot.slane %v360, 1
      %v409 = vsel %vm397, %v407, %v408
      %v410 = vrot.slane %v361, 1
      %v411 = vrot.slane %v362, 1
      %v412 = vsel %vm397, %v410, %v411
      %v413 = vrot.slane %v363, 1
      %v414 = vrot.slane %v364, 1
      %v415 = vsel %vm397, %v413, %v414
      %v416 = vrot.slane %v365, 1
      %v417 = vrot.slane %v366, 1
      %v418 = vsel %vm397, %v416, %v417
      %v419 = vrot.slane %v367, 1
      %v420 = vrot.slane %v368, 1
      %v421 = vsel %vm397, %v419, %v420
      %v422 = vrot.slane %v369, 1
      %v423 = vrot.slane %v370, 1
      %v424 = vsel %vm397, %v422, %v423
      %v425 = vrot.slane %v371, 1
      %v426 = vrot.slane %v372, 1
      %v427 = vsel %vm397, %v425, %v426
      %v428 = vrot.slane %v373, 1
      %v429 = vrot.slane %v374, 1
      %v430 = vsel %vm397, %v428, %v429
      %v453 = vadd.f32 %v330, %v400
      %v454 = vadd.f32 %v331, %v399
      %v455 = vadd.f32 %v332, %v403
      %v456 = vadd.f32 %v333, %v402
      %v457 = vadd.f32 %v334, %v406
      %v458 = vadd.f32 %v335, %v405
      %v459 = vadd.f32 %v336, %v409
      %v460 = vadd.f32 %v337, %v408
      %v461 = vadd.f32 %v338, %v412
      %v462 = vadd.f32 %v339, %v411
      %v463 = vadd.f32 %v340, %v415
      %v464 = vadd.f32 %v341, %v414
      %v465 = vadd.f32 %v342, %v418
      %v466 = vadd.f32 %v343, %v417
      %v467 = vadd.f32 %v344, %v421
      %v468 = vadd.f32 %v345, %v420
      %v469 = vadd.f32 %v346, %v424
      %v470 = vadd.f32 %v347, %v423
      %v471 = vadd.f32 %v348, %v427
      %v472 = vadd.f32 %v349, %v426
      %v473 = vadd.f32 %v350, %v430
      %v474 = vadd.f32 %v351, %v429
      %v475 = vperm.slane %v302, 2
      %v476 = vmul.f32 %v272, %v475
      %v477 = vmul.f32 %v273, %v475
      %v478 = vmul.f32 %v274, %v475
      %v479 = vmul.f32 %v275, %v475
      %v480 = vmul.f32 %v276, %v475
      %v481 = vmul.f32 %v277, %v475
      %v482 = vmul.f32 %v278, %v475
      %v483 = vmul.f32 %v279, %v475
      %v484 = vmul.f32 %v280, %v475
      %v485 = vmul.f32 %v281, %v475
      %v486 = vmul.f32 %v282, %v475
      %v487 = vmul.f32 %v283, %v475
      %v488 = vmul.f32 %v284, %v475
      %v489 = vmul.f32 %v285, %v475
      %v490 = vmul.f32 %v286, %v475
      %v491 = vmul.f32 %v287, %v475
      %v492 = vmul.f32 %v288, %v475
      %v493 = vmul.f32 %v289, %v475
      %v494 = vmul.f32 %v290, %v475
      %v495 = vmul.f32 %v291, %v475
      %v496 = vmul.f32 %v292, %v475
      %v497 = vmul.f32 %v293, %v475
      %vm520 = vcmask 1045504
      %v521 = vrot.slane %v476, 2
      %v522 = vrot.slane %v477, 2
      %v523 = vsel %vm520, %v521, %v522
      %v524 = vrot.slane %v478, 2
      %v525 = vrot.slane %v479, 2
      %v526 = vsel %vm520, %v524, %v525
      %v527 = vrot.slane %v480, 2
      %v528 = vrot.slane %v481, 2
      %v529 = vsel %vm520, %v527, %v528
      %v530 = vrot.slane %v482, 2
      %v531 = vrot.slane %v483, 2
      %v532 = vsel %vm520, %v530, %v531
      %v533 = vrot.slane %v484, 2
      %v534 = vrot.slane %v485, 2
      %v535 = vsel %vm520, %v533, %v534
      %v536 = vrot.slane %v486, 2
      %v537 = vrot.slane %v487, 2
      %v538 = vsel %vm520, %v536, %v537
      %v539 = vrot.slane %v488, 2
      %v540 = vrot.slane %v489, 2
      %v541 = vsel %vm520, %v539, %v540
      %v542 = vrot.slane %v490, 2
      %v543 = vrot.slane %v491, 2
      %v544 = vsel %vm520, %v542, %v543
      %v545 = vrot.slane %v492, 2
      %v546 = vrot.slane %v493, 2
      %v547 = vsel %vm520, %v545, %v546
      %v548 = vrot.slane %v494, 2
      %v549 = vrot.slane %v495, 2
      %v550 = vsel %vm520, %v548, %v549
      %v551 = vrot.slane %v496, 2
      %v552 = vrot.slane %v497, 2
      %v553 = vsel %vm520, %v551, %v552
      %v576 = vadd.f32 %v453, %v523
      %v577 = vadd.f32 %v454, %v522
      %v578 = vadd.f32 %v455, %v526
      %v579 = vadd.f32 %v456, %v525
      %v580 = vadd.f32 %v457, %v529
      %v581 = vadd.f32 %v458, %v528
      %v582 = vadd.f32 %v459, %v532
      %v583 = vadd.f32 %v460, %v531
      %v584 = vadd.f32 %v461, %v535
      %v585 = vadd.f32 %v462, %v534
      %v586 = vadd.f32 %v463, %v538
      %v587 = vadd.f32 %v464, %v537
      %v588 = vadd.f32 %v465, %v541
      %v589 = vadd.f32 %v466, %v540
      %v590 = vadd.f32 %v467, %v544
      %v591 = vadd.f32 %v468, %v543
      %v592 = vadd.f32 %v469, %v547
      %v593 = vadd.f32 %v470, %v546
      %v594 = vadd.f32 %v471, %v550
      %v595 = vadd.f32 %v472, %v549
      %v596 = vadd.f32 %v473, %v553
      %v597 = vadd.f32 %v474, %v552
      %v598 = vperm.slane %v302, 3
      %v599 = vmul.f32 %v272, %v598
      %v600 = vmul.f32 %v273, %v598
      %v601 = vmul.f32 %v274, %v598
      %v602 = vmul.f32 %v275, %v598
      %v603 = vmul.f32 %v276, %v598
      %v604 = vmul.f32 %v277, %v598
      %v605 = vmul.f32 %v278, %v598
      %v606 = vmul.f32 %v279, %v598
      %v607 = vmul.f32 %v280, %v598
      %v608 = vmul.f32 %v281, %v598
      %v609 = vmul.f32 %v282, %v598
      %v610 = vmul.f32 %v283, %v598
      %v611 = vmul.f32 %v284, %v598
      %v612 = vmul.f32 %v285, %v598
      %v613 = vmul.f32 %v286, %v598
      %v614 = vmul.f32 %v287, %v598
      %v615 = vmul.f32 %v288, %v598
      %v616 = vmul.f32 %v289, %v598
      %v617 = vmul.f32 %v290, %v598
      %v618 = vmul.f32 %v291, %v598
      %v619 = vmul.f32 %v292, %v598
      %v620 = vmul.f32 %v293, %v598
      %vm643 = vcmask 1044480
      %v644 = vrot.slane %v599, 3
      %v645 = vrot.slane %v600, 3
      %v646 = vsel %vm643, %v644, %v645
      %v647 = vrot.slane %v601, 3
      %v648 = vrot.slane %v602, 3
      %v649 = vsel %vm643, %v647, %v648
      %v650 = vrot.slane %v603, 3
      %v651 = vrot.slane %v604, 3
      %v652 = vsel %vm643, %v650, %v651
      %v653 = vrot.slane %v605, 3
      %v654 = vrot.slane %v606, 3
      %v655 = vsel %vm643, %v653, %v654
      %v656 = vrot.slane %v607, 3
      %v657 = vrot.slane %v608, 3
      %v658 = vsel %vm643, %v656, %v657
      %v659 = vrot.slane %v609, 3
      %v660 = vrot.slane %v610, 3
      %v661 = vsel %vm643, %v659, %v660
      %v662 = vrot.slane %v611, 3
      %v663 = vrot.slane %v612, 3
      %v664 = vsel %vm643, %v662, %v663
      %v665 = vrot.slane %v613, 3
      %v666 = vrot.slane %v614, 3
      %v667 = vsel %vm643, %v665, %v666
      %v668 = vrot.slane %v615, 3
      %v669 = vrot.slane %v616, 3
      %v670 = vsel %vm643, %v668, %v669
      %v671 = vrot.slane %v617, 3
      %v672 = vrot.slane %v618, 3
      %v673 = vsel %vm643, %v671, %v672
      %v674 = vrot.slane %v619, 3
      %v675 = vrot.slane %v620, 3
      %v676 = vsel %vm643, %v674, %v675
      %v699 = vadd.f32 %v576, %v646
      %v700 = vadd.f32 %v577, %v645
      %v701 = vadd.f32 %v578, %v649
      %v702 = vadd.f32 %v579, %v648
      %v703 = vadd.f32 %v580, %v652
      %v704 = vadd.f32 %v581, %v651
      %v705 = vadd.f32 %v582, %v655
      %v706 = vadd.f32 %v583, %v654
      %v707 = vadd.f32 %v584, %v658
      %v708 = vadd.f32 %v585, %v657
      %v709 = vadd.f32 %v586, %v661
      %v710 = vadd.f32 %v587, %v660
      %v711 = vadd.f32 %v588, %v664
      %v712 = vadd.f32 %v589, %v663
      %v713 = vadd.f32 %v590, %v667
      %v714 = vadd.f32 %v591, %v666
      %v715 = vadd.f32 %v592, %v670
      %v716 = vadd.f32 %v593, %v669
      %v717 = vadd.f32 %v594, %v673
      %v718 = vadd.f32 %v595, %v672
      %v719 = vadd.f32 %v596, %v676
      %v720 = vadd.f32 %v597, %v675
      %v721 = vperm.slane %v302, 4
      %v722 = vmul.f32 %v272, %v721
      %v723 = vmul.f32 %v273, %v721
      %v724 = vmul.f32 %v274, %v721
      %v725 = vmul.f32 %v275, %v721
      %v726 = vmul.f32 %v276, %v721
      %v727 = vmul.f32 %v277, %v721
      %v728 = vmul.f32 %v278, %v721
      %v729 = vmul.f32 %v279, %v721
      %v730 = vmul.f32 %v280, %v721
      %v731 = vmul.f32 %v281, %v721
      %v732 = vmul.f32 %v282, %v721
      %v733 = vmul.f32 %v283, %v721
      %v734 = vmul.f32 %v284, %v721
      %v735 = vmul.f32 %v285, %v721
      %v736 = vmul.f32 %v286, %v721
      %v737 = vmul.f32 %v287, %v721
      %v738 = vmul.f32 %v288, %v721
      %v739 = vmul.f32 %v289, %v721
      %v740 = vmul.f32 %v290, %v721
      %v741 = vmul.f32 %v291, %v721
      %v742 = vmul.f32 %v292, %v721
      %v743 = vmul.f32 %v293, %v721
      %vm766 = vcmask 1043456
      %v767 = vrot.slane %v722, 4
      %v768 = vrot.slane %v723, 4
      %v769 = vsel %vm766, %v767, %v768
      %v770 = vrot.slane %v724, 4
      %v771 = vrot.slane %v725, 4
      %v772 = vsel %vm766, %v770, %v771
      %v773 = vrot.slane %v726, 4
      %v774 = vrot.slane %v727, 4
      %v775 = vsel %vm766, %v773, %v774
      %v776 = vrot.slane %v728, 4
      %v777 = vrot.slane %v729, 4
      %v778 = vsel %vm766, %v776, %v777
      %v779 = vrot.slane %v730, 4
      %v780 = vrot.slane %v731, 4
      %v781 = vsel %vm766, %v779, %v780
      %v782 = vrot.slane %v732, 4
      %v783 = vrot.slane %v733, 4
      %v784 = vsel %vm766, %v782, %v783
      %v785 = vrot.slane %v734, 4
      %v786 = vrot.slane %v735, 4
      %v787 = vsel %vm766, %v785, %v786
      %v788 = vrot.slane %v736, 4
      %v789 = vrot.slane %v737, 4
      %v790 = vsel %vm766, %v788, %v789
      %v791 = vrot.slane %v738, 4
      %v792 = vrot.slane %v739, 4
      %v793 = vsel %vm766, %v791, %v792
      %v794 = vrot.slane %v740, 4
      %v795 = vrot.slane %v741, 4
      %v796 = vsel %vm766, %v794, %v795
      %v797 = vrot.slane %v742, 4
      %v798 = vrot.slane %v743, 4
      %v799 = vsel %vm766, %v797, %v798
      %v822 = vadd.f32 %v699, %v769
      %v823 = vadd.f32 %v700, %v768
      %v824 = vadd.f32 %v701, %v772
      %v825 = vadd.f32 %v702, %v771
      %v826 = vadd.f32 %v703, %v775
      %v827 = vadd.f32 %v704, %v774
      %v828 = vadd.f32 %v705, %v778
      %v829 = vadd.f32 %v706, %v777
      %v830 = vadd.f32 %v707, %v781
      %v831 = vadd.f32 %v708, %v780
      %v832 = vadd.f32 %v709, %v784
      %v833 = vadd.f32 %v710, %v783
      %v834 = vadd.f32 %v711, %v787
      %v835 = vadd.f32 %v712, %v786
      %v836 = vadd.f32 %v713, %v790
      %v837 = vadd.f32 %v714, %v789
      %v838 = vadd.f32 %v715, %v793
      %v839 = vadd.f32 %v716, %v792
      %v840 = vadd.f32 %v717, %v796
      %v841 = vadd.f32 %v718, %v795
      %v842 = vadd.f32 %v719, %v799
      %v843 = vadd.f32 %v720, %v798
      %v844 = vperm.slane %v303, 0
      %v845 = vmul.f32 %v274, %v844
      %v846 = vmul.f32 %v275, %v844
      %v847 = vmul.f32 %v276, %v844
      %v848 = vmul.f32 %v277, %v844
      %v849 = vmul.f32 %v278, %v844
      %v850 = vmul.f32 %v279, %v844
      %v851 = vmul.f32 %v280, %v844
      %v852 = vmul.f32 %v281, %v844
      %v853 = vmul.f32 %v282, %v844
      %v854 = vmul.f32 %v283, %v844
      %v855 = vmul.f32 %v284, %v844
      %v856 = vmul.f32 %v285, %v844
      %v857 = vmul.f32 %v286, %v844
      %v858 = vmul.f32 %v287, %v844
      %v859 = vmul.f32 %v288, %v844
      %v860 = vmul.f32 %v289, %v844
      %v861 = vmul.f32 %v290, %v844
      %v862 = vmul.f32 %v291, %v844
      %v863 = vmul.f32 %v292, %v844
      %v864 = vmul.f32 %v293, %v844
      %v865 = vmul.f32 %v294, %v844
      %v866 = vmul.f32 %v295, %v844
      %v867 = vadd.f32 %v822, %v845
      %v868 = vadd.f32 %v823, %v846
      %v869 = vadd.f32 %v824, %v847
      %v870 = vadd.f32 %v825, %v848
      %v871 = vadd.f32 %v826, %v849
      %v872 = vadd.f32 %v827, %v850
      %v873 = vadd.f32 %v828, %v851
      %v874 = vadd.f32 %v829, %v852
      %v875 = vadd.f32 %v830, %v853
      %v876 = vadd.f32 %v831, %v854
      %v877 = vadd.f32 %v832, %v855
      %v878 = vadd.f32 %v833, %v856
      %v879 = vadd.f32 %v834, %v857
      %v880 = vadd.f32 %v835, %v858
      %v881 = vadd.f32 %v836, %v859
      %v882 = vadd.f32 %v837, %v860
      %v883 = vadd.f32 %v838, %v861
      %v884 = vadd.f32 %v839, %v862
      %v885 = vadd.f32 %v840, %v863
      %v886 = vadd.f32 %v841, %v864
      %v887 = vadd.f32 %v842, %v865
      %v888 = vadd.f32 %v843, %v866
      %v889 = vperm.slane %v303, 1
      %v890 = vmul.f32 %v274, %v889
      %v891 = vmul.f32 %v275, %v889
      %v892 = vmul.f32 %v276, %v889
      %v893 = vmul.f32 %v277, %v889
      %v894 = vmul.f32 %v278, %v889
      %v895 = vmul.f32 %v279, %v889
      %v896 = vmul.f32 %v280, %v889
      %v897 = vmul.f32 %v281, %v889
      %v898 = vmul.f32 %v282, %v889
      %v899 = vmul.f32 %v283, %v889
      %v900 = vmul.f32 %v284, %v889
      %v901 = vmul.f32 %v285, %v889
      %v902 = vmul.f32 %v286, %v889
      %v903 = vmul.f32 %v287, %v889
      %v904 = vmul.f32 %v288, %v889
      %v905 = vmul.f32 %v289, %v889
      %v906 = vmul.f32 %v290, %v889
      %v907 = vmul.f32 %v291, %v889
      %v908 = vmul.f32 %v292, %v889
      %v909 = vmul.f32 %v293, %v889
      %v910 = vmul.f32 %v294, %v889
      %v911 = vmul.f32 %v295, %v889
      %v934 = vrot.slane %v890, 1
      %v935 = vrot.slane %v891, 1
      %v936 = vsel %vm397, %v934, %v935
      %v937 = vrot.slane %v892, 1
      %v938 = vrot.slane %v893, 1
      %v939 = vsel %vm397, %v937, %v938
      %v940 = vrot.slane %v894, 1
      %v941 = vrot.slane %v895, 1
      %v942 = vsel %vm397, %v940, %v941
      %v943 = vrot.slane %v896, 1
      %v944 = vrot.slane %v897, 1
      %v945 = vsel %vm397, %v943, %v944
      %v946 = vrot.slane %v898, 1
      %v947 = vrot.slane %v899, 1
      %v948 = vsel %vm397, %v946, %v947
      %v949 = vrot.slane %v900, 1
      %v950 = vrot.slane %v901, 1
      %v951 = vsel %vm397, %v949, %v950
      %v952 = vrot.slane %v902, 1
      %v953 = vrot.slane %v903, 1
      %v954 = vsel %vm397, %v952, %v953
      %v955 = vrot.slane %v904, 1
      %v956 = vrot.slane %v905, 1
      %v957 = vsel %vm397, %v955, %v956
      %v958 = vrot.slane %v906, 1
      %v959 = vrot.slane %v907, 1
      %v960 = vsel %vm397, %v958, %v959
      %v961 = vrot.slane %v908, 1
      %v962 = vrot.slane %v909, 1
      %v963 = vsel %vm397, %v961, %v962
      %v964 = vrot.slane %v910, 1
      %v965 = vrot.slane %v911, 1
      %v966 = vsel %vm397, %v964, %v965
      %v989 = vadd.f32 %v867, %v936
      %v990 = vadd.f32 %v868, %v935
      %v991 = vadd.f32 %v869, %v939
      %v992 = vadd.f32 %v870, %v938
      %v993 = vadd.f32 %v871, %v942
      %v994 = vadd.f32 %v872, %v941
      %v995 = vadd.f32 %v873, %v945
      %v996 = vadd.f32 %v874, %v944
      %v997 = vadd.f32 %v875, %v948
      %v998 = vadd.f32 %v876, %v947
      %v999 = vadd.f32 %v877, %v951
      %v1000 = vadd.f32 %v878, %v950
      %v1001 = vadd.f32 %v879, %v954
      %v1002 = vadd.f32 %v880, %v953
      %v1003 = vadd.f32 %v881, %v957
      %v1004 = vadd.f32 %v882, %v956
      %v1005 = vadd.f32 %v883, %v960
      %v1006 = vadd.f32 %v884, %v959
      %v1007 = vadd.f32 %v885, %v963
      %v1008 = vadd.f32 %v886, %v962
      %v1009 = vadd.f32 %v887, %v966
      %v1010 = vadd.f32 %v888, %v965
      %v1011 = vperm.slane %v303, 2
      %v1012 = vmul.f32 %v274, %v1011
      %v1013 = vmul.f32 %v275, %v1011
      %v1014 = vmul.f32 %v276, %v1011
      %v1015 = vmul.f32 %v277, %v1011
      %v1016 = vmul.f32 %v278, %v1011
      %v1017 = vmul.f32 %v279, %v1011
      %v1018 = vmul.f32 %v280, %v1011
      %v1019 = vmul.f32 %v281, %v1011
      %v1020 = vmul.f32 %v282, %v1011
      %v1021 = vmul.f32 %v283, %v1011
      %v1022 = vmul.f32 %v284, %v1011
      %v1023 = vmul.f32 %v285, %v1011
      %v1024 = vmul.f32 %v286, %v1011
      %v1025 = vmul.f32 %v287, %v1011
      %v1026 = vmul.f32 %v288, %v1011
      %v1027 = vmul.f32 %v289, %v1011
      %v1028 = vmul.f32 %v290, %v1011
      %v1029 = vmul.f32 %v291, %v1011
      %v1030 = vmul.f32 %v292, %v1011
      %v1031 = vmul.f32 %v293, %v1011
      %v1032 = vmul.f32 %v294, %v1011
      %v1033 = vmul.f32 %v295, %v1011
      %v1056 = vrot.slane %v1012, 2
      %v1057 = vrot.slane %v1013, 2
      %v1058 = vsel %vm520, %v1056, %v1057
      %v1059 = vrot.slane %v1014, 2
      %v1060 = vrot.slane %v1015, 2
      %v1061 = vsel %vm520, %v1059, %v1060
      %v1062 = vrot.slane %v1016, 2
      %v1063 = vrot.slane %v1017, 2
      %v1064 = vsel %vm520, %v1062, %v1063
      %v1065 = vrot.slane %v1018, 2
      %v1066 = vrot.slane %v1019, 2
      %v1067 = vsel %vm520, %v1065, %v1066
      %v1068 = vrot.slane %v1020, 2
      %v1069 = vrot.slane %v1021, 2
      %v1070 = vsel %vm520, %v1068, %v1069
      %v1071 = vrot.slane %v1022, 2
      %v1072 = vrot.slane %v1023, 2
      %v1073 = vsel %vm520, %v1071, %v1072
      %v1074 = vrot.slane %v1024, 2
      %v1075 = vrot.slane %v1025, 2
      %v1076 = vsel %vm520, %v1074, %v1075
      %v1077 = vrot.slane %v1026, 2
      %v1078 = vrot.slane %v1027, 2
      %v1079 = vsel %vm520, %v1077, %v1078
      %v1080 = vrot.slane %v1028, 2
      %v1081 = vrot.slane %v1029, 2
      %v1082 = vsel %vm520, %v1080, %v1081
      %v1083 = vrot.slane %v1030, 2
      %v1084 = vrot.slane %v1031, 2
      %v1085 = vsel %vm520, %v1083, %v1084
      %v1086 = vrot.slane %v1032, 2
      %v1087 = vrot.slane %v1033, 2
      %v1088 = vsel %vm520, %v1086, %v1087
      %v1111 = vadd.f32 %v989, %v1058
      %v1112 = vadd.f32 %v990, %v1057
      %v1113 = vadd.f32 %v991, %v1061
      %v1114 = vadd.f32 %v992, %v1060
      %v1115 = vadd.f32 %v993, %v1064
      %v1116 = vadd.f32 %v994, %v1063
      %v1117 = vadd.f32 %v995, %v1067
      %v1118 = vadd.f32 %v996, %v1066
      %v1119 = vadd.f32 %v997, %v1070
      %v1120 = vadd.f32 %v998, %v1069
      %v1121 = vadd.f32 %v999, %v1073
      %v1122 = vadd.f32 %v1000, %v1072
      %v1123 = vadd.f32 %v1001, %v1076
      %v1124 = vadd.f32 %v1002, %v1075
      %v1125 = vadd.f32 %v1003, %v1079
      %v1126 = vadd.f32 %v1004, %v1078
      %v1127 = vadd.f32 %v1005, %v1082
      %v1128 = vadd.f32 %v1006, %v1081
      %v1129 = vadd.f32 %v1007, %v1085
      %v1130 = vadd.f32 %v1008, %v1084
      %v1131 = vadd.f32 %v1009, %v1088
      %v1132 = vadd.f32 %v1010, %v1087
      %v1133 = vperm.slane %v303, 3
      %v1134 = vmul.f32 %v274, %v1133
      %v1135 = vmul.f32 %v275, %v1133
      %v1136 = vmul.f32 %v276, %v1133
      %v1137 = vmul.f32 %v277, %v1133
      %v1138 = vmul.f32 %v278, %v1133
      %v1139 = vmul.f32 %v279, %v1133
      %v1140 = vmul.f32 %v280, %v1133
      %v1141 = vmul.f32 %v281, %v1133
      %v1142 = vmul.f32 %v282, %v1133
      %v1143 = vmul.f32 %v283, %v1133
      %v1144 = vmul.f32 %v284, %v1133
      %v1145 = vmul.f32 %v285, %v1133
      %v1146 = vmul.f32 %v286, %v1133
      %v1147 = vmul.f32 %v287, %v1133
      %v1148 = vmul.f32 %v288, %v1133
      %v1149 = vmul.f32 %v289, %v1133
      %v1150 = vmul.f32 %v290, %v1133
      %v1151 = vmul.f32 %v291, %v1133
      %v1152 = vmul.f32 %v292, %v1133
      %v1153 = vmul.f32 %v293, %v1133
      %v1154 = vmul.f32 %v294, %v1133
      %v1155 = vmul.f32 %v295, %v1133
      %v1178 = vrot.slane %v1134, 3
      %v1179 = vrot.slane %v1135, 3
      %v1180 = vsel %vm643, %v1178, %v1179
      %v1181 = vrot.slane %v1136, 3
      %v1182 = vrot.slane %v1137, 3
      %v1183 = vsel %vm643, %v1181, %v1182
      %v1184 = vrot.slane %v1138, 3
      %v1185 = vrot.slane %v1139, 3
      %v1186 = vsel %vm643, %v1184, %v1185
      %v1187 = vrot.slane %v1140, 3
      %v1188 = vrot.slane %v1141, 3
      %v1189 = vsel %vm643, %v1187, %v1188
      %v1190 = vrot.slane %v1142, 3
      %v1191 = vrot.slane %v1143, 3
      %v1192 = vsel %vm643, %v1190, %v1191
      %v1193 = vrot.slane %v1144, 3
      %v1194 = vrot.slane %v1145, 3
      %v1195 = vsel %vm643, %v1193, %v1194
      %v1196 = vrot.slane %v1146, 3
      %v1197 = vrot.slane %v1147, 3
      %v1198 = vsel %vm643, %v1196, %v1197
      %v1199 = vrot.slane %v1148, 3
      %v1200 = vrot.slane %v1149, 3
      %v1201 = vsel %vm643, %v1199, %v1200
      %v1202 = vrot.slane %v1150, 3
      %v1203 = vrot.slane %v1151, 3
      %v1204 = vsel %vm643, %v1202, %v1203
      %v1205 = vrot.slane %v1152, 3
      %v1206 = vrot.slane %v1153, 3
      %v1207 = vsel %vm643, %v1205, %v1206
      %v1208 = vrot.slane %v1154, 3
      %v1209 = vrot.slane %v1155, 3
      %v1210 = vsel %vm643, %v1208, %v1209
      %v1233 = vadd.f32 %v1111, %v1180
      %v1234 = vadd.f32 %v1112, %v1179
      %v1235 = vadd.f32 %v1113, %v1183
      %v1236 = vadd.f32 %v1114, %v1182
      %v1237 = vadd.f32 %v1115, %v1186
      %v1238 = vadd.f32 %v1116, %v1185
      %v1239 = vadd.f32 %v1117, %v1189
      %v1240 = vadd.f32 %v1118, %v1188
      %v1241 = vadd.f32 %v1119, %v1192
      %v1242 = vadd.f32 %v1120, %v1191
      %v1243 = vadd.f32 %v1121, %v1195
      %v1244 = vadd.f32 %v1122, %v1194
      %v1245 = vadd.f32 %v1123, %v1198
      %v1246 = vadd.f32 %v1124, %v1197
      %v1247 = vadd.f32 %v1125, %v1201
      %v1248 = vadd.f32 %v1126, %v1200
      %v1249 = vadd.f32 %v1127, %v1204
      %v1250 = vadd.f32 %v1128, %v1203
      %v1251 = vadd.f32 %v1129, %v1207
      %v1252 = vadd.f32 %v1130, %v1206
      %v1253 = vadd.f32 %v1131, %v1210
      %v1254 = vadd.f32 %v1132, %v1209
      %v1255 = vperm.slane %v303, 4
      %v1256 = vmul.f32 %v274, %v1255
      %v1257 = vmul.f32 %v275, %v1255
      %v1258 = vmul.f32 %v276, %v1255
      %v1259 = vmul.f32 %v277, %v1255
      %v1260 = vmul.f32 %v278, %v1255
      %v1261 = vmul.f32 %v279, %v1255
      %v1262 = vmul.f32 %v280, %v1255
      %v1263 = vmul.f32 %v281, %v1255
      %v1264 = vmul.f32 %v282, %v1255
      %v1265 = vmul.f32 %v283, %v1255
      %v1266 = vmul.f32 %v284, %v1255
      %v1267 = vmul.f32 %v285, %v1255
      %v1268 = vmul.f32 %v286, %v1255
      %v1269 = vmul.f32 %v287, %v1255
      %v1270 = vmul.f32 %v288, %v1255
      %v1271 = vmul.f32 %v289, %v1255
      %v1272 = vmul.f32 %v290, %v1255
      %v1273 = vmul.f32 %v291, %v1255
      %v1274 = vmul.f32 %v292, %v1255
      %v1275 = vmul.f32 %v293, %v1255
      %v1276 = vmul.f32 %v294, %v1255
      %v1277 = vmul.f32 %v295, %v1255
      %v1300 = vrot.slane %v1256, 4
      %v1301 = vrot.slane %v1257, 4
      %v1302 = vsel %vm766, %v1300, %v1301
      %v1303 = vrot.slane %v1258, 4
      %v1304 = vrot.slane %v1259, 4
      %v1305 = vsel %vm766, %v1303, %v1304
      %v1306 = vrot.slane %v1260, 4
      %v1307 = vrot.slane %v1261, 4
      %v1308 = vsel %vm766, %v1306, %v1307
      %v1309 = vrot.slane %v1262, 4
      %v1310 = vrot.slane %v1263, 4
      %v1311 = vsel %vm766, %v1309, %v1310
      %v1312 = vrot.slane %v1264, 4
      %v1313 = vrot.slane %v1265, 4
      %v1314 = vsel %vm766, %v1312, %v1313
      %v1315 = vrot.slane %v1266, 4
      %v1316 = vrot.slane %v1267, 4
      %v1317 = vsel %vm766, %v1315, %v1316
      %v1318 = vrot.slane %v1268, 4
      %v1319 = vrot.slane %v1269, 4
      %v1320 = vsel %vm766, %v1318, %v1319
      %v1321 = vrot.slane %v1270, 4
      %v1322 = vrot.slane %v1271, 4
      %v1323 = vsel %vm766, %v1321, %v1322
      %v1324 = vrot.slane %v1272, 4
      %v1325 = vrot.slane %v1273, 4
      %v1326 = vsel %vm766, %v1324, %v1325
      %v1327 = vrot.slane %v1274, 4
      %v1328 = vrot.slane %v1275, 4
      %v1329 = vsel %vm766, %v1327, %v1328
      %v1330 = vrot.slane %v1276, 4
      %v1331 = vrot.slane %v1277, 4
      %v1332 = vsel %vm766, %v1330, %v1331
      %v1355 = vadd.f32 %v1233, %v1302
      %v1356 = vadd.f32 %v1234, %v1301
      %v1357 = vadd.f32 %v1235, %v1305
      %v1358 = vadd.f32 %v1236, %v1304
      %v1359 = vadd.f32 %v1237, %v1308
      %v1360 = vadd.f32 %v1238, %v1307
      %v1361 = vadd.f32 %v1239, %v1311
      %v1362 = vadd.f32 %v1240, %v1310
      %v1363 = vadd.f32 %v1241, %v1314
      %v1364 = vadd.f32 %v1242, %v1313
      %v1365 = vadd.f32 %v1243, %v1317
      %v1366 = vadd.f32 %v1244, %v1316
      %v1367 = vadd.f32 %v1245, %v1320
      %v1368 = vadd.f32 %v1246, %v1319
      %v1369 = vadd.f32 %v1247, %v1323
      %v1370 = vadd.f32 %v1248, %v1322
      %v1371 = vadd.f32 %v1249, %v1326
      %v1372 = vadd.f32 %v1250, %v1325
      %v1373 = vadd.f32 %v1251, %v1329
      %v1374 = vadd.f32 %v1252, %v1328
      %v1375 = vadd.f32 %v1253, %v1332
      %v1376 = vadd.f32 %v1254, %v1331
      %v1377 = vperm.slane %v304, 0
      %v1378 = vmul.f32 %v276, %v1377
      %v1379 = vmul.f32 %v277, %v1377
      %v1380 = vmul.f32 %v278, %v1377
      %v1381 = vmul.f32 %v279, %v1377
      %v1382 = vmul.f32 %v280, %v1377
      %v1383 = vmul.f32 %v281, %v1377
      %v1384 = vmul.f32 %v282, %v1377
      %v1385 = vmul.f32 %v283, %v1377
      %v1386 = vmul.f32 %v284, %v1377
      %v1387 = vmul.f32 %v285, %v1377
      %v1388 = vmul.f32 %v286, %v1377
      %v1389 = vmul.f32 %v287, %v1377
      %v1390 = vmul.f32 %v288, %v1377
      %v1391 = vmul.f32 %v289, %v1377
      %v1392 = vmul.f32 %v290, %v1377
      %v1393 = vmul.f32 %v291, %v1377
      %v1394 = vmul.f32 %v292, %v1377
      %v1395 = vmul.f32 %v293, %v1377
      %v1396 = vmul.f32 %v294, %v1377
      %v1397 = vmul.f32 %v295, %v1377
      %v1398 = vmul.f32 %v296, %v1377
      %v1399 = vmul.f32 %v297, %v1377
      %v1400 = vadd.f32 %v1355, %v1378
      %v1401 = vadd.f32 %v1356, %v1379
      %v1402 = vadd.f32 %v1357, %v1380
      %v1403 = vadd.f32 %v1358, %v1381
      %v1404 = vadd.f32 %v1359, %v1382
      %v1405 = vadd.f32 %v1360, %v1383
      %v1406 = vadd.f32 %v1361, %v1384
      %v1407 = vadd.f32 %v1362, %v1385
      %v1408 = vadd.f32 %v1363, %v1386
      %v1409 = vadd.f32 %v1364, %v1387
      %v1410 = vadd.f32 %v1365, %v1388
      %v1411 = vadd.f32 %v1366, %v1389
      %v1412 = vadd.f32 %v1367, %v1390
      %v1413 = vadd.f32 %v1368, %v1391
      %v1414 = vadd.f32 %v1369, %v1392
      %v1415 = vadd.f32 %v1370, %v1393
      %v1416 = vadd.f32 %v1371, %v1394
      %v1417 = vadd.f32 %v1372, %v1395
      %v1418 = vadd.f32 %v1373, %v1396
      %v1419 = vadd.f32 %v1374, %v1397
      %v1420 = vadd.f32 %v1375, %v1398
      %v1421 = vadd.f32 %v1376, %v1399
      %v1422 = vperm.slane %v304, 1
      %v1423 = vmul.f32 %v276, %v1422
      %v1424 = vmul.f32 %v277, %v1422
      %v1425 = vmul.f32 %v278, %v1422
      %v1426 = vmul.f32 %v279, %v1422
      %v1427 = vmul.f32 %v280, %v1422
      %v1428 = vmul.f32 %v281, %v1422
      %v1429 = vmul.f32 %v282, %v1422
      %v1430 = vmul.f32 %v283, %v1422
      %v1431 = vmul.f32 %v284, %v1422
      %v1432 = vmul.f32 %v285, %v1422
      %v1433 = vmul.f32 %v286, %v1422
      %v1434 = vmul.f32 %v287, %v1422
      %v1435 = vmul.f32 %v288, %v1422
      %v1436 = vmul.f32 %v289, %v1422
      %v1437 = vmul.f32 %v290, %v1422
      %v1438 = vmul.f32 %v291, %v1422
      %v1439 = vmul.f32 %v292, %v1422
      %v1440 = vmul.f32 %v293, %v1422
      %v1441 = vmul.f32 %v294, %v1422
      %v1442 = vmul.f32 %v295, %v1422
      %v1443 = vmul.f32 %v296, %v1422
      %v1444 = vmul.f32 %v297, %v1422
      %v1467 = vrot.slane %v1423, 1
      %v1468 = vrot.slane %v1424, 1
      %v1469 = vsel %vm397, %v1467, %v1468
      %v1470 = vrot.slane %v1425, 1
      %v1471 = vrot.slane %v1426, 1
      %v1472 = vsel %vm397, %v1470, %v1471
      %v1473 = vrot.slane %v1427, 1
      %v1474 = vrot.slane %v1428, 1
      %v1475 = vsel %vm397, %v1473, %v1474
      %v1476 = vrot.slane %v1429, 1
      %v1477 = vrot.slane %v1430, 1
      %v1478 = vsel %vm397, %v1476, %v1477
      %v1479 = vrot.slane %v1431, 1
      %v1480 = vrot.slane %v1432, 1
      %v1481 = vsel %vm397, %v1479, %v1480
      %v1482 = vrot.slane %v1433, 1
      %v1483 = vrot.slane %v1434, 1
      %v1484 = vsel %vm397, %v1482, %v1483
      %v1485 = vrot.slane %v1435, 1
      %v1486 = vrot.slane %v1436, 1
      %v1487 = vsel %vm397, %v1485, %v1486
      %v1488 = vrot.slane %v1437, 1
      %v1489 = vrot.slane %v1438, 1
      %v1490 = vsel %vm397, %v1488, %v1489
      %v1491 = vrot.slane %v1439, 1
      %v1492 = vrot.slane %v1440, 1
      %v1493 = vsel %vm397, %v1491, %v1492
      %v1494 = vrot.slane %v1441, 1
      %v1495 = vrot.slane %v1442, 1
      %v1496 = vsel %vm397, %v1494, %v1495
      %v1497 = vrot.slane %v1443, 1
      %v1498 = vrot.slane %v1444, 1
      %v1499 = vsel %vm397, %v1497, %v1498
      %v1522 = vadd.f32 %v1400, %v1469
      %v1523 = vadd.f32 %v1401, %v1468
      %v1524 = vadd.f32 %v1402, %v1472
      %v1525 = vadd.f32 %v1403, %v1471
      %v1526 = vadd.f32 %v1404, %v1475
      %v1527 = vadd.f32 %v1405, %v1474
      %v1528 = vadd.f32 %v1406, %v1478
      %v1529 = vadd.f32 %v1407, %v1477
      %v1530 = vadd.f32 %v1408, %v1481
      %v1531 = vadd.f32 %v1409, %v1480
      %v1532 = vadd.f32 %v1410, %v1484
      %v1533 = vadd.f32 %v1411, %v1483
      %v1534 = vadd.f32 %v1412, %v1487
      %v1535 = vadd.f32 %v1413, %v1486
      %v1536 = vadd.f32 %v1414, %v1490
      %v1537 = vadd.f32 %v1415, %v1489
      %v1538 = vadd.f32 %v1416, %v1493
      %v1539 = vadd.f32 %v1417, %v1492
      %v1540 = vadd.f32 %v1418, %v1496
      %v1541 = vadd.f32 %v1419, %v1495
      %v1542 = vadd.f32 %v1420, %v1499
      %v1543 = vadd.f32 %v1421, %v1498
      %v1544 = vperm.slane %v304, 2
      %v1545 = vmul.f32 %v276, %v1544
      %v1546 = vmul.f32 %v277, %v1544
      %v1547 = vmul.f32 %v278, %v1544
      %v1548 = vmul.f32 %v279, %v1544
      %v1549 = vmul.f32 %v280, %v1544
      %v1550 = vmul.f32 %v281, %v1544
      %v1551 = vmul.f32 %v282, %v1544
      %v1552 = vmul.f32 %v283, %v1544
      %v1553 = vmul.f32 %v284, %v1544
      %v1554 = vmul.f32 %v285, %v1544
      %v1555 = vmul.f32 %v286, %v1544
      %v1556 = vmul.f32 %v287, %v1544
      %v1557 = vmul.f32 %v288, %v1544
      %v1558 = vmul.f32 %v289, %v1544
      %v1559 = vmul.f32 %v290, %v1544
      %v1560 = vmul.f32 %v291, %v1544
      %v1561 = vmul.f32 %v292, %v1544
      %v1562 = vmul.f32 %v293, %v1544
      %v1563 = vmul.f32 %v294, %v1544
      %v1564 = vmul.f32 %v295, %v1544
      %v1565 = vmul.f32 %v296, %v1544
      %v1566 = vmul.f32 %v297, %v1544
      %v1589 = vrot.slane %v1545, 2
      %v1590 = vrot.slane %v1546, 2
      %v1591 = vsel %vm520, %v1589, %v1590
      %v1592 = vrot.slane %v1547, 2
      %v1593 = vrot.slane %v1548, 2
      %v1594 = vsel %vm520, %v1592, %v1593
      %v1595 = vrot.slane %v1549, 2
      %v1596 = vrot.slane %v1550, 2
      %v1597 = vsel %vm520, %v1595, %v1596
      %v1598 = vrot.slane %v1551, 2
      %v1599 = vrot.slane %v1552, 2
      %v1600 = vsel %vm520, %v1598, %v1599
      %v1601 = vrot.slane %v1553, 2
      %v1602 = vrot.slane %v1554, 2
      %v1603 = vsel %vm520, %v1601, %v1602
      %v1604 = vrot.slane %v1555, 2
      %v1605 = vrot.slane %v1556, 2
      %v1606 = vsel %vm520, %v1604, %v1605
      %v1607 = vrot.slane %v1557, 2
      %v1608 = vrot.slane %v1558, 2
      %v1609 = vsel %vm520, %v1607, %v1608
      %v1610 = vrot.slane %v1559, 2
      %v1611 = vrot.slane %v1560, 2
      %v1612 = vsel %vm520, %v1610, %v1611
      %v1613 = vrot.slane %v1561, 2
      %v1614 = vrot.slane %v1562, 2
      %v1615 = vsel %vm520, %v1613, %v1614
      %v1616 = vrot.slane %v1563, 2
      %v1617 = vrot.slane %v1564, 2
      %v1618 = vsel %vm520, %v1616, %v1617
      %v1619 = vrot.slane %v1565, 2
      %v1620 = vrot.slane %v1566, 2
      %v1621 = vsel %vm520, %v1619, %v1620
      %v1644 = vadd.f32 %v1522, %v1591
      %v1645 = vadd.f32 %v1523, %v1590
      %v1646 = vadd.f32 %v1524, %v1594
      %v1647 = vadd.f32 %v1525, %v1593
      %v1648 = vadd.f32 %v1526, %v1597
      %v1649 = vadd.f32 %v1527, %v1596
      %v1650 = vadd.f32 %v1528, %v1600
      %v1651 = vadd.f32 %v1529, %v1599
      %v1652 = vadd.f32 %v1530, %v1603
      %v1653 = vadd.f32 %v1531, %v1602
      %v1654 = vadd.f32 %v1532, %v1606
      %v1655 = vadd.f32 %v1533, %v1605
      %v1656 = vadd.f32 %v1534, %v1609
      %v1657 = vadd.f32 %v1535, %v1608
      %v1658 = vadd.f32 %v1536, %v1612
      %v1659 = vadd.f32 %v1537, %v1611
      %v1660 = vadd.f32 %v1538, %v1615
      %v1661 = vadd.f32 %v1539, %v1614
      %v1662 = vadd.f32 %v1540, %v1618
      %v1663 = vadd.f32 %v1541, %v1617
      %v1664 = vadd.f32 %v1542, %v1621
      %v1665 = vadd.f32 %v1543, %v1620
      %v1666 = vperm.slane %v304, 3
      %v1667 = vmul.f32 %v276, %v1666
      %v1668 = vmul.f32 %v277, %v1666
      %v1669 = vmul.f32 %v278, %v1666
      %v1670 = vmul.f32 %v279, %v1666
      %v1671 = vmul.f32 %v280, %v1666
      %v1672 = vmul.f32 %v281, %v1666
      %v1673 = vmul.f32 %v282, %v1666
      %v1674 = vmul.f32 %v283, %v1666
      %v1675 = vmul.f32 %v284, %v1666
      %v1676 = vmul.f32 %v285, %v1666
      %v1677 = vmul.f32 %v286, %v1666
      %v1678 = vmul.f32 %v287, %v1666
      %v1679 = vmul.f32 %v288, %v1666
      %v1680 = vmul.f32 %v289, %v1666
      %v1681 = vmul.f32 %v290, %v1666
      %v1682 = vmul.f32 %v291, %v1666
      %v1683 = vmul.f32 %v292, %v1666
      %v1684 = vmul.f32 %v293, %v1666
      %v1685 = vmul.f32 %v294, %v1666
      %v1686 = vmul.f32 %v295, %v1666
      %v1687 = vmul.f32 %v296, %v1666
      %v1688 = vmul.f32 %v297, %v1666
      %v1711 = vrot.slane %v1667, 3
      %v1712 = vrot.slane %v1668, 3
      %v1713 = vsel %vm643, %v1711, %v1712
      %v1714 = vrot.slane %v1669, 3
      %v1715 = vrot.slane %v1670, 3
      %v1716 = vsel %vm643, %v1714, %v1715
      %v1717 = vrot.slane %v1671, 3
      %v1718 = vrot.slane %v1672, 3
      %v1719 = vsel %vm643, %v1717, %v1718
      %v1720 = vrot.slane %v1673, 3
      %v1721 = vrot.slane %v1674, 3
      %v1722 = vsel %vm643, %v1720, %v1721
      %v1723 = vrot.slane %v1675, 3
      %v1724 = vrot.slane %v1676, 3
      %v1725 = vsel %vm643, %v1723, %v1724
      %v1726 = vrot.slane %v1677, 3
      %v1727 = vrot.slane %v1678, 3
      %v1728 = vsel %vm643, %v1726, %v1727
      %v1729 = vrot.slane %v1679, 3
      %v1730 = vrot.slane %v1680, 3
      %v1731 = vsel %vm643, %v1729, %v1730
      %v1732 = vrot.slane %v1681, 3
      %v1733 = vrot.slane %v1682, 3
      %v1734 = vsel %vm643, %v1732, %v1733
      %v1735 = vrot.slane %v1683, 3
      %v1736 = vrot.slane %v1684, 3
      %v1737 = vsel %vm643, %v1735, %v1736
      %v1738 = vrot.slane %v1685, 3
      %v1739 = vrot.slane %v1686, 3
      %v1740 = vsel %vm643, %v1738, %v1739
      %v1741 = vrot.slane %v1687, 3
      %v1742 = vrot.slane %v1688, 3
      %v1743 = vsel %vm643, %v1741, %v1742
      %v1766 = vadd.f32 %v1644, %v1713
      %v1767 = vadd.f32 %v1645, %v1712
      %v1768 = vadd.f32 %v1646, %v1716
      %v1769 = vadd.f32 %v1647, %v1715
      %v1770 = vadd.f32 %v1648, %v1719
      %v1771 = vadd.f32 %v1649, %v1718
      %v1772 = vadd.f32 %v1650, %v1722
      %v1773 = vadd.f32 %v1651, %v1721
      %v1774 = vadd.f32 %v1652, %v1725
      %v1775 = vadd.f32 %v1653, %v1724
      %v1776 = vadd.f32 %v1654, %v1728
      %v1777 = vadd.f32 %v1655, %v1727
      %v1778 = vadd.f32 %v1656, %v1731
      %v1779 = vadd.f32 %v1657, %v1730
      %v1780 = vadd.f32 %v1658, %v1734
      %v1781 = vadd.f32 %v1659, %v1733
      %v1782 = vadd.f32 %v1660, %v1737
      %v1783 = vadd.f32 %v1661, %v1736
      %v1784 = vadd.f32 %v1662, %v1740
      %v1785 = vadd.f32 %v1663, %v1739
      %v1786 = vadd.f32 %v1664, %v1743
      %v1787 = vadd.f32 %v1665, %v1742
      %v1788 = vperm.slane %v304, 4
      %v1789 = vmul.f32 %v276, %v1788
      %v1790 = vmul.f32 %v277, %v1788
      %v1791 = vmul.f32 %v278, %v1788
      %v1792 = vmul.f32 %v279, %v1788
      %v1793 = vmul.f32 %v280, %v1788
      %v1794 = vmul.f32 %v281, %v1788
      %v1795 = vmul.f32 %v282, %v1788
      %v1796 = vmul.f32 %v283, %v1788
      %v1797 = vmul.f32 %v284, %v1788
      %v1798 = vmul.f32 %v285, %v1788
      %v1799 = vmul.f32 %v286, %v1788
      %v1800 = vmul.f32 %v287, %v1788
      %v1801 = vmul.f32 %v288, %v1788
      %v1802 = vmul.f32 %v289, %v1788
      %v1803 = vmul.f32 %v290, %v1788
      %v1804 = vmul.f32 %v291, %v1788
      %v1805 = vmul.f32 %v292, %v1788
      %v1806 = vmul.f32 %v293, %v1788
      %v1807 = vmul.f32 %v294, %v1788
      %v1808 = vmul.f32 %v295, %v1788
      %v1809 = vmul.f32 %v296, %v1788
      %v1810 = vmul.f32 %v297, %v1788
      %v1833 = vrot.slane %v1789, 4
      %v1834 = vrot.slane %v1790, 4
      %v1835 = vsel %vm766, %v1833, %v1834
      %v1836 = vrot.slane %v1791, 4
      %v1837 = vrot.slane %v1792, 4
      %v1838 = vsel %vm766, %v1836, %v1837
      %v1839 = vrot.slane %v1793, 4
      %v1840 = vrot.slane %v1794, 4
      %v1841 = vsel %vm766, %v1839, %v1840
      %v1842 = vrot.slane %v1795, 4
      %v1843 = vrot.slane %v1796, 4
      %v1844 = vsel %vm766, %v1842, %v1843
      %v1845 = vrot.slane %v1797, 4
      %v1846 = vrot.slane %v1798, 4
      %v1847 = vsel %vm766, %v1845, %v1846
      %v1848 = vrot.slane %v1799, 4
      %v1849 = vrot.slane %v1800, 4
      %v1850 = vsel %vm766, %v1848, %v1849
      %v1851 = vrot.slane %v1801, 4
      %v1852 = vrot.slane %v1802, 4
      %v1853 = vsel %vm766, %v1851, %v1852
      %v1854 = vrot.slane %v1803, 4
      %v1855 = vrot.slane %v1804, 4
      %v1856 = vsel %vm766, %v1854, %v1855
      %v1857 = vrot.slane %v1805, 4
      %v1858 = vrot.slane %v1806, 4
      %v1859 = vsel %vm766, %v1857, %v1858
      %v1860 = vrot.slane %v1807, 4
      %v1861 = vrot.slane %v1808, 4
      %v1862 = vsel %vm766, %v1860, %v1861
      %v1863 = vrot.slane %v1809, 4
      %v1864 = vrot.slane %v1810, 4
      %v1865 = vsel %vm766, %v1863, %v1864
      %v1888 = vadd.f32 %v1766, %v1835
      %v1889 = vadd.f32 %v1767, %v1834
      %v1890 = vadd.f32 %v1768, %v1838
      %v1891 = vadd.f32 %v1769, %v1837
      %v1892 = vadd.f32 %v1770, %v1841
      %v1893 = vadd.f32 %v1771, %v1840
      %v1894 = vadd.f32 %v1772, %v1844
      %v1895 = vadd.f32 %v1773, %v1843
      %v1896 = vadd.f32 %v1774, %v1847
      %v1897 = vadd.f32 %v1775, %v1846
      %v1898 = vadd.f32 %v1776, %v1850
      %v1899 = vadd.f32 %v1777, %v1849
      %v1900 = vadd.f32 %v1778, %v1853
      %v1901 = vadd.f32 %v1779, %v1852
      %v1902 = vadd.f32 %v1780, %v1856
      %v1903 = vadd.f32 %v1781, %v1855
      %v1904 = vadd.f32 %v1782, %v1859
      %v1905 = vadd.f32 %v1783, %v1858
      %v1906 = vadd.f32 %v1784, %v1862
      %v1907 = vadd.f32 %v1785, %v1861
      %v1908 = vadd.f32 %v1786, %v1865
      %v1909 = vadd.f32 %v1787, %v1864
      %v1910 = vperm.slane %v305, 0
      %v1911 = vmul.f32 %v278, %v1910
      %v1912 = vmul.f32 %v279, %v1910
      %v1913 = vmul.f32 %v280, %v1910
      %v1914 = vmul.f32 %v281, %v1910
      %v1915 = vmul.f32 %v282, %v1910
      %v1916 = vmul.f32 %v283, %v1910
      %v1917 = vmul.f32 %v284, %v1910
      %v1918 = vmul.f32 %v285, %v1910
      %v1919 = vmul.f32 %v286, %v1910
      %v1920 = vmul.f32 %v287, %v1910
      %v1921 = vmul.f32 %v288, %v1910
      %v1922 = vmul.f32 %v289, %v1910
      %v1923 = vmul.f32 %v290, %v1910
      %v1924 = vmul.f32 %v291, %v1910
      %v1925 = vmul.f32 %v292, %v1910
      %v1926 = vmul.f32 %v293, %v1910
      %v1927 = vmul.f32 %v294, %v1910
      %v1928 = vmul.f32 %v295, %v1910
      %v1929 = vmul.f32 %v296, %v1910
      %v1930 = vmul.f32 %v297, %v1910
      %v1931 = vmul.f32 %v298, %v1910
      %v1932 = vmul.f32 %v299, %v1910
      %v1933 = vadd.f32 %v1888, %v1911
      %v1934 = vadd.f32 %v1889, %v1912
      %v1935 = vadd.f32 %v1890, %v1913
      %v1936 = vadd.f32 %v1891, %v1914
      %v1937 = vadd.f32 %v1892, %v1915
      %v1938 = vadd.f32 %v1893, %v1916
      %v1939 = vadd.f32 %v1894, %v1917
      %v1940 = vadd.f32 %v1895, %v1918
      %v1941 = vadd.f32 %v1896, %v1919
      %v1942 = vadd.f32 %v1897, %v1920
      %v1943 = vadd.f32 %v1898, %v1921
      %v1944 = vadd.f32 %v1899, %v1922
      %v1945 = vadd.f32 %v1900, %v1923
      %v1946 = vadd.f32 %v1901, %v1924
      %v1947 = vadd.f32 %v1902, %v1925
      %v1948 = vadd.f32 %v1903, %v1926
      %v1949 = vadd.f32 %v1904, %v1927
      %v1950 = vadd.f32 %v1905, %v1928
      %v1951 = vadd.f32 %v1906, %v1929
      %v1952 = vadd.f32 %v1907, %v1930
      %v1953 = vadd.f32 %v1908, %v1931
      %v1954 = vadd.f32 %v1909, %v1932
      %v1955 = vperm.slane %v305, 1
      %v1956 = vmul.f32 %v278, %v1955
      %v1957 = vmul.f32 %v279, %v1955
      %v1958 = vmul.f32 %v280, %v1955
      %v1959 = vmul.f32 %v281, %v1955
      %v1960 = vmul.f32 %v282, %v1955
      %v1961 = vmul.f32 %v283, %v1955
      %v1962 = vmul.f32 %v284, %v1955
      %v1963 = vmul.f32 %v285, %v1955
      %v1964 = vmul.f32 %v286, %v1955
      %v1965 = vmul.f32 %v287, %v1955
      %v1966 = vmul.f32 %v288, %v1955
      %v1967 = vmul.f32 %v289, %v1955
      %v1968 = vmul.f32 %v290, %v1955
      %v1969 = vmul.f32 %v291, %v1955
      %v1970 = vmul.f32 %v292, %v1955
      %v1971 = vmul.f32 %v293, %v1955
      %v1972 = vmul.f32 %v294, %v1955
      %v1973 = vmul.f32 %v295, %v1955
      %v1974 = vmul.f32 %v296, %v1955
      %v1975 = vmul.f32 %v297, %v1955
      %v1976 = vmul.f32 %v298, %v1955
      %v1977 = vmul.f32 %v299, %v1955
      %v2000 = vrot.slane %v1956, 1
      %v2001 = vrot.slane %v1957, 1
      %v2002 = vsel %vm397, %v2000, %v2001
      %v2003 = vrot.slane %v1958, 1
      %v2004 = vrot.slane %v1959, 1
      %v2005 = vsel %vm397, %v2003, %v2004
      %v2006 = vrot.slane %v1960, 1
      %v2007 = vrot.slane %v1961, 1
      %v2008 = vsel %vm397, %v2006, %v2007
      %v2009 = vrot.slane %v1962, 1
      %v2010 = vrot.slane %v1963, 1
      %v2011 = vsel %vm397, %v2009, %v2010
      %v2012 = vrot.slane %v1964, 1
      %v2013 = vrot.slane %v1965, 1
      %v2014 = vsel %vm397, %v2012, %v2013
      %v2015 = vrot.slane %v1966, 1
      %v2016 = vrot.slane %v1967, 1
      %v2017 = vsel %vm397, %v2015, %v2016
      %v2018 = vrot.slane %v1968, 1
      %v2019 = vrot.slane %v1969, 1
      %v2020 = vsel %vm397, %v2018, %v2019
      %v2021 = vrot.slane %v1970, 1
      %v2022 = vrot.slane %v1971, 1
      %v2023 = vsel %vm397, %v2021, %v2022
      %v2024 = vrot.slane %v1972, 1
      %v2025 = vrot.slane %v1973, 1
      %v2026 = vsel %vm397, %v2024, %v2025
      %v2027 = vrot.slane %v1974, 1
      %v2028 = vrot.slane %v1975, 1
      %v2029 = vsel %vm397, %v2027, %v2028
      %v2030 = vrot.slane %v1976, 1
      %v2031 = vrot.slane %v1977, 1
      %v2032 = vsel %vm397, %v2030, %v2031
      %v2055 = vadd.f32 %v1933, %v2002
      %v2056 = vadd.f32 %v1934, %v2001
      %v2057 = vadd.f32 %v1935, %v2005
      %v2058 = vadd.f32 %v1936, %v2004
      %v2059 = vadd.f32 %v1937, %v2008
      %v2060 = vadd.f32 %v1938, %v2007
      %v2061 = vadd.f32 %v1939, %v2011
      %v2062 = vadd.f32 %v1940, %v2010
      %v2063 = vadd.f32 %v1941, %v2014
      %v2064 = vadd.f32 %v1942, %v2013
      %v2065 = vadd.f32 %v1943, %v2017
      %v2066 = vadd.f32 %v1944, %v2016
      %v2067 = vadd.f32 %v1945, %v2020
      %v2068 = vadd.f32 %v1946, %v2019
      %v2069 = vadd.f32 %v1947, %v2023
      %v2070 = vadd.f32 %v1948, %v2022
      %v2071 = vadd.f32 %v1949, %v2026
      %v2072 = vadd.f32 %v1950, %v2025
      %v2073 = vadd.f32 %v1951, %v2029
      %v2074 = vadd.f32 %v1952, %v2028
      %v2075 = vadd.f32 %v1953, %v2032
      %v2076 = vadd.f32 %v1954, %v2031
      %v2077 = vperm.slane %v305, 2
      %v2078 = vmul.f32 %v278, %v2077
      %v2079 = vmul.f32 %v279, %v2077
      %v2080 = vmul.f32 %v280, %v2077
      %v2081 = vmul.f32 %v281, %v2077
      %v2082 = vmul.f32 %v282, %v2077
      %v2083 = vmul.f32 %v283, %v2077
      %v2084 = vmul.f32 %v284, %v2077
      %v2085 = vmul.f32 %v285, %v2077
      %v2086 = vmul.f32 %v286, %v2077
      %v2087 = vmul.f32 %v287, %v2077
      %v2088 = vmul.f32 %v288, %v2077
      %v2089 = vmul.f32 %v289, %v2077
      %v2090 = vmul.f32 %v290, %v2077
      %v2091 = vmul.f32 %v291, %v2077
      %v2092 = vmul.f32 %v292, %v2077
      %v2093 = vmul.f32 %v293, %v2077
      %v2094 = vmul.f32 %v294, %v2077
      %v2095 = vmul.f32 %v295, %v2077
      %v2096 = vmul.f32 %v296, %v2077
      %v2097 = vmul.f32 %v297, %v2077
      %v2098 = vmul.f32 %v298, %v2077
      %v2099 = vmul.f32 %v299, %v2077
      %v2122 = vrot.slane %v2078, 2
      %v2123 = vrot.slane %v2079, 2
      %v2124 = vsel %vm520, %v2122, %v2123
      %v2125 = vrot.slane %v2080, 2
      %v2126 = vrot.slane %v2081, 2
      %v2127 = vsel %vm520, %v2125, %v2126
      %v2128 = vrot.slane %v2082, 2
      %v2129 = vrot.slane %v2083, 2
      %v2130 = vsel %vm520, %v2128, %v2129
      %v2131 = vrot.slane %v2084, 2
      %v2132 = vrot.slane %v2085, 2
      %v2133 = vsel %vm520, %v2131, %v2132
      %v2134 = vrot.slane %v2086, 2
      %v2135 = vrot.slane %v2087, 2
      %v2136 = vsel %vm520, %v2134, %v2135
      %v2137 = vrot.slane %v2088, 2
      %v2138 = vrot.slane %v2089, 2
      %v2139 = vsel %vm520, %v2137, %v2138
      %v2140 = vrot.slane %v2090, 2
      %v2141 = vrot.slane %v2091, 2
      %v2142 = vsel %vm520, %v2140, %v2141
      %v2143 = vrot.slane %v2092, 2
      %v2144 = vrot.slane %v2093, 2
      %v2145 = vsel %vm520, %v2143, %v2144
      %v2146 = vrot.slane %v2094, 2
      %v2147 = vrot.slane %v2095, 2
      %v2148 = vsel %vm520, %v2146, %v2147
      %v2149 = vrot.slane %v2096, 2
      %v2150 = vrot.slane %v2097, 2
      %v2151 = vsel %vm520, %v2149, %v2150
      %v2152 = vrot.slane %v2098, 2
      %v2153 = vrot.slane %v2099, 2
      %v2154 = vsel %vm520, %v2152, %v2153
      %v2177 = vadd.f32 %v2055, %v2124
      %v2178 = vadd.f32 %v2056, %v2123
      %v2179 = vadd.f32 %v2057, %v2127
      %v2180 = vadd.f32 %v2058, %v2126
      %v2181 = vadd.f32 %v2059, %v2130
      %v2182 = vadd.f32 %v2060, %v2129
      %v2183 = vadd.f32 %v2061, %v2133
      %v2184 = vadd.f32 %v2062, %v2132
      %v2185 = vadd.f32 %v2063, %v2136
      %v2186 = vadd.f32 %v2064, %v2135
      %v2187 = vadd.f32 %v2065, %v2139
      %v2188 = vadd.f32 %v2066, %v2138
      %v2189 = vadd.f32 %v2067, %v2142
      %v2190 = vadd.f32 %v2068, %v2141
      %v2191 = vadd.f32 %v2069, %v2145
      %v2192 = vadd.f32 %v2070, %v2144
      %v2193 = vadd.f32 %v2071, %v2148
      %v2194 = vadd.f32 %v2072, %v2147
      %v2195 = vadd.f32 %v2073, %v2151
      %v2196 = vadd.f32 %v2074, %v2150
      %v2197 = vadd.f32 %v2075, %v2154
      %v2198 = vadd.f32 %v2076, %v2153
      %v2199 = vperm.slane %v305, 3
      %v2200 = vmul.f32 %v278, %v2199
      %v2201 = vmul.f32 %v279, %v2199
      %v2202 = vmul.f32 %v280, %v2199
      %v2203 = vmul.f32 %v281, %v2199
      %v2204 = vmul.f32 %v282, %v2199
      %v2205 = vmul.f32 %v283, %v2199
      %v2206 = vmul.f32 %v284, %v2199
      %v2207 = vmul.f32 %v285, %v2199
      %v2208 = vmul.f32 %v286, %v2199
      %v2209 = vmul.f32 %v287, %v2199
      %v2210 = vmul.f32 %v288, %v2199
      %v2211 = vmul.f32 %v289, %v2199
      %v2212 = vmul.f32 %v290, %v2199
      %v2213 = vmul.f32 %v291, %v2199
      %v2214 = vmul.f32 %v292, %v2199
      %v2215 = vmul.f32 %v293, %v2199
      %v2216 = vmul.f32 %v294, %v2199
      %v2217 = vmul.f32 %v295, %v2199
      %v2218 = vmul.f32 %v296, %v2199
      %v2219 = vmul.f32 %v297, %v2199
      %v2220 = vmul.f32 %v298, %v2199
      %v2221 = vmul.f32 %v299, %v2199
      %v2244 = vrot.slane %v2200, 3
      %v2245 = vrot.slane %v2201, 3
      %v2246 = vsel %vm643, %v2244, %v2245
      %v2247 = vrot.slane %v2202, 3
      %v2248 = vrot.slane %v2203, 3
      %v2249 = vsel %vm643, %v2247, %v2248
      %v2250 = vrot.slane %v2204, 3
      %v2251 = vrot.slane %v2205, 3
      %v2252 = vsel %vm643, %v2250, %v2251
      %v2253 = vrot.slane %v2206, 3
      %v2254 = vrot.slane %v2207, 3
      %v2255 = vsel %vm643, %v2253, %v2254
      %v2256 = vrot.slane %v2208, 3
      %v2257 = vrot.slane %v2209, 3
      %v2258 = vsel %vm643, %v2256, %v2257
      %v2259 = vrot.slane %v2210, 3
      %v2260 = vrot.slane %v2211, 3
      %v2261 = vsel %vm643, %v2259, %v2260
      %v2262 = vrot.slane %v2212, 3
      %v2263 = vrot.slane %v2213, 3
      %v2264 = vsel %vm643, %v2262, %v2263
      %v2265 = vrot.slane %v2214, 3
      %v2266 = vrot.slane %v2215, 3
      %v2267 = vsel %vm643, %v2265, %v2266
      %v2268 = vrot.slane %v2216, 3
      %v2269 = vrot.slane %v2217, 3
      %v2270 = vsel %vm643, %v2268, %v2269
      %v2271 = vrot.slane %v2218, 3
      %v2272 = vrot.slane %v2219, 3
      %v2273 = vsel %vm643, %v2271, %v2272
      %v2274 = vrot.slane %v2220, 3
      %v2275 = vrot.slane %v2221, 3
      %v2276 = vsel %vm643, %v2274, %v2275
      %v2299 = vadd.f32 %v2177, %v2246
      %v2300 = vadd.f32 %v2178, %v2245
      %v2301 = vadd.f32 %v2179, %v2249
      %v2302 = vadd.f32 %v2180, %v2248
      %v2303 = vadd.f32 %v2181, %v2252
      %v2304 = vadd.f32 %v2182, %v2251
      %v2305 = vadd.f32 %v2183, %v2255
      %v2306 = vadd.f32 %v2184, %v2254
      %v2307 = vadd.f32 %v2185, %v2258
      %v2308 = vadd.f32 %v2186, %v2257
      %v2309 = vadd.f32 %v2187, %v2261
      %v2310 = vadd.f32 %v2188, %v2260
      %v2311 = vadd.f32 %v2189, %v2264
      %v2312 = vadd.f32 %v2190, %v2263
      %v2313 = vadd.f32 %v2191, %v2267
      %v2314 = vadd.f32 %v2192, %v2266
      %v2315 = vadd.f32 %v2193, %v2270
      %v2316 = vadd.f32 %v2194, %v2269
      %v2317 = vadd.f32 %v2195, %v2273
      %v2318 = vadd.f32 %v2196, %v2272
      %v2319 = vadd.f32 %v2197, %v2276
      %v2320 = vadd.f32 %v2198, %v2275
      %v2321 = vperm.slane %v305, 4
      %v2322 = vmul.f32 %v278, %v2321
      %v2323 = vmul.f32 %v279, %v2321
      %v2324 = vmul.f32 %v280, %v2321
      %v2325 = vmul.f32 %v281, %v2321
      %v2326 = vmul.f32 %v282, %v2321
      %v2327 = vmul.f32 %v283, %v2321
      %v2328 = vmul.f32 %v284, %v2321
      %v2329 = vmul.f32 %v285, %v2321
      %v2330 = vmul.f32 %v286, %v2321
      %v2331 = vmul.f32 %v287, %v2321
      %v2332 = vmul.f32 %v288, %v2321
      %v2333 = vmul.f32 %v289, %v2321
      %v2334 = vmul.f32 %v290, %v2321
      %v2335 = vmul.f32 %v291, %v2321
      %v2336 = vmul.f32 %v292, %v2321
      %v2337 = vmul.f32 %v293, %v2321
      %v2338 = vmul.f32 %v294, %v2321
      %v2339 = vmul.f32 %v295, %v2321
      %v2340 = vmul.f32 %v296, %v2321
      %v2341 = vmul.f32 %v297, %v2321
      %v2342 = vmul.f32 %v298, %v2321
      %v2343 = vmul.f32 %v299, %v2321
      %v2366 = vrot.slane %v2322, 4
      %v2367 = vrot.slane %v2323, 4
      %v2368 = vsel %vm766, %v2366, %v2367
      %v2369 = vrot.slane %v2324, 4
      %v2370 = vrot.slane %v2325, 4
      %v2371 = vsel %vm766, %v2369, %v2370
      %v2372 = vrot.slane %v2326, 4
      %v2373 = vrot.slane %v2327, 4
      %v2374 = vsel %vm766, %v2372, %v2373
      %v2375 = vrot.slane %v2328, 4
      %v2376 = vrot.slane %v2329, 4
      %v2377 = vsel %vm766, %v2375, %v2376
      %v2378 = vrot.slane %v2330, 4
      %v2379 = vrot.slane %v2331, 4
      %v2380 = vsel %vm766, %v2378, %v2379
      %v2381 = vrot.slane %v2332, 4
      %v2382 = vrot.slane %v2333, 4
      %v2383 = vsel %vm766, %v2381, %v2382
      %v2384 = vrot.slane %v2334, 4
      %v2385 = vrot.slane %v2335, 4
      %v2386 = vsel %vm766, %v2384, %v2385
      %v2387 = vrot.slane %v2336, 4
      %v2388 = vrot.slane %v2337, 4
      %v2389 = vsel %vm766, %v2387, %v2388
      %v2390 = vrot.slane %v2338, 4
      %v2391 = vrot.slane %v2339, 4
      %v2392 = vsel %vm766, %v2390, %v2391
      %v2393 = vrot.slane %v2340, 4
      %v2394 = vrot.slane %v2341, 4
      %v2395 = vsel %vm766, %v2393, %v2394
      %v2396 = vrot.slane %v2342, 4
      %v2397 = vrot.slane %v2343, 4
      %v2398 = vsel %vm766, %v2396, %v2397
      %v2421 = vadd.f32 %v2299, %v2368
      %v2422 = vadd.f32 %v2300, %v2367
      %v2423 = vadd.f32 %v2301, %v2371
      %v2424 = vadd.f32 %v2302, %v2370
      %v2425 = vadd.f32 %v2303, %v2374
      %v2426 = vadd.f32 %v2304, %v2373
      %v2427 = vadd.f32 %v2305, %v2377
      %v2428 = vadd.f32 %v2306, %v2376
      %v2429 = vadd.f32 %v2307, %v2380
      %v2430 = vadd.f32 %v2308, %v2379
      %v2431 = vadd.f32 %v2309, %v2383
      %v2432 = vadd.f32 %v2310, %v2382
      %v2433 = vadd.f32 %v2311, %v2386
      %v2434 = vadd.f32 %v2312, %v2385
      %v2435 = vadd.f32 %v2313, %v2389
      %v2436 = vadd.f32 %v2314, %v2388
      %v2437 = vadd.f32 %v2315, %v2392
      %v2438 = vadd.f32 %v2316, %v2391
      %v2439 = vadd.f32 %v2317, %v2395
      %v2440 = vadd.f32 %v2318, %v2394
      %v2441 = vadd.f32 %v2319, %v2398
      %v2442 = vadd.f32 %v2320, %v2397
      %v2443 = vperm.slane %v306, 0
      %v2444 = vmul.f32 %v280, %v2443
      %v2445 = vmul.f32 %v281, %v2443
      %v2446 = vmul.f32 %v282, %v2443
      %v2447 = vmul.f32 %v283, %v2443
      %v2448 = vmul.f32 %v284, %v2443
      %v2449 = vmul.f32 %v285, %v2443
      %v2450 = vmul.f32 %v286, %v2443
      %v2451 = vmul.f32 %v287, %v2443
      %v2452 = vmul.f32 %v288, %v2443
      %v2453 = vmul.f32 %v289, %v2443
      %v2454 = vmul.f32 %v290, %v2443
      %v2455 = vmul.f32 %v291, %v2443
      %v2456 = vmul.f32 %v292, %v2443
      %v2457 = vmul.f32 %v293, %v2443
      %v2458 = vmul.f32 %v294, %v2443
      %v2459 = vmul.f32 %v295, %v2443
      %v2460 = vmul.f32 %v296, %v2443
      %v2461 = vmul.f32 %v297, %v2443
      %v2462 = vmul.f32 %v298, %v2443
      %v2463 = vmul.f32 %v299, %v2443
      %v2464 = vmul.f32 %v300, %v2443
      %v2465 = vmul.f32 %v301, %v2443
      %v2466 = vadd.f32 %v2421, %v2444
      %v2467 = vadd.f32 %v2422, %v2445
      %v2468 = vadd.f32 %v2423, %v2446
      %v2469 = vadd.f32 %v2424, %v2447
      %v2470 = vadd.f32 %v2425, %v2448
      %v2471 = vadd.f32 %v2426, %v2449
      %v2472 = vadd.f32 %v2427, %v2450
      %v2473 = vadd.f32 %v2428, %v2451
      %v2474 = vadd.f32 %v2429, %v2452
      %v2475 = vadd.f32 %v2430, %v2453
      %v2476 = vadd.f32 %v2431, %v2454
      %v2477 = vadd.f32 %v2432, %v2455
      %v2478 = vadd.f32 %v2433, %v2456
      %v2479 = vadd.f32 %v2434, %v2457
      %v2480 = vadd.f32 %v2435, %v2458
      %v2481 = vadd.f32 %v2436, %v2459
      %v2482 = vadd.f32 %v2437, %v2460
      %v2483 = vadd.f32 %v2438, %v2461
      %v2484 = vadd.f32 %v2439, %v2462
      %v2485 = vadd.f32 %v2440, %v2463
      %v2486 = vadd.f32 %v2441, %v2464
      %v2487 = vadd.f32 %v2442, %v2465
      %v2488 = vperm.slane %v306, 1
      %v2489 = vmul.f32 %v280, %v2488
      %v2490 = vmul.f32 %v281, %v2488
      %v2491 = vmul.f32 %v282, %v2488
      %v2492 = vmul.f32 %v283, %v2488
      %v2493 = vmul.f32 %v284, %v2488
      %v2494 = vmul.f32 %v285, %v2488
      %v2495 = vmul.f32 %v286, %v2488
      %v2496 = vmul.f32 %v287, %v2488
      %v2497 = vmul.f32 %v288, %v2488
      %v2498 = vmul.f32 %v289, %v2488
      %v2499 = vmul.f32 %v290, %v2488
      %v2500 = vmul.f32 %v291, %v2488
      %v2501 = vmul.f32 %v292, %v2488
      %v2502 = vmul.f32 %v293, %v2488
      %v2503 = vmul.f32 %v294, %v2488
      %v2504 = vmul.f32 %v295, %v2488
      %v2505 = vmul.f32 %v296, %v2488
      %v2506 = vmul.f32 %v297, %v2488
      %v2507 = vmul.f32 %v298, %v2488
      %v2508 = vmul.f32 %v299, %v2488
      %v2509 = vmul.f32 %v300, %v2488
      %v2510 = vmul.f32 %v301, %v2488
      %v2533 = vrot.slane %v2489, 1
      %v2534 = vrot.slane %v2490, 1
      %v2535 = vsel %vm397, %v2533, %v2534
      %v2536 = vrot.slane %v2491, 1
      %v2537 = vrot.slane %v2492, 1
      %v2538 = vsel %vm397, %v2536, %v2537
      %v2539 = vrot.slane %v2493, 1
      %v2540 = vrot.slane %v2494, 1
      %v2541 = vsel %vm397, %v2539, %v2540
      %v2542 = vrot.slane %v2495, 1
      %v2543 = vrot.slane %v2496, 1
      %v2544 = vsel %vm397, %v2542, %v2543
      %v2545 = vrot.slane %v2497, 1
      %v2546 = vrot.slane %v2498, 1
      %v2547 = vsel %vm397, %v2545, %v2546
      %v2548 = vrot.slane %v2499, 1
      %v2549 = vrot.slane %v2500, 1
      %v2550 = vsel %vm397, %v2548, %v2549
      %v2551 = vrot.slane %v2501, 1
      %v2552 = vrot.slane %v2502, 1
      %v2553 = vsel %vm397, %v2551, %v2552
      %v2554 = vrot.slane %v2503, 1
      %v2555 = vrot.slane %v2504, 1
      %v2556 = vsel %vm397, %v2554, %v2555
      %v2557 = vrot.slane %v2505, 1
      %v2558 = vrot.slane %v2506, 1
      %v2559 = vsel %vm397, %v2557, %v2558
      %v2560 = vrot.slane %v2507, 1
      %v2561 = vrot.slane %v2508, 1
      %v2562 = vsel %vm397, %v2560, %v2561
      %v2563 = vrot.slane %v2509, 1
      %v2564 = vrot.slane %v2510, 1
      %v2565 = vsel %vm397, %v2563, %v2564
      %v2588 = vadd.f32 %v2466, %v2535
      %v2589 = vadd.f32 %v2467, %v2534
      %v2590 = vadd.f32 %v2468, %v2538
      %v2591 = vadd.f32 %v2469, %v2537
      %v2592 = vadd.f32 %v2470, %v2541
      %v2593 = vadd.f32 %v2471, %v2540
      %v2594 = vadd.f32 %v2472, %v2544
      %v2595 = vadd.f32 %v2473, %v2543
      %v2596 = vadd.f32 %v2474, %v2547
      %v2597 = vadd.f32 %v2475, %v2546
      %v2598 = vadd.f32 %v2476, %v2550
      %v2599 = vadd.f32 %v2477, %v2549
      %v2600 = vadd.f32 %v2478, %v2553
      %v2601 = vadd.f32 %v2479, %v2552
      %v2602 = vadd.f32 %v2480, %v2556
      %v2603 = vadd.f32 %v2481, %v2555
      %v2604 = vadd.f32 %v2482, %v2559
      %v2605 = vadd.f32 %v2483, %v2558
      %v2606 = vadd.f32 %v2484, %v2562
      %v2607 = vadd.f32 %v2485, %v2561
      %v2608 = vadd.f32 %v2486, %v2565
      %v2609 = vadd.f32 %v2487, %v2564
      %v2610 = vperm.slane %v306, 2
      %v2611 = vmul.f32 %v280, %v2610
      %v2612 = vmul.f32 %v281, %v2610
      %v2613 = vmul.f32 %v282, %v2610
      %v2614 = vmul.f32 %v283, %v2610
      %v2615 = vmul.f32 %v284, %v2610
      %v2616 = vmul.f32 %v285, %v2610
      %v2617 = vmul.f32 %v286, %v2610
      %v2618 = vmul.f32 %v287, %v2610
      %v2619 = vmul.f32 %v288, %v2610
      %v2620 = vmul.f32 %v289, %v2610
      %v2621 = vmul.f32 %v290, %v2610
      %v2622 = vmul.f32 %v291, %v2610
      %v2623 = vmul.f32 %v292, %v2610
      %v2624 = vmul.f32 %v293, %v2610
      %v2625 = vmul.f32 %v294, %v2610
      %v2626 = vmul.f32 %v295, %v2610
      %v2627 = vmul.f32 %v296, %v2610
      %v2628 = vmul.f32 %v297, %v2610
      %v2629 = vmul.f32 %v298, %v2610
      %v2630 = vmul.f32 %v299, %v2610
      %v2631 = vmul.f32 %v300, %v2610
      %v2632 = vmul.f32 %v301, %v2610
      %v2655 = vrot.slane %v2611, 2
      %v2656 = vrot.slane %v2612, 2
      %v2657 = vsel %vm520, %v2655, %v2656
      %v2658 = vrot.slane %v2613, 2
      %v2659 = vrot.slane %v2614, 2
      %v2660 = vsel %vm520, %v2658, %v2659
      %v2661 = vrot.slane %v2615, 2
      %v2662 = vrot.slane %v2616, 2
      %v2663 = vsel %vm520, %v2661, %v2662
      %v2664 = vrot.slane %v2617, 2
      %v2665 = vrot.slane %v2618, 2
      %v2666 = vsel %vm520, %v2664, %v2665
      %v2667 = vrot.slane %v2619, 2
      %v2668 = vrot.slane %v2620, 2
      %v2669 = vsel %vm520, %v2667, %v2668
      %v2670 = vrot.slane %v2621, 2
      %v2671 = vrot.slane %v2622, 2
      %v2672 = vsel %vm520, %v2670, %v2671
      %v2673 = vrot.slane %v2623, 2
      %v2674 = vrot.slane %v2624, 2
      %v2675 = vsel %vm520, %v2673, %v2674
      %v2676 = vrot.slane %v2625, 2
      %v2677 = vrot.slane %v2626, 2
      %v2678 = vsel %vm520, %v2676, %v2677
      %v2679 = vrot.slane %v2627, 2
      %v2680 = vrot.slane %v2628, 2
      %v2681 = vsel %vm520, %v2679, %v2680
      %v2682 = vrot.slane %v2629, 2
      %v2683 = vrot.slane %v2630, 2
      %v2684 = vsel %vm520, %v2682, %v2683
      %v2685 = vrot.slane %v2631, 2
      %v2686 = vrot.slane %v2632, 2
      %v2687 = vsel %vm520, %v2685, %v2686
      %v2710 = vadd.f32 %v2588, %v2657
      %v2711 = vadd.f32 %v2589, %v2656
      %v2712 = vadd.f32 %v2590, %v2660
      %v2713 = vadd.f32 %v2591, %v2659
      %v2714 = vadd.f32 %v2592, %v2663
      %v2715 = vadd.f32 %v2593, %v2662
      %v2716 = vadd.f32 %v2594, %v2666
      %v2717 = vadd.f32 %v2595, %v2665
      %v2718 = vadd.f32 %v2596, %v2669
      %v2719 = vadd.f32 %v2597, %v2668
      %v2720 = vadd.f32 %v2598, %v2672
      %v2721 = vadd.f32 %v2599, %v2671
      %v2722 = vadd.f32 %v2600, %v2675
      %v2723 = vadd.f32 %v2601, %v2674
      %v2724 = vadd.f32 %v2602, %v2678
      %v2725 = vadd.f32 %v2603, %v2677
      %v2726 = vadd.f32 %v2604, %v2681
      %v2727 = vadd.f32 %v2605, %v2680
      %v2728 = vadd.f32 %v2606, %v2684
      %v2729 = vadd.f32 %v2607, %v2683
      %v2730 = vadd.f32 %v2608, %v2687
      %v2731 = vadd.f32 %v2609, %v2686
      %v2732 = vperm.slane %v306, 3
      %v2733 = vmul.f32 %v280, %v2732
      %v2734 = vmul.f32 %v281, %v2732
      %v2735 = vmul.f32 %v282, %v2732
      %v2736 = vmul.f32 %v283, %v2732
      %v2737 = vmul.f32 %v284, %v2732
      %v2738 = vmul.f32 %v285, %v2732
      %v2739 = vmul.f32 %v286, %v2732
      %v2740 = vmul.f32 %v287, %v2732
      %v2741 = vmul.f32 %v288, %v2732
      %v2742 = vmul.f32 %v289, %v2732
      %v2743 = vmul.f32 %v290, %v2732
      %v2744 = vmul.f32 %v291, %v2732
      %v2745 = vmul.f32 %v292, %v2732
      %v2746 = vmul.f32 %v293, %v2732
      %v2747 = vmul.f32 %v294, %v2732
      %v2748 = vmul.f32 %v295, %v2732
      %v2749 = vmul.f32 %v296, %v2732
      %v2750 = vmul.f32 %v297, %v2732
      %v2751 = vmul.f32 %v298, %v2732
      %v2752 = vmul.f32 %v299, %v2732
      %v2753 = vmul.f32 %v300, %v2732
      %v2754 = vmul.f32 %v301, %v2732
      %v2777 = vrot.slane %v2733, 3
      %v2778 = vrot.slane %v2734, 3
      %v2779 = vsel %vm643, %v2777, %v2778
      %v2780 = vrot.slane %v2735, 3
      %v2781 = vrot.slane %v2736, 3
      %v2782 = vsel %vm643, %v2780, %v2781
      %v2783 = vrot.slane %v2737, 3
      %v2784 = vrot.slane %v2738, 3
      %v2785 = vsel %vm643, %v2783, %v2784
      %v2786 = vrot.slane %v2739, 3
      %v2787 = vrot.slane %v2740, 3
      %v2788 = vsel %vm643, %v2786, %v2787
      %v2789 = vrot.slane %v2741, 3
      %v2790 = vrot.slane %v2742, 3
      %v2791 = vsel %vm643, %v2789, %v2790
      %v2792 = vrot.slane %v2743, 3
      %v2793 = vrot.slane %v2744, 3
      %v2794 = vsel %vm643, %v2792, %v2793
      %v2795 = vrot.slane %v2745, 3
      %v2796 = vrot.slane %v2746, 3
      %v2797 = vsel %vm643, %v2795, %v2796
      %v2798 = vrot.slane %v2747, 3
      %v2799 = vrot.slane %v2748, 3
      %v2800 = vsel %vm643, %v2798, %v2799
      %v2801 = vrot.slane %v2749, 3
      %v2802 = vrot.slane %v2750, 3
      %v2803 = vsel %vm643, %v2801, %v2802
      %v2804 = vrot.slane %v2751, 3
      %v2805 = vrot.slane %v2752, 3
      %v2806 = vsel %vm643, %v2804, %v2805
      %v2807 = vrot.slane %v2753, 3
      %v2808 = vrot.slane %v2754, 3
      %v2809 = vsel %vm643, %v2807, %v2808
      %v2832 = vadd.f32 %v2710, %v2779
      %v2833 = vadd.f32 %v2711, %v2778
      %v2834 = vadd.f32 %v2712, %v2782
      %v2835 = vadd.f32 %v2713, %v2781
      %v2836 = vadd.f32 %v2714, %v2785
      %v2837 = vadd.f32 %v2715, %v2784
      %v2838 = vadd.f32 %v2716, %v2788
      %v2839 = vadd.f32 %v2717, %v2787
      %v2840 = vadd.f32 %v2718, %v2791
      %v2841 = vadd.f32 %v2719, %v2790
      %v2842 = vadd.f32 %v2720, %v2794
      %v2843 = vadd.f32 %v2721, %v2793
      %v2844 = vadd.f32 %v2722, %v2797
      %v2845 = vadd.f32 %v2723, %v2796
      %v2846 = vadd.f32 %v2724, %v2800
      %v2847 = vadd.f32 %v2725, %v2799
      %v2848 = vadd.f32 %v2726, %v2803
      %v2849 = vadd.f32 %v2727, %v2802
      %v2850 = vadd.f32 %v2728, %v2806
      %v2851 = vadd.f32 %v2729, %v2805
      %v2852 = vadd.f32 %v2730, %v2809
      %v2853 = vadd.f32 %v2731, %v2808
      %v2854 = vperm.slane %v306, 4
      %v2855 = vmul.f32 %v280, %v2854
      %v2856 = vmul.f32 %v281, %v2854
      %v2857 = vmul.f32 %v282, %v2854
      %v2858 = vmul.f32 %v283, %v2854
      %v2859 = vmul.f32 %v284, %v2854
      %v2860 = vmul.f32 %v285, %v2854
      %v2861 = vmul.f32 %v286, %v2854
      %v2862 = vmul.f32 %v287, %v2854
      %v2863 = vmul.f32 %v288, %v2854
      %v2864 = vmul.f32 %v289, %v2854
      %v2865 = vmul.f32 %v290, %v2854
      %v2866 = vmul.f32 %v291, %v2854
      %v2867 = vmul.f32 %v292, %v2854
      %v2868 = vmul.f32 %v293, %v2854
      %v2869 = vmul.f32 %v294, %v2854
      %v2870 = vmul.f32 %v295, %v2854
      %v2871 = vmul.f32 %v296, %v2854
      %v2872 = vmul.f32 %v297, %v2854
      %v2873 = vmul.f32 %v298, %v2854
      %v2874 = vmul.f32 %v299, %v2854
      %v2875 = vmul.f32 %v300, %v2854
      %v2876 = vmul.f32 %v301, %v2854
      %v2899 = vrot.slane %v2855, 4
      %v2900 = vrot.slane %v2856, 4
      %v2901 = vsel %vm766, %v2899, %v2900
      %v2902 = vrot.slane %v2857, 4
      %v2903 = vrot.slane %v2858, 4
      %v2904 = vsel %vm766, %v2902, %v2903
      %v2905 = vrot.slane %v2859, 4
      %v2906 = vrot.slane %v2860, 4
      %v2907 = vsel %vm766, %v2905, %v2906
      %v2908 = vrot.slane %v2861, 4
      %v2909 = vrot.slane %v2862, 4
      %v2910 = vsel %vm766, %v2908, %v2909
      %v2911 = vrot.slane %v2863, 4
      %v2912 = vrot.slane %v2864, 4
      %v2913 = vsel %vm766, %v2911, %v2912
      %v2914 = vrot.slane %v2865, 4
      %v2915 = vrot.slane %v2866, 4
      %v2916 = vsel %vm766, %v2914, %v2915
      %v2917 = vrot.slane %v2867, 4
      %v2918 = vrot.slane %v2868, 4
      %v2919 = vsel %vm766, %v2917, %v2918
      %v2920 = vrot.slane %v2869, 4
      %v2921 = vrot.slane %v2870, 4
      %v2922 = vsel %vm766, %v2920, %v2921
      %v2923 = vrot.slane %v2871, 4
      %v2924 = vrot.slane %v2872, 4
      %v2925 = vsel %vm766, %v2923, %v2924
      %v2926 = vrot.slane %v2873, 4
      %v2927 = vrot.slane %v2874, 4
      %v2928 = vsel %vm766, %v2926, %v2927
      %v2929 = vrot.slane %v2875, 4
      %v2930 = vrot.slane %v2876, 4
      %v2931 = vsel %vm766, %v2929, %v2930
      %v2954 = vadd.f32 %v2832, %v2901
      %v2955 = vadd.f32 %v2833, %v2900
      %v2956 = vadd.f32 %v2834, %v2904
      %v2957 = vadd.f32 %v2835, %v2903
      %v2958 = vadd.f32 %v2836, %v2907
      %v2959 = vadd.f32 %v2837, %v2906
      %v2960 = vadd.f32 %v2838, %v2910
      %v2961 = vadd.f32 %v2839, %v2909
      %v2962 = vadd.f32 %v2840, %v2913
      %v2963 = vadd.f32 %v2841, %v2912
      %v2964 = vadd.f32 %v2842, %v2916
      %v2965 = vadd.f32 %v2843, %v2915
      %v2966 = vadd.f32 %v2844, %v2919
      %v2967 = vadd.f32 %v2845, %v2918
      %v2968 = vadd.f32 %v2846, %v2922
      %v2969 = vadd.f32 %v2847, %v2921
      %v2970 = vadd.f32 %v2848, %v2925
      %v2971 = vadd.f32 %v2849, %v2924
      %v2972 = vadd.f32 %v2850, %v2928
      %v2973 = vadd.f32 %v2851, %v2927
      %v2974 = vadd.f32 %v2852, %v2931
      %v2975 = vadd.f32 %v2853, %v2930
      %vm2976 = vcmask 130048
      %2977 = vst.msk [vmem:[#allocation2] sm:$0xff] %vm2976, %v2954
      %vm2978 = vcmask 124928
      %2979 = vst.msk [vmem:[#allocation2 + $0x8] sm:$0x7] %vm2978, %v2955
      %2980 = vst.msk [vmem:[#allocation2 + $0xb] sm:$0xff] %vm2976, %v2956
      %2981 = vst.msk [vmem:[#allocation2 + $0x13] sm:$0x7] %vm2978, %v2957
      %2982 = vst.msk [vmem:[#allocation2 + $0x16] sm:$0xff] %vm2976, %v2958
      %2983 = vst.msk [vmem:[#allocation2 + $0x1e] sm:$0x7] %vm2978, %v2959
      %2984 = vst.msk [vmem:[#allocation2 + $0x21] sm:$0xff] %vm2976, %v2960
      %2985 = vst.msk [vmem:[#allocation2 + $0x29] sm:$0x7] %vm2978, %v2961
      %2986 = vst.msk [vmem:[#allocation2 + $0x2c] sm:$0xff] %vm2976, %v2962
      %2987 = vst.msk [vmem:[#allocation2 + $0x34] sm:$0x7] %vm2978, %v2963
      %2988 = vst.msk [vmem:[#allocation2 + $0x37] sm:$0xff] %vm2976, %v2964
      %2989 = vst.msk [vmem:[#allocation2 + $0x3f] sm:$0x7] %vm2978, %v2965
      %2990 = vst.msk [vmem:[#allocation2 + $0x42] sm:$0xff] %vm2976, %v2966
      %2991 = vst.msk [vmem:[#allocation2 + $0x4a] sm:$0x7] %vm2978, %v2967
      %2992 = vst.msk [vmem:[#allocation2 + $0x4d] sm:$0xff] %vm2976, %v2968
      %2993 = vst.msk [vmem:[#allocation2 + $0x55] sm:$0x7] %vm2978, %v2969
      %2994 = vst.msk [vmem:[#allocation2 + $0x58] sm:$0xff] %vm2976, %v2970
      %2995 = vst.msk [vmem:[#allocation2 + $0x60] sm:$0x7] %vm2978, %v2971
      %2996 = vst.msk [vmem:[#allocation2 + $0x63] sm:$0xff] %vm2976, %v2972
      %2997 = vst.msk [vmem:[#allocation2 + $0x6b] sm:$0x7] %vm2978, %v2973
      %2998 = vst.msk [vmem:[#allocation2 + $0x6e] sm:$0xff] %vm2976, %v2974
      %2999 = vst.msk [vmem:[#allocation2 + $0x76] sm:$0x7] %vm2978, %v2975
      %v3000 = vld [vmem:[#allocation2] sm:$0xff]
      %v3001 = vld [vmem:[#allocation2 + $0x8] sm:$0xff]
      %v3002 = vld [vmem:[#allocation2 + $0x10] sm:$0xff]
      %v3003 = vld [vmem:[#allocation2 + $0x18] sm:$0xff]
      %v3004 = vld [vmem:[#allocation2 + $0x20] sm:$0xff]
      %v3005 = vld [vmem:[#allocation2 + $0x28] sm:$0xff]
      %v3006 = vld [vmem:[#allocation2 + $0x30] sm:$0xff]
      %v3007 = vld [vmem:[#allocation2 + $0x38] sm:$0xff]
      %v3008 = vld [vmem:[#allocation2 + $0x40] sm:$0xff]
      %v3009 = vld [vmem:[#allocation2 + $0x48] sm:$0xff]
      %v3010 = vld [vmem:[#allocation2 + $0x50] sm:$0xff]
      %v3011 = vld [vmem:[#allocation2 + $0x58] sm:$0xff]
      %v3012 = vld [vmem:[#allocation2 + $0x60] sm:$0xff]
      %v3013 = vld [vmem:[#allocation2 + $0x68] sm:$0xff]
      %v3014 = vld [vmem:[#allocation2 + $0x70] sm:$0xff]
      %v3015 = vld [vmem:[#allocation2 + $0x78] sm:$0x1]
      %v3016 = vld [vmem:[%s2] sm:$0xff]
      %v3017 = vld [vmem:[%s2 + $0x8] sm:$0xff]
      %v3018 = vld [vmem:[%s3] sm:$0x1]
      %v3020 = vperm.slane %v3018, 0
      %v3023 = vsel %vm2976, %v3000, 0
      %v3026 = vsel %vm2976, %v3001, 0
      %v3029 = vsel %vm2976, %v3002, 0
      %v3032 = vsel %vm2976, %v3003, 0
      %v3035 = vsel %vm2976, %v3004, 0
      %v3038 = vsel %vm2976, %v3005, 0
      %v3041 = vsel %vm2976, %v3006, 0
      %v3044 = vsel %vm2976, %v3007, 0
      %v3047 = vsel %vm2976, %v3008, 0
      %v3050 = vsel %vm2976, %v3009, 0
      %v3053 = vsel %vm2976, %v3010, 0
      %v3056 = vsel %vm2976, %v3011, 0
      %v3059 = vsel %vm2976, %v3012, 0
      %v3062 = vsel %vm2976, %v3013, 0
      %v3065 = vsel %vm2976, %v3014, 0
      %v3068 = vsel %vm2976, %v3015, 0
      %3070 = vmatpush.msra.mxu0 0.0
      %3071 = vmatpush.msra.mxu0 0.0
      %3072 = vmatpush.msra.mxu0 0.0
      %3073 = vmatpush.msra.mxu0 0.0
      %3074 = vmatpush.msra.mxu0 0.0
      %3075 = vmatpush.msra.mxu0 0.0
      %3076 = vmatpush.msra.mxu0 0.0
      %3077 = vmatpush.msra.mxu0 0.0
      %3078 = vmatpush.msra.mxu0 0.0
      %3079 = vmatpush.msra.mxu0 0.0
      %3080 = vmatpush.msra.mxu0 0.0
      %3081 = vmatpush.msra.mxu0 0.0
      %3082 = vmatpush.msra.mxu0 0.0
      %3083 = vmatpush.msra.mxu0 0.0
      %3084 = vmatpush.msra.mxu0 %v3017
      %3085 = vmatpush.msra.mxu0 %v3016
      %3086 = vmatmul.f32.gmra.mxu0 %v3023
      %v3087 = vpop.f32.mrf.mxu0
      %v3088 = vadd.f32 %v3020, %v3087
      %3089 = vmatmul.f32.gmra.mxu0 %v3026
      %v3090 = vpop.f32.mrf.mxu0
      %v3091 = vadd.f32 %v3020, %v3090
      %3092 = vmatmul.f32.gmra.mxu0 %v3029
      %v3093 = vpop.f32.mrf.mxu0
      %v3094 = vadd.f32 %v3020, %v3093
      %3095 = vmatmul.f32.gmra.mxu0 %v3032
      %v3096 = vpop.f32.mrf.mxu0
      %v3097 = vadd.f32 %v3020, %v3096
      %3098 = vmatmul.f32.gmra.mxu0 %v3035
      %v3099 = vpop.f32.mrf.mxu0
      %v3100 = vadd.f32 %v3020, %v3099
      %3101 = vmatmul.f32.gmra.mxu0 %v3038
      %v3102 = vpop.f32.mrf.mxu0
      %v3103 = vadd.f32 %v3020, %v3102
      %3104 = vmatmul.f32.gmra.mxu0 %v3041
      %v3105 = vpop.f32.mrf.mxu0
      %v3106 = vadd.f32 %v3020, %v3105
      %3107 = vmatmul.f32.gmra.mxu0 %v3044
      %v3108 = vpop.f32.mrf.mxu0
      %v3109 = vadd.f32 %v3020, %v3108
      %3110 = vmatmul.f32.gmra.mxu0 %v3047
      %v3111 = vpop.f32.mrf.mxu0
      %v3112 = vadd.f32 %v3020, %v3111
      %3113 = vmatmul.f32.gmra.mxu0 %v3050
      %v3114 = vpop.f32.mrf.mxu0
      %v3115 = vadd.f32 %v3020, %v3114
      %3116 = vmatmul.f32.gmra.mxu0 %v3053
      %v3117 = vpop.f32.mrf.mxu0
      %v3118 = vadd.f32 %v3020, %v3117
      %3119 = vmatmul.f32.gmra.mxu0 %v3056
      %v3120 = vpop.f32.mrf.mxu0
      %v3121 = vadd.f32 %v3020, %v3120
      %3122 = vmatmul.f32.gmra.mxu0 %v3059
      %v3123 = vpop.f32.mrf.mxu0
      %v3124 = vadd.f32 %v3020, %v3123
      %3125 = vmatmul.f32.gmra.mxu0 %v3062
      %v3126 = vpop.f32.mrf.mxu0
      %v3127 = vadd.f32 %v3020, %v3126
      %3128 = vmatmul.f32.gmra.mxu0 %v3065
      %v3129 = vpop.f32.mrf.mxu0
      %v3130 = vadd.f32 %v3020, %v3129
      %3131 = vmatmul.f32.gmra.mxu0 %v3068
      %v3132 = vpop.f32.mrf.mxu0
      %v3133 = vadd.f32 %v3020, %v3132
      %3134 = vdwg.mxu0
      %v3135 = vmax.f32 %v3088, 0.0
      %v3136 = vmax.f32 %v3091, 0.0
      %v3137 = vmax.f32 %v3094, 0.0
      %v3138 = vmax.f32 %v3097, 0.0
      %v3139 = vmax.f32 %v3100, 0.0
      %v3140 = vmax.f32 %v3103, 0.0
      %v3141 = vmax.f32 %v3106, 0.0
      %v3142 = vmax.f32 %v3109, 0.0
      %v3143 = vmax.f32 %v3112, 0.0
      %v3144 = vmax.f32 %v3115, 0.0
      %v3145 = vmax.f32 %v3118, 0.0
      %v3146 = vmax.f32 %v3121, 0.0
      %v3147 = vmax.f32 %v3124, 0.0
      %v3148 = vmax.f32 %v3127, 0.0
      %v3149 = vmax.f32 %v3130, 0.0
      %v3150 = vmax.f32 %v3133, 0.0
      %v3151 = vld [vmem:[%s4] sm:$0xff]
      %v3152 = vld [vmem:[%s4 + $0x8] sm:$0xff]
      %v3153 = vld [vmem:[%s5] sm:$0x1]
      %v3155 = vperm.slane %v3153, 0
      %v3158 = vsel %vm2976, %v3135, 0
      %v3161 = vsel %vm2976, %v3136, 0
      %v3164 = vsel %vm2976, %v3137, 0
      %v3167 = vsel %vm2976, %v3138, 0
      %v3170 = vsel %vm2976, %v3139, 0
      %v3173 = vsel %vm2976, %v3140, 0
      %v3176 = vsel %vm2976, %v3141, 0
      %v3179 = vsel %vm2976, %v3142, 0
      %v3182 = vsel %vm2976, %v3143, 0
      %v3185 = vsel %vm2976, %v3144, 0
      %v3188 = vsel %vm2976, %v3145, 0
      %v3191 = vsel %vm2976, %v3146, 0
      %v3194 = vsel %vm2976, %v3147, 0
      %v3197 = vsel %vm2976, %v3148, 0
      %v3200 = vsel %vm2976, %v3149, 0
      %v3203 = vsel %vm2976, %v3150, 0
      %3205 = vmatpush.msra.mxu0 0.0
      %3206 = vmatpush.msra.mxu0 0.0
      %3207 = vmatpush.msra.mxu0 0.0
      %3208 = vmatpush.msra.mxu0 0.0
      %3209 = vmatpush.msra.mxu0 0.0
      %3210 = vmatpush.msra.mxu0 0.0
      %3211 = vmatpush.msra.mxu0 0.0
      %3212 = vmatpush.msra.mxu0 0.0
      %3213 = vmatpush.msra.mxu0 0.0
      %3214 = vmatpush.msra.mxu0 0.0
      %3215 = vmatpush.msra.mxu0 0.0
      %3216 = vmatpush.msra.mxu0 0.0
      %3217 = vmatpush.msra.mxu0 0.0
      %3218 = vmatpush.msra.mxu0 0.0
      %3219 = vmatpush.msra.mxu0 %v3152
      %3220 = vmatpush.msra.mxu0 %v3151
      %3221 = vmatmul.f32.gmra.mxu0 %v3158
      %v3222 = vpop.f32.mrf.mxu0
      %v3223 = vadd.f32 %v3155, %v3222
      %3224 = vmatmul.f32.gmra.mxu0 %v3161
      %v3225 = vpop.f32.mrf.mxu0
      %v3226 = vadd.f32 %v3155, %v3225
      %3227 = vmatmul.f32.gmra.mxu0 %v3164
      %v3228 = vpop.f32.mrf.mxu0
      %v3229 = vadd.f32 %v3155, %v3228
      %3230 = vmatmul.f32.gmra.mxu0 %v3167
      %v3231 = vpop.f32.mrf.mxu0
      %v3232 = vadd.f32 %v3155, %v3231
      %3233 = vmatmul.f32.gmra.mxu0 %v3170
      %v3234 = vpop.f32.mrf.mxu0
      %v3235 = vadd.f32 %v3155, %v3234
      %3236 = vmatmul.f32.gmra.mxu0 %v3173
      %v3237 = vpop.f32.mrf.mxu0
      %v3238 = vadd.f32 %v3155, %v3237
      %3239 = vmatmul.f32.gmra.mxu0 %v3176
      %v3240 = vpop.f32.mrf.mxu0
      %v3241 = vadd.f32 %v3155, %v3240
      %3242 = vmatmul.f32.gmra.mxu0 %v3179
      %v3243 = vpop.f32.mrf.mxu0
      %v3244 = vadd.f32 %v3155, %v3243
      %3245 = vmatmul.f32.gmra.mxu0 %v3182
      %v3246 = vpop.f32.mrf.mxu0
      %v3247 = vadd.f32 %v3155, %v3246
      %3248 = vmatmul.f32.gmra.mxu0 %v3185
      %v3249 = vpop.f32.mrf.mxu0
      %v3250 = vadd.f32 %v3155, %v3249
      %3251 = vmatmul.f32.gmra.mxu0 %v3188
      %v3252 = vpop.f32.mrf.mxu0
      %v3253 = vadd.f32 %v3155, %v3252
      %3254 = vmatmul.f32.gmra.mxu0 %v3191
      %v3255 = vpop.f32.mrf.mxu0
      %v3256 = vadd.f32 %v3155, %v3255
      %3257 = vmatmul.f32.gmra.mxu0 %v3194
      %v3258 = vpop.f32.mrf.mxu0
      %v3259 = vadd.f32 %v3155, %v3258
      %3260 = vmatmul.f32.gmra.mxu0 %v3197
      %v3261 = vpop.f32.mrf.mxu0
      %v3262 = vadd.f32 %v3155, %v3261
      %3263 = vmatmul.f32.gmra.mxu0 %v3200
      %v3264 = vpop.f32.mrf.mxu0
      %v3265 = vadd.f32 %v3155, %v3264
      %3266 = vmatmul.f32.gmra.mxu0 %v3203
      %v3267 = vpop.f32.mrf.mxu0
      %v3268 = vadd.f32 %v3155, %v3267
      %3269 = vdwg.mxu0
      %vm3270 = vcmask 31744
      %3271 = vst.msk [vmem:[%s271] sm:$0xff] %vm3270, %v3223
      %3272 = vst.msk [vmem:[%s271 + $0x8] sm:$0xff] %vm3270, %v3226
      %3273 = vst.msk [vmem:[%s271 + $0x10] sm:$0xff] %vm3270, %v3229
      %3274 = vst.msk [vmem:[%s271 + $0x18] sm:$0xff] %vm3270, %v3232
      %3275 = vst.msk [vmem:[%s271 + $0x20] sm:$0xff] %vm3270, %v3235
      %3276 = vst.msk [vmem:[%s271 + $0x28] sm:$0xff] %vm3270, %v3238
      %3277 = vst.msk [vmem:[%s271 + $0x30] sm:$0xff] %vm3270, %v3241
      %3278 = vst.msk [vmem:[%s271 + $0x38] sm:$0xff] %vm3270, %v3244
      %3279 = vst.msk [vmem:[%s271 + $0x40] sm:$0xff] %vm3270, %v3247
      %3280 = vst.msk [vmem:[%s271 + $0x48] sm:$0xff] %vm3270, %v3250
      %3281 = vst.msk [vmem:[%s271 + $0x50] sm:$0xff] %vm3270, %v3253
      %3282 = vst.msk [vmem:[%s271 + $0x58] sm:$0xff] %vm3270, %v3256
      %3283 = vst.msk [vmem:[%s271 + $0x60] sm:$0xff] %vm3270, %v3259
      %3284 = vst.msk [vmem:[%s271 + $0x68] sm:$0xff] %vm3270, %v3262
      %3285 = vst.msk [vmem:[%s271 + $0x70] sm:$0xff] %vm3270, %v3265
      %vm3286 = vcmask 24576
      %3287 = vst.msk [vmem:[%s271 + $0x78] sm:$0x1] %vm3286, %v3268
      %p3288 = scmp.lt.s32.totalorder %s17, 1
      %s3289 = scalar_select %p3288, %s17, 1
      %s3290 = smul.addr %s3289, 16
      %s3291 = smul.addr %s3290, 8
      %s3292 = scalar_lea.vmem %s6, %s3291
      // Predicated region
      $region45: #{depthwise_xcorr_forward.5} parent=43 // pred_check
        %p3293 = pneg %p171
      $region46: #{depthwise_xcorr_forward.5} parent=43 // pred_check_branch
        %3295 = sbr.rel (%p3293) target = $region48
      $region47: #{depthwise_xcorr_forward.5} parent=43 // pred_region
        _
      $region48: #{depthwise_xcorr_forward.5} parent=43 // pred_fallthru
        _
    $region44: #{depthwise_xcorr_forward.5} parent=5 // pred_fallthru
      _
    %p3296 = scmp.le.s32.totalorder 2, %s12
    // Predicated region
    $region49: #{depthwise_xcorr_forward.5} parent=5 // pred_check
      %p3297 = pneg %p3296
    $region50: #{depthwise_xcorr_forward.5} parent=5 // pred_check_branch
      %3299 = sbr.rel (%p3297) target = $region52
    $region51: #{depthwise_xcorr_forward.5} parent=5 // pred_region
      %s3300 = ssub.s32 %s12, 2
      // Predicated region
      $region53: #{depthwise_xcorr_forward.5} parent=51 // pred_check
        %p3301 = pneg %p177
      $region54: #{depthwise_xcorr_forward.5} parent=51 // pred_check_branch
        %3303 = sbr.rel (%p3301) target = $region56
      $region55: #{depthwise_xcorr_forward.5} parent=51 // pred_region
        %p3304 = scmp.lt.s32.totalorder %s18, 1
        %s3305 = scalar_select %p3304, %s18, 1
        %s3306 = smul.addr %s3305, 16
        %s3307 = smul.addr %s3306, 8
        %s3308 = scalar_lea.vmem %s6, %s3307
      $region56: #{depthwise_xcorr_forward.5} parent=51 // pred_fallthru
        _
    $region52: #{depthwise_xcorr_forward.5} parent=5 // pred_fallthru
      _
  $region6: #{depthwise_xcorr_forward.5} parent=0 // loop_footer
    %s16 = sadd.s32 1, %s12
  $region7: #{depthwise_xcorr_forward.5} parent=0 // loop_footer_branch
    %11 = sbr.rel target = $region3
  $region8: #{depthwise_xcorr_forward.5} parent=0 // loop_exit
    _

</llo_original>
